<compile_context>
chip_gen: v7x
topology: tpu7x:2x2x1
jax: 0.10.0
libtpu: 0.0.40
codegen_flags: <defaults>
</compile_context>

<pallas_src>
import math
import functools

import numpy as np
import jax
import jax.numpy as jnp
from jax import lax
from jax.experimental import pallas as pl
from jax.experimental.pallas import tpu as pltpu

# ------------------------- small config (ModelArgs) -------------------------
DIM = 64                 # args.dim
N_LAYERS = 2             # args.n_layers
N_HEADS = 4              # args.n_heads
HEAD_DIM = DIM // N_HEADS
HIDDEN_DIM = 128         # args.hidden_dim (FFN)
MAX_SEQ_LEN = 16         # args.max_seq_len
NORM_EPS = 1e-5          # args.norm_eps
PRED_HIDDEN = 2048       # NNCLRPredictionHead hidden dim
BN_EPS = 1e-5


# ----------------------------- fused Pallas kernel ---------------------------
def _fused_kernel(x_ref, kbias_ref, vs_ref, cos_ref, sin_ref, perm_ref,
                  wih_ref, whh_ref, lb_ref, norms_ref,
                  wqkv_ref, wo_ref, w13_ref, w2_ref,
                  pb1_ref, pb2_ref, pw1_hbm, pw2_hbm,
                  out_ref,
                  pw1_vmem, pw2_vmem, dma_sem,
                  *, B, T, D, H, L, FFN, eps, scale):
    HD = D // H
    f32 = jnp.float32
    bf16 = jnp.bfloat16

    # ---- latency hiding: head weights (~0.5 MiB bf16) are consumed only at
    # the very end, so DMA HBM->VMEM behind the LSTM + transformer compute.
    pw1_cp = pltpu.make_async_copy(pw1_hbm, pw1_vmem, dma_sem.at[0])
    pw2_cp = pltpu.make_async_copy(pw2_hbm, pw2_vmem, dma_sem.at[1])
    pw1_cp.start()
    pw2_cp.start()

    def rmsnorm(v, w):
        ms = jnp.mean(v * v, axis=-1, keepdims=True)
        return v * lax.rsqrt(ms + eps) * w

    x2d = x_ref[...].reshape(B * T, D)            # lane-dense (B*T, D)

    valid = vs_ref[:, :, 0:1]                     # (B, T, 1)  1/0 key mask
    lengths_f = jnp.sum(valid, axis=1)            # (B, 1)  float lengths
    # key-padding bias broadcast hoisted out of the head/layer loops
    kbias_b = jnp.broadcast_to(kbias_ref[...], (B, T, T))       # (B, T, T)

    # ---------------- LSTM branch: hoisted input projection + unrolled recurrence
    xg = (jnp.dot(x2d, wih_ref[...], preferred_element_type=f32)
          + lb_ref[...]).reshape(B, T, 4 * D)     # PyTorch gate order i,f,g,o
    whh = whh_ref[...]
    h_t = jnp.zeros((B, D), f32)
    c_t = jnp.zeros((B, D), f32)
    hn_lstm = jnp.zeros((B, D), f32)
    for t in range(T):                            # static unroll, T <= 16
        gates = xg[:, t, :] + jnp.dot(h_t, whh, preferred_element_type=f32)   # (B, 4D)
        # single full-width activations (EUP has slack), then slice results
        sg = jax.nn.sigmoid(gates)
        tg = jnp.tanh(gates)
        c_t = sg[:, D:2 * D] * c_t + sg[:, 0:D] * tg[:, 2 * D:3 * D]
        h_t = sg[:, 3 * D:4 * D] * jnp.tanh(c_t)
        # one-hot pick of hidden state at t == lengths-1 (pack_padded-free gather)
        hn_lstm = hn_lstm + vs_ref[:, t, 1:2] * h_t

    # ---------------- transformer branch (layers unrolled, weights resident)
    cos2 = cos_ref[...][None]                     # (1, T, 2D) fused [q|k] tables
    sin2 = sin_ref[...][None]
    perm2 = perm_ref[...]                         # (2D, 2D) pair-swap/sign matrix
    h = x2d
    for l in range(L):
        # ---- attention sub-block
        hn = rmsnorm(h, norms_ref[l])                                         # (B*T, D)
        qkv = jnp.dot(hn.astype(bf16), wqkv_ref[l],
                      preferred_element_type=f32)                             # (B*T, 3D)
        # RoPE on the vreg-aligned fused [q|k] slab (lanes 0:2D), one matmul
        qk = qkv[:, :2 * D]                                                   # (B*T, 2D)
        rot = jnp.dot(qk, perm2, preferred_element_type=f32)
        qk3 = qk.reshape(B, T, 2 * D) * cos2 + rot.reshape(B, T, 2 * D) * sin2
        q3 = qk3[:, :, :D]
        k3 = qk3[:, :, D:]
        v3 = qkv[:, 2 * D:].reshape(B, T, D)                                  # aligned slice
        # TODO(synk): merge the per-head loop into one multi-batch-dim
        # dot_general ('bqhd,bkhd->bhqk') once Mosaic lowering for >1 batch
        # dim is verified; kept single-batch-dim einsums for robust lowering.
        ctx = []
        for hh in range(H):                        # static unroll over heads
            lo = hh * HD
            qh = q3[:, :, lo:lo + HD]
            kh = k3[:, :, lo:lo + HD]
            s = jnp.einsum('bqd,bkd->bqk', qh, kh,
                           preferred_element_type=f32) * scale                # (B, T, T)
            s = s + kbias_b                                                   # key-padding mask
            s = s - jnp.max(s, axis=-1, keepdims=True)
            p = jnp.exp(s)
            p = p / jnp.sum(p, axis=-1, keepdims=True)                        # exact softmax
            ctx.append(jnp.einsum('bqk,bkd->bqd', p, v3[:, :, lo:lo + HD],
                                  preferred_element_type=f32))                # (B, T, HD)
        attn = jnp.concatenate(ctx, axis=-1).reshape(B * T, D)
        h = h + jnp.dot(attn.astype(bf16), wo_ref[l],
                        preferred_element_type=f32)   # resid_dropout = identity (eval)

        # ---- feed-forward sub-block (w1 & w3 fused)
        hn = rmsnorm(h, norms_ref[L + l])
        h13 = jnp.dot(hn.astype(bf16), w13_ref[l], preferred_element_type=f32)   # (B*T, 2*FFN)
        h1 = h13[:, :FFN]
        h3 = h13[:, FFN:]
        h = h + jnp.dot(((h1 * jax.nn.sigmoid(h1)) * h3).astype(bf16), w2_ref[l],
                        preferred_element_type=f32)

    # ---------------- final norm + masked mean pool + LSTM hidden
    hfin = rmsnorm(h, norms_ref[2 * L]).reshape(B, T, D)
    pooled = hn_lstm + jnp.sum(hfin * valid, axis=1) / lengths_f              # (B, D)

    # ---------------- prediction head: Linear(BN folded) -> ReLU -> Linear
    pw1_cp.wait()
    ph = jnp.dot(pooled.astype(bf16), pw1_vmem[...],
                 preferred_element_type=f32) + pb1_ref[...]
    ph = jnp.maximum(ph, 0.0)
    pw2_cp.wait()
    out_ref[...] = jnp.dot(ph.astype(bf16), pw2_vmem[...],
                           preferred_element_type=f32) + pb2_ref[...]


# ------------------------------ host-side glue --------------------------------
def precompute_freqs_cis(dim, end, theta=10000.0):
    freqs = 1.0 / theta ** (jnp.arange(0, dim, 2)[: dim // 2].astype(jnp.float32) / dim)
    t = jnp.arange(end, dtype=jnp.float32)
    freqs = jnp.outer(t, freqs)
    return jnp.cos(freqs), jnp.sin(freqs)


def init_params(key):
    D, FFN, L, PH = DIM, HIDDEN_DIM, N_LAYERS, PRED_HIDDEN
    std = 0.02
    std_small = 0.02 / math.sqrt(2 * L)
    keys = iter(jax.random.split(key, 64))
    bf16 = jnp.bfloat16

    def nrm(shape, s):
        return s * jax.random.normal(next(keys), shape, dtype=jnp.float32)

    klstm = 1.0 / math.sqrt(D)
    p = {
        # LSTM weights stored transposed so gates = x @ W (PyTorch: x @ W^T);
        # b = b_ih + b_hh combined (numerically equivalent for inference).
        # Kept f32: they sit on the serial recurrent chain and are tiny.
        "lstm_wih": jax.random.uniform(next(keys), (D, 4 * D), jnp.float32, -klstm, klstm),
        "lstm_whh": jax.random.uniform(next(keys), (D, 4 * D), jnp.float32, -klstm, klstm),
        "lstm_b":   jax.random.uniform(next(keys), (1, 4 * D), jnp.float32, -klstm, klstm),
    }

    wqkv, wo, w13, w2 = [], [], [], []
    for _ in range(L):
        wq, wk, wv = nrm((D, D), std), nrm((D, D), std), nrm((D, D), std)
        wqkv.append(jnp.concatenate([wq, wk, wv], axis=1))      # fused QKV (D, 3D)
        wo.append(nrm((D, D), std_small))                       # special init for wo
        w1 = nrm((D, FFN), std)
        w3 = nrm((D, FFN), std_small)                           # special init for w3
        w13.append(jnp.concatenate([w1, w3], axis=1))           # fused (D, 2*FFN)
        w2.append(nrm((FFN, D), std))
    # bf16 MXU weights (activations stay f32; cast only at the dot)
    p["wqkv"] = jnp.stack(wqkv).astype(bf16)
    p["wo"] = jnp.stack(wo).astype(bf16)
    p["w13"] = jnp.stack(w13).astype(bf16)
    p["w2"] = jnp.stack(w2).astype(bf16)
    # all RMSNorm weights packed into one array: [attn x L | ffn x L | final]
    p["norms"] = jnp.ones((2 * L + 1, 1, D), jnp.float32)

    # Prediction head: Linear(no bias) -> BatchNorm1d(eval, running stats) -> ReLU -> Linear.
    # BN affine folded into the first Linear (exact for eval mode); weights bf16.
    ph_w1 = nrm((D, PH), std)
    bn_gamma = jnp.ones((PH,), jnp.float32)
    bn_beta = jnp.zeros((PH,), jnp.float32)
    bn_mean = jnp.zeros((PH,), jnp.float32)
    bn_var = jnp.ones((PH,), jnp.float32)
    bn_scale = bn_gamma / jnp.sqrt(bn_var + BN_EPS)
    p["ph_w1"] = (ph_w1 * bn_scale[None, :]).astype(bf16)
    p["ph_b1"] = (bn_beta - bn_mean * bn_scale).reshape(1, PH)
    p["ph_w2"] = nrm((PH, D), std).astype(bf16)
    p["ph_b2"] = jnp.zeros((1, D), jnp.float32)

    # RoPE tables + pairwise rotation matrix for the fused [q|k] slab:
    # (x@P)[2j] = -x[2j+1], (x@P)[2j+1] = x[2j]  over all 2D lanes.
    fc, fs = precompute_freqs_cis(HEAD_DIM, MAX_SEQ_LEN)
    p["freqs_cos"], p["freqs_sin"] = fc, fs
    perm = np.zeros((2 * D, 2 * D), np.float32)
    for j in range(D):
        perm[2 * j + 1, 2 * j] = -1.0
        perm[2 * j, 2 * j + 1] = 1.0
    p["rope_perm2"] = jnp.asarray(perm)
    return p


def forward(params, x, lengths, *, batch_tile=None):
    B, T, D = x.shape
    H = N_HEADS
    L = N_LAYERS
    Bt = B if batch_tile is None else batch_tile
    assert B % Bt == 0 and (Bt == B or Bt % 8 == 0)

    # Tiny O(B*T) mask prep (one fused XLA elementwise blob).
    t_idx = jnp.arange(T)
    valid = (t_idx[None, :] < lengths[:, None]).astype(jnp.float32)           # (B, T)
    kbias = ((valid - 1.0) * 1e30).reshape(B, 1, T)                           # 0 / -1e30
    sel = (t_idx[None, :] == (lengths[:, None] - 1)).astype(jnp.float32)      # (B, T)
    vs = jnp.stack([valid, sel], axis=-1)                                     # (B, T, 2)

    # RoPE tables for the fused [q|k] slab: (T, 2*D); broadcast over batch in-kernel.
    cos = jnp.repeat(params["freqs_cos"][:T], 2, axis=-1)                     # (T, HD)
    sin = jnp.repeat(params["freqs_sin"][:T], 2, axis=-1)
    cos2 = jnp.tile(cos, (1, 2 * H))                                          # (T, 2D)
    sin2 = jnp.tile(sin, (1, 2 * H))

    kernel = functools.partial(
        _fused_kernel, B=Bt, T=T, D=D, H=H, L=L, FFN=HIDDEN_DIM,
        eps=NORM_EPS, scale=1.0 / math.sqrt(D // H))

    const2 = lambda i: (0, 0)
    const3 = lambda i: (0, 0, 0)

    grid_spec = pltpu.PrefetchScalarGridSpec(
        num_scalar_prefetch=0,
        grid=(B // Bt,),                                   # batch-tile grid
        in_specs=[
            pl.BlockSpec((Bt, T, D), lambda i: (i, 0, 0)),          # x         (streamed)
            pl.BlockSpec((Bt, 1, T), lambda i: (i, 0, 0)),          # key bias  (streamed)
            pl.BlockSpec((Bt, T, 2), lambda i: (i, 0, 0)),          # valid|sel (streamed)
            pl.BlockSpec((T, 2 * D), const2),                       # cos2      (resident)
            pl.BlockSpec((T, 2 * D), const2),                       # sin2
            pl.BlockSpec((2 * D, 2 * D), const2),                   # rope perm
            pl.BlockSpec((D, 4 * D), const2),                       # lstm_wih
            pl.BlockSpec((D, 4 * D), const2),                       # lstm_whh
            pl.BlockSpec((1, 4 * D), const2),                       # lstm_b
            pl.BlockSpec((2 * L + 1, 1, D), const3),                # norms
            pl.BlockSpec((L, D, 3 * D), const3),                    # wqkv
            pl.BlockSpec((L, D, D), const3),                        # wo
            pl.BlockSpec((L, D, 2 * HIDDEN_DIM), const3),           # w13
            pl.BlockSpec((L, HIDDEN_DIM, D), const3),               # w2
            pl.BlockSpec((1, PRED_HIDDEN), const2),                 # head bias 1
            pl.BlockSpec((1, D), const2),                           # head bias 2
            pl.BlockSpec(memory_space=pl.ANY),                      # pw1 (HBM, manual DMA)
            pl.BlockSpec(memory_space=pl.ANY),                      # pw2 (HBM, manual DMA)
        ],
        out_specs=pl.BlockSpec((Bt, D), lambda i: (i, 0)),
        scratch_shapes=[
            pltpu.VMEM((D, PRED_HIDDEN), jnp.bfloat16),             # pw1 landing buffer
            pltpu.VMEM((PRED_HIDDEN, D), jnp.bfloat16),             # pw2 landing buffer
            pltpu.SemaphoreType.DMA((2,)),
        ],
    )

    return pl.pallas_call(
        kernel,
        out_shape=jax.ShapeDtypeStruct((B, D), jnp.float32),
        grid_spec=grid_spec,
        compiler_params=pltpu.CompilerParams(
            dimension_semantics=("parallel",),            # megacore sharding on v7x
            vmem_limit_bytes=32 * 1024 * 1024),           # explicit, safe on v5e/v6e/v7x
    )(x, kbias, vs, cos2, sin2, params["rope_perm2"],
      params["lstm_wih"], params["lstm_whh"], params["lstm_b"],
      params["norms"], params["wqkv"], params["wo"], params["w13"], params["w2"],
      params["ph_b1"], params["ph_b2"], params["ph_w1"], params["ph_w2"])


if __name__ == "__main__":
    key = jax.random.PRNGKey(0)
    pkey, xkey = jax.random.split(key)
    params = init_params(pkey)

    B, T = 2, 8
    x = jax.random.normal(xkey, (B, T, DIM), dtype=jnp.float32)
    lengths = jnp.array([5, 8], dtype=jnp.int32)

    out = jax.jit(forward)(params, x, lengths)
    out = jax.block_until_ready(out)
    assert out.shape == (B, DIM)
    assert bool(jnp.all(jnp.isfinite(out)))
    print("KERNEL_OK")
</pallas_src>

<mosaic_0001>
module attributes {stable_mosaic.version = 11 : i64} {
  func.func @_fused_kernel(%arg0: i32, %arg1: memref<2x8x64xf32, #tpu.memory_space<vmem>>, %arg2: memref<2x1x8xf32, #tpu.memory_space<vmem>>, %arg3: memref<2x8x2xf32, #tpu.memory_space<vmem>>, %arg4: memref<8x128xf32, #tpu.memory_space<vmem>>, %arg5: memref<8x128xf32, #tpu.memory_space<vmem>>, %arg6: memref<128x128xf32, #tpu.memory_space<vmem>>, %arg7: memref<64x256xf32, #tpu.memory_space<vmem>>, %arg8: memref<64x256xf32, #tpu.memory_space<vmem>>, %arg9: memref<1x256xf32, #tpu.memory_space<vmem>>, %arg10: memref<5x1x64xf32, #tpu.memory_space<vmem>>, %arg11: memref<2x64x192xbf16, #tpu.memory_space<vmem>>, %arg12: memref<2x64x64xbf16, #tpu.memory_space<vmem>>, %arg13: memref<2x64x256xbf16, #tpu.memory_space<vmem>>, %arg14: memref<2x128x64xbf16, #tpu.memory_space<vmem>>, %arg15: memref<1x2048xf32, #tpu.memory_space<vmem>>, %arg16: memref<1x64xf32, #tpu.memory_space<vmem>>, %arg17: memref<64x2048xbf16, #tpu.memory_space<any>>, %arg18: memref<2048x64xbf16, #tpu.memory_space<any>>, %arg19: memref<2x64xf32, #tpu.memory_space<vmem>>, %arg20: memref<64x2048xbf16, #tpu.memory_space<vmem>>, %arg21: memref<2048x64xbf16, #tpu.memory_space<vmem>>, %arg22: memref<2x!tpu.dma_semaphore, #tpu.memory_space<semaphore_mem>>) attributes {dimension_semantics = [#tpu.dimension_semantics<parallel>], iteration_bounds = array<i64: 1>, scalar_prefetch = 0 : i64, scratch_operands = 3 : i64, tpu.core_type = #tpu.core_type<tc>, window_params = [{transform_indices = @transform_0, window_bounds = array<i64: 2, 8, 64>}, {transform_indices = @transform_1, window_bounds = array<i64: 2, 1, 8>}, {transform_indices = @transform_2, window_bounds = array<i64: 2, 8, 2>}, {pipeline_mode = #tpu.pipeline_mode<synchronous>, transform_indices = @transform_3, window_bounds = array<i64: 8, 128>}, {pipeline_mode = #tpu.pipeline_mode<synchronous>, transform_indices = @transform_4, window_bounds = array<i64: 8, 128>}, {pipeline_mode = #tpu.pipeline_mode<synchronous>, transform_indices = @transform_5, window_bounds = array<i64: 128, 128>}, {pipeline_mode = #tpu.pipeline_mode<synchronous>, transform_indices = @transform_6, window_bounds = array<i64: 64, 256>}, {pipeline_mode = #tpu.pipeline_mode<synchronous>, transform_indices = @transform_7, window_bounds = array<i64: 64, 256>}, {pipeline_mode = #tpu.pipeline_mode<synchronous>, transform_indices = @transform_8, window_bounds = array<i64: 1, 256>}, {pipeline_mode = #tpu.pipeline_mode<synchronous>, transform_indices = @transform_9, window_bounds = array<i64: 5, 1, 64>}, {pipeline_mode = #tpu.pipeline_mode<synchronous>, transform_indices = @transform_10, window_bounds = array<i64: 2, 64, 192>}, {pipeline_mode = #tpu.pipeline_mode<synchronous>, transform_indices = @transform_11, window_bounds = array<i64: 2, 64, 64>}, {pipeline_mode = #tpu.pipeline_mode<synchronous>, transform_indices = @transform_12, window_bounds = array<i64: 2, 64, 256>}, {pipeline_mode = #tpu.pipeline_mode<synchronous>, transform_indices = @transform_13, window_bounds = array<i64: 2, 128, 64>}, {pipeline_mode = #tpu.pipeline_mode<synchronous>, transform_indices = @transform_14, window_bounds = array<i64: 1, 2048>}, {pipeline_mode = #tpu.pipeline_mode<synchronous>, transform_indices = @transform_15, window_bounds = array<i64: 1, 64>}, {}, {}, {transform_indices = @transform_18, window_bounds = array<i64: 2, 64>}]} {
    %c0_i32 = arith.constant 0 : i32
    %0 = tpu.memref_slice %arg22[%c0_i32] : memref<2x!tpu.dma_semaphore, #tpu.memory_space<semaphore_mem>> -> memref<1x!tpu.dma_semaphore, #tpu.memory_space<semaphore_mem>>
    %1 = tpu.memref_squeeze %0 : memref<1x!tpu.dma_semaphore, #tpu.memory_space<semaphore_mem>> -> memref<!tpu.dma_semaphore, #tpu.memory_space<semaphore_mem>>
    tpu.enqueue_dma source(%arg17 : memref<64x2048xbf16, #tpu.memory_space<any>>) target(%arg20 : memref<64x2048xbf16, #tpu.memory_space<vmem>>) target_semaphore(%1 : memref<!tpu.dma_semaphore, #tpu.memory_space<semaphore_mem>>)
    %c1_i32 = arith.constant 1 : i32
    %2 = tpu.memref_slice %arg22[%c1_i32] : memref<2x!tpu.dma_semaphore, #tpu.memory_space<semaphore_mem>> -> memref<1x!tpu.dma_semaphore, #tpu.memory_space<semaphore_mem>>
    %3 = tpu.memref_squeeze %2 : memref<1x!tpu.dma_semaphore, #tpu.memory_space<semaphore_mem>> -> memref<!tpu.dma_semaphore, #tpu.memory_space<semaphore_mem>>
    tpu.enqueue_dma source(%arg18 : memref<2048x64xbf16, #tpu.memory_space<any>>) target(%arg21 : memref<2048x64xbf16, #tpu.memory_space<vmem>>) target_semaphore(%3 : memref<!tpu.dma_semaphore, #tpu.memory_space<semaphore_mem>>)
    %c0 = arith.constant 0 : index
    %c0_0 = arith.constant 0 : index
    %c0_1 = arith.constant 0 : index
    %4 = vector.load %arg1[%c0, %c0_0, %c0_1] : memref<2x8x64xf32, #tpu.memory_space<vmem>>, vector<2x8x64xf32>
    %5 = vector.shape_cast %4 : vector<2x8x64xf32> to vector<16x64xf32>
    %c0_2 = arith.constant 0 : index
    %c0_3 = arith.constant 0 : index
    %c0_4 = arith.constant 0 : index
    %6 = vector.load %arg3[%c0_2, %c0_3, %c0_4] : memref<2x8x2xf32, #tpu.memory_space<vmem>>, vector<2x8x1xf32>
    %cst = arith.constant dense<0.000000e+00> : vector<2x1xf32>
    %7 = vector.multi_reduction <add>, %6, %cst [1] : vector<2x8x1xf32> to vector<2x1xf32>
    %c0_5 = arith.constant 0 : index
    %c0_6 = arith.constant 0 : index
    %c0_7 = arith.constant 0 : index
    %8 = vector.load %arg2[%c0_5, %c0_6, %c0_7] : memref<2x1x8xf32, #tpu.memory_space<vmem>>, vector<2x1x8xf32>
    %9 = vector.shape_cast %8 : vector<2x1x8xf32> to vector<2x1x8xf32>
    %10 = vector.broadcast %9 : vector<2x1x8xf32> to vector<2x8x8xf32>
    %c0_8 = arith.constant 0 : index
    %c0_9 = arith.constant 0 : index
    %11 = vector.load %arg7[%c0_8, %c0_9] : memref<64x256xf32, #tpu.memory_space<vmem>>, vector<64x256xf32>
    %cst_10 = arith.constant dense<0.000000e+00> : vector<16x256xf32>
    %12 = tpu.matmul %5, %11, %cst_10 {dimension_numbers = #tpu.dot_dimension_numbers<[1], [0], [0], [1], [0, 0, 1, 1], [], []>} : vector<16x64xf32>, vector<64x256xf32>, vector<16x256xf32> -> vector<16x256xf32>
    %c0_11 = arith.constant 0 : index
    %c0_12 = arith.constant 0 : index
    %13 = vector.load %arg9[%c0_11, %c0_12] : memref<1x256xf32, #tpu.memory_space<vmem>>, vector<1x256xf32>
    %14 = vector.broadcast %13 : vector<1x256xf32> to vector<16x256xf32>
    %15 = arith.addf %12, %14 : vector<16x256xf32>
    %16 = vector.shape_cast %15 : vector<16x256xf32> to vector<2x8x256xf32>
    %c0_13 = arith.constant 0 : index
    %c0_14 = arith.constant 0 : index
    %17 = vector.load %arg8[%c0_13, %c0_14] : memref<64x256xf32, #tpu.memory_space<vmem>>, vector<64x256xf32>
    %cst_15 = arith.constant 0.000000e+00 : f32
    %18 = vector.broadcast %cst_15 : f32 to vector<2x64xf32>
    %cst_16 = arith.constant 0.000000e+00 : f32
    %19 = vector.broadcast %cst_16 : f32 to vector<2x64xf32>
    %cst_17 = arith.constant 0.000000e+00 : f32
    %20 = vector.broadcast %cst_17 : f32 to vector<2x64xf32>
    %21 = vector.extract_strided_slice %16 {offsets = [0, 0, 0], sizes = [2, 1, 256], strides = [1, 1, 1]} : vector<2x8x256xf32> to vector<2x1x256xf32>
    %22 = vector.shape_cast %21 : vector<2x1x256xf32> to vector<2x256xf32>
    %cst_18 = arith.constant dense<0.000000e+00> : vector<2x256xf32>
    %23 = tpu.matmul %18, %17, %cst_18 {dimension_numbers = #tpu.dot_dimension_numbers<[1], [0], [0], [1], [0, 0, 1, 1], [], []>} : vector<2x64xf32>, vector<64x256xf32>, vector<2x256xf32> -> vector<2x256xf32>
    %24 = arith.addf %22, %23 : vector<2x256xf32>
    %25 = arith.negf %24 : vector<2x256xf32>
    %26 = math.exp %25 : vector<2x256xf32>
    %cst_19 = arith.constant 1.000000e+00 : f32
    %27 = vector.broadcast %cst_19 : f32 to vector<2x256xf32>
    %28 = arith.addf %27, %26 : vector<2x256xf32>
    %29 = arith.divf %27, %28 : vector<2x256xf32>
    %30 = math.tanh %24 : vector<2x256xf32>
    %31 = vector.extract_strided_slice %29 {offsets = [0, 64], sizes = [2, 64], strides = [1, 1]} : vector<2x256xf32> to vector<2x64xf32>
    %32 = arith.mulf %31, %19 : vector<2x64xf32>
    %33 = vector.extract_strided_slice %29 {offsets = [0, 0], sizes = [2, 64], strides = [1, 1]} : vector<2x256xf32> to vector<2x64xf32>
    %34 = vector.extract_strided_slice %30 {offsets = [0, 128], sizes = [2, 64], strides = [1, 1]} : vector<2x256xf32> to vector<2x64xf32>
    %35 = arith.mulf %33, %34 : vector<2x64xf32>
    %36 = arith.addf %32, %35 : vector<2x64xf32>
    %37 = vector.extract_strided_slice %29 {offsets = [0, 192], sizes = [2, 64], strides = [1, 1]} : vector<2x256xf32> to vector<2x64xf32>
    %38 = math.tanh %36 : vector<2x64xf32>
    %39 = arith.mulf %37, %38 : vector<2x64xf32>
    %c0_20 = arith.constant 0 : index
    %c0_21 = arith.constant 0 : index
    %c1 = arith.constant 1 : index
    %40 = vector.load %arg3[%c0_20, %c0_21, %c1] : memref<2x8x2xf32, #tpu.memory_space<vmem>>, vector<2x1x1xf32>
    %41 = vector.shape_cast %40 : vector<2x1x1xf32> to vector<2x1xf32>
    %42 = vector.broadcast %41 : vector<2x1xf32> to vector<2x64xf32>
    %43 = arith.mulf %42, %39 : vector<2x64xf32>
    %44 = arith.addf %20, %43 : vector<2x64xf32>
    %45 = vector.extract_strided_slice %16 {offsets = [0, 1, 0], sizes = [2, 1, 256], strides = [1, 1, 1]} : vector<2x8x256xf32> to vector<2x1x256xf32>
    %46 = vector.shape_cast %45 : vector<2x1x256xf32> to vector<2x256xf32>
    %cst_22 = arith.constant dense<0.000000e+00> : vector<2x256xf32>
    %47 = tpu.matmul %39, %17, %cst_22 {dimension_numbers = #tpu.dot_dimension_numbers<[1], [0], [0], [1], [0, 0, 1, 1], [], []>} : vector<2x64xf32>, vector<64x256xf32>, vector<2x256xf32> -> vector<2x256xf32>
    %48 = arith.addf %46, %47 : vector<2x256xf32>
    %49 = arith.negf %48 : vector<2x256xf32>
    %50 = math.exp %49 : vector<2x256xf32>
    %cst_23 = arith.constant 1.000000e+00 : f32
    %51 = vector.broadcast %cst_23 : f32 to vector<2x256xf32>
    %52 = arith.addf %51, %50 : vector<2x256xf32>
    %53 = arith.divf %51, %52 : vector<2x256xf32>
    %54 = math.tanh %48 : vector<2x256xf32>
    %55 = vector.extract_strided_slice %53 {offsets = [0, 64], sizes = [2, 64], strides = [1, 1]} : vector<2x256xf32> to vector<2x64xf32>
    %56 = arith.mulf %55, %36 : vector<2x64xf32>
    %57 = vector.extract_strided_slice %53 {offsets = [0, 0], sizes = [2, 64], strides = [1, 1]} : vector<2x256xf32> to vector<2x64xf32>
    %58 = vector.extract_strided_slice %54 {offsets = [0, 128], sizes = [2, 64], strides = [1, 1]} : vector<2x256xf32> to vector<2x64xf32>
    %59 = arith.mulf %57, %58 : vector<2x64xf32>
    %60 = arith.addf %56, %59 : vector<2x64xf32>
    %61 = vector.extract_strided_slice %53 {offsets = [0, 192], sizes = [2, 64], strides = [1, 1]} : vector<2x256xf32> to vector<2x64xf32>
    %62 = math.tanh %60 : vector<2x64xf32>
    %63 = arith.mulf %61, %62 : vector<2x64xf32>
    %c0_24 = arith.constant 0 : index
    %c1_25 = arith.constant 1 : index
    %c1_26 = arith.constant 1 : index
    %64 = vector.load %arg3[%c0_24, %c1_25, %c1_26] : memref<2x8x2xf32, #tpu.memory_space<vmem>>, vector<2x1x1xf32>
    %65 = vector.shape_cast %64 : vector<2x1x1xf32> to vector<2x1xf32>
    %66 = vector.broadcast %65 : vector<2x1xf32> to vector<2x64xf32>
    %67 = arith.mulf %66, %63 : vector<2x64xf32>
    %68 = arith.addf %44, %67 : vector<2x64xf32>
    %69 = vector.extract_strided_slice %16 {offsets = [0, 2, 0], sizes = [2, 1, 256], strides = [1, 1, 1]} : vector<2x8x256xf32> to vector<2x1x256xf32>
    %70 = vector.shape_cast %69 : vector<2x1x256xf32> to vector<2x256xf32>
    %cst_27 = arith.constant dense<0.000000e+00> : vector<2x256xf32>
    %71 = tpu.matmul %63, %17, %cst_27 {dimension_numbers = #tpu.dot_dimension_numbers<[1], [0], [0], [1], [0, 0, 1, 1], [], []>} : vector<2x64xf32>, vector<64x256xf32>, vector<2x256xf32> -> vector<2x256xf32>
    %72 = arith.addf %70, %71 : vector<2x256xf32>
    %73 = arith.negf %72 : vector<2x256xf32>
    %74 = math.exp %73 : vector<2x256xf32>
    %cst_28 = arith.constant 1.000000e+00 : f32
    %75 = vector.broadcast %cst_28 : f32 to vector<2x256xf32>
    %76 = arith.addf %75, %74 : vector<2x256xf32>
    %77 = arith.divf %75, %76 : vector<2x256xf32>
    %78 = math.tanh %72 : vector<2x256xf32>
    %79 = vector.extract_strided_slice %77 {offsets = [0, 64], sizes = [2, 64], strides = [1, 1]} : vector<2x256xf32> to vector<2x64xf32>
    %80 = arith.mulf %79, %60 : vector<2x64xf32>
    %81 = vector.extract_strided_slice %77 {offsets = [0, 0], sizes = [2, 64], strides = [1, 1]} : vector<2x256xf32> to vector<2x64xf32>
    %82 = vector.extract_strided_slice %78 {offsets = [0, 128], sizes = [2, 64], strides = [1, 1]} : vector<2x256xf32> to vector<2x64xf32>
    %83 = arith.mulf %81, %82 : vector<2x64xf32>
    %84 = arith.addf %80, %83 : vector<2x64xf32>
    %85 = vector.extract_strided_slice %77 {offsets = [0, 192], sizes = [2, 64], strides = [1, 1]} : vector<2x256xf32> to vector<2x64xf32>
    %86 = math.tanh %84 : vector<2x64xf32>
    %87 = arith.mulf %85, %86 : vector<2x64xf32>
    %c0_29 = arith.constant 0 : index
    %c2 = arith.constant 2 : index
    %c1_30 = arith.constant 1 : index
    %88 = vector.load %arg3[%c0_29, %c2, %c1_30] : memref<2x8x2xf32, #tpu.memory_space<vmem>>, vector<2x1x1xf32>
    %89 = vector.shape_cast %88 : vector<2x1x1xf32> to vector<2x1xf32>
    %90 = vector.broadcast %89 : vector<2x1xf32> to vector<2x64xf32>
    %91 = arith.mulf %90, %87 : vector<2x64xf32>
    %92 = arith.addf %68, %91 : vector<2x64xf32>
    %93 = vector.extract_strided_slice %16 {offsets = [0, 3, 0], sizes = [2, 1, 256], strides = [1, 1, 1]} : vector<2x8x256xf32> to vector<2x1x256xf32>
    %94 = vector.shape_cast %93 : vector<2x1x256xf32> to vector<2x256xf32>
    %cst_31 = arith.constant dense<0.000000e+00> : vector<2x256xf32>
    %95 = tpu.matmul %87, %17, %cst_31 {dimension_numbers = #tpu.dot_dimension_numbers<[1], [0], [0], [1], [0, 0, 1, 1], [], []>} : vector<2x64xf32>, vector<64x256xf32>, vector<2x256xf32> -> vector<2x256xf32>
    %96 = arith.addf %94, %95 : vector<2x256xf32>
    %97 = arith.negf %96 : vector<2x256xf32>
    %98 = math.exp %97 : vector<2x256xf32>
    %cst_32 = arith.constant 1.000000e+00 : f32
    %99 = vector.broadcast %cst_32 : f32 to vector<2x256xf32>
    %100 = arith.addf %99, %98 : vector<2x256xf32>
    %101 = arith.divf %99, %100 : vector<2x256xf32>
    %102 = math.tanh %96 : vector<2x256xf32>
    %103 = vector.extract_strided_slice %101 {offsets = [0, 64], sizes = [2, 64], strides = [1, 1]} : vector<2x256xf32> to vector<2x64xf32>
    %104 = arith.mulf %103, %84 : vector<2x64xf32>
    %105 = vector.extract_strided_slice %101 {offsets = [0, 0], sizes = [2, 64], strides = [1, 1]} : vector<2x256xf32> to vector<2x64xf32>
    %106 = vector.extract_strided_slice %102 {offsets = [0, 128], sizes = [2, 64], strides = [1, 1]} : vector<2x256xf32> to vector<2x64xf32>
    %107 = arith.mulf %105, %106 : vector<2x64xf32>
    %108 = arith.addf %104, %107 : vector<2x64xf32>
    %109 = vector.extract_strided_slice %101 {offsets = [0, 192], sizes = [2, 64], strides = [1, 1]} : vector<2x256xf32> to vector<2x64xf32>
    %110 = math.tanh %108 : vector<2x64xf32>
    %111 = arith.mulf %109, %110 : vector<2x64xf32>
    %c0_33 = arith.constant 0 : index
    %c3 = arith.constant 3 : index
    %c1_34 = arith.constant 1 : index
    %112 = vector.load %arg3[%c0_33, %c3, %c1_34] : memref<2x8x2xf32, #tpu.memory_space<vmem>>, vector<2x1x1xf32>
    %113 = vector.shape_cast %112 : vector<2x1x1xf32> to vector<2x1xf32>
    %114 = vector.broadcast %113 : vector<2x1xf32> to vector<2x64xf32>
    %115 = arith.mulf %114, %111 : vector<2x64xf32>
    %116 = arith.addf %92, %115 : vector<2x64xf32>
    %117 = vector.extract_strided_slice %16 {offsets = [0, 4, 0], sizes = [2, 1, 256], strides = [1, 1, 1]} : vector<2x8x256xf32> to vector<2x1x256xf32>
    %118 = vector.shape_cast %117 : vector<2x1x256xf32> to vector<2x256xf32>
    %cst_35 = arith.constant dense<0.000000e+00> : vector<2x256xf32>
    %119 = tpu.matmul %111, %17, %cst_35 {dimension_numbers = #tpu.dot_dimension_numbers<[1], [0], [0], [1], [0, 0, 1, 1], [], []>} : vector<2x64xf32>, vector<64x256xf32>, vector<2x256xf32> -> vector<2x256xf32>
    %120 = arith.addf %118, %119 : vector<2x256xf32>
    %121 = arith.negf %120 : vector<2x256xf32>
    %122 = math.exp %121 : vector<2x256xf32>
    %cst_36 = arith.constant 1.000000e+00 : f32
    %123 = vector.broadcast %cst_36 : f32 to vector<2x256xf32>
    %124 = arith.addf %123, %122 : vector<2x256xf32>
    %125 = arith.divf %123, %124 : vector<2x256xf32>
    %126 = math.tanh %120 : vector<2x256xf32>
    %127 = vector.extract_strided_slice %125 {offsets = [0, 64], sizes = [2, 64], strides = [1, 1]} : vector<2x256xf32> to vector<2x64xf32>
    %128 = arith.mulf %127, %108 : vector<2x64xf32>
    %129 = vector.extract_strided_slice %125 {offsets = [0, 0], sizes = [2, 64], strides = [1, 1]} : vector<2x256xf32> to vector<2x64xf32>
    %130 = vector.extract_strided_slice %126 {offsets = [0, 128], sizes = [2, 64], strides = [1, 1]} : vector<2x256xf32> to vector<2x64xf32>
    %131 = arith.mulf %129, %130 : vector<2x64xf32>
    %132 = arith.addf %128, %131 : vector<2x64xf32>
    %133 = vector.extract_strided_slice %125 {offsets = [0, 192], sizes = [2, 64], strides = [1, 1]} : vector<2x256xf32> to vector<2x64xf32>
    %134 = math.tanh %132 : vector<2x64xf32>
    %135 = arith.mulf %133, %134 : vector<2x64xf32>
    %c0_37 = arith.constant 0 : index
    %c4 = arith.constant 4 : index
    %c1_38 = arith.constant 1 : index
    %136 = vector.load %arg3[%c0_37, %c4, %c1_38] : memref<2x8x2xf32, #tpu.memory_space<vmem>>, vector<2x1x1xf32>
    %137 = vector.shape_cast %136 : vector<2x1x1xf32> to vector<2x1xf32>
    %138 = vector.broadcast %137 : vector<2x1xf32> to vector<2x64xf32>
    %139 = arith.mulf %138, %135 : vector<2x64xf32>
    %140 = arith.addf %116, %139 : vector<2x64xf32>
    %141 = vector.extract_strided_slice %16 {offsets = [0, 5, 0], sizes = [2, 1, 256], strides = [1, 1, 1]} : vector<2x8x256xf32> to vector<2x1x256xf32>
    %142 = vector.shape_cast %141 : vector<2x1x256xf32> to vector<2x256xf32>
    %cst_39 = arith.constant dense<0.000000e+00> : vector<2x256xf32>
    %143 = tpu.matmul %135, %17, %cst_39 {dimension_numbers = #tpu.dot_dimension_numbers<[1], [0], [0], [1], [0, 0, 1, 1], [], []>} : vector<2x64xf32>, vector<64x256xf32>, vector<2x256xf32> -> vector<2x256xf32>
    %144 = arith.addf %142, %143 : vector<2x256xf32>
    %145 = arith.negf %144 : vector<2x256xf32>
    %146 = math.exp %145 : vector<2x256xf32>
    %cst_40 = arith.constant 1.000000e+00 : f32
    %147 = vector.broadcast %cst_40 : f32 to vector<2x256xf32>
    %148 = arith.addf %147, %146 : vector<2x256xf32>
    %149 = arith.divf %147, %148 : vector<2x256xf32>
    %150 = math.tanh %144 : vector<2x256xf32>
    %151 = vector.extract_strided_slice %149 {offsets = [0, 64], sizes = [2, 64], strides = [1, 1]} : vector<2x256xf32> to vector<2x64xf32>
    %152 = arith.mulf %151, %132 : vector<2x64xf32>
    %153 = vector.extract_strided_slice %149 {offsets = [0, 0], sizes = [2, 64], strides = [1, 1]} : vector<2x256xf32> to vector<2x64xf32>
    %154 = vector.extract_strided_slice %150 {offsets = [0, 128], sizes = [2, 64], strides = [1, 1]} : vector<2x256xf32> to vector<2x64xf32>
    %155 = arith.mulf %153, %154 : vector<2x64xf32>
    %156 = arith.addf %152, %155 : vector<2x64xf32>
    %157 = vector.extract_strided_slice %149 {offsets = [0, 192], sizes = [2, 64], strides = [1, 1]} : vector<2x256xf32> to vector<2x64xf32>
    %158 = math.tanh %156 : vector<2x64xf32>
    %159 = arith.mulf %157, %158 : vector<2x64xf32>
    %c0_41 = arith.constant 0 : index
    %c5 = arith.constant 5 : index
    %c1_42 = arith.constant 1 : index
    %160 = vector.load %arg3[%c0_41, %c5, %c1_42] : memref<2x8x2xf32, #tpu.memory_space<vmem>>, vector<2x1x1xf32>
    %161 = vector.shape_cast %160 : vector<2x1x1xf32> to vector<2x1xf32>
    %162 = vector.broadcast %161 : vector<2x1xf32> to vector<2x64xf32>
    %163 = arith.mulf %162, %159 : vector<2x64xf32>
    %164 = arith.addf %140, %163 : vector<2x64xf32>
    %165 = vector.extract_strided_slice %16 {offsets = [0, 6, 0], sizes = [2, 1, 256], strides = [1, 1, 1]} : vector<2x8x256xf32> to vector<2x1x256xf32>
    %166 = vector.shape_cast %165 : vector<2x1x256xf32> to vector<2x256xf32>
    %cst_43 = arith.constant dense<0.000000e+00> : vector<2x256xf32>
    %167 = tpu.matmul %159, %17, %cst_43 {dimension_numbers = #tpu.dot_dimension_numbers<[1], [0], [0], [1], [0, 0, 1, 1], [], []>} : vector<2x64xf32>, vector<64x256xf32>, vector<2x256xf32> -> vector<2x256xf32>
    %168 = arith.addf %166, %167 : vector<2x256xf32>
    %169 = arith.negf %168 : vector<2x256xf32>
    %170 = math.exp %169 : vector<2x256xf32>
    %cst_44 = arith.constant 1.000000e+00 : f32
    %171 = vector.broadcast %cst_44 : f32 to vector<2x256xf32>
    %172 = arith.addf %171, %170 : vector<2x256xf32>
    %173 = arith.divf %171, %172 : vector<2x256xf32>
    %174 = math.tanh %168 : vector<2x256xf32>
    %175 = vector.extract_strided_slice %173 {offsets = [0, 64], sizes = [2, 64], strides = [1, 1]} : vector<2x256xf32> to vector<2x64xf32>
    %176 = arith.mulf %175, %156 : vector<2x64xf32>
    %177 = vector.extract_strided_slice %173 {offsets = [0, 0], sizes = [2, 64], strides = [1, 1]} : vector<2x256xf32> to vector<2x64xf32>
    %178 = vector.extract_strided_slice %174 {offsets = [0, 128], sizes = [2, 64], strides = [1, 1]} : vector<2x256xf32> to vector<2x64xf32>
    %179 = arith.mulf %177, %178 : vector<2x64xf32>
    %180 = arith.addf %176, %179 : vector<2x64xf32>
    %181 = vector.extract_strided_slice %173 {offsets = [0, 192], sizes = [2, 64], strides = [1, 1]} : vector<2x256xf32> to vector<2x64xf32>
    %182 = math.tanh %180 : vector<2x64xf32>
    %183 = arith.mulf %181, %182 : vector<2x64xf32>
    %c0_45 = arith.constant 0 : index
    %c6 = arith.constant 6 : index
    %c1_46 = arith.constant 1 : index
    %184 = vector.load %arg3[%c0_45, %c6, %c1_46] : memref<2x8x2xf32, #tpu.memory_space<vmem>>, vector<2x1x1xf32>
    %185 = vector.shape_cast %184 : vector<2x1x1xf32> to vector<2x1xf32>
    %186 = vector.broadcast %185 : vector<2x1xf32> to vector<2x64xf32>
    %187 = arith.mulf %186, %183 : vector<2x64xf32>
    %188 = arith.addf %164, %187 : vector<2x64xf32>
    %189 = vector.extract_strided_slice %16 {offsets = [0, 7, 0], sizes = [2, 1, 256], strides = [1, 1, 1]} : vector<2x8x256xf32> to vector<2x1x256xf32>
    %190 = vector.shape_cast %189 : vector<2x1x256xf32> to vector<2x256xf32>
    %cst_47 = arith.constant dense<0.000000e+00> : vector<2x256xf32>
    %191 = tpu.matmul %183, %17, %cst_47 {dimension_numbers = #tpu.dot_dimension_numbers<[1], [0], [0], [1], [0, 0, 1, 1], [], []>} : vector<2x64xf32>, vector<64x256xf32>, vector<2x256xf32> -> vector<2x256xf32>
    %192 = arith.addf %190, %191 : vector<2x256xf32>
    %193 = arith.negf %192 : vector<2x256xf32>
    %194 = math.exp %193 : vector<2x256xf32>
    %cst_48 = arith.constant 1.000000e+00 : f32
    %195 = vector.broadcast %cst_48 : f32 to vector<2x256xf32>
    %196 = arith.addf %195, %194 : vector<2x256xf32>
    %197 = arith.divf %195, %196 : vector<2x256xf32>
    %198 = math.tanh %192 : vector<2x256xf32>
    %199 = vector.extract_strided_slice %197 {offsets = [0, 64], sizes = [2, 64], strides = [1, 1]} : vector<2x256xf32> to vector<2x64xf32>
    %200 = arith.mulf %199, %180 : vector<2x64xf32>
    %201 = vector.extract_strided_slice %197 {offsets = [0, 0], sizes = [2, 64], strides = [1, 1]} : vector<2x256xf32> to vector<2x64xf32>
    %202 = vector.extract_strided_slice %198 {offsets = [0, 128], sizes = [2, 64], strides = [1, 1]} : vector<2x256xf32> to vector<2x64xf32>
    %203 = arith.mulf %201, %202 : vector<2x64xf32>
    %204 = arith.addf %200, %203 : vector<2x64xf32>
    %205 = vector.extract_strided_slice %197 {offsets = [0, 192], sizes = [2, 64], strides = [1, 1]} : vector<2x256xf32> to vector<2x64xf32>
    %206 = math.tanh %204 : vector<2x64xf32>
    %207 = arith.mulf %205, %206 : vector<2x64xf32>
    %c0_49 = arith.constant 0 : index
    %c7 = arith.constant 7 : index
    %c1_50 = arith.constant 1 : index
    %208 = vector.load %arg3[%c0_49, %c7, %c1_50] : memref<2x8x2xf32, #tpu.memory_space<vmem>>, vector<2x1x1xf32>
    %209 = vector.shape_cast %208 : vector<2x1x1xf32> to vector<2x1xf32>
    %210 = vector.broadcast %209 : vector<2x1xf32> to vector<2x64xf32>
    %211 = arith.mulf %210, %207 : vector<2x64xf32>
    %212 = arith.addf %188, %211 : vector<2x64xf32>
    %c0_51 = arith.constant 0 : index
    %c0_52 = arith.constant 0 : index
    %213 = vector.load %arg4[%c0_51, %c0_52] : memref<8x128xf32, #tpu.memory_space<vmem>>, vector<8x128xf32>
    %214 = vector.shape_cast %213 : vector<8x128xf32> to vector<1x8x128xf32>
    %c0_53 = arith.constant 0 : index
    %c0_54 = arith.constant 0 : index
    %215 = vector.load %arg5[%c0_53, %c0_54] : memref<8x128xf32, #tpu.memory_space<vmem>>, vector<8x128xf32>
    %216 = vector.shape_cast %215 : vector<8x128xf32> to vector<1x8x128xf32>
    %c0_55 = arith.constant 0 : index
    %c0_56 = arith.constant 0 : index
    %217 = vector.load %arg6[%c0_55, %c0_56] : memref<128x128xf32, #tpu.memory_space<vmem>>, vector<128x128xf32>
    %c0_57 = arith.constant 0 : index
    %c0_58 = arith.constant 0 : index
    %c0_59 = arith.constant 0 : index
    %218 = vector.load %arg10[%c0_57, %c0_58, %c0_59] : memref<5x1x64xf32, #tpu.memory_space<vmem>>, vector<1x1x64xf32>
    %219 = vector.shape_cast %218 : vector<1x1x64xf32> to vector<1x64xf32>
    %220 = arith.mulf %5, %5 : vector<16x64xf32>
    %cst_60 = arith.constant dense<0.000000e+00> : vector<16xf32>
    %221 = vector.multi_reduction <add>, %220, %cst_60 [1] : vector<16x64xf32> to vector<16xf32>
    %222 = vector.shape_cast %221 : vector<16xf32> to vector<16x1xf32>
    %cst_61 = arith.constant 6.400000e+01 : f32
    %223 = vector.broadcast %cst_61 : f32 to vector<16x1xf32>
    %224 = arith.divf %222, %223 : vector<16x1xf32>
    %cst_62 = arith.constant 9.99999974E-6 : f32
    %225 = vector.broadcast %cst_62 : f32 to vector<16x1xf32>
    %226 = arith.addf %224, %225 : vector<16x1xf32>
    %227 = math.rsqrt %226 : vector<16x1xf32>
    %228 = vector.broadcast %227 : vector<16x1xf32> to vector<16x64xf32>
    %229 = arith.mulf %5, %228 : vector<16x64xf32>
    %230 = vector.broadcast %219 : vector<1x64xf32> to vector<16x64xf32>
    %231 = arith.mulf %229, %230 : vector<16x64xf32>
    %232 = arith.truncf %231 : vector<16x64xf32> to vector<16x64xbf16>
    %c0_63 = arith.constant 0 : index
    %c0_64 = arith.constant 0 : index
    %c0_65 = arith.constant 0 : index
    %233 = vector.load %arg11[%c0_63, %c0_64, %c0_65] : memref<2x64x192xbf16, #tpu.memory_space<vmem>>, vector<1x64x192xbf16>
    %234 = vector.shape_cast %233 : vector<1x64x192xbf16> to vector<64x192xbf16>
    %cst_66 = arith.constant dense<0.000000e+00> : vector<16x192xf32>
    %235 = tpu.matmul %232, %234, %cst_66 {dimension_numbers = #tpu.dot_dimension_numbers<[1], [0], [0], [1], [0, 0, 1, 1], [], []>} : vector<16x64xbf16>, vector<64x192xbf16>, vector<16x192xf32> -> vector<16x192xf32>
    %236 = vector.extract_strided_slice %235 {offsets = [0, 0], sizes = [16, 128], strides = [1, 1]} : vector<16x192xf32> to vector<16x128xf32>
    %cst_67 = arith.constant dense<0.000000e+00> : vector<16x128xf32>
    %237 = tpu.matmul %236, %217, %cst_67 {dimension_numbers = #tpu.dot_dimension_numbers<[1], [0], [0], [1], [0, 0, 1, 1], [], []>} : vector<16x128xf32>, vector<128x128xf32>, vector<16x128xf32> -> vector<16x128xf32>
    %238 = vector.shape_cast %236 : vector<16x128xf32> to vector<2x8x128xf32>
    %239 = vector.broadcast %214 : vector<1x8x128xf32> to vector<2x8x128xf32>
    %240 = arith.mulf %238, %239 : vector<2x8x128xf32>
    %241 = vector.shape_cast %237 : vector<16x128xf32> to vector<2x8x128xf32>
    %242 = vector.broadcast %216 : vector<1x8x128xf32> to vector<2x8x128xf32>
    %243 = arith.mulf %241, %242 : vector<2x8x128xf32>
    %244 = arith.addf %240, %243 : vector<2x8x128xf32>
    %245 = vector.extract_strided_slice %244 {offsets = [0, 0, 0], sizes = [2, 8, 64], strides = [1, 1, 1]} : vector<2x8x128xf32> to vector<2x8x64xf32>
    %246 = vector.extract_strided_slice %244 {offsets = [0, 0, 64], sizes = [2, 8, 64], strides = [1, 1, 1]} : vector<2x8x128xf32> to vector<2x8x64xf32>
    %247 = vector.extract_strided_slice %235 {offsets = [0, 128], sizes = [16, 64], strides = [1, 1]} : vector<16x192xf32> to vector<16x64xf32>
    %248 = vector.shape_cast %247 : vector<16x64xf32> to vector<2x8x64xf32>
    %249 = vector.extract_strided_slice %245 {offsets = [0, 0, 0], sizes = [2, 8, 16], strides = [1, 1, 1]} : vector<2x8x64xf32> to vector<2x8x16xf32>
    %250 = vector.extract_strided_slice %246 {offsets = [0, 0, 0], sizes = [2, 8, 16], strides = [1, 1, 1]} : vector<2x8x64xf32> to vector<2x8x16xf32>
    "tpu.trace_start"() <{level = 10 : i32, message = "bqd,bkd->bqk"}> : () -> ()
    %cst_68 = arith.constant dense<0.000000e+00> : vector<2x8x8xf32>
    %251 = tpu.matmul %249, %250, %cst_68 {dimension_numbers = #tpu.dot_dimension_numbers<[2], [2], [1], [1], [0, 0, 0, 1, 1, 1], [0], [0]>} : vector<2x8x16xf32>, vector<2x8x16xf32>, vector<2x8x8xf32> -> vector<2x8x8xf32>
    "tpu.trace_stop"() : () -> ()
    %cst_69 = arith.constant 2.500000e-01 : f32
    %252 = vector.broadcast %cst_69 : f32 to vector<2x8x8xf32>
    %253 = arith.mulf %251, %252 : vector<2x8x8xf32>
    %254 = arith.addf %253, %10 : vector<2x8x8xf32>
    %cst_70 = arith.constant dense<0xFF800000> : vector<2x8xf32>
    %255 = vector.multi_reduction <maximumf>, %254, %cst_70 [2] : vector<2x8x8xf32> to vector<2x8xf32>
    %256 = vector.shape_cast %255 : vector<2x8xf32> to vector<2x8x1xf32>
    %257 = vector.broadcast %256 : vector<2x8x1xf32> to vector<2x8x8xf32>
    %258 = arith.subf %254, %257 : vector<2x8x8xf32>
    %259 = math.exp %258 : vector<2x8x8xf32>
    %cst_71 = arith.constant dense<0.000000e+00> : vector<2x8xf32>
    %260 = vector.multi_reduction <add>, %259, %cst_71 [2] : vector<2x8x8xf32> to vector<2x8xf32>
    %261 = vector.shape_cast %260 : vector<2x8xf32> to vector<2x8x1xf32>
    %262 = vector.broadcast %261 : vector<2x8x1xf32> to vector<2x8x8xf32>
    %263 = arith.divf %259, %262 : vector<2x8x8xf32>
    %264 = vector.extract_strided_slice %248 {offsets = [0, 0, 0], sizes = [2, 8, 16], strides = [1, 1, 1]} : vector<2x8x64xf32> to vector<2x8x16xf32>
    "tpu.trace_start"() <{level = 10 : i32, message = "bqk,bkd->bqd"}> : () -> ()
    %cst_72 = arith.constant dense<0.000000e+00> : vector<2x8x16xf32>
    %265 = tpu.matmul %263, %264, %cst_72 {dimension_numbers = #tpu.dot_dimension_numbers<[2], [1], [1], [2], [0, 0, 0, 1, 1, 2], [0], [0]>} : vector<2x8x8xf32>, vector<2x8x16xf32>, vector<2x8x16xf32> -> vector<2x8x16xf32>
    "tpu.trace_stop"() : () -> ()
    %266 = vector.extract_strided_slice %245 {offsets = [0, 0, 16], sizes = [2, 8, 16], strides = [1, 1, 1]} : vector<2x8x64xf32> to vector<2x8x16xf32>
    %267 = vector.extract_strided_slice %246 {offsets = [0, 0, 16], sizes = [2, 8, 16], strides = [1, 1, 1]} : vector<2x8x64xf32> to vector<2x8x16xf32>
    "tpu.trace_start"() <{level = 10 : i32, message = "bqd,bkd->bqk"}> : () -> ()
    %cst_73 = arith.constant dense<0.000000e+00> : vector<2x8x8xf32>
    %268 = tpu.matmul %266, %267, %cst_73 {dimension_numbers = #tpu.dot_dimension_numbers<[2], [2], [1], [1], [0, 0, 0, 1, 1, 1], [0], [0]>} : vector<2x8x16xf32>, vector<2x8x16xf32>, vector<2x8x8xf32> -> vector<2x8x8xf32>
    "tpu.trace_stop"() : () -> ()
    %cst_74 = arith.constant 2.500000e-01 : f32
    %269 = vector.broadcast %cst_74 : f32 to vector<2x8x8xf32>
    %270 = arith.mulf %268, %269 : vector<2x8x8xf32>
    %271 = arith.addf %270, %10 : vector<2x8x8xf32>
    %cst_75 = arith.constant dense<0xFF800000> : vector<2x8xf32>
    %272 = vector.multi_reduction <maximumf>, %271, %cst_75 [2] : vector<2x8x8xf32> to vector<2x8xf32>
    %273 = vector.shape_cast %272 : vector<2x8xf32> to vector<2x8x1xf32>
    %274 = vector.broadcast %273 : vector<2x8x1xf32> to vector<2x8x8xf32>
    %275 = arith.subf %271, %274 : vector<2x8x8xf32>
    %276 = math.exp %275 : vector<2x8x8xf32>
    %cst_76 = arith.constant dense<0.000000e+00> : vector<2x8xf32>
    %277 = vector.multi_reduction <add>, %276, %cst_76 [2] : vector<2x8x8xf32> to vector<2x8xf32>
    %278 = vector.shape_cast %277 : vector<2x8xf32> to vector<2x8x1xf32>
    %279 = vector.broadcast %278 : vector<2x8x1xf32> to vector<2x8x8xf32>
    %280 = arith.divf %276, %279 : vector<2x8x8xf32>
    %281 = vector.extract_strided_slice %248 {offsets = [0, 0, 16], sizes = [2, 8, 16], strides = [1, 1, 1]} : vector<2x8x64xf32> to vector<2x8x16xf32>
    "tpu.trace_start"() <{level = 10 : i32, message = "bqk,bkd->bqd"}> : () -> ()
    %cst_77 = arith.constant dense<0.000000e+00> : vector<2x8x16xf32>
    %282 = tpu.matmul %280, %281, %cst_77 {dimension_numbers = #tpu.dot_dimension_numbers<[2], [1], [1], [2], [0, 0, 0, 1, 1, 2], [0], [0]>} : vector<2x8x8xf32>, vector<2x8x16xf32>, vector<2x8x16xf32> -> vector<2x8x16xf32>
    "tpu.trace_stop"() : () -> ()
    %283 = vector.extract_strided_slice %245 {offsets = [0, 0, 32], sizes = [2, 8, 16], strides = [1, 1, 1]} : vector<2x8x64xf32> to vector<2x8x16xf32>
    %284 = vector.extract_strided_slice %246 {offsets = [0, 0, 32], sizes = [2, 8, 16], strides = [1, 1, 1]} : vector<2x8x64xf32> to vector<2x8x16xf32>
    "tpu.trace_start"() <{level = 10 : i32, message = "bqd,bkd->bqk"}> : () -> ()
    %cst_78 = arith.constant dense<0.000000e+00> : vector<2x8x8xf32>
    %285 = tpu.matmul %283, %284, %cst_78 {dimension_numbers = #tpu.dot_dimension_numbers<[2], [2], [1], [1], [0, 0, 0, 1, 1, 1], [0], [0]>} : vector<2x8x16xf32>, vector<2x8x16xf32>, vector<2x8x8xf32> -> vector<2x8x8xf32>
    "tpu.trace_stop"() : () -> ()
    %cst_79 = arith.constant 2.500000e-01 : f32
    %286 = vector.broadcast %cst_79 : f32 to vector<2x8x8xf32>
    %287 = arith.mulf %285, %286 : vector<2x8x8xf32>
    %288 = arith.addf %287, %10 : vector<2x8x8xf32>
    %cst_80 = arith.constant dense<0xFF800000> : vector<2x8xf32>
    %289 = vector.multi_reduction <maximumf>, %288, %cst_80 [2] : vector<2x8x8xf32> to vector<2x8xf32>
    %290 = vector.shape_cast %289 : vector<2x8xf32> to vector<2x8x1xf32>
    %291 = vector.broadcast %290 : vector<2x8x1xf32> to vector<2x8x8xf32>
    %292 = arith.subf %288, %291 : vector<2x8x8xf32>
    %293 = math.exp %292 : vector<2x8x8xf32>
    %cst_81 = arith.constant dense<0.000000e+00> : vector<2x8xf32>
    %294 = vector.multi_reduction <add>, %293, %cst_81 [2] : vector<2x8x8xf32> to vector<2x8xf32>
    %295 = vector.shape_cast %294 : vector<2x8xf32> to vector<2x8x1xf32>
    %296 = vector.broadcast %295 : vector<2x8x1xf32> to vector<2x8x8xf32>
    %297 = arith.divf %293, %296 : vector<2x8x8xf32>
    %298 = vector.extract_strided_slice %248 {offsets = [0, 0, 32], sizes = [2, 8, 16], strides = [1, 1, 1]} : vector<2x8x64xf32> to vector<2x8x16xf32>
    "tpu.trace_start"() <{level = 10 : i32, message = "bqk,bkd->bqd"}> : () -> ()
    %cst_82 = arith.constant dense<0.000000e+00> : vector<2x8x16xf32>
    %299 = tpu.matmul %297, %298, %cst_82 {dimension_numbers = #tpu.dot_dimension_numbers<[2], [1], [1], [2], [0, 0, 0, 1, 1, 2], [0], [0]>} : vector<2x8x8xf32>, vector<2x8x16xf32>, vector<2x8x16xf32> -> vector<2x8x16xf32>
    "tpu.trace_stop"() : () -> ()
    %300 = vector.extract_strided_slice %245 {offsets = [0, 0, 48], sizes = [2, 8, 16], strides = [1, 1, 1]} : vector<2x8x64xf32> to vector<2x8x16xf32>
    %301 = vector.extract_strided_slice %246 {offsets = [0, 0, 48], sizes = [2, 8, 16], strides = [1, 1, 1]} : vector<2x8x64xf32> to vector<2x8x16xf32>
    "tpu.trace_start"() <{level = 10 : i32, message = "bqd,bkd->bqk"}> : () -> ()
    %cst_83 = arith.constant dense<0.000000e+00> : vector<2x8x8xf32>
    %302 = tpu.matmul %300, %301, %cst_83 {dimension_numbers = #tpu.dot_dimension_numbers<[2], [2], [1], [1], [0, 0, 0, 1, 1, 1], [0], [0]>} : vector<2x8x16xf32>, vector<2x8x16xf32>, vector<2x8x8xf32> -> vector<2x8x8xf32>
    "tpu.trace_stop"() : () -> ()
    %cst_84 = arith.constant 2.500000e-01 : f32
    %303 = vector.broadcast %cst_84 : f32 to vector<2x8x8xf32>
    %304 = arith.mulf %302, %303 : vector<2x8x8xf32>
    %305 = arith.addf %304, %10 : vector<2x8x8xf32>
    %cst_85 = arith.constant dense<0xFF800000> : vector<2x8xf32>
    %306 = vector.multi_reduction <maximumf>, %305, %cst_85 [2] : vector<2x8x8xf32> to vector<2x8xf32>
    %307 = vector.shape_cast %306 : vector<2x8xf32> to vector<2x8x1xf32>
    %308 = vector.broadcast %307 : vector<2x8x1xf32> to vector<2x8x8xf32>
    %309 = arith.subf %305, %308 : vector<2x8x8xf32>
    %310 = math.exp %309 : vector<2x8x8xf32>
    %cst_86 = arith.constant dense<0.000000e+00> : vector<2x8xf32>
    %311 = vector.multi_reduction <add>, %310, %cst_86 [2] : vector<2x8x8xf32> to vector<2x8xf32>
    %312 = vector.shape_cast %311 : vector<2x8xf32> to vector<2x8x1xf32>
    %313 = vector.broadcast %312 : vector<2x8x1xf32> to vector<2x8x8xf32>
    %314 = arith.divf %310, %313 : vector<2x8x8xf32>
    %315 = vector.extract_strided_slice %248 {offsets = [0, 0, 48], sizes = [2, 8, 16], strides = [1, 1, 1]} : vector<2x8x64xf32> to vector<2x8x16xf32>
    "tpu.trace_start"() <{level = 10 : i32, message = "bqk,bkd->bqd"}> : () -> ()
    %cst_87 = arith.constant dense<0.000000e+00> : vector<2x8x16xf32>
    %316 = tpu.matmul %314, %315, %cst_87 {dimension_numbers = #tpu.dot_dimension_numbers<[2], [1], [1], [2], [0, 0, 0, 1, 1, 2], [0], [0]>} : vector<2x8x8xf32>, vector<2x8x16xf32>, vector<2x8x16xf32> -> vector<2x8x16xf32>
    "tpu.trace_stop"() : () -> ()
    %317 = tpu.concatenate %265, %282, %299, %316 in 2 : vector<2x8x16xf32>, vector<2x8x16xf32>, vector<2x8x16xf32>, vector<2x8x16xf32> -> vector<2x8x64xf32>
    %318 = vector.shape_cast %317 : vector<2x8x64xf32> to vector<16x64xf32>
    %319 = arith.truncf %318 : vector<16x64xf32> to vector<16x64xbf16>
    %c0_88 = arith.constant 0 : index
    %c0_89 = arith.constant 0 : index
    %c0_90 = arith.constant 0 : index
    %320 = vector.load %arg12[%c0_88, %c0_89, %c0_90] : memref<2x64x64xbf16, #tpu.memory_space<vmem>>, vector<1x64x64xbf16>
    %321 = vector.shape_cast %320 : vector<1x64x64xbf16> to vector<64x64xbf16>
    %cst_91 = arith.constant dense<0.000000e+00> : vector<16x64xf32>
    %322 = tpu.matmul %319, %321, %cst_91 {dimension_numbers = #tpu.dot_dimension_numbers<[1], [0], [0], [1], [0, 0, 1, 1], [], []>} : vector<16x64xbf16>, vector<64x64xbf16>, vector<16x64xf32> -> vector<16x64xf32>
    %323 = arith.addf %5, %322 : vector<16x64xf32>
    %c2_92 = arith.constant 2 : index
    %c0_93 = arith.constant 0 : index
    %c0_94 = arith.constant 0 : index
    %324 = vector.load %arg10[%c2_92, %c0_93, %c0_94] : memref<5x1x64xf32, #tpu.memory_space<vmem>>, vector<1x1x64xf32>
    %325 = vector.shape_cast %324 : vector<1x1x64xf32> to vector<1x64xf32>
    %326 = arith.mulf %323, %323 : vector<16x64xf32>
    %cst_95 = arith.constant dense<0.000000e+00> : vector<16xf32>
    %327 = vector.multi_reduction <add>, %326, %cst_95 [1] : vector<16x64xf32> to vector<16xf32>
    %328 = vector.shape_cast %327 : vector<16xf32> to vector<16x1xf32>
    %cst_96 = arith.constant 6.400000e+01 : f32
    %329 = vector.broadcast %cst_96 : f32 to vector<16x1xf32>
    %330 = arith.divf %328, %329 : vector<16x1xf32>
    %cst_97 = arith.constant 9.99999974E-6 : f32
    %331 = vector.broadcast %cst_97 : f32 to vector<16x1xf32>
    %332 = arith.addf %330, %331 : vector<16x1xf32>
    %333 = math.rsqrt %332 : vector<16x1xf32>
    %334 = vector.broadcast %333 : vector<16x1xf32> to vector<16x64xf32>
    %335 = arith.mulf %323, %334 : vector<16x64xf32>
    %336 = vector.broadcast %325 : vector<1x64xf32> to vector<16x64xf32>
    %337 = arith.mulf %335, %336 : vector<16x64xf32>
    %338 = arith.truncf %337 : vector<16x64xf32> to vector<16x64xbf16>
    %c0_98 = arith.constant 0 : index
    %c0_99 = arith.constant 0 : index
    %c0_100 = arith.constant 0 : index
    %339 = vector.load %arg13[%c0_98, %c0_99, %c0_100] : memref<2x64x256xbf16, #tpu.memory_space<vmem>>, vector<1x64x256xbf16>
    %340 = vector.shape_cast %339 : vector<1x64x256xbf16> to vector<64x256xbf16>
    %cst_101 = arith.constant dense<0.000000e+00> : vector<16x256xf32>
    %341 = tpu.matmul %338, %340, %cst_101 {dimension_numbers = #tpu.dot_dimension_numbers<[1], [0], [0], [1], [0, 0, 1, 1], [], []>} : vector<16x64xbf16>, vector<64x256xbf16>, vector<16x256xf32> -> vector<16x256xf32>
    %342 = vector.extract_strided_slice %341 {offsets = [0, 0], sizes = [16, 128], strides = [1, 1]} : vector<16x256xf32> to vector<16x128xf32>
    %343 = vector.extract_strided_slice %341 {offsets = [0, 128], sizes = [16, 128], strides = [1, 1]} : vector<16x256xf32> to vector<16x128xf32>
    %344 = arith.negf %342 : vector<16x128xf32>
    %345 = math.exp %344 : vector<16x128xf32>
    %cst_102 = arith.constant 1.000000e+00 : f32
    %346 = vector.broadcast %cst_102 : f32 to vector<16x128xf32>
    %347 = arith.addf %346, %345 : vector<16x128xf32>
    %348 = arith.divf %346, %347 : vector<16x128xf32>
    %349 = arith.mulf %342, %348 : vector<16x128xf32>
    %350 = arith.mulf %349, %343 : vector<16x128xf32>
    %351 = arith.truncf %350 : vector<16x128xf32> to vector<16x128xbf16>
    %c0_103 = arith.constant 0 : index
    %c0_104 = arith.constant 0 : index
    %c0_105 = arith.constant 0 : index
    %352 = vector.load %arg14[%c0_103, %c0_104, %c0_105] : memref<2x128x64xbf16, #tpu.memory_space<vmem>>, vector<1x128x64xbf16>
    %353 = vector.shape_cast %352 : vector<1x128x64xbf16> to vector<128x64xbf16>
    %cst_106 = arith.constant dense<0.000000e+00> : vector<16x64xf32>
    %354 = tpu.matmul %351, %353, %cst_106 {dimension_numbers = #tpu.dot_dimension_numbers<[1], [0], [0], [1], [0, 0, 1, 1], [], []>} : vector<16x128xbf16>, vector<128x64xbf16>, vector<16x64xf32> -> vector<16x64xf32>
    %355 = arith.addf %323, %354 : vector<16x64xf32>
    %c1_107 = arith.constant 1 : index
    %c0_108 = arith.constant 0 : index
    %c0_109 = arith.constant 0 : index
    %356 = vector.load %arg10[%c1_107, %c0_108, %c0_109] : memref<5x1x64xf32, #tpu.memory_space<vmem>>, vector<1x1x64xf32>
    %357 = vector.shape_cast %356 : vector<1x1x64xf32> to vector<1x64xf32>
    %358 = arith.mulf %355, %355 : vector<16x64xf32>
    %cst_110 = arith.constant dense<0.000000e+00> : vector<16xf32>
    %359 = vector.multi_reduction <add>, %358, %cst_110 [1] : vector<16x64xf32> to vector<16xf32>
    %360 = vector.shape_cast %359 : vector<16xf32> to vector<16x1xf32>
    %cst_111 = arith.constant 6.400000e+01 : f32
    %361 = vector.broadcast %cst_111 : f32 to vector<16x1xf32>
    %362 = arith.divf %360, %361 : vector<16x1xf32>
    %cst_112 = arith.constant 9.99999974E-6 : f32
    %363 = vector.broadcast %cst_112 : f32 to vector<16x1xf32>
    %364 = arith.addf %362, %363 : vector<16x1xf32>
    %365 = math.rsqrt %364 : vector<16x1xf32>
    %366 = vector.broadcast %365 : vector<16x1xf32> to vector<16x64xf32>
    %367 = arith.mulf %355, %366 : vector<16x64xf32>
    %368 = vector.broadcast %357 : vector<1x64xf32> to vector<16x64xf32>
    %369 = arith.mulf %367, %368 : vector<16x64xf32>
    %370 = arith.truncf %369 : vector<16x64xf32> to vector<16x64xbf16>
    %c1_113 = arith.constant 1 : index
    %c0_114 = arith.constant 0 : index
    %c0_115 = arith.constant 0 : index
    %371 = vector.load %arg11[%c1_113, %c0_114, %c0_115] : memref<2x64x192xbf16, #tpu.memory_space<vmem>>, vector<1x64x192xbf16>
    %372 = vector.shape_cast %371 : vector<1x64x192xbf16> to vector<64x192xbf16>
    %cst_116 = arith.constant dense<0.000000e+00> : vector<16x192xf32>
    %373 = tpu.matmul %370, %372, %cst_116 {dimension_numbers = #tpu.dot_dimension_numbers<[1], [0], [0], [1], [0, 0, 1, 1], [], []>} : vector<16x64xbf16>, vector<64x192xbf16>, vector<16x192xf32> -> vector<16x192xf32>
    %374 = vector.extract_strided_slice %373 {offsets = [0, 0], sizes = [16, 128], strides = [1, 1]} : vector<16x192xf32> to vector<16x128xf32>
    %cst_117 = arith.constant dense<0.000000e+00> : vector<16x128xf32>
    %375 = tpu.matmul %374, %217, %cst_117 {dimension_numbers = #tpu.dot_dimension_numbers<[1], [0], [0], [1], [0, 0, 1, 1], [], []>} : vector<16x128xf32>, vector<128x128xf32>, vector<16x128xf32> -> vector<16x128xf32>
    %376 = vector.shape_cast %374 : vector<16x128xf32> to vector<2x8x128xf32>
    %377 = vector.broadcast %214 : vector<1x8x128xf32> to vector<2x8x128xf32>
    %378 = arith.mulf %376, %377 : vector<2x8x128xf32>
    %379 = vector.shape_cast %375 : vector<16x128xf32> to vector<2x8x128xf32>
    %380 = vector.broadcast %216 : vector<1x8x128xf32> to vector<2x8x128xf32>
    %381 = arith.mulf %379, %380 : vector<2x8x128xf32>
    %382 = arith.addf %378, %381 : vector<2x8x128xf32>
    %383 = vector.extract_strided_slice %382 {offsets = [0, 0, 0], sizes = [2, 8, 64], strides = [1, 1, 1]} : vector<2x8x128xf32> to vector<2x8x64xf32>
    %384 = vector.extract_strided_slice %382 {offsets = [0, 0, 64], sizes = [2, 8, 64], strides = [1, 1, 1]} : vector<2x8x128xf32> to vector<2x8x64xf32>
    %385 = vector.extract_strided_slice %373 {offsets = [0, 128], sizes = [16, 64], strides = [1, 1]} : vector<16x192xf32> to vector<16x64xf32>
    %386 = vector.shape_cast %385 : vector<16x64xf32> to vector<2x8x64xf32>
    %387 = vector.extract_strided_slice %383 {offsets = [0, 0, 0], sizes = [2, 8, 16], strides = [1, 1, 1]} : vector<2x8x64xf32> to vector<2x8x16xf32>
    %388 = vector.extract_strided_slice %384 {offsets = [0, 0, 0], sizes = [2, 8, 16], strides = [1, 1, 1]} : vector<2x8x64xf32> to vector<2x8x16xf32>
    "tpu.trace_start"() <{level = 10 : i32, message = "bqd,bkd->bqk"}> : () -> ()
    %cst_118 = arith.constant dense<0.000000e+00> : vector<2x8x8xf32>
    %389 = tpu.matmul %387, %388, %cst_118 {dimension_numbers = #tpu.dot_dimension_numbers<[2], [2], [1], [1], [0, 0, 0, 1, 1, 1], [0], [0]>} : vector<2x8x16xf32>, vector<2x8x16xf32>, vector<2x8x8xf32> -> vector<2x8x8xf32>
    "tpu.trace_stop"() : () -> ()
    %cst_119 = arith.constant 2.500000e-01 : f32
    %390 = vector.broadcast %cst_119 : f32 to vector<2x8x8xf32>
    %391 = arith.mulf %389, %390 : vector<2x8x8xf32>
    %392 = arith.addf %391, %10 : vector<2x8x8xf32>
    %cst_120 = arith.constant dense<0xFF800000> : vector<2x8xf32>
    %393 = vector.multi_reduction <maximumf>, %392, %cst_120 [2] : vector<2x8x8xf32> to vector<2x8xf32>
    %394 = vector.shape_cast %393 : vector<2x8xf32> to vector<2x8x1xf32>
    %395 = vector.broadcast %394 : vector<2x8x1xf32> to vector<2x8x8xf32>
    %396 = arith.subf %392, %395 : vector<2x8x8xf32>
    %397 = math.exp %396 : vector<2x8x8xf32>
    %cst_121 = arith.constant dense<0.000000e+00> : vector<2x8xf32>
    %398 = vector.multi_reduction <add>, %397, %cst_121 [2] : vector<2x8x8xf32> to vector<2x8xf32>
    %399 = vector.shape_cast %398 : vector<2x8xf32> to vector<2x8x1xf32>
    %400 = vector.broadcast %399 : vector<2x8x1xf32> to vector<2x8x8xf32>
    %401 = arith.divf %397, %400 : vector<2x8x8xf32>
    %402 = vector.extract_strided_slice %386 {offsets = [0, 0, 0], sizes = [2, 8, 16], strides = [1, 1, 1]} : vector<2x8x64xf32> to vector<2x8x16xf32>
    "tpu.trace_start"() <{level = 10 : i32, message = "bqk,bkd->bqd"}> : () -> ()
    %cst_122 = arith.constant dense<0.000000e+00> : vector<2x8x16xf32>
    %403 = tpu.matmul %401, %402, %cst_122 {dimension_numbers = #tpu.dot_dimension_numbers<[2], [1], [1], [2], [0, 0, 0, 1, 1, 2], [0], [0]>} : vector<2x8x8xf32>, vector<2x8x16xf32>, vector<2x8x16xf32> -> vector<2x8x16xf32>
    "tpu.trace_stop"() : () -> ()
    %404 = vector.extract_strided_slice %383 {offsets = [0, 0, 16], sizes = [2, 8, 16], strides = [1, 1, 1]} : vector<2x8x64xf32> to vector<2x8x16xf32>
    %405 = vector.extract_strided_slice %384 {offsets = [0, 0, 16], sizes = [2, 8, 16], strides = [1, 1, 1]} : vector<2x8x64xf32> to vector<2x8x16xf32>
    "tpu.trace_start"() <{level = 10 : i32, message = "bqd,bkd->bqk"}> : () -> ()
    %cst_123 = arith.constant dense<0.000000e+00> : vector<2x8x8xf32>
    %406 = tpu.matmul %404, %405, %cst_123 {dimension_numbers = #tpu.dot_dimension_numbers<[2], [2], [1], [1], [0, 0, 0, 1, 1, 1], [0], [0]>} : vector<2x8x16xf32>, vector<2x8x16xf32>, vector<2x8x8xf32> -> vector<2x8x8xf32>
    "tpu.trace_stop"() : () -> ()
    %cst_124 = arith.constant 2.500000e-01 : f32
    %407 = vector.broadcast %cst_124 : f32 to vector<2x8x8xf32>
    %408 = arith.mulf %406, %407 : vector<2x8x8xf32>
    %409 = arith.addf %408, %10 : vector<2x8x8xf32>
    %cst_125 = arith.constant dense<0xFF800000> : vector<2x8xf32>
    %410 = vector.multi_reduction <maximumf>, %409, %cst_125 [2] : vector<2x8x8xf32> to vector<2x8xf32>
    %411 = vector.shape_cast %410 : vector<2x8xf32> to vector<2x8x1xf32>
    %412 = vector.broadcast %411 : vector<2x8x1xf32> to vector<2x8x8xf32>
    %413 = arith.subf %409, %412 : vector<2x8x8xf32>
    %414 = math.exp %413 : vector<2x8x8xf32>
    %cst_126 = arith.constant dense<0.000000e+00> : vector<2x8xf32>
    %415 = vector.multi_reduction <add>, %414, %cst_126 [2] : vector<2x8x8xf32> to vector<2x8xf32>
    %416 = vector.shape_cast %415 : vector<2x8xf32> to vector<2x8x1xf32>
    %417 = vector.broadcast %416 : vector<2x8x1xf32> to vector<2x8x8xf32>
    %418 = arith.divf %414, %417 : vector<2x8x8xf32>
    %419 = vector.extract_strided_slice %386 {offsets = [0, 0, 16], sizes = [2, 8, 16], strides = [1, 1, 1]} : vector<2x8x64xf32> to vector<2x8x16xf32>
    "tpu.trace_start"() <{level = 10 : i32, message = "bqk,bkd->bqd"}> : () -> ()
    %cst_127 = arith.constant dense<0.000000e+00> : vector<2x8x16xf32>
    %420 = tpu.matmul %418, %419, %cst_127 {dimension_numbers = #tpu.dot_dimension_numbers<[2], [1], [1], [2], [0, 0, 0, 1, 1, 2], [0], [0]>} : vector<2x8x8xf32>, vector<2x8x16xf32>, vector<2x8x16xf32> -> vector<2x8x16xf32>
    "tpu.trace_stop"() : () -> ()
    %421 = vector.extract_strided_slice %383 {offsets = [0, 0, 32], sizes = [2, 8, 16], strides = [1, 1, 1]} : vector<2x8x64xf32> to vector<2x8x16xf32>
    %422 = vector.extract_strided_slice %384 {offsets = [0, 0, 32], sizes = [2, 8, 16], strides = [1, 1, 1]} : vector<2x8x64xf32> to vector<2x8x16xf32>
    "tpu.trace_start"() <{level = 10 : i32, message = "bqd,bkd->bqk"}> : () -> ()
    %cst_128 = arith.constant dense<0.000000e+00> : vector<2x8x8xf32>
    %423 = tpu.matmul %421, %422, %cst_128 {dimension_numbers = #tpu.dot_dimension_numbers<[2], [2], [1], [1], [0, 0, 0, 1, 1, 1], [0], [0]>} : vector<2x8x16xf32>, vector<2x8x16xf32>, vector<2x8x8xf32> -> vector<2x8x8xf32>
    "tpu.trace_stop"() : () -> ()
    %cst_129 = arith.constant 2.500000e-01 : f32
    %424 = vector.broadcast %cst_129 : f32 to vector<2x8x8xf32>
    %425 = arith.mulf %423, %424 : vector<2x8x8xf32>
    %426 = arith.addf %425, %10 : vector<2x8x8xf32>
    %cst_130 = arith.constant dense<0xFF800000> : vector<2x8xf32>
    %427 = vector.multi_reduction <maximumf>, %426, %cst_130 [2] : vector<2x8x8xf32> to vector<2x8xf32>
    %428 = vector.shape_cast %427 : vector<2x8xf32> to vector<2x8x1xf32>
    %429 = vector.broadcast %428 : vector<2x8x1xf32> to vector<2x8x8xf32>
    %430 = arith.subf %426, %429 : vector<2x8x8xf32>
    %431 = math.exp %430 : vector<2x8x8xf32>
    %cst_131 = arith.constant dense<0.000000e+00> : vector<2x8xf32>
    %432 = vector.multi_reduction <add>, %431, %cst_131 [2] : vector<2x8x8xf32> to vector<2x8xf32>
    %433 = vector.shape_cast %432 : vector<2x8xf32> to vector<2x8x1xf32>
    %434 = vector.broadcast %433 : vector<2x8x1xf32> to vector<2x8x8xf32>
    %435 = arith.divf %431, %434 : vector<2x8x8xf32>
    %436 = vector.extract_strided_slice %386 {offsets = [0, 0, 32], sizes = [2, 8, 16], strides = [1, 1, 1]} : vector<2x8x64xf32> to vector<2x8x16xf32>
    "tpu.trace_start"() <{level = 10 : i32, message = "bqk,bkd->bqd"}> : () -> ()
    %cst_132 = arith.constant dense<0.000000e+00> : vector<2x8x16xf32>
    %437 = tpu.matmul %435, %436, %cst_132 {dimension_numbers = #tpu.dot_dimension_numbers<[2], [1], [1], [2], [0, 0, 0, 1, 1, 2], [0], [0]>} : vector<2x8x8xf32>, vector<2x8x16xf32>, vector<2x8x16xf32> -> vector<2x8x16xf32>
    "tpu.trace_stop"() : () -> ()
    %438 = vector.extract_strided_slice %383 {offsets = [0, 0, 48], sizes = [2, 8, 16], strides = [1, 1, 1]} : vector<2x8x64xf32> to vector<2x8x16xf32>
    %439 = vector.extract_strided_slice %384 {offsets = [0, 0, 48], sizes = [2, 8, 16], strides = [1, 1, 1]} : vector<2x8x64xf32> to vector<2x8x16xf32>
    "tpu.trace_start"() <{level = 10 : i32, message = "bqd,bkd->bqk"}> : () -> ()
    %cst_133 = arith.constant dense<0.000000e+00> : vector<2x8x8xf32>
    %440 = tpu.matmul %438, %439, %cst_133 {dimension_numbers = #tpu.dot_dimension_numbers<[2], [2], [1], [1], [0, 0, 0, 1, 1, 1], [0], [0]>} : vector<2x8x16xf32>, vector<2x8x16xf32>, vector<2x8x8xf32> -> vector<2x8x8xf32>
    "tpu.trace_stop"() : () -> ()
    %cst_134 = arith.constant 2.500000e-01 : f32
    %441 = vector.broadcast %cst_134 : f32 to vector<2x8x8xf32>
    %442 = arith.mulf %440, %441 : vector<2x8x8xf32>
    %443 = arith.addf %442, %10 : vector<2x8x8xf32>
    %cst_135 = arith.constant dense<0xFF800000> : vector<2x8xf32>
    %444 = vector.multi_reduction <maximumf>, %443, %cst_135 [2] : vector<2x8x8xf32> to vector<2x8xf32>
    %445 = vector.shape_cast %444 : vector<2x8xf32> to vector<2x8x1xf32>
    %446 = vector.broadcast %445 : vector<2x8x1xf32> to vector<2x8x8xf32>
    %447 = arith.subf %443, %446 : vector<2x8x8xf32>
    %448 = math.exp %447 : vector<2x8x8xf32>
    %cst_136 = arith.constant dense<0.000000e+00> : vector<2x8xf32>
    %449 = vector.multi_reduction <add>, %448, %cst_136 [2] : vector<2x8x8xf32> to vector<2x8xf32>
    %450 = vector.shape_cast %449 : vector<2x8xf32> to vector<2x8x1xf32>
    %451 = vector.broadcast %450 : vector<2x8x1xf32> to vector<2x8x8xf32>
    %452 = arith.divf %448, %451 : vector<2x8x8xf32>
    %453 = vector.extract_strided_slice %386 {offsets = [0, 0, 48], sizes = [2, 8, 16], strides = [1, 1, 1]} : vector<2x8x64xf32> to vector<2x8x16xf32>
    "tpu.trace_start"() <{level = 10 : i32, message = "bqk,bkd->bqd"}> : () -> ()
    %cst_137 = arith.constant dense<0.000000e+00> : vector<2x8x16xf32>
    %454 = tpu.matmul %452, %453, %cst_137 {dimension_numbers = #tpu.dot_dimension_numbers<[2], [1], [1], [2], [0, 0, 0, 1, 1, 2], [0], [0]>} : vector<2x8x8xf32>, vector<2x8x16xf32>, vector<2x8x16xf32> -> vector<2x8x16xf32>
    "tpu.trace_stop"() : () -> ()
    %455 = tpu.concatenate %403, %420, %437, %454 in 2 : vector<2x8x16xf32>, vector<2x8x16xf32>, vector<2x8x16xf32>, vector<2x8x16xf32> -> vector<2x8x64xf32>
    %456 = vector.shape_cast %455 : vector<2x8x64xf32> to vector<16x64xf32>
    %457 = arith.truncf %456 : vector<16x64xf32> to vector<16x64xbf16>
    %c1_138 = arith.constant 1 : index
    %c0_139 = arith.constant 0 : index
    %c0_140 = arith.constant 0 : index
    %458 = vector.load %arg12[%c1_138, %c0_139, %c0_140] : memref<2x64x64xbf16, #tpu.memory_space<vmem>>, vector<1x64x64xbf16>
    %459 = vector.shape_cast %458 : vector<1x64x64xbf16> to vector<64x64xbf16>
    %cst_141 = arith.constant dense<0.000000e+00> : vector<16x64xf32>
    %460 = tpu.matmul %457, %459, %cst_141 {dimension_numbers = #tpu.dot_dimension_numbers<[1], [0], [0], [1], [0, 0, 1, 1], [], []>} : vector<16x64xbf16>, vector<64x64xbf16>, vector<16x64xf32> -> vector<16x64xf32>
    %461 = arith.addf %355, %460 : vector<16x64xf32>
    %c3_142 = arith.constant 3 : index
    %c0_143 = arith.constant 0 : index
    %c0_144 = arith.constant 0 : index
    %462 = vector.load %arg10[%c3_142, %c0_143, %c0_144] : memref<5x1x64xf32, #tpu.memory_space<vmem>>, vector<1x1x64xf32>
    %463 = vector.shape_cast %462 : vector<1x1x64xf32> to vector<1x64xf32>
    %464 = arith.mulf %461, %461 : vector<16x64xf32>
    %cst_145 = arith.constant dense<0.000000e+00> : vector<16xf32>
    %465 = vector.multi_reduction <add>, %464, %cst_145 [1] : vector<16x64xf32> to vector<16xf32>
    %466 = vector.shape_cast %465 : vector<16xf32> to vector<16x1xf32>
    %cst_146 = arith.constant 6.400000e+01 : f32
    %467 = vector.broadcast %cst_146 : f32 to vector<16x1xf32>
    %468 = arith.divf %466, %467 : vector<16x1xf32>
    %cst_147 = arith.constant 9.99999974E-6 : f32
    %469 = vector.broadcast %cst_147 : f32 to vector<16x1xf32>
    %470 = arith.addf %468, %469 : vector<16x1xf32>
    %471 = math.rsqrt %470 : vector<16x1xf32>
    %472 = vector.broadcast %471 : vector<16x1xf32> to vector<16x64xf32>
    %473 = arith.mulf %461, %472 : vector<16x64xf32>
    %474 = vector.broadcast %463 : vector<1x64xf32> to vector<16x64xf32>
    %475 = arith.mulf %473, %474 : vector<16x64xf32>
    %476 = arith.truncf %475 : vector<16x64xf32> to vector<16x64xbf16>
    %c1_148 = arith.constant 1 : index
    %c0_149 = arith.constant 0 : index
    %c0_150 = arith.constant 0 : index
    %477 = vector.load %arg13[%c1_148, %c0_149, %c0_150] : memref<2x64x256xbf16, #tpu.memory_space<vmem>>, vector<1x64x256xbf16>
    %478 = vector.shape_cast %477 : vector<1x64x256xbf16> to vector<64x256xbf16>
    %cst_151 = arith.constant dense<0.000000e+00> : vector<16x256xf32>
    %479 = tpu.matmul %476, %478, %cst_151 {dimension_numbers = #tpu.dot_dimension_numbers<[1], [0], [0], [1], [0, 0, 1, 1], [], []>} : vector<16x64xbf16>, vector<64x256xbf16>, vector<16x256xf32> -> vector<16x256xf32>
    %480 = vector.extract_strided_slice %479 {offsets = [0, 0], sizes = [16, 128], strides = [1, 1]} : vector<16x256xf32> to vector<16x128xf32>
    %481 = vector.extract_strided_slice %479 {offsets = [0, 128], sizes = [16, 128], strides = [1, 1]} : vector<16x256xf32> to vector<16x128xf32>
    %482 = arith.negf %480 : vector<16x128xf32>
    %483 = math.exp %482 : vector<16x128xf32>
    %cst_152 = arith.constant 1.000000e+00 : f32
    %484 = vector.broadcast %cst_152 : f32 to vector<16x128xf32>
    %485 = arith.addf %484, %483 : vector<16x128xf32>
    %486 = arith.divf %484, %485 : vector<16x128xf32>
    %487 = arith.mulf %480, %486 : vector<16x128xf32>
    %488 = arith.mulf %487, %481 : vector<16x128xf32>
    %489 = arith.truncf %488 : vector<16x128xf32> to vector<16x128xbf16>
    %c1_153 = arith.constant 1 : index
    %c0_154 = arith.constant 0 : index
    %c0_155 = arith.constant 0 : index
    %490 = vector.load %arg14[%c1_153, %c0_154, %c0_155] : memref<2x128x64xbf16, #tpu.memory_space<vmem>>, vector<1x128x64xbf16>
    %491 = vector.shape_cast %490 : vector<1x128x64xbf16> to vector<128x64xbf16>
    %cst_156 = arith.constant dense<0.000000e+00> : vector<16x64xf32>
    %492 = tpu.matmul %489, %491, %cst_156 {dimension_numbers = #tpu.dot_dimension_numbers<[1], [0], [0], [1], [0, 0, 1, 1], [], []>} : vector<16x128xbf16>, vector<128x64xbf16>, vector<16x64xf32> -> vector<16x64xf32>
    %493 = arith.addf %461, %492 : vector<16x64xf32>
    %c4_157 = arith.constant 4 : index
    %c0_158 = arith.constant 0 : index
    %c0_159 = arith.constant 0 : index
    %494 = vector.load %arg10[%c4_157, %c0_158, %c0_159] : memref<5x1x64xf32, #tpu.memory_space<vmem>>, vector<1x1x64xf32>
    %495 = vector.shape_cast %494 : vector<1x1x64xf32> to vector<1x64xf32>
    %496 = arith.mulf %493, %493 : vector<16x64xf32>
    %cst_160 = arith.constant dense<0.000000e+00> : vector<16xf32>
    %497 = vector.multi_reduction <add>, %496, %cst_160 [1] : vector<16x64xf32> to vector<16xf32>
    %498 = vector.shape_cast %497 : vector<16xf32> to vector<16x1xf32>
    %cst_161 = arith.constant 6.400000e+01 : f32
    %499 = vector.broadcast %cst_161 : f32 to vector<16x1xf32>
    %500 = arith.divf %498, %499 : vector<16x1xf32>
    %cst_162 = arith.constant 9.99999974E-6 : f32
    %501 = vector.broadcast %cst_162 : f32 to vector<16x1xf32>
    %502 = arith.addf %500, %501 : vector<16x1xf32>
    %503 = math.rsqrt %502 : vector<16x1xf32>
    %504 = vector.broadcast %503 : vector<16x1xf32> to vector<16x64xf32>
    %505 = arith.mulf %493, %504 : vector<16x64xf32>
    %506 = vector.broadcast %495 : vector<1x64xf32> to vector<16x64xf32>
    %507 = arith.mulf %505, %506 : vector<16x64xf32>
    %508 = vector.shape_cast %507 : vector<16x64xf32> to vector<2x8x64xf32>
    %509 = vector.broadcast %6 : vector<2x8x1xf32> to vector<2x8x64xf32>
    %510 = arith.mulf %508, %509 : vector<2x8x64xf32>
    %cst_163 = arith.constant dense<0.000000e+00> : vector<2x64xf32>
    %511 = vector.multi_reduction <add>, %510, %cst_163 [1] : vector<2x8x64xf32> to vector<2x64xf32>
    %512 = vector.broadcast %7 : vector<2x1xf32> to vector<2x64xf32>
    %513 = arith.divf %511, %512 : vector<2x64xf32>
    %514 = arith.addf %212, %513 : vector<2x64xf32>
    %c0_i32_164 = arith.constant 0 : i32
    %515 = tpu.memref_slice %arg22[%c0_i32_164] : memref<2x!tpu.dma_semaphore, #tpu.memory_space<semaphore_mem>> -> memref<1x!tpu.dma_semaphore, #tpu.memory_space<semaphore_mem>>
    %516 = tpu.memref_squeeze %515 : memref<1x!tpu.dma_semaphore, #tpu.memory_space<semaphore_mem>> -> memref<!tpu.dma_semaphore, #tpu.memory_space<semaphore_mem>>
    tpu.wait_dma2 semaphore(%516 : memref<!tpu.dma_semaphore, #tpu.memory_space<semaphore_mem>>) src(%arg17 : memref<64x2048xbf16, #tpu.memory_space<any>>) dst(%arg20 : memref<64x2048xbf16, #tpu.memory_space<vmem>>)
    %517 = arith.truncf %514 : vector<2x64xf32> to vector<2x64xbf16>
    %c0_165 = arith.constant 0 : index
    %c0_166 = arith.constant 0 : index
    %518 = vector.load %arg20[%c0_165, %c0_166] : memref<64x2048xbf16, #tpu.memory_space<vmem>>, vector<64x2048xbf16>
    %cst_167 = arith.constant dense<0.000000e+00> : vector<2x2048xf32>
    %519 = tpu.matmul %517, %518, %cst_167 {dimension_numbers = #tpu.dot_dimension_numbers<[1], [0], [0], [1], [0, 0, 1, 1], [], []>} : vector<2x64xbf16>, vector<64x2048xbf16>, vector<2x2048xf32> -> vector<2x2048xf32>
    %c0_168 = arith.constant 0 : index
    %c0_169 = arith.constant 0 : index
    %520 = vector.load %arg15[%c0_168, %c0_169] : memref<1x2048xf32, #tpu.memory_space<vmem>>, vector<1x2048xf32>
    %521 = vector.broadcast %520 : vector<1x2048xf32> to vector<2x2048xf32>
    %522 = arith.addf %519, %521 : vector<2x2048xf32>
    %cst_170 = arith.constant 0.000000e+00 : f32
    %523 = vector.broadcast %cst_170 : f32 to vector<2x2048xf32>
    %524 = arith.maximumf %522, %523 : vector<2x2048xf32>
    %c1_i32_171 = arith.constant 1 : i32
    %525 = tpu.memref_slice %arg22[%c1_i32_171] : memref<2x!tpu.dma_semaphore, #tpu.memory_space<semaphore_mem>> -> memref<1x!tpu.dma_semaphore, #tpu.memory_space<semaphore_mem>>
    %526 = tpu.memref_squeeze %525 : memref<1x!tpu.dma_semaphore, #tpu.memory_space<semaphore_mem>> -> memref<!tpu.dma_semaphore, #tpu.memory_space<semaphore_mem>>
    tpu.wait_dma2 semaphore(%526 : memref<!tpu.dma_semaphore, #tpu.memory_space<semaphore_mem>>) src(%arg18 : memref<2048x64xbf16, #tpu.memory_space<any>>) dst(%arg21 : memref<2048x64xbf16, #tpu.memory_space<vmem>>)
    %527 = arith.truncf %524 : vector<2x2048xf32> to vector<2x2048xbf16>
    %c0_172 = arith.constant 0 : index
    %c0_173 = arith.constant 0 : index
    %528 = vector.load %arg21[%c0_172, %c0_173] : memref<2048x64xbf16, #tpu.memory_space<vmem>>, vector<2048x64xbf16>
    %cst_174 = arith.constant dense<0.000000e+00> : vector<2x64xf32>
    %529 = tpu.matmul %527, %528, %cst_174 {dimension_numbers = #tpu.dot_dimension_numbers<[1], [0], [0], [1], [0, 0, 1, 1], [], []>} : vector<2x2048xbf16>, vector<2048x64xbf16>, vector<2x64xf32> -> vector<2x64xf32>
    %c0_175 = arith.constant 0 : index
    %c0_176 = arith.constant 0 : index
    %530 = vector.load %arg16[%c0_175, %c0_176] : memref<1x64xf32, #tpu.memory_space<vmem>>, vector<1x64xf32>
    %531 = vector.broadcast %530 : vector<1x64xf32> to vector<2x64xf32>
    %532 = arith.addf %529, %531 : vector<2x64xf32>
    %c0_177 = arith.constant 0 : index
    %c0_178 = arith.constant 0 : index
    %533 = vector.load %arg19[%c0_177, %c0_178] : memref<2x64xf32, #tpu.memory_space<vmem>>, vector<2x64xf32>
    tpu.vector_store %arg19[%c0_177, %c0_178], %532 {strides = array<i32>} : memref<2x64xf32, #tpu.memory_space<vmem>>, vector<2x64xf32>,
    return
  }
  func.func @transform_0(%arg0: i32) -> (i32, i32, i32) {
    %c0_i32 = arith.constant 0 : i32
    %c0_i32_0 = arith.constant 0 : i32
    %c0_i32_1 = arith.constant 0 : i32
    return %arg0, %c0_i32, %c0_i32_0 : i32, i32, i32
  }
  func.func @transform_1(%arg0: i32) -> (i32, i32, i32) {
    %c0_i32 = arith.constant 0 : i32
    %c0_i32_0 = arith.constant 0 : i32
    %c0_i32_1 = arith.constant 0 : i32
    return %arg0, %c0_i32, %c0_i32_0 : i32, i32, i32
  }
  func.func @transform_2(%arg0: i32) -> (i32, i32, i32) {
    %c0_i32 = arith.constant 0 : i32
    %c0_i32_0 = arith.constant 0 : i32
    %c0_i32_1 = arith.constant 0 : i32
    return %arg0, %c0_i32, %c0_i32_0 : i32, i32, i32
  }
  func.func @transform_3(%arg0: i32) -> (i32, i32) {
    %c0_i32 = arith.constant 0 : i32
    %c0_i32_0 = arith.constant 0 : i32
    %c0_i32_1 = arith.constant 0 : i32
    return %c0_i32, %c0_i32_0 : i32, i32
  }
  func.func @transform_4(%arg0: i32) -> (i32, i32) {
    %c0_i32 = arith.constant 0 : i32
    %c0_i32_0 = arith.constant 0 : i32
    %c0_i32_1 = arith.constant 0 : i32
    return %c0_i32, %c0_i32_0 : i32, i32
  }
  func.func @transform_5(%arg0: i32) -> (i32, i32) {
    %c0_i32 = arith.constant 0 : i32
    %c0_i32_0 = arith.constant 0 : i32
    %c0_i32_1 = arith.constant 0 : i32
    return %c0_i32, %c0_i32_0 : i32, i32
  }
  func.func @transform_6(%arg0: i32) -> (i32, i32) {
    %c0_i32 = arith.constant 0 : i32
    %c0_i32_0 = arith.constant 0 : i32
    %c0_i32_1 = arith.constant 0 : i32
    return %c0_i32, %c0_i32_0 : i32, i32
  }
  func.func @transform_7(%arg0: i32) -> (i32, i32) {
    %c0_i32 = arith.constant 0 : i32
    %c0_i32_0 = arith.constant 0 : i32
    %c0_i32_1 = arith.constant 0 : i32
    return %c0_i32, %c0_i32_0 : i32, i32
  }
  func.func @transform_8(%arg0: i32) -> (i32, i32) {
    %c0_i32 = arith.constant 0 : i32
    %c0_i32_0 = arith.constant 0 : i32
    %c0_i32_1 = arith.constant 0 : i32
    return %c0_i32, %c0_i32_0 : i32, i32
  }
  func.func @transform_9(%arg0: i32) -> (i32, i32, i32) {
    %c0_i32 = arith.constant 0 : i32
    %c0_i32_0 = arith.constant 0 : i32
    %c0_i32_1 = arith.constant 0 : i32
    %c0_i32_2 = arith.constant 0 : i32
    return %c0_i32, %c0_i32_0, %c0_i32_1 : i32, i32, i32
  }
  func.func @transform_10(%arg0: i32) -> (i32, i32, i32) {
    %c0_i32 = arith.constant 0 : i32
    %c0_i32_0 = arith.constant 0 : i32
    %c0_i32_1 = arith.constant 0 : i32
    %c0_i32_2 = arith.constant 0 : i32
    return %c0_i32, %c0_i32_0, %c0_i32_1 : i32, i32, i32
  }
  func.func @transform_11(%arg0: i32) -> (i32, i32, i32) {
    %c0_i32 = arith.constant 0 : i32
    %c0_i32_0 = arith.constant 0 : i32
    %c0_i32_1 = arith.constant 0 : i32
    %c0_i32_2 = arith.constant 0 : i32
    return %c0_i32, %c0_i32_0, %c0_i32_1 : i32, i32, i32
  }
  func.func @transform_12(%arg0: i32) -> (i32, i32, i32) {
    %c0_i32 = arith.constant 0 : i32
    %c0_i32_0 = arith.constant 0 : i32
    %c0_i32_1 = arith.constant 0 : i32
    %c0_i32_2 = arith.constant 0 : i32
    return %c0_i32, %c0_i32_0, %c0_i32_1 : i32, i32, i32
  }
  func.func @transform_13(%arg0: i32) -> (i32, i32, i32) {
    %c0_i32 = arith.constant 0 : i32
    %c0_i32_0 = arith.constant 0 : i32
    %c0_i32_1 = arith.constant 0 : i32
    %c0_i32_2 = arith.constant 0 : i32
    return %c0_i32, %c0_i32_0, %c0_i32_1 : i32, i32, i32
  }
  func.func @transform_14(%arg0: i32) -> (i32, i32) {
    %c0_i32 = arith.constant 0 : i32
    %c0_i32_0 = arith.constant 0 : i32
    %c0_i32_1 = arith.constant 0 : i32
    return %c0_i32, %c0_i32_0 : i32, i32
  }
  func.func @transform_15(%arg0: i32) -> (i32, i32) {
    %c0_i32 = arith.constant 0 : i32
    %c0_i32_0 = arith.constant 0 : i32
    %c0_i32_1 = arith.constant 0 : i32
    return %c0_i32, %c0_i32_0 : i32, i32
  }
  func.func @transform_18(%arg0: i32) -> (i32, i32) {
    %c0_i32 = arith.constant 0 : i32
    %c0_i32_0 = arith.constant 0 : i32
    return %arg0, %c0_i32 : i32, i32
  }
}

</mosaic_0001>

<llo_original>
// kernel: tile.15
$region0: #{tile.15}
  %s0 = inlined_call_operand.vmem [shape: f32[8,8,16], index: 0, kind: input, shape index: {}]
  %s1 = inlined_call_operand.vmem [shape: f32[8,128], index: 1, kind: output, shape index: {}]
  %v2 = vld [vmem:[%s0] ss:$8 sm:$0xf]
  %v3 = vld [vmem:[%s0] ss:$8 sm:$0xf0]
  %vm4 = vcmask 1047556
  %v5 = vsel %vm4, %v3, %v2
  %vm6 = vcmask 130048
  %7 = vst.msk [vmem:[%s1] sm:$0xff] %vm6, %v5
  %s8 = scalar_lea.vmem %s0, 7
  %v9 = vld [vmem:[%s8] ss:$8 sm:$0xf]
  %s10 = scalar_lea.vmem %s0, 7
  %v11 = vld [vmem:[%s10] ss:$8 sm:$0xf0]
  %vm12 = vcmask 1047556
  %v13 = vsel %vm12, %v11, %v9
  %14 = vrot.lane.b32.xlu0 %v13, 112
  %v15 = vpop.permute.xlu0 %14
  %vm16 = vcmask 1048448
  %17 = vst.msk [vmem:[%s1] sm:$0xff] %vm16, %v15
  %s18 = scalar_lea.vmem %s0, 6
  %v19 = vld [vmem:[%s18] ss:$8 sm:$0xf]
  %s20 = scalar_lea.vmem %s0, 6
  %v21 = vld [vmem:[%s20] ss:$8 sm:$0xf0]
  %vm22 = vcmask 1047556
  %v23 = vsel %vm22, %v21, %v19
  %24 = vrot.lane.b32.xlu0 %v23, 96
  %v25 = vpop.permute.xlu0 %24
  %vm26 = vcmask 917248
  %27 = vst.msk [vmem:[%s1] sm:$0xff] %vm26, %v25
  %s28 = scalar_lea.vmem %s0, 5
  %v29 = vld [vmem:[%s28] ss:$8 sm:$0xf]
  %s30 = scalar_lea.vmem %s0, 5
  %v31 = vld [vmem:[%s30] ss:$8 sm:$0xf0]
  %vm32 = vcmask 1047556
  %v33 = vsel %vm32, %v31, %v29
  %34 = vrot.lane.b32.xlu0 %v33, 80
  %v35 = vpop.permute.xlu0 %34
  %vm36 = vcmask 786048
  %37 = vst.msk [vmem:[%s1] sm:$0xff] %vm36, %v35
  %s38 = scalar_lea.vmem %s0, 4
  %v39 = vld [vmem:[%s38] ss:$8 sm:$0xf]
  %s40 = scalar_lea.vmem %s0, 4
  %v41 = vld [vmem:[%s40] ss:$8 sm:$0xf0]
  %vm42 = vcmask 1047556
  %v43 = vsel %vm42, %v41, %v39
  %44 = vrot.lane.b32.xlu0 %v43, 64
  %v45 = vpop.permute.xlu0 %44
  %vm46 = vcmask 654848
  %47 = vst.msk [vmem:[%s1] sm:$0xff] %vm46, %v45
  %s48 = scalar_lea.vmem %s0, 3
  %v49 = vld [vmem:[%s48] ss:$8 sm:$0xf]
  %s50 = scalar_lea.vmem %s0, 3
  %v51 = vld [vmem:[%s50] ss:$8 sm:$0xf0]
  %vm52 = vcmask 1047556
  %v53 = vsel %vm52, %v51, %v49
  %54 = vrot.lane.b32.xlu0 %v53, 48
  %v55 = vpop.permute.xlu0 %54
  %vm56 = vcmask 523648
  %57 = vst.msk [vmem:[%s1] sm:$0xff] %vm56, %v55
  %s58 = scalar_lea.vmem %s0, 2
  %v59 = vld [vmem:[%s58] ss:$8 sm:$0xf]
  %s60 = scalar_lea.vmem %s0, 2
  %v61 = vld [vmem:[%s60] ss:$8 sm:$0xf0]
  %vm62 = vcmask 1047556
  %v63 = vsel %vm62, %v61, %v59
  %64 = vrot.lane.b32.xlu0 %v63, 32
  %v65 = vpop.permute.xlu0 %64
  %vm66 = vcmask 392448
  %67 = vst.msk [vmem:[%s1] sm:$0xff] %vm66, %v65
  %s68 = scalar_lea.vmem %s0, 1
  %v69 = vld [vmem:[%s68] ss:$8 sm:$0xf]
  %s70 = scalar_lea.vmem %s0, 1
  %v71 = vld [vmem:[%s70] ss:$8 sm:$0xf0]
  %vm72 = vcmask 1047556
  %v73 = vsel %vm72, %v71, %v69
  %74 = vrot.lane.b32.xlu0 %v73, 16
  %v75 = vpop.permute.xlu0 %74
  %vm76 = vcmask 261248
  %77 = vst.msk [vmem:[%s1] sm:$0xff] %vm76, %v75

// kernel: forward.1
$region0: #{forward.1}
  #allocation0 [shape = 'u32[]', space=smem, size = 0x4, offset = 0x4, fixed_abs, tag = 'smem constant byte address 0x4 - core index']
  #allocation1 [shape = 'u32[144,128]{1,0:T(1,128)}', space=vmem, size = 0x12000, scoped, tag = 'internal scratch']
  #allocation2 [shape = 'bf16[64,2048]{1,0:T(16,128)(2,1)}', space=vmem, size = 0x40000, scoped, tag = 'scratch operand']
  #allocation3 [shape = 'bf16[2048,64]{1,0:T(16,128)(2,1)}', space=vmem, size = 0x80000, scoped, tag = 'scratch operand']
  #allocation4 [shape = 's32[2]{0}', space=sflag, size = 0x8, scoped, tag = 'scratch operand']
  #allocation7 [shape = 's32[]', space=sflag, size = 0x4, offset = 0, fixed_abs, tag = 'sflag constant byte address 0x0 - dummy sync flag']
  #allocation8 [shape = 's32[]', space=sflag, size = 0x4, offset = 0, fixed_abs, tag = 'sflag constant byte address 0x0 - dummy sync flag']
  %s0 = inlined_call_operand.vmem [shape: f32[2,8,64], index: 0, kind: input, shape index: {}]
  %s1 = inlined_call_operand.vmem [shape: f32[2,1,8], index: 1, kind: input, shape index: {}]
  %s2 = inlined_call_operand.vmem [shape: f32[2,8,2], index: 2, kind: input, shape index: {}]
  %s3 = inlined_call_operand.vmem [shape: f32[8,128], index: 3, kind: input, shape index: {}]
  %s4 = inlined_call_operand.vmem [shape: f32[8,128], index: 4, kind: input, shape index: {}]
  %s5 = inlined_call_operand.vmem [shape: f32[128,128], index: 5, kind: input, shape index: {}]
  %s6 = inlined_call_operand.vmem [shape: f32[64,256], index: 6, kind: input, shape index: {}]
  %s7 = inlined_call_operand.vmem [shape: f32[64,256], index: 7, kind: input, shape index: {}]
  %s8 = inlined_call_operand.vmem [shape: f32[1,256], index: 8, kind: input, shape index: {}]
  %s9 = inlined_call_operand.vmem [shape: f32[5,1,64], index: 9, kind: input, shape index: {}]
  %s10 = inlined_call_operand.vmem [shape: bf16[2,64,192], index: 10, kind: input, shape index: {}]
  %s11 = inlined_call_operand.vmem [shape: bf16[2,64,64], index: 11, kind: input, shape index: {}]
  %s12 = inlined_call_operand.vmem [shape: bf16[2,64,256], index: 12, kind: input, shape index: {}]
  %s13 = inlined_call_operand.vmem [shape: bf16[2,128,64], index: 13, kind: input, shape index: {}]
  %s14 = inlined_call_operand.vmem [shape: f32[1,2048], index: 14, kind: input, shape index: {}]
  %s15 = inlined_call_operand.vmem [shape: f32[1,64], index: 15, kind: input, shape index: {}]
  %s16 = inlined_call_operand.vmem [shape: bf16[64,2048], index: 16, kind: input, shape index: {}]
  %s17 = inlined_call_operand.vmem [shape: bf16[2048,64], index: 17, kind: input, shape index: {}]
  %s18 = inlined_call_operand.hbm [shape: f32[2,64], index: 18, kind: output, shape index: {}]
  %s19 = sld [smem:[#allocation0]]
  $region145: #{forward.1} parent=0
    _
  %s21 = ssub.s32 1, %s19
  %s22 = scalar_select 0, %s21, %s19
  $region1: #{forward.1} parent=0
    #allocation5 [shape = 'u8[1024]{0}', space=vmem, size = 0x400, scoped, tag = 'output window, operand 0, single buffered']
    #allocation6 [shape = 's32[1]{0}', space=sflag, size = 0x4, scoped, tag = 'scoped memory for forward.1']
    %23 = vsyncpa [#allocation6], 0
    // Predicated region
    $region2: #{forward.1} parent=1 // pred_check
      _
    $region3: #{forward.1} parent=1 // pred_check_branch
      %25 = sbr.rel (0) target = $region5
    $region4: #{forward.1} parent=1 // pred_region
      _
    $region5: #{forward.1} parent=1 // pred_fallthru
      _
    // Predicated region
    $region6: #{forward.1} parent=1 // pred_check
      _
    $region7: #{forward.1} parent=1 // pred_check_branch
      %27 = sbr.rel (0) target = $region9
    $region8: #{forward.1} parent=1 // pred_region
      _
    $region9: #{forward.1} parent=1 // pred_fallthru
      _
    // Predicated region
    $region10: #{forward.1} parent=1 // pred_check
      _
    $region11: #{forward.1} parent=1 // pred_check_branch
      %29 = sbr.rel (0) target = $region13
    $region12: #{forward.1} parent=1 // pred_region
      _
    $region13: #{forward.1} parent=1 // pred_fallthru
      _
    // Predicated region
    $region14: #{forward.1} parent=1 // pred_check
      _
    $region15: #{forward.1} parent=1 // pred_check_branch
      %31 = sbr.rel (0) target = $region17
    $region16: #{forward.1} parent=1 // pred_region
      _
    $region17: #{forward.1} parent=1 // pred_fallthru
      _
    // Predicated region
    $region18: #{forward.1} parent=1 // pred_check
      _
    $region19: #{forward.1} parent=1 // pred_check_branch
      %33 = sbr.rel (0) target = $region21
    $region20: #{forward.1} parent=1 // pred_region
      _
    $region21: #{forward.1} parent=1 // pred_fallthru
      _
    // Predicated region
    $region22: #{forward.1} parent=1 // pred_check
      _
    $region23: #{forward.1} parent=1 // pred_check_branch
      %35 = sbr.rel (0) target = $region25
    $region24: #{forward.1} parent=1 // pred_region
      _
    $region25: #{forward.1} parent=1 // pred_fallthru
      _
    // Predicated region
    $region26: #{forward.1} parent=1 // pred_check
      _
    $region27: #{forward.1} parent=1 // pred_check_branch
      %37 = sbr.rel (0) target = $region29
    $region28: #{forward.1} parent=1 // pred_region
      _
    $region29: #{forward.1} parent=1 // pred_fallthru
      _
    // Predicated region
    $region30: #{forward.1} parent=1 // pred_check
      _
    $region31: #{forward.1} parent=1 // pred_check_branch
      %39 = sbr.rel (0) target = $region33
    $region32: #{forward.1} parent=1 // pred_region
      _
    $region33: #{forward.1} parent=1 // pred_fallthru
      _
    // Predicated region
    $region34: #{forward.1} parent=1 // pred_check
      _
    $region35: #{forward.1} parent=1 // pred_check_branch
      %41 = sbr.rel (0) target = $region37
    $region36: #{forward.1} parent=1 // pred_region
      _
    $region37: #{forward.1} parent=1 // pred_fallthru
      _
    // Predicated region
    $region38: #{forward.1} parent=1 // pred_check
      _
    $region39: #{forward.1} parent=1 // pred_check_branch
      %43 = sbr.rel (0) target = $region41
    $region40: #{forward.1} parent=1 // pred_region
      _
    $region41: #{forward.1} parent=1 // pred_fallthru
      _
    // Predicated region
    $region42: #{forward.1} parent=1 // pred_check
      _
    $region43: #{forward.1} parent=1 // pred_check_branch
      %45 = sbr.rel (0) target = $region45
    $region44: #{forward.1} parent=1 // pred_region
      _
    $region45: #{forward.1} parent=1 // pred_fallthru
      _
    // Predicated region
    $region46: #{forward.1} parent=1 // pred_check
      _
    $region47: #{forward.1} parent=1 // pred_check_branch
      %47 = sbr.rel (0) target = $region49
    $region48: #{forward.1} parent=1 // pred_region
      _
    $region49: #{forward.1} parent=1 // pred_fallthru
      _
    // Predicated region
    $region50: #{forward.1} parent=1 // pred_check
      _
    $region51: #{forward.1} parent=1 // pred_check_branch
      %49 = sbr.rel (0) target = $region53
    $region52: #{forward.1} parent=1 // pred_region
      _
    $region53: #{forward.1} parent=1 // pred_fallthru
      _
    // Predicated region
    $region54: #{forward.1} parent=1 // pred_check
      _
    $region55: #{forward.1} parent=1 // pred_check_branch
      %51 = sbr.rel (0) target = $region57
    $region56: #{forward.1} parent=1 // pred_region
      _
    $region57: #{forward.1} parent=1 // pred_fallthru
      _
    // Predicated region
    $region58: #{forward.1} parent=1 // pred_check
      _
    $region59: #{forward.1} parent=1 // pred_check_branch
      %53 = sbr.rel (0) target = $region61
    $region60: #{forward.1} parent=1 // pred_region
      _
    $region61: #{forward.1} parent=1 // pred_fallthru
      _
    // Predicated region
    $region62: #{forward.1} parent=1 // pred_check
      _
    $region63: #{forward.1} parent=1 // pred_check_branch
      %55 = sbr.rel (0) target = $region65
    $region64: #{forward.1} parent=1 // pred_region
      _
    $region65: #{forward.1} parent=1 // pred_fallthru
      _
    %p58 = scmp.lt.u32.totalorder 4, 8
    %p59 = pneg %p58
    // Predicated region
    $region66: #{forward.1} parent=1 // pred_check
      _
    $region67: #{forward.1} parent=1 // pred_check_branch
      %61 = sbr.rel (%p58) target = $region69
    $region68: #{forward.1} parent=1 // pred_region
      %s330 = sand.u32 4, 7
      %p331 = scmp.eq.s32.totalorder %s330, 0
      %p332 = pneg %p331
      // Predicated region
      $region81: #{forward.1} parent=68 // pred_check
        _
      $region82: #{forward.1} parent=68 // pred_check_branch
        %334 = sbr.rel (%p331) target = $region84
      $region83: #{forward.1} parent=68 // pred_region
        %s335 = sand.u32 4, 7
        %s336 = ssub.s32 4, %s335
        %s337 = scalar_lea.vmem %s16, %s336
        %s338 = ssub.s32 4, %s335
        %s339 = scalar_lea.vmem [#allocation2], %s338
        loop: start=0, step=1, limit=1
        $region85: #{forward.1} parent=83 // loop_pre_header
          _
        $region86: #{forward.1} parent=83 // loop_header
          %s341 = sphi 0, %s345
          %p342 = scmp.ge.s32.totalorder %s341, 1
          %s346 = sphi %s16, %s16
          %s347 = sphi [#allocation2], [#allocation2]
        $region87: #{forward.1} parent=83 // loop_header_branch
          %344 = sbr.rel (%p342) target = $region91
        $region88: #{forward.1} parent=83 // loop_body
          _
        $region89: #{forward.1} parent=83 // loop_footer
          %s345 = sadd.s32 1, %s341
        $region90: #{forward.1} parent=83 // loop_footer_branch
          %340 = sbr.rel target = $region86
        $region91: #{forward.1} parent=83 // loop_exit
          _
        %s348 = sshllo.u32 0, %s335
        loop: start=0, step=1, limit=1
        $region92: #{forward.1} parent=83 // loop_pre_header
          _
        $region93: #{forward.1} parent=83 // loop_header
          %s350 = sphi 0, %s354
          %p351 = scmp.ge.s32.totalorder %s350, 1
          %s355 = sphi %s337, %s337
          %s356 = sphi %s339, %s339
        $region94: #{forward.1} parent=83 // loop_header_branch
          %353 = sbr.rel (%p351) target = $region98
        $region95: #{forward.1} parent=83 // loop_body
          %v357 = vld [vmem:[%s355] sm:%s348]
          %358 = vst [vmem:[%s356] sm:%s348] %v357
          %v359 = vld [vmem:[%s355 + $0x40] sm:%s348]
          %360 = vst [vmem:[%s356 + $0x4] sm:%s348] %v359
          %v361 = vld [vmem:[%s355 + $0x4] sm:%s348]
          %362 = vst [vmem:[%s356 + $0x8] sm:%s348] %v361
          %v363 = vld [vmem:[%s355 + $0x44] sm:%s348]
          %364 = vst [vmem:[%s356 + $0xc] sm:%s348] %v363
          %v365 = vld [vmem:[%s355 + $0x8] sm:%s348]
          %366 = vst [vmem:[%s356 + $0x10] sm:%s348] %v365
          %v367 = vld [vmem:[%s355 + $0x48] sm:%s348]
          %368 = vst [vmem:[%s356 + $0x14] sm:%s348] %v367
          %v369 = vld [vmem:[%s355 + $0xc] sm:%s348]
          %370 = vst [vmem:[%s356 + $0x18] sm:%s348] %v369
          %v371 = vld [vmem:[%s355 + $0x4c] sm:%s348]
          %372 = vst [vmem:[%s356 + $0x1c] sm:%s348] %v371
          %v373 = vld [vmem:[%s355 + $0x10] sm:%s348]
          %374 = vst [vmem:[%s356 + $0x20] sm:%s348] %v373
          %v375 = vld [vmem:[%s355 + $0x50] sm:%s348]
          %376 = vst [vmem:[%s356 + $0x24] sm:%s348] %v375
          %v377 = vld [vmem:[%s355 + $0x14] sm:%s348]
          %378 = vst [vmem:[%s356 + $0x28] sm:%s348] %v377
          %v379 = vld [vmem:[%s355 + $0x54] sm:%s348]
          %380 = vst [vmem:[%s356 + $0x2c] sm:%s348] %v379
          %v381 = vld [vmem:[%s355 + $0x18] sm:%s348]
          %382 = vst [vmem:[%s356 + $0x30] sm:%s348] %v381
          %v383 = vld [vmem:[%s355 + $0x58] sm:%s348]
          %384 = vst [vmem:[%s356 + $0x34] sm:%s348] %v383
          %v385 = vld [vmem:[%s355 + $0x1c] sm:%s348]
          %386 = vst [vmem:[%s356 + $0x38] sm:%s348] %v385
          %v387 = vld [vmem:[%s355 + $0x5c] sm:%s348]
          %388 = vst [vmem:[%s356 + $0x3c] sm:%s348] %v387
          %v389 = vld [vmem:[%s355 + $0x20] sm:%s348]
          %390 = vst [vmem:[%s356 + $0x40] sm:%s348] %v389
          %v391 = vld [vmem:[%s355 + $0x60] sm:%s348]
          %392 = vst [vmem:[%s356 + $0x44] sm:%s348] %v391
          %v393 = vld [vmem:[%s355 + $0x24] sm:%s348]
          %394 = vst [vmem:[%s356 + $0x48] sm:%s348] %v393
          %v395 = vld [vmem:[%s355 + $0x64] sm:%s348]
          %396 = vst [vmem:[%s356 + $0x4c] sm:%s348] %v395
          %v397 = vld [vmem:[%s355 + $0x28] sm:%s348]
          %398 = vst [vmem:[%s356 + $0x50] sm:%s348] %v397
          %v399 = vld [vmem:[%s355 + $0x68] sm:%s348]
          %400 = vst [vmem:[%s356 + $0x54] sm:%s348] %v399
          %v401 = vld [vmem:[%s355 + $0x2c] sm:%s348]
          %402 = vst [vmem:[%s356 + $0x58] sm:%s348] %v401
          %v403 = vld [vmem:[%s355 + $0x6c] sm:%s348]
          %404 = vst [vmem:[%s356 + $0x5c] sm:%s348] %v403
          %v405 = vld [vmem:[%s355 + $0x30] sm:%s348]
          %406 = vst [vmem:[%s356 + $0x60] sm:%s348] %v405
          %v407 = vld [vmem:[%s355 + $0x70] sm:%s348]
          %408 = vst [vmem:[%s356 + $0x64] sm:%s348] %v407
          %v409 = vld [vmem:[%s355 + $0x34] sm:%s348]
          %410 = vst [vmem:[%s356 + $0x68] sm:%s348] %v409
          %v411 = vld [vmem:[%s355 + $0x74] sm:%s348]
          %412 = vst [vmem:[%s356 + $0x6c] sm:%s348] %v411
          %v413 = vld [vmem:[%s355 + $0x38] sm:%s348]
          %414 = vst [vmem:[%s356 + $0x70] sm:%s348] %v413
          %v415 = vld [vmem:[%s355 + $0x78] sm:%s348]
          %416 = vst [vmem:[%s356 + $0x74] sm:%s348] %v415
          %v417 = vld [vmem:[%s355 + $0x3c] sm:%s348]
          %418 = vst [vmem:[%s356 + $0x78] sm:%s348] %v417
          %v419 = vld [vmem:[%s355 + $0x7c] sm:%s348]
          %420 = vst [vmem:[%s356 + $0x7c] sm:%s348] %v419
          %v421 = vld [vmem:[%s355 + $0x80] sm:%s348]
          %422 = vst [vmem:[%s356 + $0x80] sm:%s348] %v421
          %v423 = vld [vmem:[%s355 + $0xc0] sm:%s348]
          %424 = vst [vmem:[%s356 + $0x84] sm:%s348] %v423
          %v425 = vld [vmem:[%s355 + $0x84] sm:%s348]
          %426 = vst [vmem:[%s356 + $0x88] sm:%s348] %v425
          %v427 = vld [vmem:[%s355 + $0xc4] sm:%s348]
          %428 = vst [vmem:[%s356 + $0x8c] sm:%s348] %v427
          %v429 = vld [vmem:[%s355 + $0x88] sm:%s348]
          %430 = vst [vmem:[%s356 + $0x90] sm:%s348] %v429
          %v431 = vld [vmem:[%s355 + $0xc8] sm:%s348]
          %432 = vst [vmem:[%s356 + $0x94] sm:%s348] %v431
          %v433 = vld [vmem:[%s355 + $0x8c] sm:%s348]
          %434 = vst [vmem:[%s356 + $0x98] sm:%s348] %v433
          %v435 = vld [vmem:[%s355 + $0xcc] sm:%s348]
          %436 = vst [vmem:[%s356 + $0x9c] sm:%s348] %v435
          %v437 = vld [vmem:[%s355 + $0x90] sm:%s348]
          %438 = vst [vmem:[%s356 + $0xa0] sm:%s348] %v437
          %v439 = vld [vmem:[%s355 + $0xd0] sm:%s348]
          %440 = vst [vmem:[%s356 + $0xa4] sm:%s348] %v439
          %v441 = vld [vmem:[%s355 + $0x94] sm:%s348]
          %442 = vst [vmem:[%s356 + $0xa8] sm:%s348] %v441
          %v443 = vld [vmem:[%s355 + $0xd4] sm:%s348]
          %444 = vst [vmem:[%s356 + $0xac] sm:%s348] %v443
          %v445 = vld [vmem:[%s355 + $0x98] sm:%s348]
          %446 = vst [vmem:[%s356 + $0xb0] sm:%s348] %v445
          %v447 = vld [vmem:[%s355 + $0xd8] sm:%s348]
          %448 = vst [vmem:[%s356 + $0xb4] sm:%s348] %v447
          %v449 = vld [vmem:[%s355 + $0x9c] sm:%s348]
          %450 = vst [vmem:[%s356 + $0xb8] sm:%s348] %v449
          %v451 = vld [vmem:[%s355 + $0xdc] sm:%s348]
          %452 = vst [vmem:[%s356 + $0xbc] sm:%s348] %v451
          %v453 = vld [vmem:[%s355 + $0xa0] sm:%s348]
          %454 = vst [vmem:[%s356 + $0xc0] sm:%s348] %v453
          %v455 = vld [vmem:[%s355 + $0xe0] sm:%s348]
          %456 = vst [vmem:[%s356 + $0xc4] sm:%s348] %v455
          %v457 = vld [vmem:[%s355 + $0xa4] sm:%s348]
          %458 = vst [vmem:[%s356 + $0xc8] sm:%s348] %v457
          %v459 = vld [vmem:[%s355 + $0xe4] sm:%s348]
          %460 = vst [vmem:[%s356 + $0xcc] sm:%s348] %v459
          %v461 = vld [vmem:[%s355 + $0xa8] sm:%s348]
          %462 = vst [vmem:[%s356 + $0xd0] sm:%s348] %v461
          %v463 = vld [vmem:[%s355 + $0xe8] sm:%s348]
          %464 = vst [vmem:[%s356 + $0xd4] sm:%s348] %v463
          %v465 = vld [vmem:[%s355 + $0xac] sm:%s348]
          %466 = vst [vmem:[%s356 + $0xd8] sm:%s348] %v465
          %v467 = vld [vmem:[%s355 + $0xec] sm:%s348]
          %468 = vst [vmem:[%s356 + $0xdc] sm:%s348] %v467
          %v469 = vld [vmem:[%s355 + $0xb0] sm:%s348]
          %470 = vst [vmem:[%s356 + $0xe0] sm:%s348] %v469
          %v471 = vld [vmem:[%s355 + $0xf0] sm:%s348]
          %472 = vst [vmem:[%s356 + $0xe4] sm:%s348] %v471
          %v473 = vld [vmem:[%s355 + $0xb4] sm:%s348]
          %474 = vst [vmem:[%s356 + $0xe8] sm:%s348] %v473
          %v475 = vld [vmem:[%s355 + $0xf4] sm:%s348]
          %476 = vst [vmem:[%s356 + $0xec] sm:%s348] %v475
          %v477 = vld [vmem:[%s355 + $0xb8] sm:%s348]
          %478 = vst [vmem:[%s356 + $0xf0] sm:%s348] %v477
          %v479 = vld [vmem:[%s355 + $0xf8] sm:%s348]
          %480 = vst [vmem:[%s356 + $0xf4] sm:%s348] %v479
          %v481 = vld [vmem:[%s355 + $0xbc] sm:%s348]
          %482 = vst [vmem:[%s356 + $0xf8] sm:%s348] %v481
          %v483 = vld [vmem:[%s355 + $0xfc] sm:%s348]
          %484 = vst [vmem:[%s356 + $0xfc] sm:%s348] %v483
          %v485 = vld [vmem:[%s355 + $0x100] sm:%s348]
          %486 = vst [vmem:[%s356 + $0x100] sm:%s348] %v485
          %v487 = vld [vmem:[%s355 + $0x140] sm:%s348]
          %488 = vst [vmem:[%s356 + $0x104] sm:%s348] %v487
          %v489 = vld [vmem:[%s355 + $0x104] sm:%s348]
          %490 = vst [vmem:[%s356 + $0x108] sm:%s348] %v489
          %v491 = vld [vmem:[%s355 + $0x144] sm:%s348]
          %492 = vst [vmem:[%s356 + $0x10c] sm:%s348] %v491
          %v493 = vld [vmem:[%s355 + $0x108] sm:%s348]
          %494 = vst [vmem:[%s356 + $0x110] sm:%s348] %v493
          %v495 = vld [vmem:[%s355 + $0x148] sm:%s348]
          %496 = vst [vmem:[%s356 + $0x114] sm:%s348] %v495
          %v497 = vld [vmem:[%s355 + $0x10c] sm:%s348]
          %498 = vst [vmem:[%s356 + $0x118] sm:%s348] %v497
          %v499 = vld [vmem:[%s355 + $0x14c] sm:%s348]
          %500 = vst [vmem:[%s356 + $0x11c] sm:%s348] %v499
          %v501 = vld [vmem:[%s355 + $0x110] sm:%s348]
          %502 = vst [vmem:[%s356 + $0x120] sm:%s348] %v501
          %v503 = vld [vmem:[%s355 + $0x150] sm:%s348]
          %504 = vst [vmem:[%s356 + $0x124] sm:%s348] %v503
          %v505 = vld [vmem:[%s355 + $0x114] sm:%s348]
          %506 = vst [vmem:[%s356 + $0x128] sm:%s348] %v505
          %v507 = vld [vmem:[%s355 + $0x154] sm:%s348]
          %508 = vst [vmem:[%s356 + $0x12c] sm:%s348] %v507
          %v509 = vld [vmem:[%s355 + $0x118] sm:%s348]
          %510 = vst [vmem:[%s356 + $0x130] sm:%s348] %v509
          %v511 = vld [vmem:[%s355 + $0x158] sm:%s348]
          %512 = vst [vmem:[%s356 + $0x134] sm:%s348] %v511
          %v513 = vld [vmem:[%s355 + $0x11c] sm:%s348]
          %514 = vst [vmem:[%s356 + $0x138] sm:%s348] %v513
          %v515 = vld [vmem:[%s355 + $0x15c] sm:%s348]
          %516 = vst [vmem:[%s356 + $0x13c] sm:%s348] %v515
          %v517 = vld [vmem:[%s355 + $0x120] sm:%s348]
          %518 = vst [vmem:[%s356 + $0x140] sm:%s348] %v517
          %v519 = vld [vmem:[%s355 + $0x160] sm:%s348]
          %520 = vst [vmem:[%s356 + $0x144] sm:%s348] %v519
          %v521 = vld [vmem:[%s355 + $0x124] sm:%s348]
          %522 = vst [vmem:[%s356 + $0x148] sm:%s348] %v521
          %v523 = vld [vmem:[%s355 + $0x164] sm:%s348]
          %524 = vst [vmem:[%s356 + $0x14c] sm:%s348] %v523
          %v525 = vld [vmem:[%s355 + $0x128] sm:%s348]
          %526 = vst [vmem:[%s356 + $0x150] sm:%s348] %v525
          %v527 = vld [vmem:[%s355 + $0x168] sm:%s348]
          %528 = vst [vmem:[%s356 + $0x154] sm:%s348] %v527
          %v529 = vld [vmem:[%s355 + $0x12c] sm:%s348]
          %530 = vst [vmem:[%s356 + $0x158] sm:%s348] %v529
          %v531 = vld [vmem:[%s355 + $0x16c] sm:%s348]
          %532 = vst [vmem:[%s356 + $0x15c] sm:%s348] %v531
          %v533 = vld [vmem:[%s355 + $0x130] sm:%s348]
          %534 = vst [vmem:[%s356 + $0x160] sm:%s348] %v533
          %v535 = vld [vmem:[%s355 + $0x170] sm:%s348]
          %536 = vst [vmem:[%s356 + $0x164] sm:%s348] %v535
          %v537 = vld [vmem:[%s355 + $0x134] sm:%s348]
          %538 = vst [vmem:[%s356 + $0x168] sm:%s348] %v537
          %v539 = vld [vmem:[%s355 + $0x174] sm:%s348]
          %540 = vst [vmem:[%s356 + $0x16c] sm:%s348] %v539
          %v541 = vld [vmem:[%s355 + $0x138] sm:%s348]
          %542 = vst [vmem:[%s356 + $0x170] sm:%s348] %v541
          %v543 = vld [vmem:[%s355 + $0x178] sm:%s348]
          %544 = vst [vmem:[%s356 + $0x174] sm:%s348] %v543
          %v545 = vld [vmem:[%s355 + $0x13c] sm:%s348]
          %546 = vst [vmem:[%s356 + $0x178] sm:%s348] %v545
          %v547 = vld [vmem:[%s355 + $0x17c] sm:%s348]
          %548 = vst [vmem:[%s356 + $0x17c] sm:%s348] %v547
          %v549 = vld [vmem:[%s355 + $0x180] sm:%s348]
          %550 = vst [vmem:[%s356 + $0x180] sm:%s348] %v549
          %v551 = vld [vmem:[%s355 + $0x1c0] sm:%s348]
          %552 = vst [vmem:[%s356 + $0x184] sm:%s348] %v551
          %v553 = vld [vmem:[%s355 + $0x184] sm:%s348]
          %554 = vst [vmem:[%s356 + $0x188] sm:%s348] %v553
          %v555 = vld [vmem:[%s355 + $0x1c4] sm:%s348]
          %556 = vst [vmem:[%s356 + $0x18c] sm:%s348] %v555
          %v557 = vld [vmem:[%s355 + $0x188] sm:%s348]
          %558 = vst [vmem:[%s356 + $0x190] sm:%s348] %v557
          %v559 = vld [vmem:[%s355 + $0x1c8] sm:%s348]
          %560 = vst [vmem:[%s356 + $0x194] sm:%s348] %v559
          %v561 = vld [vmem:[%s355 + $0x18c] sm:%s348]
          %562 = vst [vmem:[%s356 + $0x198] sm:%s348] %v561
          %v563 = vld [vmem:[%s355 + $0x1cc] sm:%s348]
          %564 = vst [vmem:[%s356 + $0x19c] sm:%s348] %v563
          %v565 = vld [vmem:[%s355 + $0x190] sm:%s348]
          %566 = vst [vmem:[%s356 + $0x1a0] sm:%s348] %v565
          %v567 = vld [vmem:[%s355 + $0x1d0] sm:%s348]
          %568 = vst [vmem:[%s356 + $0x1a4] sm:%s348] %v567
          %v569 = vld [vmem:[%s355 + $0x194] sm:%s348]
          %570 = vst [vmem:[%s356 + $0x1a8] sm:%s348] %v569
          %v571 = vld [vmem:[%s355 + $0x1d4] sm:%s348]
          %572 = vst [vmem:[%s356 + $0x1ac] sm:%s348] %v571
          %v573 = vld [vmem:[%s355 + $0x198] sm:%s348]
          %574 = vst [vmem:[%s356 + $0x1b0] sm:%s348] %v573
          %v575 = vld [vmem:[%s355 + $0x1d8] sm:%s348]
          %576 = vst [vmem:[%s356 + $0x1b4] sm:%s348] %v575
          %v577 = vld [vmem:[%s355 + $0x19c] sm:%s348]
          %578 = vst [vmem:[%s356 + $0x1b8] sm:%s348] %v577
          %v579 = vld [vmem:[%s355 + $0x1dc] sm:%s348]
          %580 = vst [vmem:[%s356 + $0x1bc] sm:%s348] %v579
          %v581 = vld [vmem:[%s355 + $0x1a0] sm:%s348]
          %582 = vst [vmem:[%s356 + $0x1c0] sm:%s348] %v581
          %v583 = vld [vmem:[%s355 + $0x1e0] sm:%s348]
          %584 = vst [vmem:[%s356 + $0x1c4] sm:%s348] %v583
          %v585 = vld [vmem:[%s355 + $0x1a4] sm:%s348]
          %586 = vst [vmem:[%s356 + $0x1c8] sm:%s348] %v585
          %v587 = vld [vmem:[%s355 + $0x1e4] sm:%s348]
          %588 = vst [vmem:[%s356 + $0x1cc] sm:%s348] %v587
          %v589 = vld [vmem:[%s355 + $0x1a8] sm:%s348]
          %590 = vst [vmem:[%s356 + $0x1d0] sm:%s348] %v589
          %v591 = vld [vmem:[%s355 + $0x1e8] sm:%s348]
          %592 = vst [vmem:[%s356 + $0x1d4] sm:%s348] %v591
          %v593 = vld [vmem:[%s355 + $0x1ac] sm:%s348]
          %594 = vst [vmem:[%s356 + $0x1d8] sm:%s348] %v593
          %v595 = vld [vmem:[%s355 + $0x1ec] sm:%s348]
          %596 = vst [vmem:[%s356 + $0x1dc] sm:%s348] %v595
          %v597 = vld [vmem:[%s355 + $0x1b0] sm:%s348]
          %598 = vst [vmem:[%s356 + $0x1e0] sm:%s348] %v597
          %v599 = vld [vmem:[%s355 + $0x1f0] sm:%s348]
          %600 = vst [vmem:[%s356 + $0x1e4] sm:%s348] %v599
          %v601 = vld [vmem:[%s355 + $0x1b4] sm:%s348]
          %602 = vst [vmem:[%s356 + $0x1e8] sm:%s348] %v601
          %v603 = vld [vmem:[%s355 + $0x1f4] sm:%s348]
          %604 = vst [vmem:[%s356 + $0x1ec] sm:%s348] %v603
          %v605 = vld [vmem:[%s355 + $0x1b8] sm:%s348]
          %606 = vst [vmem:[%s356 + $0x1f0] sm:%s348] %v605
          %v607 = vld [vmem:[%s355 + $0x1f8] sm:%s348]
          %608 = vst [vmem:[%s356 + $0x1f4] sm:%s348] %v607
          %v609 = vld [vmem:[%s355 + $0x1bc] sm:%s348]
          %610 = vst [vmem:[%s356 + $0x1f8] sm:%s348] %v609
          %v611 = vld [vmem:[%s355 + $0x1fc] sm:%s348]
          %612 = vst [vmem:[%s356 + $0x1fc] sm:%s348] %v611
        $region96: #{forward.1} parent=83 // loop_footer
          %s354 = sadd.s32 1, %s350
        $region97: #{forward.1} parent=83 // loop_footer_branch
          %349 = sbr.rel target = $region93
        $region98: #{forward.1} parent=83 // loop_exit
          _
      $region84: #{forward.1} parent=68 // pred_fallthru
        _
    $region69: #{forward.1} parent=1 // pred_fallthru
      _
    // Predicated region
    $region70: #{forward.1} parent=1 // pred_check
      %p62 = pneg %p58
    $region71: #{forward.1} parent=1 // pred_check_branch
      %64 = sbr.rel (%p62) target = $region73
    $region72: #{forward.1} parent=1 // pred_region
      %s65 = sshllo.u32 0, 4
      loop: start=0, step=1, limit=1
      $region74: #{forward.1} parent=72 // loop_pre_header
        _
      $region75: #{forward.1} parent=72 // loop_header
        %s67 = sphi 0, %s71
        %p68 = scmp.ge.s32.totalorder %s67, 1
        %s72 = sphi %s16, %s16
        %s73 = sphi [#allocation2], [#allocation2]
      $region76: #{forward.1} parent=72 // loop_header_branch
        %70 = sbr.rel (%p68) target = $region80
      $region77: #{forward.1} parent=72 // loop_body
        %v74 = vld [vmem:[%s72] sm:%s65]
        %75 = vst [vmem:[%s73] sm:%s65] %v74
        %v76 = vld [vmem:[%s72 + $0x40] sm:%s65]
        %77 = vst [vmem:[%s73 + $0x4] sm:%s65] %v76
        %v78 = vld [vmem:[%s72 + $0x4] sm:%s65]
        %79 = vst [vmem:[%s73 + $0x8] sm:%s65] %v78
        %v80 = vld [vmem:[%s72 + $0x44] sm:%s65]
        %81 = vst [vmem:[%s73 + $0xc] sm:%s65] %v80
        %v82 = vld [vmem:[%s72 + $0x8] sm:%s65]
        %83 = vst [vmem:[%s73 + $0x10] sm:%s65] %v82
        %v84 = vld [vmem:[%s72 + $0x48] sm:%s65]
        %85 = vst [vmem:[%s73 + $0x14] sm:%s65] %v84
        %v86 = vld [vmem:[%s72 + $0xc] sm:%s65]
        %87 = vst [vmem:[%s73 + $0x18] sm:%s65] %v86
        %v88 = vld [vmem:[%s72 + $0x4c] sm:%s65]
        %89 = vst [vmem:[%s73 + $0x1c] sm:%s65] %v88
        %v90 = vld [vmem:[%s72 + $0x10] sm:%s65]
        %91 = vst [vmem:[%s73 + $0x20] sm:%s65] %v90
        %v92 = vld [vmem:[%s72 + $0x50] sm:%s65]
        %93 = vst [vmem:[%s73 + $0x24] sm:%s65] %v92
        %v94 = vld [vmem:[%s72 + $0x14] sm:%s65]
        %95 = vst [vmem:[%s73 + $0x28] sm:%s65] %v94
        %v96 = vld [vmem:[%s72 + $0x54] sm:%s65]
        %97 = vst [vmem:[%s73 + $0x2c] sm:%s65] %v96
        %v98 = vld [vmem:[%s72 + $0x18] sm:%s65]
        %99 = vst [vmem:[%s73 + $0x30] sm:%s65] %v98
        %v100 = vld [vmem:[%s72 + $0x58] sm:%s65]
        %101 = vst [vmem:[%s73 + $0x34] sm:%s65] %v100
        %v102 = vld [vmem:[%s72 + $0x1c] sm:%s65]
        %103 = vst [vmem:[%s73 + $0x38] sm:%s65] %v102
        %v104 = vld [vmem:[%s72 + $0x5c] sm:%s65]
        %105 = vst [vmem:[%s73 + $0x3c] sm:%s65] %v104
        %v106 = vld [vmem:[%s72 + $0x20] sm:%s65]
        %107 = vst [vmem:[%s73 + $0x40] sm:%s65] %v106
        %v108 = vld [vmem:[%s72 + $0x60] sm:%s65]
        %109 = vst [vmem:[%s73 + $0x44] sm:%s65] %v108
        %v110 = vld [vmem:[%s72 + $0x24] sm:%s65]
        %111 = vst [vmem:[%s73 + $0x48] sm:%s65] %v110
        %v112 = vld [vmem:[%s72 + $0x64] sm:%s65]
        %113 = vst [vmem:[%s73 + $0x4c] sm:%s65] %v112
        %v114 = vld [vmem:[%s72 + $0x28] sm:%s65]
        %115 = vst [vmem:[%s73 + $0x50] sm:%s65] %v114
        %v116 = vld [vmem:[%s72 + $0x68] sm:%s65]
        %117 = vst [vmem:[%s73 + $0x54] sm:%s65] %v116
        %v118 = vld [vmem:[%s72 + $0x2c] sm:%s65]
        %119 = vst [vmem:[%s73 + $0x58] sm:%s65] %v118
        %v120 = vld [vmem:[%s72 + $0x6c] sm:%s65]
        %121 = vst [vmem:[%s73 + $0x5c] sm:%s65] %v120
        %v122 = vld [vmem:[%s72 + $0x30] sm:%s65]
        %123 = vst [vmem:[%s73 + $0x60] sm:%s65] %v122
        %v124 = vld [vmem:[%s72 + $0x70] sm:%s65]
        %125 = vst [vmem:[%s73 + $0x64] sm:%s65] %v124
        %v126 = vld [vmem:[%s72 + $0x34] sm:%s65]
        %127 = vst [vmem:[%s73 + $0x68] sm:%s65] %v126
        %v128 = vld [vmem:[%s72 + $0x74] sm:%s65]
        %129 = vst [vmem:[%s73 + $0x6c] sm:%s65] %v128
        %v130 = vld [vmem:[%s72 + $0x38] sm:%s65]
        %131 = vst [vmem:[%s73 + $0x70] sm:%s65] %v130
        %v132 = vld [vmem:[%s72 + $0x78] sm:%s65]
        %133 = vst [vmem:[%s73 + $0x74] sm:%s65] %v132
        %v134 = vld [vmem:[%s72 + $0x3c] sm:%s65]
        %135 = vst [vmem:[%s73 + $0x78] sm:%s65] %v134
        %v136 = vld [vmem:[%s72 + $0x7c] sm:%s65]
        %137 = vst [vmem:[%s73 + $0x7c] sm:%s65] %v136
        %v138 = vld [vmem:[%s72 + $0x80] sm:%s65]
        %139 = vst [vmem:[%s73 + $0x80] sm:%s65] %v138
        %v140 = vld [vmem:[%s72 + $0xc0] sm:%s65]
        %141 = vst [vmem:[%s73 + $0x84] sm:%s65] %v140
        %v142 = vld [vmem:[%s72 + $0x84] sm:%s65]
        %143 = vst [vmem:[%s73 + $0x88] sm:%s65] %v142
        %v144 = vld [vmem:[%s72 + $0xc4] sm:%s65]
        %145 = vst [vmem:[%s73 + $0x8c] sm:%s65] %v144
        %v146 = vld [vmem:[%s72 + $0x88] sm:%s65]
        %147 = vst [vmem:[%s73 + $0x90] sm:%s65] %v146
        %v148 = vld [vmem:[%s72 + $0xc8] sm:%s65]
        %149 = vst [vmem:[%s73 + $0x94] sm:%s65] %v148
        %v150 = vld [vmem:[%s72 + $0x8c] sm:%s65]
        %151 = vst [vmem:[%s73 + $0x98] sm:%s65] %v150
        %v152 = vld [vmem:[%s72 + $0xcc] sm:%s65]
        %153 = vst [vmem:[%s73 + $0x9c] sm:%s65] %v152
        %v154 = vld [vmem:[%s72 + $0x90] sm:%s65]
        %155 = vst [vmem:[%s73 + $0xa0] sm:%s65] %v154
        %v156 = vld [vmem:[%s72 + $0xd0] sm:%s65]
        %157 = vst [vmem:[%s73 + $0xa4] sm:%s65] %v156
        %v158 = vld [vmem:[%s72 + $0x94] sm:%s65]
        %159 = vst [vmem:[%s73 + $0xa8] sm:%s65] %v158
        %v160 = vld [vmem:[%s72 + $0xd4] sm:%s65]
        %161 = vst [vmem:[%s73 + $0xac] sm:%s65] %v160
        %v162 = vld [vmem:[%s72 + $0x98] sm:%s65]
        %163 = vst [vmem:[%s73 + $0xb0] sm:%s65] %v162
        %v164 = vld [vmem:[%s72 + $0xd8] sm:%s65]
        %165 = vst [vmem:[%s73 + $0xb4] sm:%s65] %v164
        %v166 = vld [vmem:[%s72 + $0x9c] sm:%s65]
        %167 = vst [vmem:[%s73 + $0xb8] sm:%s65] %v166
        %v168 = vld [vmem:[%s72 + $0xdc] sm:%s65]
        %169 = vst [vmem:[%s73 + $0xbc] sm:%s65] %v168
        %v170 = vld [vmem:[%s72 + $0xa0] sm:%s65]
        %171 = vst [vmem:[%s73 + $0xc0] sm:%s65] %v170
        %v172 = vld [vmem:[%s72 + $0xe0] sm:%s65]
        %173 = vst [vmem:[%s73 + $0xc4] sm:%s65] %v172
        %v174 = vld [vmem:[%s72 + $0xa4] sm:%s65]
        %175 = vst [vmem:[%s73 + $0xc8] sm:%s65] %v174
        %v176 = vld [vmem:[%s72 + $0xe4] sm:%s65]
        %177 = vst [vmem:[%s73 + $0xcc] sm:%s65] %v176
        %v178 = vld [vmem:[%s72 + $0xa8] sm:%s65]
        %179 = vst [vmem:[%s73 + $0xd0] sm:%s65] %v178
        %v180 = vld [vmem:[%s72 + $0xe8] sm:%s65]
        %181 = vst [vmem:[%s73 + $0xd4] sm:%s65] %v180
        %v182 = vld [vmem:[%s72 + $0xac] sm:%s65]
        %183 = vst [vmem:[%s73 + $0xd8] sm:%s65] %v182
        %v184 = vld [vmem:[%s72 + $0xec] sm:%s65]
        %185 = vst [vmem:[%s73 + $0xdc] sm:%s65] %v184
        %v186 = vld [vmem:[%s72 + $0xb0] sm:%s65]
        %187 = vst [vmem:[%s73 + $0xe0] sm:%s65] %v186
        %v188 = vld [vmem:[%s72 + $0xf0] sm:%s65]
        %189 = vst [vmem:[%s73 + $0xe4] sm:%s65] %v188
        %v190 = vld [vmem:[%s72 + $0xb4] sm:%s65]
        %191 = vst [vmem:[%s73 + $0xe8] sm:%s65] %v190
        %v192 = vld [vmem:[%s72 + $0xf4] sm:%s65]
        %193 = vst [vmem:[%s73 + $0xec] sm:%s65] %v192
        %v194 = vld [vmem:[%s72 + $0xb8] sm:%s65]
        %195 = vst [vmem:[%s73 + $0xf0] sm:%s65] %v194
        %v196 = vld [vmem:[%s72 + $0xf8] sm:%s65]
        %197 = vst [vmem:[%s73 + $0xf4] sm:%s65] %v196
        %v198 = vld [vmem:[%s72 + $0xbc] sm:%s65]
        %199 = vst [vmem:[%s73 + $0xf8] sm:%s65] %v198
        %v200 = vld [vmem:[%s72 + $0xfc] sm:%s65]
        %201 = vst [vmem:[%s73 + $0xfc] sm:%s65] %v200
        %v202 = vld [vmem:[%s72 + $0x100] sm:%s65]
        %203 = vst [vmem:[%s73 + $0x100] sm:%s65] %v202
        %v204 = vld [vmem:[%s72 + $0x140] sm:%s65]
        %205 = vst [vmem:[%s73 + $0x104] sm:%s65] %v204
        %v206 = vld [vmem:[%s72 + $0x104] sm:%s65]
        %207 = vst [vmem:[%s73 + $0x108] sm:%s65] %v206
        %v208 = vld [vmem:[%s72 + $0x144] sm:%s65]
        %209 = vst [vmem:[%s73 + $0x10c] sm:%s65] %v208
        %v210 = vld [vmem:[%s72 + $0x108] sm:%s65]
        %211 = vst [vmem:[%s73 + $0x110] sm:%s65] %v210
        %v212 = vld [vmem:[%s72 + $0x148] sm:%s65]
        %213 = vst [vmem:[%s73 + $0x114] sm:%s65] %v212
        %v214 = vld [vmem:[%s72 + $0x10c] sm:%s65]
        %215 = vst [vmem:[%s73 + $0x118] sm:%s65] %v214
        %v216 = vld [vmem:[%s72 + $0x14c] sm:%s65]
        %217 = vst [vmem:[%s73 + $0x11c] sm:%s65] %v216
        %v218 = vld [vmem:[%s72 + $0x110] sm:%s65]
        %219 = vst [vmem:[%s73 + $0x120] sm:%s65] %v218
        %v220 = vld [vmem:[%s72 + $0x150] sm:%s65]
        %221 = vst [vmem:[%s73 + $0x124] sm:%s65] %v220
        %v222 = vld [vmem:[%s72 + $0x114] sm:%s65]
        %223 = vst [vmem:[%s73 + $0x128] sm:%s65] %v222
        %v224 = vld [vmem:[%s72 + $0x154] sm:%s65]
        %225 = vst [vmem:[%s73 + $0x12c] sm:%s65] %v224
        %v226 = vld [vmem:[%s72 + $0x118] sm:%s65]
        %227 = vst [vmem:[%s73 + $0x130] sm:%s65] %v226
        %v228 = vld [vmem:[%s72 + $0x158] sm:%s65]
        %229 = vst [vmem:[%s73 + $0x134] sm:%s65] %v228
        %v230 = vld [vmem:[%s72 + $0x11c] sm:%s65]
        %231 = vst [vmem:[%s73 + $0x138] sm:%s65] %v230
        %v232 = vld [vmem:[%s72 + $0x15c] sm:%s65]
        %233 = vst [vmem:[%s73 + $0x13c] sm:%s65] %v232
        %v234 = vld [vmem:[%s72 + $0x120] sm:%s65]
        %235 = vst [vmem:[%s73 + $0x140] sm:%s65] %v234
        %v236 = vld [vmem:[%s72 + $0x160] sm:%s65]
        %237 = vst [vmem:[%s73 + $0x144] sm:%s65] %v236
        %v238 = vld [vmem:[%s72 + $0x124] sm:%s65]
        %239 = vst [vmem:[%s73 + $0x148] sm:%s65] %v238
        %v240 = vld [vmem:[%s72 + $0x164] sm:%s65]
        %241 = vst [vmem:[%s73 + $0x14c] sm:%s65] %v240
        %v242 = vld [vmem:[%s72 + $0x128] sm:%s65]
        %243 = vst [vmem:[%s73 + $0x150] sm:%s65] %v242
        %v244 = vld [vmem:[%s72 + $0x168] sm:%s65]
        %245 = vst [vmem:[%s73 + $0x154] sm:%s65] %v244
        %v246 = vld [vmem:[%s72 + $0x12c] sm:%s65]
        %247 = vst [vmem:[%s73 + $0x158] sm:%s65] %v246
        %v248 = vld [vmem:[%s72 + $0x16c] sm:%s65]
        %249 = vst [vmem:[%s73 + $0x15c] sm:%s65] %v248
        %v250 = vld [vmem:[%s72 + $0x130] sm:%s65]
        %251 = vst [vmem:[%s73 + $0x160] sm:%s65] %v250
        %v252 = vld [vmem:[%s72 + $0x170] sm:%s65]
        %253 = vst [vmem:[%s73 + $0x164] sm:%s65] %v252
        %v254 = vld [vmem:[%s72 + $0x134] sm:%s65]
        %255 = vst [vmem:[%s73 + $0x168] sm:%s65] %v254
        %v256 = vld [vmem:[%s72 + $0x174] sm:%s65]
        %257 = vst [vmem:[%s73 + $0x16c] sm:%s65] %v256
        %v258 = vld [vmem:[%s72 + $0x138] sm:%s65]
        %259 = vst [vmem:[%s73 + $0x170] sm:%s65] %v258
        %v260 = vld [vmem:[%s72 + $0x178] sm:%s65]
        %261 = vst [vmem:[%s73 + $0x174] sm:%s65] %v260
        %v262 = vld [vmem:[%s72 + $0x13c] sm:%s65]
        %263 = vst [vmem:[%s73 + $0x178] sm:%s65] %v262
        %v264 = vld [vmem:[%s72 + $0x17c] sm:%s65]
        %265 = vst [vmem:[%s73 + $0x17c] sm:%s65] %v264
        %v266 = vld [vmem:[%s72 + $0x180] sm:%s65]
        %267 = vst [vmem:[%s73 + $0x180] sm:%s65] %v266
        %v268 = vld [vmem:[%s72 + $0x1c0] sm:%s65]
        %269 = vst [vmem:[%s73 + $0x184] sm:%s65] %v268
        %v270 = vld [vmem:[%s72 + $0x184] sm:%s65]
        %271 = vst [vmem:[%s73 + $0x188] sm:%s65] %v270
        %v272 = vld [vmem:[%s72 + $0x1c4] sm:%s65]
        %273 = vst [vmem:[%s73 + $0x18c] sm:%s65] %v272
        %v274 = vld [vmem:[%s72 + $0x188] sm:%s65]
        %275 = vst [vmem:[%s73 + $0x190] sm:%s65] %v274
        %v276 = vld [vmem:[%s72 + $0x1c8] sm:%s65]
        %277 = vst [vmem:[%s73 + $0x194] sm:%s65] %v276
        %v278 = vld [vmem:[%s72 + $0x18c] sm:%s65]
        %279 = vst [vmem:[%s73 + $0x198] sm:%s65] %v278
        %v280 = vld [vmem:[%s72 + $0x1cc] sm:%s65]
        %281 = vst [vmem:[%s73 + $0x19c] sm:%s65] %v280
        %v282 = vld [vmem:[%s72 + $0x190] sm:%s65]
        %283 = vst [vmem:[%s73 + $0x1a0] sm:%s65] %v282
        %v284 = vld [vmem:[%s72 + $0x1d0] sm:%s65]
        %285 = vst [vmem:[%s73 + $0x1a4] sm:%s65] %v284
        %v286 = vld [vmem:[%s72 + $0x194] sm:%s65]
        %287 = vst [vmem:[%s73 + $0x1a8] sm:%s65] %v286
        %v288 = vld [vmem:[%s72 + $0x1d4] sm:%s65]
        %289 = vst [vmem:[%s73 + $0x1ac] sm:%s65] %v288
        %v290 = vld [vmem:[%s72 + $0x198] sm:%s65]
        %291 = vst [vmem:[%s73 + $0x1b0] sm:%s65] %v290
        %v292 = vld [vmem:[%s72 + $0x1d8] sm:%s65]
        %293 = vst [vmem:[%s73 + $0x1b4] sm:%s65] %v292
        %v294 = vld [vmem:[%s72 + $0x19c] sm:%s65]
        %295 = vst [vmem:[%s73 + $0x1b8] sm:%s65] %v294
        %v296 = vld [vmem:[%s72 + $0x1dc] sm:%s65]
        %297 = vst [vmem:[%s73 + $0x1bc] sm:%s65] %v296
        %v298 = vld [vmem:[%s72 + $0x1a0] sm:%s65]
        %299 = vst [vmem:[%s73 + $0x1c0] sm:%s65] %v298
        %v300 = vld [vmem:[%s72 + $0x1e0] sm:%s65]
        %301 = vst [vmem:[%s73 + $0x1c4] sm:%s65] %v300
        %v302 = vld [vmem:[%s72 + $0x1a4] sm:%s65]
        %303 = vst [vmem:[%s73 + $0x1c8] sm:%s65] %v302
        %v304 = vld [vmem:[%s72 + $0x1e4] sm:%s65]
        %305 = vst [vmem:[%s73 + $0x1cc] sm:%s65] %v304
        %v306 = vld [vmem:[%s72 + $0x1a8] sm:%s65]
        %307 = vst [vmem:[%s73 + $0x1d0] sm:%s65] %v306
        %v308 = vld [vmem:[%s72 + $0x1e8] sm:%s65]
        %309 = vst [vmem:[%s73 + $0x1d4] sm:%s65] %v308
        %v310 = vld [vmem:[%s72 + $0x1ac] sm:%s65]
        %311 = vst [vmem:[%s73 + $0x1d8] sm:%s65] %v310
        %v312 = vld [vmem:[%s72 + $0x1ec] sm:%s65]
        %313 = vst [vmem:[%s73 + $0x1dc] sm:%s65] %v312
        %v314 = vld [vmem:[%s72 + $0x1b0] sm:%s65]
        %315 = vst [vmem:[%s73 + $0x1e0] sm:%s65] %v314
        %v316 = vld [vmem:[%s72 + $0x1f0] sm:%s65]
        %317 = vst [vmem:[%s73 + $0x1e4] sm:%s65] %v316
        %v318 = vld [vmem:[%s72 + $0x1b4] sm:%s65]
        %319 = vst [vmem:[%s73 + $0x1e8] sm:%s65] %v318
        %v320 = vld [vmem:[%s72 + $0x1f4] sm:%s65]
        %321 = vst [vmem:[%s73 + $0x1ec] sm:%s65] %v320
        %v322 = vld [vmem:[%s72 + $0x1b8] sm:%s65]
        %323 = vst [vmem:[%s73 + $0x1f0] sm:%s65] %v322
        %v324 = vld [vmem:[%s72 + $0x1f8] sm:%s65]
        %325 = vst [vmem:[%s73 + $0x1f4] sm:%s65] %v324
        %v326 = vld [vmem:[%s72 + $0x1bc] sm:%s65]
        %327 = vst [vmem:[%s73 + $0x1f8] sm:%s65] %v326
        %v328 = vld [vmem:[%s72 + $0x1fc] sm:%s65]
        %329 = vst [vmem:[%s73 + $0x1fc] sm:%s65] %v328
      $region78: #{forward.1} parent=72 // loop_footer
        %s71 = sadd.s32 1, %s67
      $region79: #{forward.1} parent=72 // loop_footer_branch
        %66 = sbr.rel target = $region75
      $region80: #{forward.1} parent=72 // loop_exit
        _
    $region73: #{forward.1} parent=1 // pred_fallthru
      _
    // Predicated region
    $region99: #{forward.1} parent=1 // pred_check
      _
    $region100: #{forward.1} parent=1 // pred_check_branch
      %615 = sbr.rel (0) target = $region102
    $region101: #{forward.1} parent=1 // pred_region
      %616 = vsyncadd [#allocation4], 8192
    $region102: #{forward.1} parent=1 // pred_fallthru
      _
    %s617 = scalar_lea.sflag [#allocation4], 1
    %p619 = scmp.lt.u32.totalorder 1024, 8
    %p620 = pneg %p619
    // Predicated region
    $region103: #{forward.1} parent=1 // pred_check
      _
    $region104: #{forward.1} parent=1 // pred_check_branch
      %622 = sbr.rel (%p619) target = $region106
    $region105: #{forward.1} parent=1 // pred_region
      %s637 = sand.u32 1024, 7
      %p638 = scmp.eq.s32.totalorder %s637, 0
      // Predicated region
      $region118: #{forward.1} parent=105 // pred_check
        %p639 = pneg %p638
      $region119: #{forward.1} parent=105 // pred_check_branch
        %641 = sbr.rel (%p639) target = $region121
      $region120: #{forward.1} parent=105 // pred_region
        loop: start=0, step=1, limit=1
        $region122: #{forward.1} parent=120 // loop_pre_header
          _
        $region123: #{forward.1} parent=120 // loop_header
          %s643 = sphi 0, %s647
          %p644 = scmp.ge.s32.totalorder %s643, 1
          %s648 = sphi %s17, %s17
          %s649 = sphi [#allocation3], [#allocation3]
        $region124: #{forward.1} parent=120 // loop_header_branch
          %646 = sbr.rel (%p644) target = $region128
        $region125: #{forward.1} parent=120 // loop_body
          %v650 = vld [vmem:[%s648] sm:$0xff]
          %651 = vst [vmem:[%s649] sm:$0xff] %v650
          %v652 = vld [vmem:[%s648 + $0x8] sm:$0xff]
          %653 = vst [vmem:[%s649 + $0x8] sm:$0xff] %v652
          %v654 = vld [vmem:[%s648 + $0x10] sm:$0xff]
          %655 = vst [vmem:[%s649 + $0x10] sm:$0xff] %v654
          %v656 = vld [vmem:[%s648 + $0x18] sm:$0xff]
          %657 = vst [vmem:[%s649 + $0x18] sm:$0xff] %v656
          %v658 = vld [vmem:[%s648 + $0x20] sm:$0xff]
          %659 = vst [vmem:[%s649 + $0x20] sm:$0xff] %v658
          %v660 = vld [vmem:[%s648 + $0x28] sm:$0xff]
          %661 = vst [vmem:[%s649 + $0x28] sm:$0xff] %v660
          %v662 = vld [vmem:[%s648 + $0x30] sm:$0xff]
          %663 = vst [vmem:[%s649 + $0x30] sm:$0xff] %v662
          %v664 = vld [vmem:[%s648 + $0x38] sm:$0xff]
          %665 = vst [vmem:[%s649 + $0x38] sm:$0xff] %v664
          %v666 = vld [vmem:[%s648 + $0x40] sm:$0xff]
          %667 = vst [vmem:[%s649 + $0x40] sm:$0xff] %v666
          %v668 = vld [vmem:[%s648 + $0x48] sm:$0xff]
          %669 = vst [vmem:[%s649 + $0x48] sm:$0xff] %v668
          %v670 = vld [vmem:[%s648 + $0x50] sm:$0xff]
          %671 = vst [vmem:[%s649 + $0x50] sm:$0xff] %v670
          %v672 = vld [vmem:[%s648 + $0x58] sm:$0xff]
          %673 = vst [vmem:[%s649 + $0x58] sm:$0xff] %v672
          %v674 = vld [vmem:[%s648 + $0x60] sm:$0xff]
          %675 = vst [vmem:[%s649 + $0x60] sm:$0xff] %v674
          %v676 = vld [vmem:[%s648 + $0x68] sm:$0xff]
          %677 = vst [vmem:[%s649 + $0x68] sm:$0xff] %v676
          %v678 = vld [vmem:[%s648 + $0x70] sm:$0xff]
          %679 = vst [vmem:[%s649 + $0x70] sm:$0xff] %v678
          %v680 = vld [vmem:[%s648 + $0x78] sm:$0xff]
          %681 = vst [vmem:[%s649 + $0x78] sm:$0xff] %v680
          %v682 = vld [vmem:[%s648 + $0x80] sm:$0xff]
          %683 = vst [vmem:[%s649 + $0x80] sm:$0xff] %v682
          %v684 = vld [vmem:[%s648 + $0x88] sm:$0xff]
          %685 = vst [vmem:[%s649 + $0x88] sm:$0xff] %v684
          %v686 = vld [vmem:[%s648 + $0x90] sm:$0xff]
          %687 = vst [vmem:[%s649 + $0x90] sm:$0xff] %v686
          %v688 = vld [vmem:[%s648 + $0x98] sm:$0xff]
          %689 = vst [vmem:[%s649 + $0x98] sm:$0xff] %v688
          %v690 = vld [vmem:[%s648 + $0xa0] sm:$0xff]
          %691 = vst [vmem:[%s649 + $0xa0] sm:$0xff] %v690
          %v692 = vld [vmem:[%s648 + $0xa8] sm:$0xff]
          %693 = vst [vmem:[%s649 + $0xa8] sm:$0xff] %v692
          %v694 = vld [vmem:[%s648 + $0xb0] sm:$0xff]
          %695 = vst [vmem:[%s649 + $0xb0] sm:$0xff] %v694
          %v696 = vld [vmem:[%s648 + $0xb8] sm:$0xff]
          %697 = vst [vmem:[%s649 + $0xb8] sm:$0xff] %v696
          %v698 = vld [vmem:[%s648 + $0xc0] sm:$0xff]
          %699 = vst [vmem:[%s649 + $0xc0] sm:$0xff] %v698
          %v700 = vld [vmem:[%s648 + $0xc8] sm:$0xff]
          %701 = vst [vmem:[%s649 + $0xc8] sm:$0xff] %v700
          %v702 = vld [vmem:[%s648 + $0xd0] sm:$0xff]
          %703 = vst [vmem:[%s649 + $0xd0] sm:$0xff] %v702
          %v704 = vld [vmem:[%s648 + $0xd8] sm:$0xff]
          %705 = vst [vmem:[%s649 + $0xd8] sm:$0xff] %v704
          %v706 = vld [vmem:[%s648 + $0xe0] sm:$0xff]
          %707 = vst [vmem:[%s649 + $0xe0] sm:$0xff] %v706
          %v708 = vld [vmem:[%s648 + $0xe8] sm:$0xff]
          %709 = vst [vmem:[%s649 + $0xe8] sm:$0xff] %v708
          %v710 = vld [vmem:[%s648 + $0xf0] sm:$0xff]
          %711 = vst [vmem:[%s649 + $0xf0] sm:$0xff] %v710
          %v712 = vld [vmem:[%s648 + $0xf8] sm:$0xff]
          %713 = vst [vmem:[%s649 + $0xf8] sm:$0xff] %v712
          %v714 = vld [vmem:[%s648 + $0x100] sm:$0xff]
          %715 = vst [vmem:[%s649 + $0x100] sm:$0xff] %v714
          %v716 = vld [vmem:[%s648 + $0x108] sm:$0xff]
          %717 = vst [vmem:[%s649 + $0x108] sm:$0xff] %v716
          %v718 = vld [vmem:[%s648 + $0x110] sm:$0xff]
          %719 = vst [vmem:[%s649 + $0x110] sm:$0xff] %v718
          %v720 = vld [vmem:[%s648 + $0x118] sm:$0xff]
          %721 = vst [vmem:[%s649 + $0x118] sm:$0xff] %v720
          %v722 = vld [vmem:[%s648 + $0x120] sm:$0xff]
          %723 = vst [vmem:[%s649 + $0x120] sm:$0xff] %v722
          %v724 = vld [vmem:[%s648 + $0x128] sm:$0xff]
          %725 = vst [vmem:[%s649 + $0x128] sm:$0xff] %v724
          %v726 = vld [vmem:[%s648 + $0x130] sm:$0xff]
          %727 = vst [vmem:[%s649 + $0x130] sm:$0xff] %v726
          %v728 = vld [vmem:[%s648 + $0x138] sm:$0xff]
          %729 = vst [vmem:[%s649 + $0x138] sm:$0xff] %v728
          %v730 = vld [vmem:[%s648 + $0x140] sm:$0xff]
          %731 = vst [vmem:[%s649 + $0x140] sm:$0xff] %v730
          %v732 = vld [vmem:[%s648 + $0x148] sm:$0xff]
          %733 = vst [vmem:[%s649 + $0x148] sm:$0xff] %v732
          %v734 = vld [vmem:[%s648 + $0x150] sm:$0xff]
          %735 = vst [vmem:[%s649 + $0x150] sm:$0xff] %v734
          %v736 = vld [vmem:[%s648 + $0x158] sm:$0xff]
          %737 = vst [vmem:[%s649 + $0x158] sm:$0xff] %v736
          %v738 = vld [vmem:[%s648 + $0x160] sm:$0xff]
          %739 = vst [vmem:[%s649 + $0x160] sm:$0xff] %v738
          %v740 = vld [vmem:[%s648 + $0x168] sm:$0xff]
          %741 = vst [vmem:[%s649 + $0x168] sm:$0xff] %v740
          %v742 = vld [vmem:[%s648 + $0x170] sm:$0xff]
          %743 = vst [vmem:[%s649 + $0x170] sm:$0xff] %v742
          %v744 = vld [vmem:[%s648 + $0x178] sm:$0xff]
          %745 = vst [vmem:[%s649 + $0x178] sm:$0xff] %v744
          %v746 = vld [vmem:[%s648 + $0x180] sm:$0xff]
          %747 = vst [vmem:[%s649 + $0x180] sm:$0xff] %v746
          %v748 = vld [vmem:[%s648 + $0x188] sm:$0xff]
          %749 = vst [vmem:[%s649 + $0x188] sm:$0xff] %v748
          %v750 = vld [vmem:[%s648 + $0x190] sm:$0xff]
          %751 = vst [vmem:[%s649 + $0x190] sm:$0xff] %v750
          %v752 = vld [vmem:[%s648 + $0x198] sm:$0xff]
          %753 = vst [vmem:[%s649 + $0x198] sm:$0xff] %v752
          %v754 = vld [vmem:[%s648 + $0x1a0] sm:$0xff]
          %755 = vst [vmem:[%s649 + $0x1a0] sm:$0xff] %v754
          %v756 = vld [vmem:[%s648 + $0x1a8] sm:$0xff]
          %757 = vst [vmem:[%s649 + $0x1a8] sm:$0xff] %v756
          %v758 = vld [vmem:[%s648 + $0x1b0] sm:$0xff]
          %759 = vst [vmem:[%s649 + $0x1b0] sm:$0xff] %v758
          %v760 = vld [vmem:[%s648 + $0x1b8] sm:$0xff]
          %761 = vst [vmem:[%s649 + $0x1b8] sm:$0xff] %v760
          %v762 = vld [vmem:[%s648 + $0x1c0] sm:$0xff]
          %763 = vst [vmem:[%s649 + $0x1c0] sm:$0xff] %v762
          %v764 = vld [vmem:[%s648 + $0x1c8] sm:$0xff]
          %765 = vst [vmem:[%s649 + $0x1c8] sm:$0xff] %v764
          %v766 = vld [vmem:[%s648 + $0x1d0] sm:$0xff]
          %767 = vst [vmem:[%s649 + $0x1d0] sm:$0xff] %v766
          %v768 = vld [vmem:[%s648 + $0x1d8] sm:$0xff]
          %769 = vst [vmem:[%s649 + $0x1d8] sm:$0xff] %v768
          %v770 = vld [vmem:[%s648 + $0x1e0] sm:$0xff]
          %771 = vst [vmem:[%s649 + $0x1e0] sm:$0xff] %v770
          %v772 = vld [vmem:[%s648 + $0x1e8] sm:$0xff]
          %773 = vst [vmem:[%s649 + $0x1e8] sm:$0xff] %v772
          %v774 = vld [vmem:[%s648 + $0x1f0] sm:$0xff]
          %775 = vst [vmem:[%s649 + $0x1f0] sm:$0xff] %v774
          %v776 = vld [vmem:[%s648 + $0x1f8] sm:$0xff]
          %777 = vst [vmem:[%s649 + $0x1f8] sm:$0xff] %v776
          %v778 = vld [vmem:[%s648 + $0x200] sm:$0xff]
          %779 = vst [vmem:[%s649 + $0x200] sm:$0xff] %v778
          %v780 = vld [vmem:[%s648 + $0x208] sm:$0xff]
          %781 = vst [vmem:[%s649 + $0x208] sm:$0xff] %v780
          %v782 = vld [vmem:[%s648 + $0x210] sm:$0xff]
          %783 = vst [vmem:[%s649 + $0x210] sm:$0xff] %v782
          %v784 = vld [vmem:[%s648 + $0x218] sm:$0xff]
          %785 = vst [vmem:[%s649 + $0x218] sm:$0xff] %v784
          %v786 = vld [vmem:[%s648 + $0x220] sm:$0xff]
          %787 = vst [vmem:[%s649 + $0x220] sm:$0xff] %v786
          %v788 = vld [vmem:[%s648 + $0x228] sm:$0xff]
          %789 = vst [vmem:[%s649 + $0x228] sm:$0xff] %v788
          %v790 = vld [vmem:[%s648 + $0x230] sm:$0xff]
          %791 = vst [vmem:[%s649 + $0x230] sm:$0xff] %v790
          %v792 = vld [vmem:[%s648 + $0x238] sm:$0xff]
          %793 = vst [vmem:[%s649 + $0x238] sm:$0xff] %v792
          %v794 = vld [vmem:[%s648 + $0x240] sm:$0xff]
          %795 = vst [vmem:[%s649 + $0x240] sm:$0xff] %v794
          %v796 = vld [vmem:[%s648 + $0x248] sm:$0xff]
          %797 = vst [vmem:[%s649 + $0x248] sm:$0xff] %v796
          %v798 = vld [vmem:[%s648 + $0x250] sm:$0xff]
          %799 = vst [vmem:[%s649 + $0x250] sm:$0xff] %v798
          %v800 = vld [vmem:[%s648 + $0x258] sm:$0xff]
          %801 = vst [vmem:[%s649 + $0x258] sm:$0xff] %v800
          %v802 = vld [vmem:[%s648 + $0x260] sm:$0xff]
          %803 = vst [vmem:[%s649 + $0x260] sm:$0xff] %v802
          %v804 = vld [vmem:[%s648 + $0x268] sm:$0xff]
          %805 = vst [vmem:[%s649 + $0x268] sm:$0xff] %v804
          %v806 = vld [vmem:[%s648 + $0x270] sm:$0xff]
          %807 = vst [vmem:[%s649 + $0x270] sm:$0xff] %v806
          %v808 = vld [vmem:[%s648 + $0x278] sm:$0xff]
          %809 = vst [vmem:[%s649 + $0x278] sm:$0xff] %v808
          %v810 = vld [vmem:[%s648 + $0x280] sm:$0xff]
          %811 = vst [vmem:[%s649 + $0x280] sm:$0xff] %v810
          %v812 = vld [vmem:[%s648 + $0x288] sm:$0xff]
          %813 = vst [vmem:[%s649 + $0x288] sm:$0xff] %v812
          %v814 = vld [vmem:[%s648 + $0x290] sm:$0xff]
          %815 = vst [vmem:[%s649 + $0x290] sm:$0xff] %v814
          %v816 = vld [vmem:[%s648 + $0x298] sm:$0xff]
          %817 = vst [vmem:[%s649 + $0x298] sm:$0xff] %v816
          %v818 = vld [vmem:[%s648 + $0x2a0] sm:$0xff]
          %819 = vst [vmem:[%s649 + $0x2a0] sm:$0xff] %v818
          %v820 = vld [vmem:[%s648 + $0x2a8] sm:$0xff]
          %821 = vst [vmem:[%s649 + $0x2a8] sm:$0xff] %v820
          %v822 = vld [vmem:[%s648 + $0x2b0] sm:$0xff]
          %823 = vst [vmem:[%s649 + $0x2b0] sm:$0xff] %v822
          %v824 = vld [vmem:[%s648 + $0x2b8] sm:$0xff]
          %825 = vst [vmem:[%s649 + $0x2b8] sm:$0xff] %v824
          %v826 = vld [vmem:[%s648 + $0x2c0] sm:$0xff]
          %827 = vst [vmem:[%s649 + $0x2c0] sm:$0xff] %v826
          %v828 = vld [vmem:[%s648 + $0x2c8] sm:$0xff]
          %829 = vst [vmem:[%s649 + $0x2c8] sm:$0xff] %v828
          %v830 = vld [vmem:[%s648 + $0x2d0] sm:$0xff]
          %831 = vst [vmem:[%s649 + $0x2d0] sm:$0xff] %v830
          %v832 = vld [vmem:[%s648 + $0x2d8] sm:$0xff]
          %833 = vst [vmem:[%s649 + $0x2d8] sm:$0xff] %v832
          %v834 = vld [vmem:[%s648 + $0x2e0] sm:$0xff]
          %835 = vst [vmem:[%s649 + $0x2e0] sm:$0xff] %v834
          %v836 = vld [vmem:[%s648 + $0x2e8] sm:$0xff]
          %837 = vst [vmem:[%s649 + $0x2e8] sm:$0xff] %v836
          %v838 = vld [vmem:[%s648 + $0x2f0] sm:$0xff]
          %839 = vst [vmem:[%s649 + $0x2f0] sm:$0xff] %v838
          %v840 = vld [vmem:[%s648 + $0x2f8] sm:$0xff]
          %841 = vst [vmem:[%s649 + $0x2f8] sm:$0xff] %v840
          %v842 = vld [vmem:[%s648 + $0x300] sm:$0xff]
          %843 = vst [vmem:[%s649 + $0x300] sm:$0xff] %v842
          %v844 = vld [vmem:[%s648 + $0x308] sm:$0xff]
          %845 = vst [vmem:[%s649 + $0x308] sm:$0xff] %v844
          %v846 = vld [vmem:[%s648 + $0x310] sm:$0xff]
          %847 = vst [vmem:[%s649 + $0x310] sm:$0xff] %v846
          %v848 = vld [vmem:[%s648 + $0x318] sm:$0xff]
          %849 = vst [vmem:[%s649 + $0x318] sm:$0xff] %v848
          %v850 = vld [vmem:[%s648 + $0x320] sm:$0xff]
          %851 = vst [vmem:[%s649 + $0x320] sm:$0xff] %v850
          %v852 = vld [vmem:[%s648 + $0x328] sm:$0xff]
          %853 = vst [vmem:[%s649 + $0x328] sm:$0xff] %v852
          %v854 = vld [vmem:[%s648 + $0x330] sm:$0xff]
          %855 = vst [vmem:[%s649 + $0x330] sm:$0xff] %v854
          %v856 = vld [vmem:[%s648 + $0x338] sm:$0xff]
          %857 = vst [vmem:[%s649 + $0x338] sm:$0xff] %v856
          %v858 = vld [vmem:[%s648 + $0x340] sm:$0xff]
          %859 = vst [vmem:[%s649 + $0x340] sm:$0xff] %v858
          %v860 = vld [vmem:[%s648 + $0x348] sm:$0xff]
          %861 = vst [vmem:[%s649 + $0x348] sm:$0xff] %v860
          %v862 = vld [vmem:[%s648 + $0x350] sm:$0xff]
          %863 = vst [vmem:[%s649 + $0x350] sm:$0xff] %v862
          %v864 = vld [vmem:[%s648 + $0x358] sm:$0xff]
          %865 = vst [vmem:[%s649 + $0x358] sm:$0xff] %v864
          %v866 = vld [vmem:[%s648 + $0x360] sm:$0xff]
          %867 = vst [vmem:[%s649 + $0x360] sm:$0xff] %v866
          %v868 = vld [vmem:[%s648 + $0x368] sm:$0xff]
          %869 = vst [vmem:[%s649 + $0x368] sm:$0xff] %v868
          %v870 = vld [vmem:[%s648 + $0x370] sm:$0xff]
          %871 = vst [vmem:[%s649 + $0x370] sm:$0xff] %v870
          %v872 = vld [vmem:[%s648 + $0x378] sm:$0xff]
          %873 = vst [vmem:[%s649 + $0x378] sm:$0xff] %v872
          %v874 = vld [vmem:[%s648 + $0x380] sm:$0xff]
          %875 = vst [vmem:[%s649 + $0x380] sm:$0xff] %v874
          %v876 = vld [vmem:[%s648 + $0x388] sm:$0xff]
          %877 = vst [vmem:[%s649 + $0x388] sm:$0xff] %v876
          %v878 = vld [vmem:[%s648 + $0x390] sm:$0xff]
          %879 = vst [vmem:[%s649 + $0x390] sm:$0xff] %v878
          %v880 = vld [vmem:[%s648 + $0x398] sm:$0xff]
          %881 = vst [vmem:[%s649 + $0x398] sm:$0xff] %v880
          %v882 = vld [vmem:[%s648 + $0x3a0] sm:$0xff]
          %883 = vst [vmem:[%s649 + $0x3a0] sm:$0xff] %v882
          %v884 = vld [vmem:[%s648 + $0x3a8] sm:$0xff]
          %885 = vst [vmem:[%s649 + $0x3a8] sm:$0xff] %v884
          %v886 = vld [vmem:[%s648 + $0x3b0] sm:$0xff]
          %887 = vst [vmem:[%s649 + $0x3b0] sm:$0xff] %v886
          %v888 = vld [vmem:[%s648 + $0x3b8] sm:$0xff]
          %889 = vst [vmem:[%s649 + $0x3b8] sm:$0xff] %v888
          %v890 = vld [vmem:[%s648 + $0x3c0] sm:$0xff]
          %891 = vst [vmem:[%s649 + $0x3c0] sm:$0xff] %v890
          %v892 = vld [vmem:[%s648 + $0x3c8] sm:$0xff]
          %893 = vst [vmem:[%s649 + $0x3c8] sm:$0xff] %v892
          %v894 = vld [vmem:[%s648 + $0x3d0] sm:$0xff]
          %895 = vst [vmem:[%s649 + $0x3d0] sm:$0xff] %v894
          %v896 = vld [vmem:[%s648 + $0x3d8] sm:$0xff]
          %897 = vst [vmem:[%s649 + $0x3d8] sm:$0xff] %v896
          %v898 = vld [vmem:[%s648 + $0x3e0] sm:$0xff]
          %899 = vst [vmem:[%s649 + $0x3e0] sm:$0xff] %v898
          %v900 = vld [vmem:[%s648 + $0x3e8] sm:$0xff]
          %901 = vst [vmem:[%s649 + $0x3e8] sm:$0xff] %v900
          %v902 = vld [vmem:[%s648 + $0x3f0] sm:$0xff]
          %903 = vst [vmem:[%s649 + $0x3f0] sm:$0xff] %v902
          %v904 = vld [vmem:[%s648 + $0x3f8] sm:$0xff]
          %905 = vst [vmem:[%s649 + $0x3f8] sm:$0xff] %v904
        $region126: #{forward.1} parent=120 // loop_footer
          %s647 = sadd.s32 1, %s643
        $region127: #{forward.1} parent=120 // loop_footer_branch
          %642 = sbr.rel target = $region123
        $region128: #{forward.1} parent=120 // loop_exit
          _
      $region121: #{forward.1} parent=105 // pred_fallthru
        _
      %p906 = pneg %p638
      // Predicated region
      $region129: #{forward.1} parent=105 // pred_check
        _
      $region130: #{forward.1} parent=105 // pred_check_branch
        %908 = sbr.rel (%p638) target = $region132
      $region131: #{forward.1} parent=105 // pred_region
        %s909 = sand.u32 1024, 7
      $region132: #{forward.1} parent=105 // pred_fallthru
        _
    $region106: #{forward.1} parent=1 // pred_fallthru
      _
    // Predicated region
    $region107: #{forward.1} parent=1 // pred_check
      %p623 = pneg %p619
    $region108: #{forward.1} parent=1 // pred_check_branch
      %625 = sbr.rel (%p623) target = $region110
    $region109: #{forward.1} parent=1 // pred_region
      %s626 = sshllo.u32 0, 1024
      loop: start=0, step=1, limit=1
      $region111: #{forward.1} parent=109 // loop_pre_header
        _
      $region112: #{forward.1} parent=109 // loop_header
        %s628 = sphi 0, %s632
        %p629 = scmp.ge.s32.totalorder %s628, 1
        %s633 = sphi %s17, %s17
        %s634 = sphi [#allocation3], [#allocation3]
      $region113: #{forward.1} parent=109 // loop_header_branch
        %631 = sbr.rel (%p629) target = $region117
      $region114: #{forward.1} parent=109 // loop_body
        %v635 = vld [vmem:[%s633] sm:%s626]
        %636 = vst [vmem:[%s634] sm:%s626] %v635
      $region115: #{forward.1} parent=109 // loop_footer
        %s632 = sadd.s32 1, %s628
      $region116: #{forward.1} parent=109 // loop_footer_branch
        %627 = sbr.rel target = $region112
      $region117: #{forward.1} parent=109 // loop_exit
        _
    $region110: #{forward.1} parent=1 // pred_fallthru
      _
    // Predicated region
    $region133: #{forward.1} parent=1 // pred_check
      _
    $region134: #{forward.1} parent=1 // pred_check_branch
      %912 = sbr.rel (0) target = $region136
    $region135: #{forward.1} parent=1 // pred_region
      %913 = vsyncadd %s617, 16384
    $region136: #{forward.1} parent=1 // pred_fallthru
      _
    %v914 = vld [vmem:[%s0] sm:$0xff]
    %v915 = vld [vmem:[%s0 + $0x8] sm:$0xff]
    %v916 = vld [vmem:[%s2] sm:$0xff]
    %v917 = vld [vmem:[%s2 + $0x8] sm:$0xff]
    %vm918 = vcmask 7168
    %v919 = vsel %vm918, %v916, 0.0
    %v920 = vrot.slane %v919, 4
    %v921 = vadd.f32 %v919, %v920
    %v922 = vrot.slane %v921, 2
    %v923 = vadd.f32 %v921, %v922
    %v924 = vrot.slane %v923, 1
    %v925 = vadd.f32 %v923, %v924
    %v926 = vsel %vm918, %v917, 0.0
    %v927 = vrot.slane %v926, 4
    %v928 = vadd.f32 %v926, %v927
    %v929 = vrot.slane %v928, 2
    %v930 = vadd.f32 %v928, %v929
    %v931 = vrot.slane %v930, 1
    %v932 = vadd.f32 %v930, %v931
    %v933 = vld [vmem:[%s1] sm:$0x1]
    %v934 = vld [vmem:[%s1 + $0x1] sm:$0x1]
    %v937 = vlaneseq
    %v938 = vshrl.u32 %v937, 7
    %v939 = vsub.s32 0, %v938
    %v940 = vrot.slane %v933, %v939
    %v941 = vlaneseq
    %v942 = vshrl.u32 %v941, 7
    %v943 = vsub.s32 0, %v942
    %v944 = vrot.slane %v934, %v943
    %v947 = vld [vmem:[%s6] sm:$0xff]
    %v948 = vld [vmem:[%s6 + $0x8] sm:$0xff]
    %v949 = vld [vmem:[%s6 + $0x10] sm:$0xff]
    %v950 = vld [vmem:[%s6 + $0x18] sm:$0xff]
    %v951 = vld [vmem:[%s6 + $0x20] sm:$0xff]
    %v952 = vld [vmem:[%s6 + $0x28] sm:$0xff]
    %v953 = vld [vmem:[%s6 + $0x30] sm:$0xff]
    %v954 = vld [vmem:[%s6 + $0x38] sm:$0xff]
    %v955 = vld [vmem:[%s6 + $0x40] sm:$0xff]
    %v956 = vld [vmem:[%s6 + $0x48] sm:$0xff]
    %v957 = vld [vmem:[%s6 + $0x50] sm:$0xff]
    %v958 = vld [vmem:[%s6 + $0x58] sm:$0xff]
    %v959 = vld [vmem:[%s6 + $0x60] sm:$0xff]
    %v960 = vld [vmem:[%s6 + $0x68] sm:$0xff]
    %v961 = vld [vmem:[%s6 + $0x70] sm:$0xff]
    %v962 = vld [vmem:[%s6 + $0x78] sm:$0xff]
    %v963 = vld [vmem:[%s8] sm:$0x3]
    %v965 = vlaneseq
    %v966 = vshrl.u32 %v965, 7
    %v967 = vsub.s32 0, %v966
    %v968 = vrot.slane %v963, %v967
    %v969 = vlaneseq
    %v970 = vshrl.u32 %v969, 7
    %v971 = vsub.s32 1, %v970
    %v972 = vrot.slane %v963, %v971
    %vm975 = vcmask 523264
    %v977 = vsel %vm975, %v914, 0
    %v980 = vsel %vm975, %v915, 0
    %982 = vmatprep.subr.mxu0 %v948
    %983 = vmatpush1.msra.mxu0 %v947
    %984 = vmatprep.subr.mxu0 %v950
    %985 = vmatpush1.msra.mxu0 %v949
    %986 = vmatprep.subr.mxu0 %v952
    %987 = vmatpush1.msra.mxu0 %v951
    %988 = vmatprep.subr.mxu0 %v954
    %989 = vmatpush1.msra.mxu0 %v953
    %990 = vmatprep.subr.mxu0 %v956
    %991 = vmatpush1.msra.mxu0 %v955
    %992 = vmatprep.subr.mxu0 %v958
    %993 = vmatpush1.msra.mxu0 %v957
    %994 = vmatprep.subr.mxu0 %v960
    %995 = vmatpush1.msra.mxu0 %v959
    %996 = vmatprep.subr.mxu0 %v962
    %997 = vmatpush1.msra.mxu0 %v961
    %998 = vmatprep.subr.mxu0 0.0
    %999 = vmatpush1.msra.mxu0 0.0
    %1000 = vmatprep.subr.mxu0 0.0
    %1001 = vmatpush1.msra.mxu0 0.0
    %1002 = vmatprep.subr.mxu0 0.0
    %1003 = vmatpush1.msra.mxu0 0.0
    %1004 = vmatprep.subr.mxu0 0.0
    %1005 = vmatpush1.msra.mxu0 0.0
    %1006 = vmatprep.subr.mxu0 0.0
    %1007 = vmatpush1.msra.mxu0 0.0
    %1008 = vmatprep.subr.mxu0 0.0
    %1009 = vmatpush1.msra.mxu0 0.0
    %1010 = vmatprep.subr.mxu0 0.0
    %1011 = vmatpush1.msra.mxu0 0.0
    %1012 = vmatprep.subr.mxu0 0.0
    %1013 = vmatpush1.msra.mxu0 0.0
    %1014 = vmatprep.subr.mxu0 0.0
    %1015 = vmatpush1.msra.mxu0 0.0
    %1016 = vmatprep.subr.mxu0 0.0
    %1017 = vmatpush1.msra.mxu0 0.0
    %1018 = vmatprep.subr.mxu0 0.0
    %1019 = vmatpush1.msra.mxu0 0.0
    %1020 = vmatprep.subr.mxu0 0.0
    %1021 = vmatpush1.msra.mxu0 0.0
    %1022 = vmatprep.subr.mxu0 0.0
    %1023 = vmatpush1.msra.mxu0 0.0
    %1024 = vmatprep.subr.mxu0 0.0
    %1025 = vmatpush1.msra.mxu0 0.0
    %1026 = vmatprep.subr.mxu0 0.0
    %1027 = vmatpush1.msra.mxu0 0.0
    %1028 = vmatprep.subr.mxu0 0.0
    %1029 = vmatpush1.msra.mxu0 0.0
    %1030 = vmatprep.subr.mxu0 0.0
    %1031 = vmatpush1.msra.mxu0 0.0
    %1032 = vmatprep.subr.mxu0 0.0
    %1033 = vmatpush1.msra.mxu0 0.0
    %1034 = vmatprep.subr.mxu0 0.0
    %1035 = vmatpush1.msra.mxu0 0.0
    %1036 = vmatprep.subr.mxu0 0.0
    %1037 = vmatpush1.msra.mxu0 0.0
    %1038 = vmatprep.subr.mxu0 0.0
    %1039 = vmatpush1.msra.mxu0 0.0
    %1040 = vmatprep.subr.mxu0 0.0
    %1041 = vmatpush1.msra.mxu0 0.0
    %1042 = vmatprep.subr.mxu0 0.0
    %1043 = vmatpush1.msra.mxu0 0.0
    %1044 = vmatprep.subr.mxu0 0.0
    %1045 = vmatpush1.msra.mxu0 0.0
    %1046 = vmatprep.mubr.f32.mxu0 0.0
    %1047 = vmatmul.mubr.f32.gmra.mrb[0].mxu0 %v977
    %v1048 = vpop.f32.mrb[0].mxu0
    %v1049 = vadd.f32 %v968, %v1048
    %v1050 = vpop.f32.mrb[0].mxu0
    %v1051 = vadd.f32 %v972, %v1050
    %1052 = vmatprep.mubr.f32.mxu0 0.0
    %1053 = vmatmul.mubr.f32.gmra.mrb[0].mxu0 %v980
    %v1054 = vpop.f32.mrb[0].mxu0
    %v1055 = vadd.f32 %v968, %v1054
    %v1056 = vpop.f32.mrb[0].mxu0
    %v1057 = vadd.f32 %v972, %v1056
    %1058 = vdwg.mxu0
    %v1059 = vld [vmem:[%s7] sm:$0xff]
    %v1060 = vld [vmem:[%s7 + $0x8] sm:$0xff]
    %v1061 = vld [vmem:[%s7 + $0x10] sm:$0xff]
    %v1062 = vld [vmem:[%s7 + $0x18] sm:$0xff]
    %v1063 = vld [vmem:[%s7 + $0x20] sm:$0xff]
    %v1064 = vld [vmem:[%s7 + $0x28] sm:$0xff]
    %v1065 = vld [vmem:[%s7 + $0x30] sm:$0xff]
    %v1066 = vld [vmem:[%s7 + $0x38] sm:$0xff]
    %v1067 = vld [vmem:[%s7 + $0x40] sm:$0xff]
    %v1068 = vld [vmem:[%s7 + $0x48] sm:$0xff]
    %v1069 = vld [vmem:[%s7 + $0x50] sm:$0xff]
    %v1070 = vld [vmem:[%s7 + $0x58] sm:$0xff]
    %v1071 = vld [vmem:[%s7 + $0x60] sm:$0xff]
    %v1072 = vld [vmem:[%s7 + $0x68] sm:$0xff]
    %v1073 = vld [vmem:[%s7 + $0x70] sm:$0xff]
    %v1074 = vld [vmem:[%s7 + $0x78] sm:$0xff]
    %v1076 = vsel %vm975, 0.0, 0
    %1078 = vmatprep.subr.mxu0 %v1060
    %1079 = vmatpush1.msra.mxu0 %v1059
    %1080 = vmatprep.subr.mxu0 %v1062
    %1081 = vmatpush1.msra.mxu0 %v1061
    %1082 = vmatprep.subr.mxu0 %v1064
    %1083 = vmatpush1.msra.mxu0 %v1063
    %1084 = vmatprep.subr.mxu0 %v1066
    %1085 = vmatpush1.msra.mxu0 %v1065
    %1086 = vmatprep.subr.mxu0 %v1068
    %1087 = vmatpush1.msra.mxu0 %v1067
    %1088 = vmatprep.subr.mxu0 %v1070
    %1089 = vmatpush1.msra.mxu0 %v1069
    %1090 = vmatprep.subr.mxu0 %v1072
    %1091 = vmatpush1.msra.mxu0 %v1071
    %1092 = vmatprep.subr.mxu0 %v1074
    %1093 = vmatpush1.msra.mxu0 %v1073
    %1094 = vmatprep.subr.mxu0 0.0
    %1095 = vmatpush1.msra.mxu0 0.0
    %1096 = vmatprep.subr.mxu0 0.0
    %1097 = vmatpush1.msra.mxu0 0.0
    %1098 = vmatprep.subr.mxu0 0.0
    %1099 = vmatpush1.msra.mxu0 0.0
    %1100 = vmatprep.subr.mxu0 0.0
    %1101 = vmatpush1.msra.mxu0 0.0
    %1102 = vmatprep.subr.mxu0 0.0
    %1103 = vmatpush1.msra.mxu0 0.0
    %1104 = vmatprep.subr.mxu0 0.0
    %1105 = vmatpush1.msra.mxu0 0.0
    %1106 = vmatprep.subr.mxu0 0.0
    %1107 = vmatpush1.msra.mxu0 0.0
    %1108 = vmatprep.subr.mxu0 0.0
    %1109 = vmatpush1.msra.mxu0 0.0
    %1110 = vmatprep.subr.mxu0 0.0
    %1111 = vmatpush1.msra.mxu0 0.0
    %1112 = vmatprep.subr.mxu0 0.0
    %1113 = vmatpush1.msra.mxu0 0.0
    %1114 = vmatprep.subr.mxu0 0.0
    %1115 = vmatpush1.msra.mxu0 0.0
    %1116 = vmatprep.subr.mxu0 0.0
    %1117 = vmatpush1.msra.mxu0 0.0
    %1118 = vmatprep.subr.mxu0 0.0
    %1119 = vmatpush1.msra.mxu0 0.0
    %1120 = vmatprep.subr.mxu0 0.0
    %1121 = vmatpush1.msra.mxu0 0.0
    %1122 = vmatprep.subr.mxu0 0.0
    %1123 = vmatpush1.msra.mxu0 0.0
    %1124 = vmatprep.subr.mxu0 0.0
    %1125 = vmatpush1.msra.mxu0 0.0
    %1126 = vmatprep.subr.mxu0 0.0
    %1127 = vmatpush1.msra.mxu0 0.0
    %1128 = vmatprep.subr.mxu0 0.0
    %1129 = vmatpush1.msra.mxu0 0.0
    %1130 = vmatprep.subr.mxu0 0.0
    %1131 = vmatpush1.msra.mxu0 0.0
    %1132 = vmatprep.subr.mxu0 0.0
    %1133 = vmatpush1.msra.mxu0 0.0
    %1134 = vmatprep.subr.mxu0 0.0
    %1135 = vmatpush1.msra.mxu0 0.0
    %1136 = vmatprep.subr.mxu0 0.0
    %1137 = vmatpush1.msra.mxu0 0.0
    %1138 = vmatprep.subr.mxu0 0.0
    %1139 = vmatpush1.msra.mxu0 0.0
    %1140 = vmatprep.subr.mxu0 0.0
    %1141 = vmatpush1.msra.mxu0 0.0
    %1142 = vmatprep.mubr.f32.mxu0 0.0
    %1143 = vmatmul.mubr.f32.gmra.mrb[0].mxu0 %v1076
    %v1144 = vpop.f32.mrb[0].mxu0
    %v1145 = vadd.f32 0.0, %v1144
    %v1146 = vpop.f32.mrb[0].mxu0
    %v1147 = vadd.f32 0.0, %v1146
    %1148 = vdwg.mxu0
    %v1151 = vrot.slane %v1145, 1
    %v1152 = vrot.slane %v1147, 1
    %v1157 = vadd.f32 %v1049, %v1145
    %v1158 = vadd.f32 %v1051, %v1147
    %v1159 = vadd.f32 %v1055, %v1151
    %v1160 = vadd.f32 %v1057, %v1152
    %v1161 = vxor.u32 %v1157, 2147483648
    %v1162 = vxor.u32 %v1158, 2147483648
    %v1163 = vxor.u32 %v1159, 2147483648
    %v1164 = vxor.u32 %v1160, 2147483648
    %v1165 = vmul.f32 %v1161, 1.442695
    %v1166 = vpow.pop %v1165
    %v1167 = vmul.f32 %v1162, 1.442695
    %v1168 = vpow.pop %v1167
    %v1169 = vmul.f32 %v1163, 1.442695
    %v1170 = vpow.pop %v1169
    %v1171 = vmul.f32 %v1164, 1.442695
    %v1172 = vpow.pop %v1171
    %v1173 = vadd.f32 %v1166, 1.0
    %v1174 = vadd.f32 %v1168, 1.0
    %v1175 = vadd.f32 %v1170, 1.0
    %v1176 = vadd.f32 %v1172, 1.0
    %v1177 = vrcp.pop %v1173
    %v1178 = vmul.f32 1.0, %v1177
    %v1179 = vrcp.pop %v1174
    %v1180 = vmul.f32 1.0, %v1179
    %v1181 = vrcp.pop %v1175
    %v1182 = vmul.f32 1.0, %v1181
    %v1183 = vrcp.pop %v1176
    %v1184 = vmul.f32 1.0, %v1183
    %v1185 = vtanh.pop %v1158
    %v1186 = vtanh.pop %v1160
    %v1187 = vmul.f32 %v1178, 0.0
    %v1188 = vmul.f32 %v1182, 0.0
    %v1189 = vmul.f32 %v1178, %v1185
    %v1190 = vmul.f32 %v1182, %v1186
    %1193 = vrot.lane.b32.xlu0 %v1189, 64
    %v1194 = vpop.permute.xlu0 %1193
    %1195 = vrot.lane.b32.xlu0 %v1190, 64
    %v1196 = vpop.permute.xlu0 %1195
    %v1199 = vadd.f32 %v1187, %v1194
    %v1200 = vadd.f32 %v1188, %v1196
    %v1201 = vtanh.pop %v1199
    %v1202 = vtanh.pop %v1200
    %v1203 = vmul.f32 %v1180, %v1201
    %v1204 = vmul.f32 %v1184, %v1202
    %v1205 = vld [vmem:[%s2] sm:$0x1]
    %v1206 = vld [vmem:[%s2 + $0x8] sm:$0x1]
    %1208 = vset.pattern.permute.xlu0 1
    %1209 = vperm.xlu0 %1208, %v1205
    %v1210 = vpop.permute.xlu0 %1209
    %1213 = vset.pattern.permute.xlu0 1
    %1214 = vperm.xlu0 %1213, %v1206
    %v1215 = vpop.permute.xlu0 %1214
    %v1217 = vmul.f32 %v1210, %v1203
    %v1218 = vmul.f32 %v1215, %v1204
    %v1219 = vadd.f32 %v1217, 0.0
    %v1220 = vadd.f32 %v1218, 0.0
    %v1223 = vrot.slane %v1204, 7
    %vm1224 = vcmask 1041409
    %v1225 = vsel %vm1224, %v1223, %v1203
    %1226 = vrot.lane.b32.xlu0 %v1225, 64
    %v1227 = vpop.permute.xlu0 %1226
    %v1228 = vsel %vm975, %v1227, 0
    %1230 = vmatprep.subr.mxu0 %v1060
    %1231 = vmatpush1.msra.mxu0 %v1059
    %1232 = vmatprep.subr.mxu0 %v1062
    %1233 = vmatpush1.msra.mxu0 %v1061
    %1234 = vmatprep.subr.mxu0 %v1064
    %1235 = vmatpush1.msra.mxu0 %v1063
    %1236 = vmatprep.subr.mxu0 %v1066
    %1237 = vmatpush1.msra.mxu0 %v1065
    %1238 = vmatprep.subr.mxu0 %v1068
    %1239 = vmatpush1.msra.mxu0 %v1067
    %1240 = vmatprep.subr.mxu0 %v1070
    %1241 = vmatpush1.msra.mxu0 %v1069
    %1242 = vmatprep.subr.mxu0 %v1072
    %1243 = vmatpush1.msra.mxu0 %v1071
    %1244 = vmatprep.subr.mxu0 %v1074
    %1245 = vmatpush1.msra.mxu0 %v1073
    %1246 = vmatprep.subr.mxu0 0.0
    %1247 = vmatpush1.msra.mxu0 0.0
    %1248 = vmatprep.subr.mxu0 0.0
    %1249 = vmatpush1.msra.mxu0 0.0
    %1250 = vmatprep.subr.mxu0 0.0
    %1251 = vmatpush1.msra.mxu0 0.0
    %1252 = vmatprep.subr.mxu0 0.0
    %1253 = vmatpush1.msra.mxu0 0.0
    %1254 = vmatprep.subr.mxu0 0.0
    %1255 = vmatpush1.msra.mxu0 0.0
    %1256 = vmatprep.subr.mxu0 0.0
    %1257 = vmatpush1.msra.mxu0 0.0
    %1258 = vmatprep.subr.mxu0 0.0
    %1259 = vmatpush1.msra.mxu0 0.0
    %1260 = vmatprep.subr.mxu0 0.0
    %1261 = vmatpush1.msra.mxu0 0.0
    %1262 = vmatprep.subr.mxu0 0.0
    %1263 = vmatpush1.msra.mxu0 0.0
    %1264 = vmatprep.subr.mxu0 0.0
    %1265 = vmatpush1.msra.mxu0 0.0
    %1266 = vmatprep.subr.mxu0 0.0
    %1267 = vmatpush1.msra.mxu0 0.0
    %1268 = vmatprep.subr.mxu0 0.0
    %1269 = vmatpush1.msra.mxu0 0.0
    %1270 = vmatprep.subr.mxu0 0.0
    %1271 = vmatpush1.msra.mxu0 0.0
    %1272 = vmatprep.subr.mxu0 0.0
    %1273 = vmatpush1.msra.mxu0 0.0
    %1274 = vmatprep.subr.mxu0 0.0
    %1275 = vmatpush1.msra.mxu0 0.0
    %1276 = vmatprep.subr.mxu0 0.0
    %1277 = vmatpush1.msra.mxu0 0.0
    %1278 = vmatprep.subr.mxu0 0.0
    %1279 = vmatpush1.msra.mxu0 0.0
    %1280 = vmatprep.subr.mxu0 0.0
    %1281 = vmatpush1.msra.mxu0 0.0
    %1282 = vmatprep.subr.mxu0 0.0
    %1283 = vmatpush1.msra.mxu0 0.0
    %1284 = vmatprep.subr.mxu0 0.0
    %1285 = vmatpush1.msra.mxu0 0.0
    %1286 = vmatprep.subr.mxu0 0.0
    %1287 = vmatpush1.msra.mxu0 0.0
    %1288 = vmatprep.subr.mxu0 0.0
    %1289 = vmatpush1.msra.mxu0 0.0
    %1290 = vmatprep.subr.mxu0 0.0
    %1291 = vmatpush1.msra.mxu0 0.0
    %1292 = vmatprep.subr.mxu0 0.0
    %1293 = vmatpush1.msra.mxu0 0.0
    %1294 = vmatprep.mubr.f32.mxu0 0.0
    %1295 = vmatmul.mubr.f32.gmra.mrb[0].mxu0 %v1228
    %v1296 = vpop.f32.mrb[0].mxu0
    %v1297 = vadd.f32 0.0, %v1296
    %v1298 = vpop.f32.mrb[0].mxu0
    %v1299 = vadd.f32 0.0, %v1298
    %1300 = vdwg.mxu0
    %v1303 = vrot.slane %v1297, 7
    %v1304 = vrot.slane %v1299, 7
    %v1309 = vadd.f32 %v1049, %v1303
    %v1310 = vadd.f32 %v1051, %v1304
    %v1311 = vadd.f32 %v1055, %v1297
    %v1312 = vadd.f32 %v1057, %v1299
    %v1313 = vxor.u32 %v1309, 2147483648
    %v1314 = vxor.u32 %v1310, 2147483648
    %v1315 = vxor.u32 %v1311, 2147483648
    %v1316 = vxor.u32 %v1312, 2147483648
    %v1317 = vmul.f32 %v1313, 1.442695
    %v1318 = vpow.pop %v1317
    %v1319 = vmul.f32 %v1314, 1.442695
    %v1320 = vpow.pop %v1319
    %v1321 = vmul.f32 %v1315, 1.442695
    %v1322 = vpow.pop %v1321
    %v1323 = vmul.f32 %v1316, 1.442695
    %v1324 = vpow.pop %v1323
    %v1325 = vadd.f32 %v1318, 1.0
    %v1326 = vadd.f32 %v1320, 1.0
    %v1327 = vadd.f32 %v1322, 1.0
    %v1328 = vadd.f32 %v1324, 1.0
    %v1329 = vrcp.pop %v1325
    %v1330 = vmul.f32 1.0, %v1329
    %v1331 = vrcp.pop %v1326
    %v1332 = vmul.f32 1.0, %v1331
    %v1333 = vrcp.pop %v1327
    %v1334 = vmul.f32 1.0, %v1333
    %v1335 = vrcp.pop %v1328
    %v1336 = vmul.f32 1.0, %v1335
    %v1337 = vtanh.pop %v1310
    %v1338 = vtanh.pop %v1312
    %v1341 = vrot.slane %v1199, 7
    %v1342 = vrot.slane %v1200, 7
    %v1345 = vmul.f32 %v1330, %v1341
    %v1346 = vmul.f32 %v1334, %v1342
    %v1347 = vmul.f32 %v1330, %v1337
    %v1348 = vmul.f32 %v1334, %v1338
    %1351 = vrot.lane.b32.xlu0 %v1347, 64
    %v1352 = vpop.permute.xlu0 %1351
    %1353 = vrot.lane.b32.xlu0 %v1348, 64
    %v1354 = vpop.permute.xlu0 %1353
    %v1357 = vadd.f32 %v1345, %v1352
    %v1358 = vadd.f32 %v1346, %v1354
    %v1359 = vtanh.pop %v1357
    %v1360 = vtanh.pop %v1358
    %v1361 = vmul.f32 %v1332, %v1359
    %v1362 = vmul.f32 %v1336, %v1360
    %v1363 = vld [vmem:[%s2 + $0x1] sm:$0x1]
    %v1364 = vld [vmem:[%s2 + $0x9] sm:$0x1]
    %1366 = vset.pattern.permute.xlu0 1
    %1367 = vperm.xlu0 %1366, %v1363
    %v1368 = vpop.permute.xlu0 %1367
    %1371 = vset.pattern.permute.xlu0 1
    %1372 = vperm.xlu0 %1371, %v1364
    %v1373 = vpop.permute.xlu0 %1372
    %v1377 = vrot.slane %v1361, 1
    %v1378 = vrot.slane %v1362, 1
    %1379 = vrot.lane.b32.xlu0 %v1377, 64
    %v1380 = vpop.permute.xlu0 %1379
    %1381 = vrot.lane.b32.xlu0 %v1378, 64
    %v1382 = vpop.permute.xlu0 %1381
    %v1385 = vmul.f32 %v1368, %v1380
    %v1386 = vmul.f32 %v1373, %v1382
    %1389 = vrot.lane.b32.xlu0 %v1385, 64
    %v1390 = vpop.permute.xlu0 %1389
    %1391 = vrot.lane.b32.xlu0 %v1386, 64
    %v1392 = vpop.permute.xlu0 %1391
    %v1395 = vadd.f32 %v1219, %v1390
    %v1396 = vadd.f32 %v1220, %v1392
    %v1397 = vsel %vm1224, %v1362, %v1377
    %1398 = vrot.lane.b32.xlu0 %v1397, 64
    %v1399 = vpop.permute.xlu0 %1398
    %v1400 = vsel %vm975, %v1399, 0
    %1402 = vmatprep.subr.mxu0 %v1060
    %1403 = vmatpush1.msra.mxu0 %v1059
    %1404 = vmatprep.subr.mxu0 %v1062
    %1405 = vmatpush1.msra.mxu0 %v1061
    %1406 = vmatprep.subr.mxu0 %v1064
    %1407 = vmatpush1.msra.mxu0 %v1063
    %1408 = vmatprep.subr.mxu0 %v1066
    %1409 = vmatpush1.msra.mxu0 %v1065
    %1410 = vmatprep.subr.mxu0 %v1068
    %1411 = vmatpush1.msra.mxu0 %v1067
    %1412 = vmatprep.subr.mxu0 %v1070
    %1413 = vmatpush1.msra.mxu0 %v1069
    %1414 = vmatprep.subr.mxu0 %v1072
    %1415 = vmatpush1.msra.mxu0 %v1071
    %1416 = vmatprep.subr.mxu0 %v1074
    %1417 = vmatpush1.msra.mxu0 %v1073
    %1418 = vmatprep.subr.mxu0 0.0
    %1419 = vmatpush1.msra.mxu0 0.0
    %1420 = vmatprep.subr.mxu0 0.0
    %1421 = vmatpush1.msra.mxu0 0.0
    %1422 = vmatprep.subr.mxu0 0.0
    %1423 = vmatpush1.msra.mxu0 0.0
    %1424 = vmatprep.subr.mxu0 0.0
    %1425 = vmatpush1.msra.mxu0 0.0
    %1426 = vmatprep.subr.mxu0 0.0
    %1427 = vmatpush1.msra.mxu0 0.0
    %1428 = vmatprep.subr.mxu0 0.0
    %1429 = vmatpush1.msra.mxu0 0.0
    %1430 = vmatprep.subr.mxu0 0.0
    %1431 = vmatpush1.msra.mxu0 0.0
    %1432 = vmatprep.subr.mxu0 0.0
    %1433 = vmatpush1.msra.mxu0 0.0
    %1434 = vmatprep.subr.mxu0 0.0
    %1435 = vmatpush1.msra.mxu0 0.0
    %1436 = vmatprep.subr.mxu0 0.0
    %1437 = vmatpush1.msra.mxu0 0.0
    %1438 = vmatprep.subr.mxu0 0.0
    %1439 = vmatpush1.msra.mxu0 0.0
    %1440 = vmatprep.subr.mxu0 0.0
    %1441 = vmatpush1.msra.mxu0 0.0
    %1442 = vmatprep.subr.mxu0 0.0
    %1443 = vmatpush1.msra.mxu0 0.0
    %1444 = vmatprep.subr.mxu0 0.0
    %1445 = vmatpush1.msra.mxu0 0.0
    %1446 = vmatprep.subr.mxu0 0.0
    %1447 = vmatpush1.msra.mxu0 0.0
    %1448 = vmatprep.subr.mxu0 0.0
    %1449 = vmatpush1.msra.mxu0 0.0
    %1450 = vmatprep.subr.mxu0 0.0
    %1451 = vmatpush1.msra.mxu0 0.0
    %1452 = vmatprep.subr.mxu0 0.0
    %1453 = vmatpush1.msra.mxu0 0.0
    %1454 = vmatprep.subr.mxu0 0.0
    %1455 = vmatpush1.msra.mxu0 0.0
    %1456 = vmatprep.subr.mxu0 0.0
    %1457 = vmatpush1.msra.mxu0 0.0
    %1458 = vmatprep.subr.mxu0 0.0
    %1459 = vmatpush1.msra.mxu0 0.0
    %1460 = vmatprep.subr.mxu0 0.0
    %1461 = vmatpush1.msra.mxu0 0.0
    %1462 = vmatprep.subr.mxu0 0.0
    %1463 = vmatpush1.msra.mxu0 0.0
    %1464 = vmatprep.subr.mxu0 0.0
    %1465 = vmatpush1.msra.mxu0 0.0
    %1466 = vmatprep.mubr.f32.mxu0 0.0
    %1467 = vmatmul.mubr.f32.gmra.mrb[0].mxu0 %v1400
    %v1468 = vpop.f32.mrb[0].mxu0
    %v1469 = vadd.f32 0.0, %v1468
    %v1470 = vpop.f32.mrb[0].mxu0
    %v1471 = vadd.f32 0.0, %v1470
    %1472 = vdwg.mxu0
    %v1475 = vrot.slane %v1469, 6
    %v1476 = vrot.slane %v1471, 6
    %v1477 = vrot.slane %v1469, 7
    %v1478 = vrot.slane %v1471, 7
    %v1483 = vadd.f32 %v1049, %v1475
    %v1484 = vadd.f32 %v1051, %v1476
    %v1485 = vadd.f32 %v1055, %v1477
    %v1486 = vadd.f32 %v1057, %v1478
    %v1487 = vxor.u32 %v1483, 2147483648
    %v1488 = vxor.u32 %v1484, 2147483648
    %v1489 = vxor.u32 %v1485, 2147483648
    %v1490 = vxor.u32 %v1486, 2147483648
    %v1491 = vmul.f32 %v1487, 1.442695
    %v1492 = vpow.pop %v1491
    %v1493 = vmul.f32 %v1488, 1.442695
    %v1494 = vpow.pop %v1493
    %v1495 = vmul.f32 %v1489, 1.442695
    %v1496 = vpow.pop %v1495
    %v1497 = vmul.f32 %v1490, 1.442695
    %v1498 = vpow.pop %v1497
    %v1499 = vadd.f32 %v1492, 1.0
    %v1500 = vadd.f32 %v1494, 1.0
    %v1501 = vadd.f32 %v1496, 1.0
    %v1502 = vadd.f32 %v1498, 1.0
    %v1503 = vrcp.pop %v1499
    %v1504 = vmul.f32 1.0, %v1503
    %v1505 = vrcp.pop %v1500
    %v1506 = vmul.f32 1.0, %v1505
    %v1507 = vrcp.pop %v1501
    %v1508 = vmul.f32 1.0, %v1507
    %v1509 = vrcp.pop %v1502
    %v1510 = vmul.f32 1.0, %v1509
    %v1511 = vtanh.pop %v1484
    %v1512 = vtanh.pop %v1486
    %v1515 = vrot.slane %v1357, 7
    %v1516 = vrot.slane %v1358, 7
    %v1519 = vmul.f32 %v1504, %v1515
    %v1520 = vmul.f32 %v1508, %v1516
    %v1521 = vmul.f32 %v1504, %v1511
    %v1522 = vmul.f32 %v1508, %v1512
    %1525 = vrot.lane.b32.xlu0 %v1521, 64
    %v1526 = vpop.permute.xlu0 %1525
    %1527 = vrot.lane.b32.xlu0 %v1522, 64
    %v1528 = vpop.permute.xlu0 %1527
    %v1531 = vadd.f32 %v1519, %v1526
    %v1532 = vadd.f32 %v1520, %v1528
    %v1533 = vtanh.pop %v1531
    %v1534 = vtanh.pop %v1532
    %v1535 = vmul.f32 %v1506, %v1533
    %v1536 = vmul.f32 %v1510, %v1534
    %v1537 = vld [vmem:[%s2 + $0x2] sm:$0x1]
    %v1538 = vld [vmem:[%s2 + $0xa] sm:$0x1]
    %1540 = vset.pattern.permute.xlu0 1
    %1541 = vperm.xlu0 %1540, %v1537
    %v1542 = vpop.permute.xlu0 %1541
    %1545 = vset.pattern.permute.xlu0 1
    %1546 = vperm.xlu0 %1545, %v1538
    %v1547 = vpop.permute.xlu0 %1546
    %v1551 = vrot.slane %v1535, 2
    %v1552 = vrot.slane %v1536, 2
    %1553 = vrot.lane.b32.xlu0 %v1551, 64
    %v1554 = vpop.permute.xlu0 %1553
    %1555 = vrot.lane.b32.xlu0 %v1552, 64
    %v1556 = vpop.permute.xlu0 %1555
    %v1559 = vmul.f32 %v1542, %v1554
    %v1560 = vmul.f32 %v1547, %v1556
    %1563 = vrot.lane.b32.xlu0 %v1559, 64
    %v1564 = vpop.permute.xlu0 %1563
    %1565 = vrot.lane.b32.xlu0 %v1560, 64
    %v1566 = vpop.permute.xlu0 %1565
    %v1569 = vadd.f32 %v1395, %v1564
    %v1570 = vadd.f32 %v1396, %v1566
    %v1571 = vrot.slane %v1536, 1
    %v1572 = vsel %vm1224, %v1571, %v1551
    %1573 = vrot.lane.b32.xlu0 %v1572, 64
    %v1574 = vpop.permute.xlu0 %1573
    %v1575 = vsel %vm975, %v1574, 0
    %1577 = vmatprep.subr.mxu0 %v1060
    %1578 = vmatpush1.msra.mxu0 %v1059
    %1579 = vmatprep.subr.mxu0 %v1062
    %1580 = vmatpush1.msra.mxu0 %v1061
    %1581 = vmatprep.subr.mxu0 %v1064
    %1582 = vmatpush1.msra.mxu0 %v1063
    %1583 = vmatprep.subr.mxu0 %v1066
    %1584 = vmatpush1.msra.mxu0 %v1065
    %1585 = vmatprep.subr.mxu0 %v1068
    %1586 = vmatpush1.msra.mxu0 %v1067
    %1587 = vmatprep.subr.mxu0 %v1070
    %1588 = vmatpush1.msra.mxu0 %v1069
    %1589 = vmatprep.subr.mxu0 %v1072
    %1590 = vmatpush1.msra.mxu0 %v1071
    %1591 = vmatprep.subr.mxu0 %v1074
    %1592 = vmatpush1.msra.mxu0 %v1073
    %1593 = vmatprep.subr.mxu0 0.0
    %1594 = vmatpush1.msra.mxu0 0.0
    %1595 = vmatprep.subr.mxu0 0.0
    %1596 = vmatpush1.msra.mxu0 0.0
    %1597 = vmatprep.subr.mxu0 0.0
    %1598 = vmatpush1.msra.mxu0 0.0
    %1599 = vmatprep.subr.mxu0 0.0
    %1600 = vmatpush1.msra.mxu0 0.0
    %1601 = vmatprep.subr.mxu0 0.0
    %1602 = vmatpush1.msra.mxu0 0.0
    %1603 = vmatprep.subr.mxu0 0.0
    %1604 = vmatpush1.msra.mxu0 0.0
    %1605 = vmatprep.subr.mxu0 0.0
    %1606 = vmatpush1.msra.mxu0 0.0
    %1607 = vmatprep.subr.mxu0 0.0
    %1608 = vmatpush1.msra.mxu0 0.0
    %1609 = vmatprep.subr.mxu0 0.0
    %1610 = vmatpush1.msra.mxu0 0.0
    %1611 = vmatprep.subr.mxu0 0.0
    %1612 = vmatpush1.msra.mxu0 0.0
    %1613 = vmatprep.subr.mxu0 0.0
    %1614 = vmatpush1.msra.mxu0 0.0
    %1615 = vmatprep.subr.mxu0 0.0
    %1616 = vmatpush1.msra.mxu0 0.0
    %1617 = vmatprep.subr.mxu0 0.0
    %1618 = vmatpush1.msra.mxu0 0.0
    %1619 = vmatprep.subr.mxu0 0.0
    %1620 = vmatpush1.msra.mxu0 0.0
    %1621 = vmatprep.subr.mxu0 0.0
    %1622 = vmatpush1.msra.mxu0 0.0
    %1623 = vmatprep.subr.mxu0 0.0
    %1624 = vmatpush1.msra.mxu0 0.0
    %1625 = vmatprep.subr.mxu0 0.0
    %1626 = vmatpush1.msra.mxu0 0.0
    %1627 = vmatprep.subr.mxu0 0.0
    %1628 = vmatpush1.msra.mxu0 0.0
    %1629 = vmatprep.subr.mxu0 0.0
    %1630 = vmatpush1.msra.mxu0 0.0
    %1631 = vmatprep.subr.mxu0 0.0
    %1632 = vmatpush1.msra.mxu0 0.0
    %1633 = vmatprep.subr.mxu0 0.0
    %1634 = vmatpush1.msra.mxu0 0.0
    %1635 = vmatprep.subr.mxu0 0.0
    %1636 = vmatpush1.msra.mxu0 0.0
    %1637 = vmatprep.subr.mxu0 0.0
    %1638 = vmatpush1.msra.mxu0 0.0
    %1639 = vmatprep.subr.mxu0 0.0
    %1640 = vmatpush1.msra.mxu0 0.0
    %1641 = vmatprep.mubr.f32.mxu0 0.0
    %1642 = vmatmul.mubr.f32.gmra.mrb[0].mxu0 %v1575
    %v1643 = vpop.f32.mrb[0].mxu0
    %v1644 = vadd.f32 0.0, %v1643
    %v1645 = vpop.f32.mrb[0].mxu0
    %v1646 = vadd.f32 0.0, %v1645
    %1647 = vdwg.mxu0
    %v1650 = vrot.slane %v1644, 5
    %v1651 = vrot.slane %v1646, 5
    %v1652 = vrot.slane %v1644, 6
    %v1653 = vrot.slane %v1646, 6
    %v1658 = vadd.f32 %v1049, %v1650
    %v1659 = vadd.f32 %v1051, %v1651
    %v1660 = vadd.f32 %v1055, %v1652
    %v1661 = vadd.f32 %v1057, %v1653
    %v1662 = vxor.u32 %v1658, 2147483648
    %v1663 = vxor.u32 %v1659, 2147483648
    %v1664 = vxor.u32 %v1660, 2147483648
    %v1665 = vxor.u32 %v1661, 2147483648
    %v1666 = vmul.f32 %v1662, 1.442695
    %v1667 = vpow.pop %v1666
    %v1668 = vmul.f32 %v1663, 1.442695
    %v1669 = vpow.pop %v1668
    %v1670 = vmul.f32 %v1664, 1.442695
    %v1671 = vpow.pop %v1670
    %v1672 = vmul.f32 %v1665, 1.442695
    %v1673 = vpow.pop %v1672
    %v1674 = vadd.f32 %v1667, 1.0
    %v1675 = vadd.f32 %v1669, 1.0
    %v1676 = vadd.f32 %v1671, 1.0
    %v1677 = vadd.f32 %v1673, 1.0
    %v1678 = vrcp.pop %v1674
    %v1679 = vmul.f32 1.0, %v1678
    %v1680 = vrcp.pop %v1675
    %v1681 = vmul.f32 1.0, %v1680
    %v1682 = vrcp.pop %v1676
    %v1683 = vmul.f32 1.0, %v1682
    %v1684 = vrcp.pop %v1677
    %v1685 = vmul.f32 1.0, %v1684
    %v1686 = vtanh.pop %v1659
    %v1687 = vtanh.pop %v1661
    %v1690 = vrot.slane %v1531, 7
    %v1691 = vrot.slane %v1532, 7
    %v1694 = vmul.f32 %v1679, %v1690
    %v1695 = vmul.f32 %v1683, %v1691
    %v1696 = vmul.f32 %v1679, %v1686
    %v1697 = vmul.f32 %v1683, %v1687
    %1700 = vrot.lane.b32.xlu0 %v1696, 64
    %v1701 = vpop.permute.xlu0 %1700
    %1702 = vrot.lane.b32.xlu0 %v1697, 64
    %v1703 = vpop.permute.xlu0 %1702
    %v1706 = vadd.f32 %v1694, %v1701
    %v1707 = vadd.f32 %v1695, %v1703
    %v1708 = vtanh.pop %v1706
    %v1709 = vtanh.pop %v1707
    %v1710 = vmul.f32 %v1681, %v1708
    %v1711 = vmul.f32 %v1685, %v1709
    %v1712 = vld [vmem:[%s2 + $0x3] sm:$0x1]
    %v1713 = vld [vmem:[%s2 + $0xb] sm:$0x1]
    %1715 = vset.pattern.permute.xlu0 1
    %1716 = vperm.xlu0 %1715, %v1712
    %v1717 = vpop.permute.xlu0 %1716
    %1720 = vset.pattern.permute.xlu0 1
    %1721 = vperm.xlu0 %1720, %v1713
    %v1722 = vpop.permute.xlu0 %1721
    %v1726 = vrot.slane %v1710, 3
    %v1727 = vrot.slane %v1711, 3
    %1728 = vrot.lane.b32.xlu0 %v1726, 64
    %v1729 = vpop.permute.xlu0 %1728
    %1730 = vrot.lane.b32.xlu0 %v1727, 64
    %v1731 = vpop.permute.xlu0 %1730
    %v1734 = vmul.f32 %v1717, %v1729
    %v1735 = vmul.f32 %v1722, %v1731
    %1738 = vrot.lane.b32.xlu0 %v1734, 64
    %v1739 = vpop.permute.xlu0 %1738
    %1740 = vrot.lane.b32.xlu0 %v1735, 64
    %v1741 = vpop.permute.xlu0 %1740
    %v1744 = vadd.f32 %v1569, %v1739
    %v1745 = vadd.f32 %v1570, %v1741
    %v1746 = vrot.slane %v1711, 2
    %v1747 = vsel %vm1224, %v1746, %v1726
    %1748 = vrot.lane.b32.xlu0 %v1747, 64
    %v1749 = vpop.permute.xlu0 %1748
    %v1750 = vsel %vm975, %v1749, 0
    %1752 = vmatprep.subr.mxu0 %v1060
    %1753 = vmatpush1.msra.mxu0 %v1059
    %1754 = vmatprep.subr.mxu0 %v1062
    %1755 = vmatpush1.msra.mxu0 %v1061
    %1756 = vmatprep.subr.mxu0 %v1064
    %1757 = vmatpush1.msra.mxu0 %v1063
    %1758 = vmatprep.subr.mxu0 %v1066
    %1759 = vmatpush1.msra.mxu0 %v1065
    %1760 = vmatprep.subr.mxu0 %v1068
    %1761 = vmatpush1.msra.mxu0 %v1067
    %1762 = vmatprep.subr.mxu0 %v1070
    %1763 = vmatpush1.msra.mxu0 %v1069
    %1764 = vmatprep.subr.mxu0 %v1072
    %1765 = vmatpush1.msra.mxu0 %v1071
    %1766 = vmatprep.subr.mxu0 %v1074
    %1767 = vmatpush1.msra.mxu0 %v1073
    %1768 = vmatprep.subr.mxu0 0.0
    %1769 = vmatpush1.msra.mxu0 0.0
    %1770 = vmatprep.subr.mxu0 0.0
    %1771 = vmatpush1.msra.mxu0 0.0
    %1772 = vmatprep.subr.mxu0 0.0
    %1773 = vmatpush1.msra.mxu0 0.0
    %1774 = vmatprep.subr.mxu0 0.0
    %1775 = vmatpush1.msra.mxu0 0.0
    %1776 = vmatprep.subr.mxu0 0.0
    %1777 = vmatpush1.msra.mxu0 0.0
    %1778 = vmatprep.subr.mxu0 0.0
    %1779 = vmatpush1.msra.mxu0 0.0
    %1780 = vmatprep.subr.mxu0 0.0
    %1781 = vmatpush1.msra.mxu0 0.0
    %1782 = vmatprep.subr.mxu0 0.0
    %1783 = vmatpush1.msra.mxu0 0.0
    %1784 = vmatprep.subr.mxu0 0.0
    %1785 = vmatpush1.msra.mxu0 0.0
    %1786 = vmatprep.subr.mxu0 0.0
    %1787 = vmatpush1.msra.mxu0 0.0
    %1788 = vmatprep.subr.mxu0 0.0
    %1789 = vmatpush1.msra.mxu0 0.0
    %1790 = vmatprep.subr.mxu0 0.0
    %1791 = vmatpush1.msra.mxu0 0.0
    %1792 = vmatprep.subr.mxu0 0.0
    %1793 = vmatpush1.msra.mxu0 0.0
    %1794 = vmatprep.subr.mxu0 0.0
    %1795 = vmatpush1.msra.mxu0 0.0
    %1796 = vmatprep.subr.mxu0 0.0
    %1797 = vmatpush1.msra.mxu0 0.0
    %1798 = vmatprep.subr.mxu0 0.0
    %1799 = vmatpush1.msra.mxu0 0.0
    %1800 = vmatprep.subr.mxu0 0.0
    %1801 = vmatpush1.msra.mxu0 0.0
    %1802 = vmatprep.subr.mxu0 0.0
    %1803 = vmatpush1.msra.mxu0 0.0
    %1804 = vmatprep.subr.mxu0 0.0
    %1805 = vmatpush1.msra.mxu0 0.0
    %1806 = vmatprep.subr.mxu0 0.0
    %1807 = vmatpush1.msra.mxu0 0.0
    %1808 = vmatprep.subr.mxu0 0.0
    %1809 = vmatpush1.msra.mxu0 0.0
    %1810 = vmatprep.subr.mxu0 0.0
    %1811 = vmatpush1.msra.mxu0 0.0
    %1812 = vmatprep.subr.mxu0 0.0
    %1813 = vmatpush1.msra.mxu0 0.0
    %1814 = vmatprep.subr.mxu0 0.0
    %1815 = vmatpush1.msra.mxu0 0.0
    %1816 = vmatprep.mubr.f32.mxu0 0.0
    %1817 = vmatmul.mubr.f32.gmra.mrb[0].mxu0 %v1750
    %v1818 = vpop.f32.mrb[0].mxu0
    %v1819 = vadd.f32 0.0, %v1818
    %v1820 = vpop.f32.mrb[0].mxu0
    %v1821 = vadd.f32 0.0, %v1820
    %1822 = vdwg.mxu0
    %v1825 = vrot.slane %v1819, 4
    %v1826 = vrot.slane %v1821, 4
    %v1827 = vrot.slane %v1819, 5
    %v1828 = vrot.slane %v1821, 5
    %v1833 = vadd.f32 %v1049, %v1825
    %v1834 = vadd.f32 %v1051, %v1826
    %v1835 = vadd.f32 %v1055, %v1827
    %v1836 = vadd.f32 %v1057, %v1828
    %v1837 = vxor.u32 %v1833, 2147483648
    %v1838 = vxor.u32 %v1834, 2147483648
    %v1839 = vxor.u32 %v1835, 2147483648
    %v1840 = vxor.u32 %v1836, 2147483648
    %v1841 = vmul.f32 %v1837, 1.442695
    %v1842 = vpow.pop %v1841
    %v1843 = vmul.f32 %v1838, 1.442695
    %v1844 = vpow.pop %v1843
    %v1845 = vmul.f32 %v1839, 1.442695
    %v1846 = vpow.pop %v1845
    %v1847 = vmul.f32 %v1840, 1.442695
    %v1848 = vpow.pop %v1847
    %v1849 = vadd.f32 %v1842, 1.0
    %v1850 = vadd.f32 %v1844, 1.0
    %v1851 = vadd.f32 %v1846, 1.0
    %v1852 = vadd.f32 %v1848, 1.0
    %v1853 = vrcp.pop %v1849
    %v1854 = vmul.f32 1.0, %v1853
    %v1855 = vrcp.pop %v1850
    %v1856 = vmul.f32 1.0, %v1855
    %v1857 = vrcp.pop %v1851
    %v1858 = vmul.f32 1.0, %v1857
    %v1859 = vrcp.pop %v1852
    %v1860 = vmul.f32 1.0, %v1859
    %v1861 = vtanh.pop %v1834
    %v1862 = vtanh.pop %v1836
    %v1865 = vrot.slane %v1706, 7
    %v1866 = vrot.slane %v1707, 7
    %v1869 = vmul.f32 %v1854, %v1865
    %v1870 = vmul.f32 %v1858, %v1866
    %v1871 = vmul.f32 %v1854, %v1861
    %v1872 = vmul.f32 %v1858, %v1862
    %1875 = vrot.lane.b32.xlu0 %v1871, 64
    %v1876 = vpop.permute.xlu0 %1875
    %1877 = vrot.lane.b32.xlu0 %v1872, 64
    %v1878 = vpop.permute.xlu0 %1877
    %v1881 = vadd.f32 %v1869, %v1876
    %v1882 = vadd.f32 %v1870, %v1878
    %v1883 = vtanh.pop %v1881
    %v1884 = vtanh.pop %v1882
    %v1885 = vmul.f32 %v1856, %v1883
    %v1886 = vmul.f32 %v1860, %v1884
    %v1887 = vld [vmem:[%s2 + $0x4] sm:$0x1]
    %v1888 = vld [vmem:[%s2 + $0xc] sm:$0x1]
    %1890 = vset.pattern.permute.xlu0 1
    %1891 = vperm.xlu0 %1890, %v1887
    %v1892 = vpop.permute.xlu0 %1891
    %1895 = vset.pattern.permute.xlu0 1
    %1896 = vperm.xlu0 %1895, %v1888
    %v1897 = vpop.permute.xlu0 %1896
    %v1901 = vrot.slane %v1885, 4
    %v1902 = vrot.slane %v1886, 4
    %1903 = vrot.lane.b32.xlu0 %v1901, 64
    %v1904 = vpop.permute.xlu0 %1903
    %1905 = vrot.lane.b32.xlu0 %v1902, 64
    %v1906 = vpop.permute.xlu0 %1905
    %v1909 = vmul.f32 %v1892, %v1904
    %v1910 = vmul.f32 %v1897, %v1906
    %1913 = vrot.lane.b32.xlu0 %v1909, 64
    %v1914 = vpop.permute.xlu0 %1913
    %1915 = vrot.lane.b32.xlu0 %v1910, 64
    %v1916 = vpop.permute.xlu0 %1915
    %v1919 = vadd.f32 %v1744, %v1914
    %v1920 = vadd.f32 %v1745, %v1916
    %v1921 = vrot.slane %v1886, 3
    %v1922 = vsel %vm1224, %v1921, %v1901
    %1923 = vrot.lane.b32.xlu0 %v1922, 64
    %v1924 = vpop.permute.xlu0 %1923
    %v1925 = vsel %vm975, %v1924, 0
    %1927 = vmatprep.subr.mxu0 %v1060
    %1928 = vmatpush1.msra.mxu0 %v1059
    %1929 = vmatprep.subr.mxu0 %v1062
    %1930 = vmatpush1.msra.mxu0 %v1061
    %1931 = vmatprep.subr.mxu0 %v1064
    %1932 = vmatpush1.msra.mxu0 %v1063
    %1933 = vmatprep.subr.mxu0 %v1066
    %1934 = vmatpush1.msra.mxu0 %v1065
    %1935 = vmatprep.subr.mxu0 %v1068
    %1936 = vmatpush1.msra.mxu0 %v1067
    %1937 = vmatprep.subr.mxu0 %v1070
    %1938 = vmatpush1.msra.mxu0 %v1069
    %1939 = vmatprep.subr.mxu0 %v1072
    %1940 = vmatpush1.msra.mxu0 %v1071
    %1941 = vmatprep.subr.mxu0 %v1074
    %1942 = vmatpush1.msra.mxu0 %v1073
    %1943 = vmatprep.subr.mxu0 0.0
    %1944 = vmatpush1.msra.mxu0 0.0
    %1945 = vmatprep.subr.mxu0 0.0
    %1946 = vmatpush1.msra.mxu0 0.0
    %1947 = vmatprep.subr.mxu0 0.0
    %1948 = vmatpush1.msra.mxu0 0.0
    %1949 = vmatprep.subr.mxu0 0.0
    %1950 = vmatpush1.msra.mxu0 0.0
    %1951 = vmatprep.subr.mxu0 0.0
    %1952 = vmatpush1.msra.mxu0 0.0
    %1953 = vmatprep.subr.mxu0 0.0
    %1954 = vmatpush1.msra.mxu0 0.0
    %1955 = vmatprep.subr.mxu0 0.0
    %1956 = vmatpush1.msra.mxu0 0.0
    %1957 = vmatprep.subr.mxu0 0.0
    %1958 = vmatpush1.msra.mxu0 0.0
    %1959 = vmatprep.subr.mxu0 0.0
    %1960 = vmatpush1.msra.mxu0 0.0
    %1961 = vmatprep.subr.mxu0 0.0
    %1962 = vmatpush1.msra.mxu0 0.0
    %1963 = vmatprep.subr.mxu0 0.0
    %1964 = vmatpush1.msra.mxu0 0.0
    %1965 = vmatprep.subr.mxu0 0.0
    %1966 = vmatpush1.msra.mxu0 0.0
    %1967 = vmatprep.subr.mxu0 0.0
    %1968 = vmatpush1.msra.mxu0 0.0
    %1969 = vmatprep.subr.mxu0 0.0
    %1970 = vmatpush1.msra.mxu0 0.0
    %1971 = vmatprep.subr.mxu0 0.0
    %1972 = vmatpush1.msra.mxu0 0.0
    %1973 = vmatprep.subr.mxu0 0.0
    %1974 = vmatpush1.msra.mxu0 0.0
    %1975 = vmatprep.subr.mxu0 0.0
    %1976 = vmatpush1.msra.mxu0 0.0
    %1977 = vmatprep.subr.mxu0 0.0
    %1978 = vmatpush1.msra.mxu0 0.0
    %1979 = vmatprep.subr.mxu0 0.0
    %1980 = vmatpush1.msra.mxu0 0.0
    %1981 = vmatprep.subr.mxu0 0.0
    %1982 = vmatpush1.msra.mxu0 0.0
    %1983 = vmatprep.subr.mxu0 0.0
    %1984 = vmatpush1.msra.mxu0 0.0
    %1985 = vmatprep.subr.mxu0 0.0
    %1986 = vmatpush1.msra.mxu0 0.0
    %1987 = vmatprep.subr.mxu0 0.0
    %1988 = vmatpush1.msra.mxu0 0.0
    %1989 = vmatprep.subr.mxu0 0.0
    %1990 = vmatpush1.msra.mxu0 0.0
    %1991 = vmatprep.mubr.f32.mxu0 0.0
    %1992 = vmatmul.mubr.f32.gmra.mrb[0].mxu0 %v1925
    %v1993 = vpop.f32.mrb[0].mxu0
    %v1994 = vadd.f32 0.0, %v1993
    %v1995 = vpop.f32.mrb[0].mxu0
    %v1996 = vadd.f32 0.0, %v1995
    %1997 = vdwg.mxu0
    %v2000 = vrot.slane %v1994, 3
    %v2001 = vrot.slane %v1996, 3
    %v2002 = vrot.slane %v1994, 4
    %v2003 = vrot.slane %v1996, 4
    %v2008 = vadd.f32 %v1049, %v2000
    %v2009 = vadd.f32 %v1051, %v2001
    %v2010 = vadd.f32 %v1055, %v2002
    %v2011 = vadd.f32 %v1057, %v2003
    %v2012 = vxor.u32 %v2008, 2147483648
    %v2013 = vxor.u32 %v2009, 2147483648
    %v2014 = vxor.u32 %v2010, 2147483648
    %v2015 = vxor.u32 %v2011, 2147483648
    %v2016 = vmul.f32 %v2012, 1.442695
    %v2017 = vpow.pop %v2016
    %v2018 = vmul.f32 %v2013, 1.442695
    %v2019 = vpow.pop %v2018
    %v2020 = vmul.f32 %v2014, 1.442695
    %v2021 = vpow.pop %v2020
    %v2022 = vmul.f32 %v2015, 1.442695
    %v2023 = vpow.pop %v2022
    %v2024 = vadd.f32 %v2017, 1.0
    %v2025 = vadd.f32 %v2019, 1.0
    %v2026 = vadd.f32 %v2021, 1.0
    %v2027 = vadd.f32 %v2023, 1.0
    %v2028 = vrcp.pop %v2024
    %v2029 = vmul.f32 1.0, %v2028
    %v2030 = vrcp.pop %v2025
    %v2031 = vmul.f32 1.0, %v2030
    %v2032 = vrcp.pop %v2026
    %v2033 = vmul.f32 1.0, %v2032
    %v2034 = vrcp.pop %v2027
    %v2035 = vmul.f32 1.0, %v2034
    %v2036 = vtanh.pop %v2009
    %v2037 = vtanh.pop %v2011
    %v2040 = vrot.slane %v1881, 7
    %v2041 = vrot.slane %v1882, 7
    %v2044 = vmul.f32 %v2029, %v2040
    %v2045 = vmul.f32 %v2033, %v2041
    %v2046 = vmul.f32 %v2029, %v2036
    %v2047 = vmul.f32 %v2033, %v2037
    %2050 = vrot.lane.b32.xlu0 %v2046, 64
    %v2051 = vpop.permute.xlu0 %2050
    %2052 = vrot.lane.b32.xlu0 %v2047, 64
    %v2053 = vpop.permute.xlu0 %2052
    %v2056 = vadd.f32 %v2044, %v2051
    %v2057 = vadd.f32 %v2045, %v2053
    %v2058 = vtanh.pop %v2056
    %v2059 = vtanh.pop %v2057
    %v2060 = vmul.f32 %v2031, %v2058
    %v2061 = vmul.f32 %v2035, %v2059
    %v2062 = vld [vmem:[%s2 + $0x5] sm:$0x1]
    %v2063 = vld [vmem:[%s2 + $0xd] sm:$0x1]
    %2065 = vset.pattern.permute.xlu0 1
    %2066 = vperm.xlu0 %2065, %v2062
    %v2067 = vpop.permute.xlu0 %2066
    %2070 = vset.pattern.permute.xlu0 1
    %2071 = vperm.xlu0 %2070, %v2063
    %v2072 = vpop.permute.xlu0 %2071
    %v2076 = vrot.slane %v2060, 5
    %v2077 = vrot.slane %v2061, 5
    %2078 = vrot.lane.b32.xlu0 %v2076, 64
    %v2079 = vpop.permute.xlu0 %2078
    %2080 = vrot.lane.b32.xlu0 %v2077, 64
    %v2081 = vpop.permute.xlu0 %2080
    %v2084 = vmul.f32 %v2067, %v2079
    %v2085 = vmul.f32 %v2072, %v2081
    %2088 = vrot.lane.b32.xlu0 %v2084, 64
    %v2089 = vpop.permute.xlu0 %2088
    %2090 = vrot.lane.b32.xlu0 %v2085, 64
    %v2091 = vpop.permute.xlu0 %2090
    %v2094 = vadd.f32 %v1919, %v2089
    %v2095 = vadd.f32 %v1920, %v2091
    %v2096 = vrot.slane %v2061, 4
    %v2097 = vsel %vm1224, %v2096, %v2076
    %2098 = vrot.lane.b32.xlu0 %v2097, 64
    %v2099 = vpop.permute.xlu0 %2098
    %v2100 = vsel %vm975, %v2099, 0
    %2102 = vmatprep.subr.mxu0 %v1060
    %2103 = vmatpush1.msra.mxu0 %v1059
    %2104 = vmatprep.subr.mxu0 %v1062
    %2105 = vmatpush1.msra.mxu0 %v1061
    %2106 = vmatprep.subr.mxu0 %v1064
    %2107 = vmatpush1.msra.mxu0 %v1063
    %2108 = vmatprep.subr.mxu0 %v1066
    %2109 = vmatpush1.msra.mxu0 %v1065
    %2110 = vmatprep.subr.mxu0 %v1068
    %2111 = vmatpush1.msra.mxu0 %v1067
    %2112 = vmatprep.subr.mxu0 %v1070
    %2113 = vmatpush1.msra.mxu0 %v1069
    %2114 = vmatprep.subr.mxu0 %v1072
    %2115 = vmatpush1.msra.mxu0 %v1071
    %2116 = vmatprep.subr.mxu0 %v1074
    %2117 = vmatpush1.msra.mxu0 %v1073
    %2118 = vmatprep.subr.mxu0 0.0
    %2119 = vmatpush1.msra.mxu0 0.0
    %2120 = vmatprep.subr.mxu0 0.0
    %2121 = vmatpush1.msra.mxu0 0.0
    %2122 = vmatprep.subr.mxu0 0.0
    %2123 = vmatpush1.msra.mxu0 0.0
    %2124 = vmatprep.subr.mxu0 0.0
    %2125 = vmatpush1.msra.mxu0 0.0
    %2126 = vmatprep.subr.mxu0 0.0
    %2127 = vmatpush1.msra.mxu0 0.0
    %2128 = vmatprep.subr.mxu0 0.0
    %2129 = vmatpush1.msra.mxu0 0.0
    %2130 = vmatprep.subr.mxu0 0.0
    %2131 = vmatpush1.msra.mxu0 0.0
    %2132 = vmatprep.subr.mxu0 0.0
    %2133 = vmatpush1.msra.mxu0 0.0
    %2134 = vmatprep.subr.mxu0 0.0
    %2135 = vmatpush1.msra.mxu0 0.0
    %2136 = vmatprep.subr.mxu0 0.0
    %2137 = vmatpush1.msra.mxu0 0.0
    %2138 = vmatprep.subr.mxu0 0.0
    %2139 = vmatpush1.msra.mxu0 0.0
    %2140 = vmatprep.subr.mxu0 0.0
    %2141 = vmatpush1.msra.mxu0 0.0
    %2142 = vmatprep.subr.mxu0 0.0
    %2143 = vmatpush1.msra.mxu0 0.0
    %2144 = vmatprep.subr.mxu0 0.0
    %2145 = vmatpush1.msra.mxu0 0.0
    %2146 = vmatprep.subr.mxu0 0.0
    %2147 = vmatpush1.msra.mxu0 0.0
    %2148 = vmatprep.subr.mxu0 0.0
    %2149 = vmatpush1.msra.mxu0 0.0
    %2150 = vmatprep.subr.mxu0 0.0
    %2151 = vmatpush1.msra.mxu0 0.0
    %2152 = vmatprep.subr.mxu0 0.0
    %2153 = vmatpush1.msra.mxu0 0.0
    %2154 = vmatprep.subr.mxu0 0.0
    %2155 = vmatpush1.msra.mxu0 0.0
    %2156 = vmatprep.subr.mxu0 0.0
    %2157 = vmatpush1.msra.mxu0 0.0
    %2158 = vmatprep.subr.mxu0 0.0
    %2159 = vmatpush1.msra.mxu0 0.0
    %2160 = vmatprep.subr.mxu0 0.0
    %2161 = vmatpush1.msra.mxu0 0.0
    %2162 = vmatprep.subr.mxu0 0.0
    %2163 = vmatpush1.msra.mxu0 0.0
    %2164 = vmatprep.subr.mxu0 0.0
    %2165 = vmatpush1.msra.mxu0 0.0
    %2166 = vmatprep.mubr.f32.mxu0 0.0
    %2167 = vmatmul.mubr.f32.gmra.mrb[0].mxu0 %v2100
    %v2168 = vpop.f32.mrb[0].mxu0
    %v2169 = vadd.f32 0.0, %v2168
    %v2170 = vpop.f32.mrb[0].mxu0
    %v2171 = vadd.f32 0.0, %v2170
    %2172 = vdwg.mxu0
    %v2175 = vrot.slane %v2169, 2
    %v2176 = vrot.slane %v2171, 2
    %v2177 = vrot.slane %v2169, 3
    %v2178 = vrot.slane %v2171, 3
    %v2183 = vadd.f32 %v1049, %v2175
    %v2184 = vadd.f32 %v1051, %v2176
    %v2185 = vadd.f32 %v1055, %v2177
    %v2186 = vadd.f32 %v1057, %v2178
    %v2187 = vxor.u32 %v2183, 2147483648
    %v2188 = vxor.u32 %v2184, 2147483648
    %v2189 = vxor.u32 %v2185, 2147483648
    %v2190 = vxor.u32 %v2186, 2147483648
    %v2191 = vmul.f32 %v2187, 1.442695
    %v2192 = vpow.pop %v2191
    %v2193 = vmul.f32 %v2188, 1.442695
    %v2194 = vpow.pop %v2193
    %v2195 = vmul.f32 %v2189, 1.442695
    %v2196 = vpow.pop %v2195
    %v2197 = vmul.f32 %v2190, 1.442695
    %v2198 = vpow.pop %v2197
    %v2199 = vadd.f32 %v2192, 1.0
    %v2200 = vadd.f32 %v2194, 1.0
    %v2201 = vadd.f32 %v2196, 1.0
    %v2202 = vadd.f32 %v2198, 1.0
    %v2203 = vrcp.pop %v2199
    %v2204 = vmul.f32 1.0, %v2203
    %v2205 = vrcp.pop %v2200
    %v2206 = vmul.f32 1.0, %v2205
    %v2207 = vrcp.pop %v2201
    %v2208 = vmul.f32 1.0, %v2207
    %v2209 = vrcp.pop %v2202
    %v2210 = vmul.f32 1.0, %v2209
    %v2211 = vtanh.pop %v2184
    %v2212 = vtanh.pop %v2186
    %v2215 = vrot.slane %v2056, 7
    %v2216 = vrot.slane %v2057, 7
    %v2219 = vmul.f32 %v2204, %v2215
    %v2220 = vmul.f32 %v2208, %v2216
    %v2221 = vmul.f32 %v2204, %v2211
    %v2222 = vmul.f32 %v2208, %v2212
    %2225 = vrot.lane.b32.xlu0 %v2221, 64
    %v2226 = vpop.permute.xlu0 %2225
    %2227 = vrot.lane.b32.xlu0 %v2222, 64
    %v2228 = vpop.permute.xlu0 %2227
    %v2231 = vadd.f32 %v2219, %v2226
    %v2232 = vadd.f32 %v2220, %v2228
    %v2233 = vtanh.pop %v2231
    %v2234 = vtanh.pop %v2232
    %v2235 = vmul.f32 %v2206, %v2233
    %v2236 = vmul.f32 %v2210, %v2234
    %v2237 = vld [vmem:[%s2 + $0x6] sm:$0x1]
    %v2238 = vld [vmem:[%s2 + $0xe] sm:$0x1]
    %2240 = vset.pattern.permute.xlu0 1
    %2241 = vperm.xlu0 %2240, %v2237
    %v2242 = vpop.permute.xlu0 %2241
    %2245 = vset.pattern.permute.xlu0 1
    %2246 = vperm.xlu0 %2245, %v2238
    %v2247 = vpop.permute.xlu0 %2246
    %v2251 = vrot.slane %v2235, 6
    %v2252 = vrot.slane %v2236, 6
    %2253 = vrot.lane.b32.xlu0 %v2251, 64
    %v2254 = vpop.permute.xlu0 %2253
    %2255 = vrot.lane.b32.xlu0 %v2252, 64
    %v2256 = vpop.permute.xlu0 %2255
    %v2259 = vmul.f32 %v2242, %v2254
    %v2260 = vmul.f32 %v2247, %v2256
    %2263 = vrot.lane.b32.xlu0 %v2259, 64
    %v2264 = vpop.permute.xlu0 %2263
    %2265 = vrot.lane.b32.xlu0 %v2260, 64
    %v2266 = vpop.permute.xlu0 %2265
    %v2269 = vadd.f32 %v2094, %v2264
    %v2270 = vadd.f32 %v2095, %v2266
    %v2271 = vrot.slane %v2236, 5
    %v2272 = vsel %vm1224, %v2271, %v2251
    %2273 = vrot.lane.b32.xlu0 %v2272, 64
    %v2274 = vpop.permute.xlu0 %2273
    %v2275 = vsel %vm975, %v2274, 0
    %2277 = vmatprep.subr.mxu0 %v1060
    %2278 = vmatpush1.msra.mxu0 %v1059
    %2279 = vmatprep.subr.mxu0 %v1062
    %2280 = vmatpush1.msra.mxu0 %v1061
    %2281 = vmatprep.subr.mxu0 %v1064
    %2282 = vmatpush1.msra.mxu0 %v1063
    %2283 = vmatprep.subr.mxu0 %v1066
    %2284 = vmatpush1.msra.mxu0 %v1065
    %2285 = vmatprep.subr.mxu0 %v1068
    %2286 = vmatpush1.msra.mxu0 %v1067
    %2287 = vmatprep.subr.mxu0 %v1070
    %2288 = vmatpush1.msra.mxu0 %v1069
    %2289 = vmatprep.subr.mxu0 %v1072
    %2290 = vmatpush1.msra.mxu0 %v1071
    %2291 = vmatprep.subr.mxu0 %v1074
    %2292 = vmatpush1.msra.mxu0 %v1073
    %2293 = vmatprep.subr.mxu0 0.0
    %2294 = vmatpush1.msra.mxu0 0.0
    %2295 = vmatprep.subr.mxu0 0.0
    %2296 = vmatpush1.msra.mxu0 0.0
    %2297 = vmatprep.subr.mxu0 0.0
    %2298 = vmatpush1.msra.mxu0 0.0
    %2299 = vmatprep.subr.mxu0 0.0
    %2300 = vmatpush1.msra.mxu0 0.0
    %2301 = vmatprep.subr.mxu0 0.0
    %2302 = vmatpush1.msra.mxu0 0.0
    %2303 = vmatprep.subr.mxu0 0.0
    %2304 = vmatpush1.msra.mxu0 0.0
    %2305 = vmatprep.subr.mxu0 0.0
    %2306 = vmatpush1.msra.mxu0 0.0
    %2307 = vmatprep.subr.mxu0 0.0
    %2308 = vmatpush1.msra.mxu0 0.0
    %2309 = vmatprep.subr.mxu0 0.0
    %2310 = vmatpush1.msra.mxu0 0.0
    %2311 = vmatprep.subr.mxu0 0.0
    %2312 = vmatpush1.msra.mxu0 0.0
    %2313 = vmatprep.subr.mxu0 0.0
    %2314 = vmatpush1.msra.mxu0 0.0
    %2315 = vmatprep.subr.mxu0 0.0
    %2316 = vmatpush1.msra.mxu0 0.0
    %2317 = vmatprep.subr.mxu0 0.0
    %2318 = vmatpush1.msra.mxu0 0.0
    %2319 = vmatprep.subr.mxu0 0.0
    %2320 = vmatpush1.msra.mxu0 0.0
    %2321 = vmatprep.subr.mxu0 0.0
    %2322 = vmatpush1.msra.mxu0 0.0
    %2323 = vmatprep.subr.mxu0 0.0
    %2324 = vmatpush1.msra.mxu0 0.0
    %2325 = vmatprep.subr.mxu0 0.0
    %2326 = vmatpush1.msra.mxu0 0.0
    %2327 = vmatprep.subr.mxu0 0.0
    %2328 = vmatpush1.msra.mxu0 0.0
    %2329 = vmatprep.subr.mxu0 0.0
    %2330 = vmatpush1.msra.mxu0 0.0
    %2331 = vmatprep.subr.mxu0 0.0
    %2332 = vmatpush1.msra.mxu0 0.0
    %2333 = vmatprep.subr.mxu0 0.0
    %2334 = vmatpush1.msra.mxu0 0.0
    %2335 = vmatprep.subr.mxu0 0.0
    %2336 = vmatpush1.msra.mxu0 0.0
    %2337 = vmatprep.subr.mxu0 0.0
    %2338 = vmatpush1.msra.mxu0 0.0
    %2339 = vmatprep.subr.mxu0 0.0
    %2340 = vmatpush1.msra.mxu0 0.0
    %2341 = vmatprep.mubr.f32.mxu0 0.0
    %2342 = vmatmul.mubr.f32.gmra.mrb[0].mxu0 %v2275
    %v2343 = vpop.f32.mrb[0].mxu0
    %v2344 = vadd.f32 0.0, %v2343
    %v2345 = vpop.f32.mrb[0].mxu0
    %v2346 = vadd.f32 0.0, %v2345
    %2347 = vdwg.mxu0
    %v2350 = vrot.slane %v2344, 1
    %v2351 = vrot.slane %v2346, 1
    %v2352 = vrot.slane %v2344, 2
    %v2353 = vrot.slane %v2346, 2
    %v2358 = vadd.f32 %v1049, %v2350
    %v2359 = vadd.f32 %v1051, %v2351
    %v2360 = vadd.f32 %v1055, %v2352
    %v2361 = vadd.f32 %v1057, %v2353
    %v2362 = vxor.u32 %v2358, 2147483648
    %v2363 = vxor.u32 %v2359, 2147483648
    %v2364 = vxor.u32 %v2360, 2147483648
    %v2365 = vxor.u32 %v2361, 2147483648
    %v2366 = vmul.f32 %v2362, 1.442695
    %v2367 = vpow.pop %v2366
    %v2368 = vmul.f32 %v2363, 1.442695
    %v2369 = vpow.pop %v2368
    %v2370 = vmul.f32 %v2364, 1.442695
    %v2371 = vpow.pop %v2370
    %v2372 = vmul.f32 %v2365, 1.442695
    %v2373 = vpow.pop %v2372
    %v2374 = vadd.f32 %v2367, 1.0
    %v2375 = vadd.f32 %v2369, 1.0
    %v2376 = vadd.f32 %v2371, 1.0
    %v2377 = vadd.f32 %v2373, 1.0
    %v2378 = vrcp.pop %v2374
    %v2379 = vmul.f32 1.0, %v2378
    %v2380 = vrcp.pop %v2375
    %v2381 = vmul.f32 1.0, %v2380
    %v2382 = vrcp.pop %v2376
    %v2383 = vmul.f32 1.0, %v2382
    %v2384 = vrcp.pop %v2377
    %v2385 = vmul.f32 1.0, %v2384
    %v2386 = vtanh.pop %v2359
    %v2387 = vtanh.pop %v2361
    %v2390 = vrot.slane %v2231, 7
    %v2391 = vrot.slane %v2232, 7
    %v2394 = vmul.f32 %v2379, %v2390
    %v2395 = vmul.f32 %v2383, %v2391
    %v2396 = vmul.f32 %v2379, %v2386
    %v2397 = vmul.f32 %v2383, %v2387
    %2400 = vrot.lane.b32.xlu0 %v2396, 64
    %v2401 = vpop.permute.xlu0 %2400
    %2402 = vrot.lane.b32.xlu0 %v2397, 64
    %v2403 = vpop.permute.xlu0 %2402
    %v2406 = vadd.f32 %v2394, %v2401
    %v2407 = vadd.f32 %v2395, %v2403
    %v2408 = vtanh.pop %v2406
    %v2409 = vtanh.pop %v2407
    %v2410 = vmul.f32 %v2381, %v2408
    %v2411 = vmul.f32 %v2385, %v2409
    %v2412 = vld [vmem:[%s2 + $0x7] sm:$0x1]
    %v2413 = vld [vmem:[%s2 + $0xf] sm:$0x1]
    %2415 = vset.pattern.permute.xlu0 1
    %2416 = vperm.xlu0 %2415, %v2412
    %v2417 = vpop.permute.xlu0 %2416
    %2420 = vset.pattern.permute.xlu0 1
    %2421 = vperm.xlu0 %2420, %v2413
    %v2422 = vpop.permute.xlu0 %2421
    %v2426 = vrot.slane %v2410, 7
    %v2427 = vrot.slane %v2411, 7
    %2428 = vrot.lane.b32.xlu0 %v2426, 64
    %v2429 = vpop.permute.xlu0 %2428
    %2430 = vrot.lane.b32.xlu0 %v2427, 64
    %v2431 = vpop.permute.xlu0 %2430
    %v2434 = vmul.f32 %v2417, %v2429
    %v2435 = vmul.f32 %v2422, %v2431
    %2438 = vrot.lane.b32.xlu0 %v2434, 64
    %v2439 = vpop.permute.xlu0 %2438
    %2440 = vrot.lane.b32.xlu0 %v2435, 64
    %v2441 = vpop.permute.xlu0 %2440
    %v2444 = vadd.f32 %v2269, %v2439
    %v2445 = vadd.f32 %v2270, %v2441
    %v2446 = vld [vmem:[%s3] sm:$0xff]
    %v2447 = vld [vmem:[%s4] sm:$0xff]
    %v2448 = vld [vmem:[%s5] sm:$0xff]
    %v2449 = vld [vmem:[%s5 + $0x8] sm:$0xff]
    %v2450 = vld [vmem:[%s5 + $0x10] sm:$0xff]
    %v2451 = vld [vmem:[%s5 + $0x18] sm:$0xff]
    %v2452 = vld [vmem:[%s5 + $0x20] sm:$0xff]
    %v2453 = vld [vmem:[%s5 + $0x28] sm:$0xff]
    %v2454 = vld [vmem:[%s5 + $0x30] sm:$0xff]
    %v2455 = vld [vmem:[%s5 + $0x38] sm:$0xff]
    %v2456 = vld [vmem:[%s5 + $0x40] sm:$0xff]
    %v2457 = vld [vmem:[%s5 + $0x48] sm:$0xff]
    %v2458 = vld [vmem:[%s5 + $0x50] sm:$0xff]
    %v2459 = vld [vmem:[%s5 + $0x58] sm:$0xff]
    %v2460 = vld [vmem:[%s5 + $0x60] sm:$0xff]
    %v2461 = vld [vmem:[%s5 + $0x68] sm:$0xff]
    %v2462 = vld [vmem:[%s5 + $0x70] sm:$0xff]
    %v2463 = vld [vmem:[%s5 + $0x78] sm:$0xff]
    %v2464 = vld [vmem:[%s9] sm:$0x1]
    %v2465 = vmul.f32 %v914, %v914
    %v2466 = vmul.f32 %v915, %v915
    %v2467 = vsel %vm975, %v2465, 0.0
    %2468 = vadd.xlane.f32.xlu0 %v2467
    %v2469 = vpop.xlane.xlu0 %2468
    %v2470 = vsel %vm975, %v2466, 0.0
    %2471 = vadd.xlane.f32.xlu0 %v2470
    %v2472 = vpop.xlane.xlu0 %2471
    %v2473 = vrcp.pop 64.0
    %v2474 = vmul.f32 %v2469, %v2473
    %v2475 = vmul.f32 %v2472, %v2473
    %v2476 = vadd.f32 %v2474, 1e-05
    %v2477 = vadd.f32 %v2475, 1e-05
    %v2478 = vrsqrt.pop %v2476
    %v2479 = vrsqrt.pop %v2477
    %v2480 = vmul.f32 %v914, %v2478
    %v2481 = vmul.f32 %v915, %v2479
    %v2483 = vlaneseq
    %v2484 = vshrl.u32 %v2483, 7
    %v2485 = vsub.s32 0, %v2484
    %v2486 = vrot.slane %v2464, %v2485
    %v2488 = vmul.f32 %v2480, %v2486
    %v2489 = vmul.f32 %v2481, %v2486
    %v2490 = vpack.c.bf16 %v2489, %v2488
    %v2491 = vld [vmem:[%s10] sm:$0xff]
    %v2492 = vld [vmem:[%s10 + $0x8] sm:$0xff]
    %v2493 = vld [vmem:[%s10 + $0x10] sm:$0xff]
    %v2494 = vld [vmem:[%s10 + $0x18] sm:$0xff]
    %v2495 = vld [vmem:[%s10 + $0x20] sm:$0xff]
    %v2496 = vld [vmem:[%s10 + $0x28] sm:$0xff]
    %v2497 = vld [vmem:[%s10 + $0x30] sm:$0xff]
    %v2498 = vld [vmem:[%s10 + $0x38] sm:$0xff]
    %v2507 = vunpack.c.l.b16 %v2491
    %v2508 = vunpack.c.h.b16 %v2491
    %v2509 = vunpack.c.l.b16 %v2492
    %v2510 = vunpack.c.h.b16 %v2492
    %v2511 = vunpack.c.l.b16 %v2493
    %v2512 = vunpack.c.h.b16 %v2493
    %v2513 = vunpack.c.l.b16 %v2494
    %v2514 = vunpack.c.h.b16 %v2494
    %v2515 = vunpack.c.l.b16 %v2495
    %v2516 = vunpack.c.h.b16 %v2495
    %v2517 = vunpack.c.l.b16 %v2496
    %v2518 = vunpack.c.h.b16 %v2496
    %v2519 = vunpack.c.l.b16 %v2497
    %v2520 = vunpack.c.h.b16 %v2497
    %v2521 = vunpack.c.l.b16 %v2498
    %v2522 = vunpack.c.h.b16 %v2498
    %v2523 = vpack.c.b16 %v2509, %v2507
    %v2524 = vpack.c.b16 %v2510, %v2508
    %v2525 = vpack.c.b16 %v2513, %v2511
    %v2526 = vpack.c.b16 %v2514, %v2512
    %v2527 = vpack.c.b16 %v2517, %v2515
    %v2528 = vpack.c.b16 %v2518, %v2516
    %v2529 = vpack.c.b16 %v2521, %v2519
    %v2530 = vpack.c.b16 %v2522, %v2520
    %v2540 = vsel %vm975, %v2490, 0
    %2542 = vmatprep.subr.bf16.mxu0 %v2524
    %2543 = vmatpush1.bf16.msra.mxu0 %v2523
    %2544 = vmatprep.subr.bf16.mxu0 %v2526
    %2545 = vmatpush1.bf16.msra.mxu0 %v2525
    %2546 = vmatprep.subr.bf16.mxu0 %v2528
    %2547 = vmatpush1.bf16.msra.mxu0 %v2527
    %2548 = vmatprep.subr.bf16.mxu0 %v2530
    %2549 = vmatpush1.bf16.msra.mxu0 %v2529
    %2550 = vmatprep.subr.bf16.mxu0 0
    %2551 = vmatpush1.bf16.msra.mxu0 0
    %2552 = vmatprep.subr.bf16.mxu0 0
    %2553 = vmatpush1.bf16.msra.mxu0 0
    %2554 = vmatprep.subr.bf16.mxu0 0
    %2555 = vmatpush1.bf16.msra.mxu0 0
    %2556 = vmatprep.subr.bf16.mxu0 0
    %2557 = vmatpush1.bf16.msra.mxu0 0
    %2558 = vmatprep.subr.bf16.mxu0 0
    %2559 = vmatpush1.bf16.msra.mxu0 0
    %2560 = vmatprep.subr.bf16.mxu0 0
    %2561 = vmatpush1.bf16.msra.mxu0 0
    %2562 = vmatprep.subr.bf16.mxu0 0
    %2563 = vmatpush1.bf16.msra.mxu0 0
    %2564 = vmatprep.subr.bf16.mxu0 0
    %2565 = vmatpush1.bf16.msra.mxu0 0
    %2566 = vmatprep.subr.bf16.mxu0 0
    %2567 = vmatpush1.bf16.msra.mxu0 0
    %2568 = vmatprep.subr.bf16.mxu0 0
    %2569 = vmatpush1.bf16.msra.mxu0 0
    %2570 = vmatprep.subr.bf16.mxu0 0
    %2571 = vmatpush1.bf16.msra.mxu0 0
    %2572 = vmatprep.subr.bf16.mxu0 0
    %2573 = vmatpush1.bf16.msra.mxu0 0
    %2574 = vmatprep.mubr.bf16.mxu0 0
    %2575 = vmatmul.mubr.bf16.gmra.mrb[0].mxu0 %v2540
    %v2576 = vpop.f32.mrb[0].mxu0
    %v2577 = vadd.f32 0.0, %v2576
    %v2578 = vpop.f32.mrb[0].mxu0
    %v2579 = vadd.f32 0.0, %v2578
    %v2580 = vpop.f32.mrb[0].mxu0
    %v2581 = vadd.f32 0.0, %v2580
    %v2582 = vpop.f32.mrb[0].mxu0
    %v2583 = vadd.f32 0.0, %v2582
    %2584 = vdwg.mxu0
    %2585 = vmatprep.subr.mxu0 0.0
    %2586 = vmatpush1.msra.mxu0 %v2448
    %2587 = vmatprep.subr.mxu0 0.0
    %2588 = vmatpush1.msra.mxu0 %v2449
    %2589 = vmatprep.subr.mxu0 0.0
    %2590 = vmatpush1.msra.mxu0 %v2450
    %2591 = vmatprep.subr.mxu0 0.0
    %2592 = vmatpush1.msra.mxu0 %v2451
    %2593 = vmatprep.subr.mxu0 0.0
    %2594 = vmatpush1.msra.mxu0 %v2452
    %2595 = vmatprep.subr.mxu0 0.0
    %2596 = vmatpush1.msra.mxu0 %v2453
    %2597 = vmatprep.subr.mxu0 0.0
    %2598 = vmatpush1.msra.mxu0 %v2454
    %2599 = vmatprep.subr.mxu0 0.0
    %2600 = vmatpush1.msra.mxu0 %v2455
    %2601 = vmatprep.subr.mxu0 0.0
    %2602 = vmatpush1.msra.mxu0 %v2456
    %2603 = vmatprep.subr.mxu0 0.0
    %2604 = vmatpush1.msra.mxu0 %v2457
    %2605 = vmatprep.subr.mxu0 0.0
    %2606 = vmatpush1.msra.mxu0 %v2458
    %2607 = vmatprep.subr.mxu0 0.0
    %2608 = vmatpush1.msra.mxu0 %v2459
    %2609 = vmatprep.subr.mxu0 0.0
    %2610 = vmatpush1.msra.mxu0 %v2460
    %2611 = vmatprep.subr.mxu0 0.0
    %2612 = vmatpush1.msra.mxu0 %v2461
    %2613 = vmatprep.subr.mxu0 0.0
    %2614 = vmatpush1.msra.mxu0 %v2462
    %2615 = vmatprep.subr.mxu0 0.0
    %2616 = vmatpush1.msra.mxu0 %v2463
    %2617 = vmatprep.subr.mxu0 0.0
    %2618 = vmatpush1.msra.mxu0 0.0
    %2619 = vmatprep.subr.mxu0 0.0
    %2620 = vmatpush1.msra.mxu0 0.0
    %2621 = vmatprep.subr.mxu0 0.0
    %2622 = vmatpush1.msra.mxu0 0.0
    %2623 = vmatprep.subr.mxu0 0.0
    %2624 = vmatpush1.msra.mxu0 0.0
    %2625 = vmatprep.subr.mxu0 0.0
    %2626 = vmatpush1.msra.mxu0 0.0
    %2627 = vmatprep.subr.mxu0 0.0
    %2628 = vmatpush1.msra.mxu0 0.0
    %2629 = vmatprep.subr.mxu0 0.0
    %2630 = vmatpush1.msra.mxu0 0.0
    %2631 = vmatprep.subr.mxu0 0.0
    %2632 = vmatpush1.msra.mxu0 0.0
    %2633 = vmatprep.subr.mxu0 0.0
    %2634 = vmatpush1.msra.mxu0 0.0
    %2635 = vmatprep.subr.mxu0 0.0
    %2636 = vmatpush1.msra.mxu0 0.0
    %2637 = vmatprep.subr.mxu0 0.0
    %2638 = vmatpush1.msra.mxu0 0.0
    %2639 = vmatprep.subr.mxu0 0.0
    %2640 = vmatpush1.msra.mxu0 0.0
    %2641 = vmatprep.subr.mxu0 0.0
    %2642 = vmatpush1.msra.mxu0 0.0
    %2643 = vmatprep.subr.mxu0 0.0
    %2644 = vmatpush1.msra.mxu0 0.0
    %2645 = vmatprep.subr.mxu0 0.0
    %2646 = vmatpush1.msra.mxu0 0.0
    %2647 = vmatprep.subr.mxu0 0.0
    %2648 = vmatpush1.msra.mxu0 0.0
    %2649 = vmatprep.mubr.f32.mxu0 0.0
    %2650 = vmatmul.mubr.f32.gmra.mrb[0].mxu0 %v2577
    %v2651 = vpop.f32.mrb[0].mxu0
    %v2652 = vadd.f32 0.0, %v2651
    %v2653 = vpop.f32.mrb[0].mxu0
    %2654 = vmatprep.mubr.f32.mxu0 0.0
    %2655 = vmatmul.mubr.f32.gmra.mrb[0].mxu0 %v2581
    %v2656 = vpop.f32.mrb[0].mxu0
    %v2657 = vadd.f32 0.0, %v2656
    %v2658 = vpop.f32.mrb[0].mxu0
    %2659 = vdwg.mxu0
    %v2660 = vmul.f32 %v2577, %v2446
    %v2661 = vmul.f32 %v2581, %v2446
    %v2662 = vmul.f32 %v2652, %v2447
    %v2663 = vmul.f32 %v2657, %v2447
    %v2664 = vadd.f32 %v2660, %v2662
    %v2665 = vadd.f32 %v2661, %v2663
    %2667 = vrot.lane.b32.xlu0 %v2664, 64
    %v2668 = vpop.permute.xlu0 %2667
    %vm2669 = vcmask 130048
    %v2670 = vsel %vm2669, %v2664, 0
    %v2672 = vsel %vm2669, %v2668, 0
    %2674 = vmatprep.subr.mxu0 0.0
    %2675 = vmatpush1.xpose.msra.mxu0 %v2672
    %2676 = vmatprep.subr.mxu0 0.0
    %2677 = vmatpush1.xpose.msra.mxu0 0.0
    %2678 = vmatprep.subr.mxu0 0.0
    %2679 = vmatpush1.xpose.msra.mxu0 0.0
    %2680 = vmatprep.subr.mxu0 0.0
    %2681 = vmatpush1.xpose.msra.mxu0 0.0
    %2682 = vmatprep.subr.mxu0 0.0
    %2683 = vmatpush1.xpose.msra.mxu0 0.0
    %2684 = vmatprep.subr.mxu0 0.0
    %2685 = vmatpush1.xpose.msra.mxu0 0.0
    %2686 = vmatprep.subr.mxu0 0.0
    %2687 = vmatpush1.xpose.msra.mxu0 0.0
    %2688 = vmatprep.subr.mxu0 0.0
    %2689 = vmatpush1.xpose.msra.mxu0 0.0
    %2690 = vmatprep.subr.mxu0 0.0
    %2691 = vmatpush1.xpose.msra.mxu0 0.0
    %2692 = vmatprep.subr.mxu0 0.0
    %2693 = vmatpush1.xpose.msra.mxu0 0.0
    %2694 = vmatprep.subr.mxu0 0.0
    %2695 = vmatpush1.xpose.msra.mxu0 0.0
    %2696 = vmatprep.subr.mxu0 0.0
    %2697 = vmatpush1.xpose.msra.mxu0 0.0
    %2698 = vmatprep.subr.mxu0 0.0
    %2699 = vmatpush1.xpose.msra.mxu0 0.0
    %2700 = vmatprep.subr.mxu0 0.0
    %2701 = vmatpush1.xpose.msra.mxu0 0.0
    %2702 = vmatprep.subr.mxu0 0.0
    %2703 = vmatpush1.xpose.msra.mxu0 0.0
    %2704 = vmatprep.subr.mxu0 0.0
    %2705 = vmatpush1.xpose.msra.mxu0 0.0
    %2706 = vmatprep.subr.mxu0 0.0
    %2707 = vmatpush1.xpose.msra.mxu0 0.0
    %2708 = vmatprep.subr.mxu0 0.0
    %2709 = vmatpush1.xpose.msra.mxu0 0.0
    %2710 = vmatprep.subr.mxu0 0.0
    %2711 = vmatpush1.xpose.msra.mxu0 0.0
    %2712 = vmatprep.subr.mxu0 0.0
    %2713 = vmatpush1.xpose.msra.mxu0 0.0
    %2714 = vmatprep.subr.mxu0 0.0
    %2715 = vmatpush1.xpose.msra.mxu0 0.0
    %2716 = vmatprep.subr.mxu0 0.0
    %2717 = vmatpush1.xpose.msra.mxu0 0.0
    %2718 = vmatprep.subr.mxu0 0.0
    %2719 = vmatpush1.xpose.msra.mxu0 0.0
    %2720 = vmatprep.subr.mxu0 0.0
    %2721 = vmatpush1.xpose.msra.mxu0 0.0
    %2722 = vmatprep.subr.mxu0 0.0
    %2723 = vmatpush1.xpose.msra.mxu0 0.0
    %2724 = vmatprep.subr.mxu0 0.0
    %2725 = vmatpush1.xpose.msra.mxu0 0.0
    %2726 = vmatprep.subr.mxu0 0.0
    %2727 = vmatpush1.xpose.msra.mxu0 0.0
    %2728 = vmatprep.subr.mxu0 0.0
    %2729 = vmatpush1.xpose.msra.mxu0 0.0
    %2730 = vmatprep.subr.mxu0 0.0
    %2731 = vmatpush1.xpose.msra.mxu0 0.0
    %2732 = vmatprep.subr.mxu0 0.0
    %2733 = vmatpush1.xpose.msra.mxu0 0.0
    %2734 = vmatprep.subr.mxu0 0.0
    %2735 = vmatpush1.xpose.msra.mxu0 0.0
    %2736 = vmatprep.subr.mxu0 0.0
    %2737 = vmatpush1.xpose.msra.mxu0 0.0
    %2738 = vmatprep.mubr.f32.mxu0 0.0
    %2739 = vmatmul.mubr.f32.gmra.mrb[0].mxu0 %v2670
    %v2740 = vpop.f32.mrb[0].mxu0
    %v2741 = vadd.f32 0.0, %v2740
    %v2742 = vpop.f32.mrb[0].mxu0
    %2743 = vdwg.mxu0
    %2745 = vrot.lane.b32.xlu0 %v2665, 64
    %v2746 = vpop.permute.xlu0 %2745
    %v2747 = vsel %vm2669, %v2665, 0
    %v2749 = vsel %vm2669, %v2746, 0
    %2751 = vmatprep.subr.mxu0 0.0
    %2752 = vmatpush1.xpose.msra.mxu0 %v2749
    %2753 = vmatprep.subr.mxu0 0.0
    %2754 = vmatpush1.xpose.msra.mxu0 0.0
    %2755 = vmatprep.subr.mxu0 0.0
    %2756 = vmatpush1.xpose.msra.mxu0 0.0
    %2757 = vmatprep.subr.mxu0 0.0
    %2758 = vmatpush1.xpose.msra.mxu0 0.0
    %2759 = vmatprep.subr.mxu0 0.0
    %2760 = vmatpush1.xpose.msra.mxu0 0.0
    %2761 = vmatprep.subr.mxu0 0.0
    %2762 = vmatpush1.xpose.msra.mxu0 0.0
    %2763 = vmatprep.subr.mxu0 0.0
    %2764 = vmatpush1.xpose.msra.mxu0 0.0
    %2765 = vmatprep.subr.mxu0 0.0
    %2766 = vmatpush1.xpose.msra.mxu0 0.0
    %2767 = vmatprep.subr.mxu0 0.0
    %2768 = vmatpush1.xpose.msra.mxu0 0.0
    %2769 = vmatprep.subr.mxu0 0.0
    %2770 = vmatpush1.xpose.msra.mxu0 0.0
    %2771 = vmatprep.subr.mxu0 0.0
    %2772 = vmatpush1.xpose.msra.mxu0 0.0
    %2773 = vmatprep.subr.mxu0 0.0
    %2774 = vmatpush1.xpose.msra.mxu0 0.0
    %2775 = vmatprep.subr.mxu0 0.0
    %2776 = vmatpush1.xpose.msra.mxu0 0.0
    %2777 = vmatprep.subr.mxu0 0.0
    %2778 = vmatpush1.xpose.msra.mxu0 0.0
    %2779 = vmatprep.subr.mxu0 0.0
    %2780 = vmatpush1.xpose.msra.mxu0 0.0
    %2781 = vmatprep.subr.mxu0 0.0
    %2782 = vmatpush1.xpose.msra.mxu0 0.0
    %2783 = vmatprep.subr.mxu0 0.0
    %2784 = vmatpush1.xpose.msra.mxu0 0.0
    %2785 = vmatprep.subr.mxu0 0.0
    %2786 = vmatpush1.xpose.msra.mxu0 0.0
    %2787 = vmatprep.subr.mxu0 0.0
    %2788 = vmatpush1.xpose.msra.mxu0 0.0
    %2789 = vmatprep.subr.mxu0 0.0
    %2790 = vmatpush1.xpose.msra.mxu0 0.0
    %2791 = vmatprep.subr.mxu0 0.0
    %2792 = vmatpush1.xpose.msra.mxu0 0.0
    %2793 = vmatprep.subr.mxu0 0.0
    %2794 = vmatpush1.xpose.msra.mxu0 0.0
    %2795 = vmatprep.subr.mxu0 0.0
    %2796 = vmatpush1.xpose.msra.mxu0 0.0
    %2797 = vmatprep.subr.mxu0 0.0
    %2798 = vmatpush1.xpose.msra.mxu0 0.0
    %2799 = vmatprep.subr.mxu0 0.0
    %2800 = vmatpush1.xpose.msra.mxu0 0.0
    %2801 = vmatprep.subr.mxu0 0.0
    %2802 = vmatpush1.xpose.msra.mxu0 0.0
    %2803 = vmatprep.subr.mxu0 0.0
    %2804 = vmatpush1.xpose.msra.mxu0 0.0
    %2805 = vmatprep.subr.mxu0 0.0
    %2806 = vmatpush1.xpose.msra.mxu0 0.0
    %2807 = vmatprep.subr.mxu0 0.0
    %2808 = vmatpush1.xpose.msra.mxu0 0.0
    %2809 = vmatprep.subr.mxu0 0.0
    %2810 = vmatpush1.xpose.msra.mxu0 0.0
    %2811 = vmatprep.subr.mxu0 0.0
    %2812 = vmatpush1.xpose.msra.mxu0 0.0
    %2813 = vmatprep.subr.mxu0 0.0
    %2814 = vmatpush1.xpose.msra.mxu0 0.0
    %2815 = vmatprep.mubr.f32.mxu0 0.0
    %2816 = vmatmul.mubr.f32.gmra.mrb[0].mxu0 %v2747
    %v2817 = vpop.f32.mrb[0].mxu0
    %v2818 = vadd.f32 0.0, %v2817
    %v2819 = vpop.f32.mrb[0].mxu0
    %2820 = vdwg.mxu0
    %v2821 = vmul.f32 %v2741, 0.25
    %v2822 = vmul.f32 %v2818, 0.25
    %v2823 = vadd.f32 %v2821, %v940
    %v2824 = vadd.f32 %v2822, %v944
    %vm2825 = vcmask 64512
    %v2826 = vsel %vm2825, %v2823, -inf
    %2827 = vmax.xlane.f32.xlu0 %v2826
    %v2828 = vpop.xlane.xlu0 %2827
    %v2829 = vsel %vm2825, %v2824, -inf
    %2830 = vmax.xlane.f32.xlu0 %v2829
    %v2831 = vpop.xlane.xlu0 %2830
    %v2832 = vsub.f32 %v2823, %v2828
    %v2833 = vsub.f32 %v2824, %v2831
    %v2834 = vmul.f32 %v2832, 1.442695
    %v2835 = vpow.pop %v2834
    %v2836 = vmul.f32 %v2833, 1.442695
    %v2837 = vpow.pop %v2836
    %v2838 = vsel %vm2825, %v2835, 0.0
    %2839 = vadd.xlane.f32.xlu0 %v2838
    %v2840 = vpop.xlane.xlu0 %2839
    %v2841 = vsel %vm2825, %v2837, 0.0
    %2842 = vadd.xlane.f32.xlu0 %v2841
    %v2843 = vpop.xlane.xlu0 %2842
    %v2844 = vrcp.pop %v2840
    %v2845 = vmul.f32 %v2835, %v2844
    %v2846 = vrcp.pop %v2843
    %v2847 = vmul.f32 %v2837, %v2846
    %v2849 = vsel %vm2825, %v2845, 0
    %2851 = vmatprep.subr.mxu0 0.0
    %2852 = vmatpush1.msra.mxu0 %v2579
    %2853 = vmatprep.subr.mxu0 0.0
    %2854 = vmatpush1.msra.mxu0 0.0
    %2855 = vmatprep.subr.mxu0 0.0
    %2856 = vmatpush1.msra.mxu0 0.0
    %2857 = vmatprep.subr.mxu0 0.0
    %2858 = vmatpush1.msra.mxu0 0.0
    %2859 = vmatprep.subr.mxu0 0.0
    %2860 = vmatpush1.msra.mxu0 0.0
    %2861 = vmatprep.subr.mxu0 0.0
    %2862 = vmatpush1.msra.mxu0 0.0
    %2863 = vmatprep.subr.mxu0 0.0
    %2864 = vmatpush1.msra.mxu0 0.0
    %2865 = vmatprep.subr.mxu0 0.0
    %2866 = vmatpush1.msra.mxu0 0.0
    %2867 = vmatprep.subr.mxu0 0.0
    %2868 = vmatpush1.msra.mxu0 0.0
    %2869 = vmatprep.subr.mxu0 0.0
    %2870 = vmatpush1.msra.mxu0 0.0
    %2871 = vmatprep.subr.mxu0 0.0
    %2872 = vmatpush1.msra.mxu0 0.0
    %2873 = vmatprep.subr.mxu0 0.0
    %2874 = vmatpush1.msra.mxu0 0.0
    %2875 = vmatprep.subr.mxu0 0.0
    %2876 = vmatpush1.msra.mxu0 0.0
    %2877 = vmatprep.subr.mxu0 0.0
    %2878 = vmatpush1.msra.mxu0 0.0
    %2879 = vmatprep.subr.mxu0 0.0
    %2880 = vmatpush1.msra.mxu0 0.0
    %2881 = vmatprep.subr.mxu0 0.0
    %2882 = vmatpush1.msra.mxu0 0.0
    %2883 = vmatprep.subr.mxu0 0.0
    %2884 = vmatpush1.msra.mxu0 0.0
    %2885 = vmatprep.subr.mxu0 0.0
    %2886 = vmatpush1.msra.mxu0 0.0
    %2887 = vmatprep.subr.mxu0 0.0
    %2888 = vmatpush1.msra.mxu0 0.0
    %2889 = vmatprep.subr.mxu0 0.0
    %2890 = vmatpush1.msra.mxu0 0.0
    %2891 = vmatprep.subr.mxu0 0.0
    %2892 = vmatpush1.msra.mxu0 0.0
    %2893 = vmatprep.subr.mxu0 0.0
    %2894 = vmatpush1.msra.mxu0 0.0
    %2895 = vmatprep.subr.mxu0 0.0
    %2896 = vmatpush1.msra.mxu0 0.0
    %2897 = vmatprep.subr.mxu0 0.0
    %2898 = vmatpush1.msra.mxu0 0.0
    %2899 = vmatprep.subr.mxu0 0.0
    %2900 = vmatpush1.msra.mxu0 0.0
    %2901 = vmatprep.subr.mxu0 0.0
    %2902 = vmatpush1.msra.mxu0 0.0
    %2903 = vmatprep.subr.mxu0 0.0
    %2904 = vmatpush1.msra.mxu0 0.0
    %2905 = vmatprep.subr.mxu0 0.0
    %2906 = vmatpush1.msra.mxu0 0.0
    %2907 = vmatprep.subr.mxu0 0.0
    %2908 = vmatpush1.msra.mxu0 0.0
    %2909 = vmatprep.subr.mxu0 0.0
    %2910 = vmatpush1.msra.mxu0 0.0
    %2911 = vmatprep.subr.mxu0 0.0
    %2912 = vmatpush1.msra.mxu0 0.0
    %2913 = vmatprep.subr.mxu0 0.0
    %2914 = vmatpush1.msra.mxu0 0.0
    %2915 = vmatprep.mubr.f32.mxu0 0.0
    %2916 = vmatmul.mubr.f32.gmra.mrb[0].mxu0 %v2849
    %v2917 = vpop.f32.mrb[0].mxu0
    %v2918 = vadd.f32 0.0, %v2917
    %v2919 = vpop.f32.mrb[0].mxu0
    %2920 = vdwg.mxu0
    %v2922 = vsel %vm2825, %v2847, 0
    %2924 = vmatprep.subr.mxu0 0.0
    %2925 = vmatpush1.msra.mxu0 %v2583
    %2926 = vmatprep.subr.mxu0 0.0
    %2927 = vmatpush1.msra.mxu0 0.0
    %2928 = vmatprep.subr.mxu0 0.0
    %2929 = vmatpush1.msra.mxu0 0.0
    %2930 = vmatprep.subr.mxu0 0.0
    %2931 = vmatpush1.msra.mxu0 0.0
    %2932 = vmatprep.subr.mxu0 0.0
    %2933 = vmatpush1.msra.mxu0 0.0
    %2934 = vmatprep.subr.mxu0 0.0
    %2935 = vmatpush1.msra.mxu0 0.0
    %2936 = vmatprep.subr.mxu0 0.0
    %2937 = vmatpush1.msra.mxu0 0.0
    %2938 = vmatprep.subr.mxu0 0.0
    %2939 = vmatpush1.msra.mxu0 0.0
    %2940 = vmatprep.subr.mxu0 0.0
    %2941 = vmatpush1.msra.mxu0 0.0
    %2942 = vmatprep.subr.mxu0 0.0
    %2943 = vmatpush1.msra.mxu0 0.0
    %2944 = vmatprep.subr.mxu0 0.0
    %2945 = vmatpush1.msra.mxu0 0.0
    %2946 = vmatprep.subr.mxu0 0.0
    %2947 = vmatpush1.msra.mxu0 0.0
    %2948 = vmatprep.subr.mxu0 0.0
    %2949 = vmatpush1.msra.mxu0 0.0
    %2950 = vmatprep.subr.mxu0 0.0
    %2951 = vmatpush1.msra.mxu0 0.0
    %2952 = vmatprep.subr.mxu0 0.0
    %2953 = vmatpush1.msra.mxu0 0.0
    %2954 = vmatprep.subr.mxu0 0.0
    %2955 = vmatpush1.msra.mxu0 0.0
    %2956 = vmatprep.subr.mxu0 0.0
    %2957 = vmatpush1.msra.mxu0 0.0
    %2958 = vmatprep.subr.mxu0 0.0
    %2959 = vmatpush1.msra.mxu0 0.0
    %2960 = vmatprep.subr.mxu0 0.0
    %2961 = vmatpush1.msra.mxu0 0.0
    %2962 = vmatprep.subr.mxu0 0.0
    %2963 = vmatpush1.msra.mxu0 0.0
    %2964 = vmatprep.subr.mxu0 0.0
    %2965 = vmatpush1.msra.mxu0 0.0
    %2966 = vmatprep.subr.mxu0 0.0
    %2967 = vmatpush1.msra.mxu0 0.0
    %2968 = vmatprep.subr.mxu0 0.0
    %2969 = vmatpush1.msra.mxu0 0.0
    %2970 = vmatprep.subr.mxu0 0.0
    %2971 = vmatpush1.msra.mxu0 0.0
    %2972 = vmatprep.subr.mxu0 0.0
    %2973 = vmatpush1.msra.mxu0 0.0
    %2974 = vmatprep.subr.mxu0 0.0
    %2975 = vmatpush1.msra.mxu0 0.0
    %2976 = vmatprep.subr.mxu0 0.0
    %2977 = vmatpush1.msra.mxu0 0.0
    %2978 = vmatprep.subr.mxu0 0.0
    %2979 = vmatpush1.msra.mxu0 0.0
    %2980 = vmatprep.subr.mxu0 0.0
    %2981 = vmatpush1.msra.mxu0 0.0
    %2982 = vmatprep.subr.mxu0 0.0
    %2983 = vmatpush1.msra.mxu0 0.0
    %2984 = vmatprep.subr.mxu0 0.0
    %2985 = vmatpush1.msra.mxu0 0.0
    %2986 = vmatprep.subr.mxu0 0.0
    %2987 = vmatpush1.msra.mxu0 0.0
    %2988 = vmatprep.mubr.f32.mxu0 0.0
    %2989 = vmatmul.mubr.f32.gmra.mrb[0].mxu0 %v2922
    %v2990 = vpop.f32.mrb[0].mxu0
    %v2991 = vadd.f32 0.0, %v2990
    %v2992 = vpop.f32.mrb[0].mxu0
    %2993 = vdwg.mxu0
    %2994 = vrot.lane.b32.xlu0 %v2664, 112
    %v2995 = vpop.permute.xlu0 %2994
    %2996 = vrot.lane.b32.xlu0 %v2664, 48
    %v2997 = vpop.permute.xlu0 %2996
    %v2998 = vsel %vm2669, %v2995, 0
    %v3000 = vsel %vm2669, %v2997, 0
    %3002 = vmatprep.subr.mxu0 0.0
    %3003 = vmatpush1.xpose.msra.mxu0 %v3000
    %3004 = vmatprep.subr.mxu0 0.0
    %3005 = vmatpush1.xpose.msra.mxu0 0.0
    %3006 = vmatprep.subr.mxu0 0.0
    %3007 = vmatpush1.xpose.msra.mxu0 0.0
    %3008 = vmatprep.subr.mxu0 0.0
    %3009 = vmatpush1.xpose.msra.mxu0 0.0
    %3010 = vmatprep.subr.mxu0 0.0
    %3011 = vmatpush1.xpose.msra.mxu0 0.0
    %3012 = vmatprep.subr.mxu0 0.0
    %3013 = vmatpush1.xpose.msra.mxu0 0.0
    %3014 = vmatprep.subr.mxu0 0.0
    %3015 = vmatpush1.xpose.msra.mxu0 0.0
    %3016 = vmatprep.subr.mxu0 0.0
    %3017 = vmatpush1.xpose.msra.mxu0 0.0
    %3018 = vmatprep.subr.mxu0 0.0
    %3019 = vmatpush1.xpose.msra.mxu0 0.0
    %3020 = vmatprep.subr.mxu0 0.0
    %3021 = vmatpush1.xpose.msra.mxu0 0.0
    %3022 = vmatprep.subr.mxu0 0.0
    %3023 = vmatpush1.xpose.msra.mxu0 0.0
    %3024 = vmatprep.subr.mxu0 0.0
    %3025 = vmatpush1.xpose.msra.mxu0 0.0
    %3026 = vmatprep.subr.mxu0 0.0
    %3027 = vmatpush1.xpose.msra.mxu0 0.0
    %3028 = vmatprep.subr.mxu0 0.0
    %3029 = vmatpush1.xpose.msra.mxu0 0.0
    %3030 = vmatprep.subr.mxu0 0.0
    %3031 = vmatpush1.xpose.msra.mxu0 0.0
    %3032 = vmatprep.subr.mxu0 0.0
    %3033 = vmatpush1.xpose.msra.mxu0 0.0
    %3034 = vmatprep.subr.mxu0 0.0
    %3035 = vmatpush1.xpose.msra.mxu0 0.0
    %3036 = vmatprep.subr.mxu0 0.0
    %3037 = vmatpush1.xpose.msra.mxu0 0.0
    %3038 = vmatprep.subr.mxu0 0.0
    %3039 = vmatpush1.xpose.msra.mxu0 0.0
    %3040 = vmatprep.subr.mxu0 0.0
    %3041 = vmatpush1.xpose.msra.mxu0 0.0
    %3042 = vmatprep.subr.mxu0 0.0
    %3043 = vmatpush1.xpose.msra.mxu0 0.0
    %3044 = vmatprep.subr.mxu0 0.0
    %3045 = vmatpush1.xpose.msra.mxu0 0.0
    %3046 = vmatprep.subr.mxu0 0.0
    %3047 = vmatpush1.xpose.msra.mxu0 0.0
    %3048 = vmatprep.subr.mxu0 0.0
    %3049 = vmatpush1.xpose.msra.mxu0 0.0
    %3050 = vmatprep.subr.mxu0 0.0
    %3051 = vmatpush1.xpose.msra.mxu0 0.0
    %3052 = vmatprep.subr.mxu0 0.0
    %3053 = vmatpush1.xpose.msra.mxu0 0.0
    %3054 = vmatprep.subr.mxu0 0.0
    %3055 = vmatpush1.xpose.msra.mxu0 0.0
    %3056 = vmatprep.subr.mxu0 0.0
    %3057 = vmatpush1.xpose.msra.mxu0 0.0
    %3058 = vmatprep.subr.mxu0 0.0
    %3059 = vmatpush1.xpose.msra.mxu0 0.0
    %3060 = vmatprep.subr.mxu0 0.0
    %3061 = vmatpush1.xpose.msra.mxu0 0.0
    %3062 = vmatprep.subr.mxu0 0.0
    %3063 = vmatpush1.xpose.msra.mxu0 0.0
    %3064 = vmatprep.subr.mxu0 0.0
    %3065 = vmatpush1.xpose.msra.mxu0 0.0
    %3066 = vmatprep.mubr.f32.mxu0 0.0
    %3067 = vmatmul.mubr.f32.gmra.mrb[0].mxu0 %v2998
    %v3068 = vpop.f32.mrb[0].mxu0
    %v3069 = vadd.f32 0.0, %v3068
    %v3070 = vpop.f32.mrb[0].mxu0
    %3071 = vdwg.mxu0
    %3072 = vrot.lane.b32.xlu0 %v2665, 112
    %v3073 = vpop.permute.xlu0 %3072
    %3074 = vrot.lane.b32.xlu0 %v2665, 48
    %v3075 = vpop.permute.xlu0 %3074
    %v3076 = vsel %vm2669, %v3073, 0
    %v3078 = vsel %vm2669, %v3075, 0
    %3080 = vmatprep.subr.mxu0 0.0
    %3081 = vmatpush1.xpose.msra.mxu0 %v3078
    %3082 = vmatprep.subr.mxu0 0.0
    %3083 = vmatpush1.xpose.msra.mxu0 0.0
    %3084 = vmatprep.subr.mxu0 0.0
    %3085 = vmatpush1.xpose.msra.mxu0 0.0
    %3086 = vmatprep.subr.mxu0 0.0
    %3087 = vmatpush1.xpose.msra.mxu0 0.0
    %3088 = vmatprep.subr.mxu0 0.0
    %3089 = vmatpush1.xpose.msra.mxu0 0.0
    %3090 = vmatprep.subr.mxu0 0.0
    %3091 = vmatpush1.xpose.msra.mxu0 0.0
    %3092 = vmatprep.subr.mxu0 0.0
    %3093 = vmatpush1.xpose.msra.mxu0 0.0
    %3094 = vmatprep.subr.mxu0 0.0
    %3095 = vmatpush1.xpose.msra.mxu0 0.0
    %3096 = vmatprep.subr.mxu0 0.0
    %3097 = vmatpush1.xpose.msra.mxu0 0.0
    %3098 = vmatprep.subr.mxu0 0.0
    %3099 = vmatpush1.xpose.msra.mxu0 0.0
    %3100 = vmatprep.subr.mxu0 0.0
    %3101 = vmatpush1.xpose.msra.mxu0 0.0
    %3102 = vmatprep.subr.mxu0 0.0
    %3103 = vmatpush1.xpose.msra.mxu0 0.0
    %3104 = vmatprep.subr.mxu0 0.0
    %3105 = vmatpush1.xpose.msra.mxu0 0.0
    %3106 = vmatprep.subr.mxu0 0.0
    %3107 = vmatpush1.xpose.msra.mxu0 0.0
    %3108 = vmatprep.subr.mxu0 0.0
    %3109 = vmatpush1.xpose.msra.mxu0 0.0
    %3110 = vmatprep.subr.mxu0 0.0
    %3111 = vmatpush1.xpose.msra.mxu0 0.0
    %3112 = vmatprep.subr.mxu0 0.0
    %3113 = vmatpush1.xpose.msra.mxu0 0.0
    %3114 = vmatprep.subr.mxu0 0.0
    %3115 = vmatpush1.xpose.msra.mxu0 0.0
    %3116 = vmatprep.subr.mxu0 0.0
    %3117 = vmatpush1.xpose.msra.mxu0 0.0
    %3118 = vmatprep.subr.mxu0 0.0
    %3119 = vmatpush1.xpose.msra.mxu0 0.0
    %3120 = vmatprep.subr.mxu0 0.0
    %3121 = vmatpush1.xpose.msra.mxu0 0.0
    %3122 = vmatprep.subr.mxu0 0.0
    %3123 = vmatpush1.xpose.msra.mxu0 0.0
    %3124 = vmatprep.subr.mxu0 0.0
    %3125 = vmatpush1.xpose.msra.mxu0 0.0
    %3126 = vmatprep.subr.mxu0 0.0
    %3127 = vmatpush1.xpose.msra.mxu0 0.0
    %3128 = vmatprep.subr.mxu0 0.0
    %3129 = vmatpush1.xpose.msra.mxu0 0.0
    %3130 = vmatprep.subr.mxu0 0.0
    %3131 = vmatpush1.xpose.msra.mxu0 0.0
    %3132 = vmatprep.subr.mxu0 0.0
    %3133 = vmatpush1.xpose.msra.mxu0 0.0
    %3134 = vmatprep.subr.mxu0 0.0
    %3135 = vmatpush1.xpose.msra.mxu0 0.0
    %3136 = vmatprep.subr.mxu0 0.0
    %3137 = vmatpush1.xpose.msra.mxu0 0.0
    %3138 = vmatprep.subr.mxu0 0.0
    %3139 = vmatpush1.xpose.msra.mxu0 0.0
    %3140 = vmatprep.subr.mxu0 0.0
    %3141 = vmatpush1.xpose.msra.mxu0 0.0
    %3142 = vmatprep.subr.mxu0 0.0
    %3143 = vmatpush1.xpose.msra.mxu0 0.0
    %3144 = vmatprep.mubr.f32.mxu0 0.0
    %3145 = vmatmul.mubr.f32.gmra.mrb[0].mxu0 %v3076
    %v3146 = vpop.f32.mrb[0].mxu0
    %v3147 = vadd.f32 0.0, %v3146
    %v3148 = vpop.f32.mrb[0].mxu0
    %3149 = vdwg.mxu0
    %v3150 = vmul.f32 %v3069, 0.25
    %v3151 = vmul.f32 %v3147, 0.25
    %v3152 = vadd.f32 %v3150, %v940
    %v3153 = vadd.f32 %v3151, %v944
    %v3154 = vsel %vm2825, %v3152, -inf
    %3155 = vmax.xlane.f32.xlu0 %v3154
    %v3156 = vpop.xlane.xlu0 %3155
    %v3157 = vsel %vm2825, %v3153, -inf
    %3158 = vmax.xlane.f32.xlu0 %v3157
    %v3159 = vpop.xlane.xlu0 %3158
    %v3160 = vsub.f32 %v3152, %v3156
    %v3161 = vsub.f32 %v3153, %v3159
    %v3162 = vmul.f32 %v3160, 1.442695
    %v3163 = vpow.pop %v3162
    %v3164 = vmul.f32 %v3161, 1.442695
    %v3165 = vpow.pop %v3164
    %v3166 = vsel %vm2825, %v3163, 0.0
    %3167 = vadd.xlane.f32.xlu0 %v3166
    %v3168 = vpop.xlane.xlu0 %3167
    %v3169 = vsel %vm2825, %v3165, 0.0
    %3170 = vadd.xlane.f32.xlu0 %v3169
    %v3171 = vpop.xlane.xlu0 %3170
    %v3172 = vrcp.pop %v3168
    %v3173 = vmul.f32 %v3163, %v3172
    %v3174 = vrcp.pop %v3171
    %v3175 = vmul.f32 %v3165, %v3174
    %3177 = vrot.lane.b32.xlu0 %v2579, 112
    %v3178 = vpop.permute.xlu0 %3177
    %v3181 = vsel %vm2825, %v3173, 0
    %3183 = vmatprep.subr.mxu0 0.0
    %3184 = vmatpush1.msra.mxu0 %v3178
    %3185 = vmatprep.subr.mxu0 0.0
    %3186 = vmatpush1.msra.mxu0 0.0
    %3187 = vmatprep.subr.mxu0 0.0
    %3188 = vmatpush1.msra.mxu0 0.0
    %3189 = vmatprep.subr.mxu0 0.0
    %3190 = vmatpush1.msra.mxu0 0.0
    %3191 = vmatprep.subr.mxu0 0.0
    %3192 = vmatpush1.msra.mxu0 0.0
    %3193 = vmatprep.subr.mxu0 0.0
    %3194 = vmatpush1.msra.mxu0 0.0
    %3195 = vmatprep.subr.mxu0 0.0
    %3196 = vmatpush1.msra.mxu0 0.0
    %3197 = vmatprep.subr.mxu0 0.0
    %3198 = vmatpush1.msra.mxu0 0.0
    %3199 = vmatprep.subr.mxu0 0.0
    %3200 = vmatpush1.msra.mxu0 0.0
    %3201 = vmatprep.subr.mxu0 0.0
    %3202 = vmatpush1.msra.mxu0 0.0
    %3203 = vmatprep.subr.mxu0 0.0
    %3204 = vmatpush1.msra.mxu0 0.0
    %3205 = vmatprep.subr.mxu0 0.0
    %3206 = vmatpush1.msra.mxu0 0.0
    %3207 = vmatprep.subr.mxu0 0.0
    %3208 = vmatpush1.msra.mxu0 0.0
    %3209 = vmatprep.subr.mxu0 0.0
    %3210 = vmatpush1.msra.mxu0 0.0
    %3211 = vmatprep.subr.mxu0 0.0
    %3212 = vmatpush1.msra.mxu0 0.0
    %3213 = vmatprep.subr.mxu0 0.0
    %3214 = vmatpush1.msra.mxu0 0.0
    %3215 = vmatprep.subr.mxu0 0.0
    %3216 = vmatpush1.msra.mxu0 0.0
    %3217 = vmatprep.subr.mxu0 0.0
    %3218 = vmatpush1.msra.mxu0 0.0
    %3219 = vmatprep.subr.mxu0 0.0
    %3220 = vmatpush1.msra.mxu0 0.0
    %3221 = vmatprep.subr.mxu0 0.0
    %3222 = vmatpush1.msra.mxu0 0.0
    %3223 = vmatprep.subr.mxu0 0.0
    %3224 = vmatpush1.msra.mxu0 0.0
    %3225 = vmatprep.subr.mxu0 0.0
    %3226 = vmatpush1.msra.mxu0 0.0
    %3227 = vmatprep.subr.mxu0 0.0
    %3228 = vmatpush1.msra.mxu0 0.0
    %3229 = vmatprep.subr.mxu0 0.0
    %3230 = vmatpush1.msra.mxu0 0.0
    %3231 = vmatprep.subr.mxu0 0.0
    %3232 = vmatpush1.msra.mxu0 0.0
    %3233 = vmatprep.subr.mxu0 0.0
    %3234 = vmatpush1.msra.mxu0 0.0
    %3235 = vmatprep.subr.mxu0 0.0
    %3236 = vmatpush1.msra.mxu0 0.0
    %3237 = vmatprep.subr.mxu0 0.0
    %3238 = vmatpush1.msra.mxu0 0.0
    %3239 = vmatprep.subr.mxu0 0.0
    %3240 = vmatpush1.msra.mxu0 0.0
    %3241 = vmatprep.subr.mxu0 0.0
    %3242 = vmatpush1.msra.mxu0 0.0
    %3243 = vmatprep.subr.mxu0 0.0
    %3244 = vmatpush1.msra.mxu0 0.0
    %3245 = vmatprep.subr.mxu0 0.0
    %3246 = vmatpush1.msra.mxu0 0.0
    %3247 = vmatprep.mubr.f32.mxu0 0.0
    %3248 = vmatmul.mubr.f32.gmra.mrb[0].mxu0 %v3181
    %v3249 = vpop.f32.mrb[0].mxu0
    %v3250 = vadd.f32 0.0, %v3249
    %v3251 = vpop.f32.mrb[0].mxu0
    %3252 = vdwg.mxu0
    %3254 = vrot.lane.b32.xlu0 %v2583, 112
    %v3255 = vpop.permute.xlu0 %3254
    %v3258 = vsel %vm2825, %v3175, 0
    %3260 = vmatprep.subr.mxu0 0.0
    %3261 = vmatpush1.msra.mxu0 %v3255
    %3262 = vmatprep.subr.mxu0 0.0
    %3263 = vmatpush1.msra.mxu0 0.0
    %3264 = vmatprep.subr.mxu0 0.0
    %3265 = vmatpush1.msra.mxu0 0.0
    %3266 = vmatprep.subr.mxu0 0.0
    %3267 = vmatpush1.msra.mxu0 0.0
    %3268 = vmatprep.subr.mxu0 0.0
    %3269 = vmatpush1.msra.mxu0 0.0
    %3270 = vmatprep.subr.mxu0 0.0
    %3271 = vmatpush1.msra.mxu0 0.0
    %3272 = vmatprep.subr.mxu0 0.0
    %3273 = vmatpush1.msra.mxu0 0.0
    %3274 = vmatprep.subr.mxu0 0.0
    %3275 = vmatpush1.msra.mxu0 0.0
    %3276 = vmatprep.subr.mxu0 0.0
    %3277 = vmatpush1.msra.mxu0 0.0
    %3278 = vmatprep.subr.mxu0 0.0
    %3279 = vmatpush1.msra.mxu0 0.0
    %3280 = vmatprep.subr.mxu0 0.0
    %3281 = vmatpush1.msra.mxu0 0.0
    %3282 = vmatprep.subr.mxu0 0.0
    %3283 = vmatpush1.msra.mxu0 0.0
    %3284 = vmatprep.subr.mxu0 0.0
    %3285 = vmatpush1.msra.mxu0 0.0
    %3286 = vmatprep.subr.mxu0 0.0
    %3287 = vmatpush1.msra.mxu0 0.0
    %3288 = vmatprep.subr.mxu0 0.0
    %3289 = vmatpush1.msra.mxu0 0.0
    %3290 = vmatprep.subr.mxu0 0.0
    %3291 = vmatpush1.msra.mxu0 0.0
    %3292 = vmatprep.subr.mxu0 0.0
    %3293 = vmatpush1.msra.mxu0 0.0
    %3294 = vmatprep.subr.mxu0 0.0
    %3295 = vmatpush1.msra.mxu0 0.0
    %3296 = vmatprep.subr.mxu0 0.0
    %3297 = vmatpush1.msra.mxu0 0.0
    %3298 = vmatprep.subr.mxu0 0.0
    %3299 = vmatpush1.msra.mxu0 0.0
    %3300 = vmatprep.subr.mxu0 0.0
    %3301 = vmatpush1.msra.mxu0 0.0
    %3302 = vmatprep.subr.mxu0 0.0
    %3303 = vmatpush1.msra.mxu0 0.0
    %3304 = vmatprep.subr.mxu0 0.0
    %3305 = vmatpush1.msra.mxu0 0.0
    %3306 = vmatprep.subr.mxu0 0.0
    %3307 = vmatpush1.msra.mxu0 0.0
    %3308 = vmatprep.subr.mxu0 0.0
    %3309 = vmatpush1.msra.mxu0 0.0
    %3310 = vmatprep.subr.mxu0 0.0
    %3311 = vmatpush1.msra.mxu0 0.0
    %3312 = vmatprep.subr.mxu0 0.0
    %3313 = vmatpush1.msra.mxu0 0.0
    %3314 = vmatprep.subr.mxu0 0.0
    %3315 = vmatpush1.msra.mxu0 0.0
    %3316 = vmatprep.subr.mxu0 0.0
    %3317 = vmatpush1.msra.mxu0 0.0
    %3318 = vmatprep.subr.mxu0 0.0
    %3319 = vmatpush1.msra.mxu0 0.0
    %3320 = vmatprep.subr.mxu0 0.0
    %3321 = vmatpush1.msra.mxu0 0.0
    %3322 = vmatprep.subr.mxu0 0.0
    %3323 = vmatpush1.msra.mxu0 0.0
    %3324 = vmatprep.mubr.f32.mxu0 0.0
    %3325 = vmatmul.mubr.f32.gmra.mrb[0].mxu0 %v3258
    %v3326 = vpop.f32.mrb[0].mxu0
    %v3327 = vadd.f32 0.0, %v3326
    %v3328 = vpop.f32.mrb[0].mxu0
    %3329 = vdwg.mxu0
    %3330 = vrot.lane.b32.xlu0 %v2664, 96
    %v3331 = vpop.permute.xlu0 %3330
    %3332 = vrot.lane.b32.xlu0 %v2664, 32
    %v3333 = vpop.permute.xlu0 %3332
    %v3334 = vsel %vm2669, %v3331, 0
    %v3336 = vsel %vm2669, %v3333, 0
    %3338 = vmatprep.subr.mxu0 0.0
    %3339 = vmatpush1.xpose.msra.mxu0 %v3336
    %3340 = vmatprep.subr.mxu0 0.0
    %3341 = vmatpush1.xpose.msra.mxu0 0.0
    %3342 = vmatprep.subr.mxu0 0.0
    %3343 = vmatpush1.xpose.msra.mxu0 0.0
    %3344 = vmatprep.subr.mxu0 0.0
    %3345 = vmatpush1.xpose.msra.mxu0 0.0
    %3346 = vmatprep.subr.mxu0 0.0
    %3347 = vmatpush1.xpose.msra.mxu0 0.0
    %3348 = vmatprep.subr.mxu0 0.0
    %3349 = vmatpush1.xpose.msra.mxu0 0.0
    %3350 = vmatprep.subr.mxu0 0.0
    %3351 = vmatpush1.xpose.msra.mxu0 0.0
    %3352 = vmatprep.subr.mxu0 0.0
    %3353 = vmatpush1.xpose.msra.mxu0 0.0
    %3354 = vmatprep.subr.mxu0 0.0
    %3355 = vmatpush1.xpose.msra.mxu0 0.0
    %3356 = vmatprep.subr.mxu0 0.0
    %3357 = vmatpush1.xpose.msra.mxu0 0.0
    %3358 = vmatprep.subr.mxu0 0.0
    %3359 = vmatpush1.xpose.msra.mxu0 0.0
    %3360 = vmatprep.subr.mxu0 0.0
    %3361 = vmatpush1.xpose.msra.mxu0 0.0
    %3362 = vmatprep.subr.mxu0 0.0
    %3363 = vmatpush1.xpose.msra.mxu0 0.0
    %3364 = vmatprep.subr.mxu0 0.0
    %3365 = vmatpush1.xpose.msra.mxu0 0.0
    %3366 = vmatprep.subr.mxu0 0.0
    %3367 = vmatpush1.xpose.msra.mxu0 0.0
    %3368 = vmatprep.subr.mxu0 0.0
    %3369 = vmatpush1.xpose.msra.mxu0 0.0
    %3370 = vmatprep.subr.mxu0 0.0
    %3371 = vmatpush1.xpose.msra.mxu0 0.0
    %3372 = vmatprep.subr.mxu0 0.0
    %3373 = vmatpush1.xpose.msra.mxu0 0.0
    %3374 = vmatprep.subr.mxu0 0.0
    %3375 = vmatpush1.xpose.msra.mxu0 0.0
    %3376 = vmatprep.subr.mxu0 0.0
    %3377 = vmatpush1.xpose.msra.mxu0 0.0
    %3378 = vmatprep.subr.mxu0 0.0
    %3379 = vmatpush1.xpose.msra.mxu0 0.0
    %3380 = vmatprep.subr.mxu0 0.0
    %3381 = vmatpush1.xpose.msra.mxu0 0.0
    %3382 = vmatprep.subr.mxu0 0.0
    %3383 = vmatpush1.xpose.msra.mxu0 0.0
    %3384 = vmatprep.subr.mxu0 0.0
    %3385 = vmatpush1.xpose.msra.mxu0 0.0
    %3386 = vmatprep.subr.mxu0 0.0
    %3387 = vmatpush1.xpose.msra.mxu0 0.0
    %3388 = vmatprep.subr.mxu0 0.0
    %3389 = vmatpush1.xpose.msra.mxu0 0.0
    %3390 = vmatprep.subr.mxu0 0.0
    %3391 = vmatpush1.xpose.msra.mxu0 0.0
    %3392 = vmatprep.subr.mxu0 0.0
    %3393 = vmatpush1.xpose.msra.mxu0 0.0
    %3394 = vmatprep.subr.mxu0 0.0
    %3395 = vmatpush1.xpose.msra.mxu0 0.0
    %3396 = vmatprep.subr.mxu0 0.0
    %3397 = vmatpush1.xpose.msra.mxu0 0.0
    %3398 = vmatprep.subr.mxu0 0.0
    %3399 = vmatpush1.xpose.msra.mxu0 0.0
    %3400 = vmatprep.subr.mxu0 0.0
    %3401 = vmatpush1.xpose.msra.mxu0 0.0
    %3402 = vmatprep.mubr.f32.mxu0 0.0
    %3403 = vmatmul.mubr.f32.gmra.mrb[0].mxu0 %v3334
    %v3404 = vpop.f32.mrb[0].mxu0
    %v3405 = vadd.f32 0.0, %v3404
    %v3406 = vpop.f32.mrb[0].mxu0
    %3407 = vdwg.mxu0
    %3408 = vrot.lane.b32.xlu0 %v2665, 96
    %v3409 = vpop.permute.xlu0 %3408
    %3410 = vrot.lane.b32.xlu0 %v2665, 32
    %v3411 = vpop.permute.xlu0 %3410
    %v3412 = vsel %vm2669, %v3409, 0
    %v3414 = vsel %vm2669, %v3411, 0
    %3416 = vmatprep.subr.mxu0 0.0
    %3417 = vmatpush1.xpose.msra.mxu0 %v3414
    %3418 = vmatprep.subr.mxu0 0.0
    %3419 = vmatpush1.xpose.msra.mxu0 0.0
    %3420 = vmatprep.subr.mxu0 0.0
    %3421 = vmatpush1.xpose.msra.mxu0 0.0
    %3422 = vmatprep.subr.mxu0 0.0
    %3423 = vmatpush1.xpose.msra.mxu0 0.0
    %3424 = vmatprep.subr.mxu0 0.0
    %3425 = vmatpush1.xpose.msra.mxu0 0.0
    %3426 = vmatprep.subr.mxu0 0.0
    %3427 = vmatpush1.xpose.msra.mxu0 0.0
    %3428 = vmatprep.subr.mxu0 0.0
    %3429 = vmatpush1.xpose.msra.mxu0 0.0
    %3430 = vmatprep.subr.mxu0 0.0
    %3431 = vmatpush1.xpose.msra.mxu0 0.0
    %3432 = vmatprep.subr.mxu0 0.0
    %3433 = vmatpush1.xpose.msra.mxu0 0.0
    %3434 = vmatprep.subr.mxu0 0.0
    %3435 = vmatpush1.xpose.msra.mxu0 0.0
    %3436 = vmatprep.subr.mxu0 0.0
    %3437 = vmatpush1.xpose.msra.mxu0 0.0
    %3438 = vmatprep.subr.mxu0 0.0
    %3439 = vmatpush1.xpose.msra.mxu0 0.0
    %3440 = vmatprep.subr.mxu0 0.0
    %3441 = vmatpush1.xpose.msra.mxu0 0.0
    %3442 = vmatprep.subr.mxu0 0.0
    %3443 = vmatpush1.xpose.msra.mxu0 0.0
    %3444 = vmatprep.subr.mxu0 0.0
    %3445 = vmatpush1.xpose.msra.mxu0 0.0
    %3446 = vmatprep.subr.mxu0 0.0
    %3447 = vmatpush1.xpose.msra.mxu0 0.0
    %3448 = vmatprep.subr.mxu0 0.0
    %3449 = vmatpush1.xpose.msra.mxu0 0.0
    %3450 = vmatprep.subr.mxu0 0.0
    %3451 = vmatpush1.xpose.msra.mxu0 0.0
    %3452 = vmatprep.subr.mxu0 0.0
    %3453 = vmatpush1.xpose.msra.mxu0 0.0
    %3454 = vmatprep.subr.mxu0 0.0
    %3455 = vmatpush1.xpose.msra.mxu0 0.0
    %3456 = vmatprep.subr.mxu0 0.0
    %3457 = vmatpush1.xpose.msra.mxu0 0.0
    %3458 = vmatprep.subr.mxu0 0.0
    %3459 = vmatpush1.xpose.msra.mxu0 0.0
    %3460 = vmatprep.subr.mxu0 0.0
    %3461 = vmatpush1.xpose.msra.mxu0 0.0
    %3462 = vmatprep.subr.mxu0 0.0
    %3463 = vmatpush1.xpose.msra.mxu0 0.0
    %3464 = vmatprep.subr.mxu0 0.0
    %3465 = vmatpush1.xpose.msra.mxu0 0.0
    %3466 = vmatprep.subr.mxu0 0.0
    %3467 = vmatpush1.xpose.msra.mxu0 0.0
    %3468 = vmatprep.subr.mxu0 0.0
    %3469 = vmatpush1.xpose.msra.mxu0 0.0
    %3470 = vmatprep.subr.mxu0 0.0
    %3471 = vmatpush1.xpose.msra.mxu0 0.0
    %3472 = vmatprep.subr.mxu0 0.0
    %3473 = vmatpush1.xpose.msra.mxu0 0.0
    %3474 = vmatprep.subr.mxu0 0.0
    %3475 = vmatpush1.xpose.msra.mxu0 0.0
    %3476 = vmatprep.subr.mxu0 0.0
    %3477 = vmatpush1.xpose.msra.mxu0 0.0
    %3478 = vmatprep.subr.mxu0 0.0
    %3479 = vmatpush1.xpose.msra.mxu0 0.0
    %3480 = vmatprep.mubr.f32.mxu0 0.0
    %3481 = vmatmul.mubr.f32.gmra.mrb[0].mxu0 %v3412
    %v3482 = vpop.f32.mrb[0].mxu0
    %v3483 = vadd.f32 0.0, %v3482
    %v3484 = vpop.f32.mrb[0].mxu0
    %3485 = vdwg.mxu0
    %v3486 = vmul.f32 %v3405, 0.25
    %v3487 = vmul.f32 %v3483, 0.25
    %v3488 = vadd.f32 %v3486, %v940
    %v3489 = vadd.f32 %v3487, %v944
    %v3490 = vsel %vm2825, %v3488, -inf
    %3491 = vmax.xlane.f32.xlu0 %v3490
    %v3492 = vpop.xlane.xlu0 %3491
    %v3493 = vsel %vm2825, %v3489, -inf
    %3494 = vmax.xlane.f32.xlu0 %v3493
    %v3495 = vpop.xlane.xlu0 %3494
    %v3496 = vsub.f32 %v3488, %v3492
    %v3497 = vsub.f32 %v3489, %v3495
    %v3498 = vmul.f32 %v3496, 1.442695
    %v3499 = vpow.pop %v3498
    %v3500 = vmul.f32 %v3497, 1.442695
    %v3501 = vpow.pop %v3500
    %v3502 = vsel %vm2825, %v3499, 0.0
    %3503 = vadd.xlane.f32.xlu0 %v3502
    %v3504 = vpop.xlane.xlu0 %3503
    %v3505 = vsel %vm2825, %v3501, 0.0
    %3506 = vadd.xlane.f32.xlu0 %v3505
    %v3507 = vpop.xlane.xlu0 %3506
    %v3508 = vrcp.pop %v3504
    %v3509 = vmul.f32 %v3499, %v3508
    %v3510 = vrcp.pop %v3507
    %v3511 = vmul.f32 %v3501, %v3510
    %3512 = vrot.lane.b32.xlu0 %v2579, 96
    %v3513 = vpop.permute.xlu0 %3512
    %v3516 = vsel %vm2825, %v3509, 0
    %3518 = vmatprep.subr.mxu0 0.0
    %3519 = vmatpush1.msra.mxu0 %v3513
    %3520 = vmatprep.subr.mxu0 0.0
    %3521 = vmatpush1.msra.mxu0 0.0
    %3522 = vmatprep.subr.mxu0 0.0
    %3523 = vmatpush1.msra.mxu0 0.0
    %3524 = vmatprep.subr.mxu0 0.0
    %3525 = vmatpush1.msra.mxu0 0.0
    %3526 = vmatprep.subr.mxu0 0.0
    %3527 = vmatpush1.msra.mxu0 0.0
    %3528 = vmatprep.subr.mxu0 0.0
    %3529 = vmatpush1.msra.mxu0 0.0
    %3530 = vmatprep.subr.mxu0 0.0
    %3531 = vmatpush1.msra.mxu0 0.0
    %3532 = vmatprep.subr.mxu0 0.0
    %3533 = vmatpush1.msra.mxu0 0.0
    %3534 = vmatprep.subr.mxu0 0.0
    %3535 = vmatpush1.msra.mxu0 0.0
    %3536 = vmatprep.subr.mxu0 0.0
    %3537 = vmatpush1.msra.mxu0 0.0
    %3538 = vmatprep.subr.mxu0 0.0
    %3539 = vmatpush1.msra.mxu0 0.0
    %3540 = vmatprep.subr.mxu0 0.0
    %3541 = vmatpush1.msra.mxu0 0.0
    %3542 = vmatprep.subr.mxu0 0.0
    %3543 = vmatpush1.msra.mxu0 0.0
    %3544 = vmatprep.subr.mxu0 0.0
    %3545 = vmatpush1.msra.mxu0 0.0
    %3546 = vmatprep.subr.mxu0 0.0
    %3547 = vmatpush1.msra.mxu0 0.0
    %3548 = vmatprep.subr.mxu0 0.0
    %3549 = vmatpush1.msra.mxu0 0.0
    %3550 = vmatprep.subr.mxu0 0.0
    %3551 = vmatpush1.msra.mxu0 0.0
    %3552 = vmatprep.subr.mxu0 0.0
    %3553 = vmatpush1.msra.mxu0 0.0
    %3554 = vmatprep.subr.mxu0 0.0
    %3555 = vmatpush1.msra.mxu0 0.0
    %3556 = vmatprep.subr.mxu0 0.0
    %3557 = vmatpush1.msra.mxu0 0.0
    %3558 = vmatprep.subr.mxu0 0.0
    %3559 = vmatpush1.msra.mxu0 0.0
    %3560 = vmatprep.subr.mxu0 0.0
    %3561 = vmatpush1.msra.mxu0 0.0
    %3562 = vmatprep.subr.mxu0 0.0
    %3563 = vmatpush1.msra.mxu0 0.0
    %3564 = vmatprep.subr.mxu0 0.0
    %3565 = vmatpush1.msra.mxu0 0.0
    %3566 = vmatprep.subr.mxu0 0.0
    %3567 = vmatpush1.msra.mxu0 0.0
    %3568 = vmatprep.subr.mxu0 0.0
    %3569 = vmatpush1.msra.mxu0 0.0
    %3570 = vmatprep.subr.mxu0 0.0
    %3571 = vmatpush1.msra.mxu0 0.0
    %3572 = vmatprep.subr.mxu0 0.0
    %3573 = vmatpush1.msra.mxu0 0.0
    %3574 = vmatprep.subr.mxu0 0.0
    %3575 = vmatpush1.msra.mxu0 0.0
    %3576 = vmatprep.subr.mxu0 0.0
    %3577 = vmatpush1.msra.mxu0 0.0
    %3578 = vmatprep.subr.mxu0 0.0
    %3579 = vmatpush1.msra.mxu0 0.0
    %3580 = vmatprep.subr.mxu0 0.0
    %3581 = vmatpush1.msra.mxu0 0.0
    %3582 = vmatprep.mubr.f32.mxu0 0.0
    %3583 = vmatmul.mubr.f32.gmra.mrb[0].mxu0 %v3516
    %v3584 = vpop.f32.mrb[0].mxu0
    %v3585 = vadd.f32 0.0, %v3584
    %v3586 = vpop.f32.mrb[0].mxu0
    %3587 = vdwg.mxu0
    %3588 = vrot.lane.b32.xlu0 %v2583, 96
    %v3589 = vpop.permute.xlu0 %3588
    %v3592 = vsel %vm2825, %v3511, 0
    %3594 = vmatprep.subr.mxu0 0.0
    %3595 = vmatpush1.msra.mxu0 %v3589
    %3596 = vmatprep.subr.mxu0 0.0
    %3597 = vmatpush1.msra.mxu0 0.0
    %3598 = vmatprep.subr.mxu0 0.0
    %3599 = vmatpush1.msra.mxu0 0.0
    %3600 = vmatprep.subr.mxu0 0.0
    %3601 = vmatpush1.msra.mxu0 0.0
    %3602 = vmatprep.subr.mxu0 0.0
    %3603 = vmatpush1.msra.mxu0 0.0
    %3604 = vmatprep.subr.mxu0 0.0
    %3605 = vmatpush1.msra.mxu0 0.0
    %3606 = vmatprep.subr.mxu0 0.0
    %3607 = vmatpush1.msra.mxu0 0.0
    %3608 = vmatprep.subr.mxu0 0.0
    %3609 = vmatpush1.msra.mxu0 0.0
    %3610 = vmatprep.subr.mxu0 0.0
    %3611 = vmatpush1.msra.mxu0 0.0
    %3612 = vmatprep.subr.mxu0 0.0
    %3613 = vmatpush1.msra.mxu0 0.0
    %3614 = vmatprep.subr.mxu0 0.0
    %3615 = vmatpush1.msra.mxu0 0.0
    %3616 = vmatprep.subr.mxu0 0.0
    %3617 = vmatpush1.msra.mxu0 0.0
    %3618 = vmatprep.subr.mxu0 0.0
    %3619 = vmatpush1.msra.mxu0 0.0
    %3620 = vmatprep.subr.mxu0 0.0
    %3621 = vmatpush1.msra.mxu0 0.0
    %3622 = vmatprep.subr.mxu0 0.0
    %3623 = vmatpush1.msra.mxu0 0.0
    %3624 = vmatprep.subr.mxu0 0.0
    %3625 = vmatpush1.msra.mxu0 0.0
    %3626 = vmatprep.subr.mxu0 0.0
    %3627 = vmatpush1.msra.mxu0 0.0
    %3628 = vmatprep.subr.mxu0 0.0
    %3629 = vmatpush1.msra.mxu0 0.0
    %3630 = vmatprep.subr.mxu0 0.0
    %3631 = vmatpush1.msra.mxu0 0.0
    %3632 = vmatprep.subr.mxu0 0.0
    %3633 = vmatpush1.msra.mxu0 0.0
    %3634 = vmatprep.subr.mxu0 0.0
    %3635 = vmatpush1.msra.mxu0 0.0
    %3636 = vmatprep.subr.mxu0 0.0
    %3637 = vmatpush1.msra.mxu0 0.0
    %3638 = vmatprep.subr.mxu0 0.0
    %3639 = vmatpush1.msra.mxu0 0.0
    %3640 = vmatprep.subr.mxu0 0.0
    %3641 = vmatpush1.msra.mxu0 0.0
    %3642 = vmatprep.subr.mxu0 0.0
    %3643 = vmatpush1.msra.mxu0 0.0
    %3644 = vmatprep.subr.mxu0 0.0
    %3645 = vmatpush1.msra.mxu0 0.0
    %3646 = vmatprep.subr.mxu0 0.0
    %3647 = vmatpush1.msra.mxu0 0.0
    %3648 = vmatprep.subr.mxu0 0.0
    %3649 = vmatpush1.msra.mxu0 0.0
    %3650 = vmatprep.subr.mxu0 0.0
    %3651 = vmatpush1.msra.mxu0 0.0
    %3652 = vmatprep.subr.mxu0 0.0
    %3653 = vmatpush1.msra.mxu0 0.0
    %3654 = vmatprep.subr.mxu0 0.0
    %3655 = vmatpush1.msra.mxu0 0.0
    %3656 = vmatprep.subr.mxu0 0.0
    %3657 = vmatpush1.msra.mxu0 0.0
    %3658 = vmatprep.mubr.f32.mxu0 0.0
    %3659 = vmatmul.mubr.f32.gmra.mrb[0].mxu0 %v3592
    %v3660 = vpop.f32.mrb[0].mxu0
    %v3661 = vadd.f32 0.0, %v3660
    %v3662 = vpop.f32.mrb[0].mxu0
    %3663 = vdwg.mxu0
    %3664 = vrot.lane.b32.xlu0 %v2664, 80
    %v3665 = vpop.permute.xlu0 %3664
    %3666 = vrot.lane.b32.xlu0 %v2664, 16
    %v3667 = vpop.permute.xlu0 %3666
    %v3668 = vsel %vm2669, %v3665, 0
    %v3670 = vsel %vm2669, %v3667, 0
    %3672 = vmatprep.subr.mxu0 0.0
    %3673 = vmatpush1.xpose.msra.mxu0 %v3670
    %3674 = vmatprep.subr.mxu0 0.0
    %3675 = vmatpush1.xpose.msra.mxu0 0.0
    %3676 = vmatprep.subr.mxu0 0.0
    %3677 = vmatpush1.xpose.msra.mxu0 0.0
    %3678 = vmatprep.subr.mxu0 0.0
    %3679 = vmatpush1.xpose.msra.mxu0 0.0
    %3680 = vmatprep.subr.mxu0 0.0
    %3681 = vmatpush1.xpose.msra.mxu0 0.0
    %3682 = vmatprep.subr.mxu0 0.0
    %3683 = vmatpush1.xpose.msra.mxu0 0.0
    %3684 = vmatprep.subr.mxu0 0.0
    %3685 = vmatpush1.xpose.msra.mxu0 0.0
    %3686 = vmatprep.subr.mxu0 0.0
    %3687 = vmatpush1.xpose.msra.mxu0 0.0
    %3688 = vmatprep.subr.mxu0 0.0
    %3689 = vmatpush1.xpose.msra.mxu0 0.0
    %3690 = vmatprep.subr.mxu0 0.0
    %3691 = vmatpush1.xpose.msra.mxu0 0.0
    %3692 = vmatprep.subr.mxu0 0.0
    %3693 = vmatpush1.xpose.msra.mxu0 0.0
    %3694 = vmatprep.subr.mxu0 0.0
    %3695 = vmatpush1.xpose.msra.mxu0 0.0
    %3696 = vmatprep.subr.mxu0 0.0
    %3697 = vmatpush1.xpose.msra.mxu0 0.0
    %3698 = vmatprep.subr.mxu0 0.0
    %3699 = vmatpush1.xpose.msra.mxu0 0.0
    %3700 = vmatprep.subr.mxu0 0.0
    %3701 = vmatpush1.xpose.msra.mxu0 0.0
    %3702 = vmatprep.subr.mxu0 0.0
    %3703 = vmatpush1.xpose.msra.mxu0 0.0
    %3704 = vmatprep.subr.mxu0 0.0
    %3705 = vmatpush1.xpose.msra.mxu0 0.0
    %3706 = vmatprep.subr.mxu0 0.0
    %3707 = vmatpush1.xpose.msra.mxu0 0.0
    %3708 = vmatprep.subr.mxu0 0.0
    %3709 = vmatpush1.xpose.msra.mxu0 0.0
    %3710 = vmatprep.subr.mxu0 0.0
    %3711 = vmatpush1.xpose.msra.mxu0 0.0
    %3712 = vmatprep.subr.mxu0 0.0
    %3713 = vmatpush1.xpose.msra.mxu0 0.0
    %3714 = vmatprep.subr.mxu0 0.0
    %3715 = vmatpush1.xpose.msra.mxu0 0.0
    %3716 = vmatprep.subr.mxu0 0.0
    %3717 = vmatpush1.xpose.msra.mxu0 0.0
    %3718 = vmatprep.subr.mxu0 0.0
    %3719 = vmatpush1.xpose.msra.mxu0 0.0
    %3720 = vmatprep.subr.mxu0 0.0
    %3721 = vmatpush1.xpose.msra.mxu0 0.0
    %3722 = vmatprep.subr.mxu0 0.0
    %3723 = vmatpush1.xpose.msra.mxu0 0.0
    %3724 = vmatprep.subr.mxu0 0.0
    %3725 = vmatpush1.xpose.msra.mxu0 0.0
    %3726 = vmatprep.subr.mxu0 0.0
    %3727 = vmatpush1.xpose.msra.mxu0 0.0
    %3728 = vmatprep.subr.mxu0 0.0
    %3729 = vmatpush1.xpose.msra.mxu0 0.0
    %3730 = vmatprep.subr.mxu0 0.0
    %3731 = vmatpush1.xpose.msra.mxu0 0.0
    %3732 = vmatprep.subr.mxu0 0.0
    %3733 = vmatpush1.xpose.msra.mxu0 0.0
    %3734 = vmatprep.subr.mxu0 0.0
    %3735 = vmatpush1.xpose.msra.mxu0 0.0
    %3736 = vmatprep.mubr.f32.mxu0 0.0
    %3737 = vmatmul.mubr.f32.gmra.mrb[0].mxu0 %v3668
    %v3738 = vpop.f32.mrb[0].mxu0
    %v3739 = vadd.f32 0.0, %v3738
    %v3740 = vpop.f32.mrb[0].mxu0
    %3741 = vdwg.mxu0
    %3742 = vrot.lane.b32.xlu0 %v2665, 80
    %v3743 = vpop.permute.xlu0 %3742
    %3744 = vrot.lane.b32.xlu0 %v2665, 16
    %v3745 = vpop.permute.xlu0 %3744
    %v3746 = vsel %vm2669, %v3743, 0
    %v3748 = vsel %vm2669, %v3745, 0
    %3750 = vmatprep.subr.mxu0 0.0
    %3751 = vmatpush1.xpose.msra.mxu0 %v3748
    %3752 = vmatprep.subr.mxu0 0.0
    %3753 = vmatpush1.xpose.msra.mxu0 0.0
    %3754 = vmatprep.subr.mxu0 0.0
    %3755 = vmatpush1.xpose.msra.mxu0 0.0
    %3756 = vmatprep.subr.mxu0 0.0
    %3757 = vmatpush1.xpose.msra.mxu0 0.0
    %3758 = vmatprep.subr.mxu0 0.0
    %3759 = vmatpush1.xpose.msra.mxu0 0.0
    %3760 = vmatprep.subr.mxu0 0.0
    %3761 = vmatpush1.xpose.msra.mxu0 0.0
    %3762 = vmatprep.subr.mxu0 0.0
    %3763 = vmatpush1.xpose.msra.mxu0 0.0
    %3764 = vmatprep.subr.mxu0 0.0
    %3765 = vmatpush1.xpose.msra.mxu0 0.0
    %3766 = vmatprep.subr.mxu0 0.0
    %3767 = vmatpush1.xpose.msra.mxu0 0.0
    %3768 = vmatprep.subr.mxu0 0.0
    %3769 = vmatpush1.xpose.msra.mxu0 0.0
    %3770 = vmatprep.subr.mxu0 0.0
    %3771 = vmatpush1.xpose.msra.mxu0 0.0
    %3772 = vmatprep.subr.mxu0 0.0
    %3773 = vmatpush1.xpose.msra.mxu0 0.0
    %3774 = vmatprep.subr.mxu0 0.0
    %3775 = vmatpush1.xpose.msra.mxu0 0.0
    %3776 = vmatprep.subr.mxu0 0.0
    %3777 = vmatpush1.xpose.msra.mxu0 0.0
    %3778 = vmatprep.subr.mxu0 0.0
    %3779 = vmatpush1.xpose.msra.mxu0 0.0
    %3780 = vmatprep.subr.mxu0 0.0
    %3781 = vmatpush1.xpose.msra.mxu0 0.0
    %3782 = vmatprep.subr.mxu0 0.0
    %3783 = vmatpush1.xpose.msra.mxu0 0.0
    %3784 = vmatprep.subr.mxu0 0.0
    %3785 = vmatpush1.xpose.msra.mxu0 0.0
    %3786 = vmatprep.subr.mxu0 0.0
    %3787 = vmatpush1.xpose.msra.mxu0 0.0
    %3788 = vmatprep.subr.mxu0 0.0
    %3789 = vmatpush1.xpose.msra.mxu0 0.0
    %3790 = vmatprep.subr.mxu0 0.0
    %3791 = vmatpush1.xpose.msra.mxu0 0.0
    %3792 = vmatprep.subr.mxu0 0.0
    %3793 = vmatpush1.xpose.msra.mxu0 0.0
    %3794 = vmatprep.subr.mxu0 0.0
    %3795 = vmatpush1.xpose.msra.mxu0 0.0
    %3796 = vmatprep.subr.mxu0 0.0
    %3797 = vmatpush1.xpose.msra.mxu0 0.0
    %3798 = vmatprep.subr.mxu0 0.0
    %3799 = vmatpush1.xpose.msra.mxu0 0.0
    %3800 = vmatprep.subr.mxu0 0.0
    %3801 = vmatpush1.xpose.msra.mxu0 0.0
    %3802 = vmatprep.subr.mxu0 0.0
    %3803 = vmatpush1.xpose.msra.mxu0 0.0
    %3804 = vmatprep.subr.mxu0 0.0
    %3805 = vmatpush1.xpose.msra.mxu0 0.0
    %3806 = vmatprep.subr.mxu0 0.0
    %3807 = vmatpush1.xpose.msra.mxu0 0.0
    %3808 = vmatprep.subr.mxu0 0.0
    %3809 = vmatpush1.xpose.msra.mxu0 0.0
    %3810 = vmatprep.subr.mxu0 0.0
    %3811 = vmatpush1.xpose.msra.mxu0 0.0
    %3812 = vmatprep.subr.mxu0 0.0
    %3813 = vmatpush1.xpose.msra.mxu0 0.0
    %3814 = vmatprep.mubr.f32.mxu0 0.0
    %3815 = vmatmul.mubr.f32.gmra.mrb[0].mxu0 %v3746
    %v3816 = vpop.f32.mrb[0].mxu0
    %v3817 = vadd.f32 0.0, %v3816
    %v3818 = vpop.f32.mrb[0].mxu0
    %3819 = vdwg.mxu0
    %v3820 = vmul.f32 %v3739, 0.25
    %v3821 = vmul.f32 %v3817, 0.25
    %v3822 = vadd.f32 %v3820, %v940
    %v3823 = vadd.f32 %v3821, %v944
    %v3824 = vsel %vm2825, %v3822, -inf
    %3825 = vmax.xlane.f32.xlu0 %v3824
    %v3826 = vpop.xlane.xlu0 %3825
    %v3827 = vsel %vm2825, %v3823, -inf
    %3828 = vmax.xlane.f32.xlu0 %v3827
    %v3829 = vpop.xlane.xlu0 %3828
    %v3830 = vsub.f32 %v3822, %v3826
    %v3831 = vsub.f32 %v3823, %v3829
    %v3832 = vmul.f32 %v3830, 1.442695
    %v3833 = vpow.pop %v3832
    %v3834 = vmul.f32 %v3831, 1.442695
    %v3835 = vpow.pop %v3834
    %v3836 = vsel %vm2825, %v3833, 0.0
    %3837 = vadd.xlane.f32.xlu0 %v3836
    %v3838 = vpop.xlane.xlu0 %3837
    %v3839 = vsel %vm2825, %v3835, 0.0
    %3840 = vadd.xlane.f32.xlu0 %v3839
    %v3841 = vpop.xlane.xlu0 %3840
    %v3842 = vrcp.pop %v3838
    %v3843 = vmul.f32 %v3833, %v3842
    %v3844 = vrcp.pop %v3841
    %v3845 = vmul.f32 %v3835, %v3844
    %3846 = vrot.lane.b32.xlu0 %v2579, 80
    %v3847 = vpop.permute.xlu0 %3846
    %v3850 = vsel %vm2825, %v3843, 0
    %3852 = vmatprep.subr.mxu0 0.0
    %3853 = vmatpush1.msra.mxu0 %v3847
    %3854 = vmatprep.subr.mxu0 0.0
    %3855 = vmatpush1.msra.mxu0 0.0
    %3856 = vmatprep.subr.mxu0 0.0
    %3857 = vmatpush1.msra.mxu0 0.0
    %3858 = vmatprep.subr.mxu0 0.0
    %3859 = vmatpush1.msra.mxu0 0.0
    %3860 = vmatprep.subr.mxu0 0.0
    %3861 = vmatpush1.msra.mxu0 0.0
    %3862 = vmatprep.subr.mxu0 0.0
    %3863 = vmatpush1.msra.mxu0 0.0
    %3864 = vmatprep.subr.mxu0 0.0
    %3865 = vmatpush1.msra.mxu0 0.0
    %3866 = vmatprep.subr.mxu0 0.0
    %3867 = vmatpush1.msra.mxu0 0.0
    %3868 = vmatprep.subr.mxu0 0.0
    %3869 = vmatpush1.msra.mxu0 0.0
    %3870 = vmatprep.subr.mxu0 0.0
    %3871 = vmatpush1.msra.mxu0 0.0
    %3872 = vmatprep.subr.mxu0 0.0
    %3873 = vmatpush1.msra.mxu0 0.0
    %3874 = vmatprep.subr.mxu0 0.0
    %3875 = vmatpush1.msra.mxu0 0.0
    %3876 = vmatprep.subr.mxu0 0.0
    %3877 = vmatpush1.msra.mxu0 0.0
    %3878 = vmatprep.subr.mxu0 0.0
    %3879 = vmatpush1.msra.mxu0 0.0
    %3880 = vmatprep.subr.mxu0 0.0
    %3881 = vmatpush1.msra.mxu0 0.0
    %3882 = vmatprep.subr.mxu0 0.0
    %3883 = vmatpush1.msra.mxu0 0.0
    %3884 = vmatprep.subr.mxu0 0.0
    %3885 = vmatpush1.msra.mxu0 0.0
    %3886 = vmatprep.subr.mxu0 0.0
    %3887 = vmatpush1.msra.mxu0 0.0
    %3888 = vmatprep.subr.mxu0 0.0
    %3889 = vmatpush1.msra.mxu0 0.0
    %3890 = vmatprep.subr.mxu0 0.0
    %3891 = vmatpush1.msra.mxu0 0.0
    %3892 = vmatprep.subr.mxu0 0.0
    %3893 = vmatpush1.msra.mxu0 0.0
    %3894 = vmatprep.subr.mxu0 0.0
    %3895 = vmatpush1.msra.mxu0 0.0
    %3896 = vmatprep.subr.mxu0 0.0
    %3897 = vmatpush1.msra.mxu0 0.0
    %3898 = vmatprep.subr.mxu0 0.0
    %3899 = vmatpush1.msra.mxu0 0.0
    %3900 = vmatprep.subr.mxu0 0.0
    %3901 = vmatpush1.msra.mxu0 0.0
    %3902 = vmatprep.subr.mxu0 0.0
    %3903 = vmatpush1.msra.mxu0 0.0
    %3904 = vmatprep.subr.mxu0 0.0
    %3905 = vmatpush1.msra.mxu0 0.0
    %3906 = vmatprep.subr.mxu0 0.0
    %3907 = vmatpush1.msra.mxu0 0.0
    %3908 = vmatprep.subr.mxu0 0.0
    %3909 = vmatpush1.msra.mxu0 0.0
    %3910 = vmatprep.subr.mxu0 0.0
    %3911 = vmatpush1.msra.mxu0 0.0
    %3912 = vmatprep.subr.mxu0 0.0
    %3913 = vmatpush1.msra.mxu0 0.0
    %3914 = vmatprep.subr.mxu0 0.0
    %3915 = vmatpush1.msra.mxu0 0.0
    %3916 = vmatprep.mubr.f32.mxu0 0.0
    %3917 = vmatmul.mubr.f32.gmra.mrb[0].mxu0 %v3850
    %v3918 = vpop.f32.mrb[0].mxu0
    %v3919 = vadd.f32 0.0, %v3918
    %v3920 = vpop.f32.mrb[0].mxu0
    %3921 = vdwg.mxu0
    %3922 = vrot.lane.b32.xlu0 %v2583, 80
    %v3923 = vpop.permute.xlu0 %3922
    %v3926 = vsel %vm2825, %v3845, 0
    %3928 = vmatprep.subr.mxu0 0.0
    %3929 = vmatpush1.msra.mxu0 %v3923
    %3930 = vmatprep.subr.mxu0 0.0
    %3931 = vmatpush1.msra.mxu0 0.0
    %3932 = vmatprep.subr.mxu0 0.0
    %3933 = vmatpush1.msra.mxu0 0.0
    %3934 = vmatprep.subr.mxu0 0.0
    %3935 = vmatpush1.msra.mxu0 0.0
    %3936 = vmatprep.subr.mxu0 0.0
    %3937 = vmatpush1.msra.mxu0 0.0
    %3938 = vmatprep.subr.mxu0 0.0
    %3939 = vmatpush1.msra.mxu0 0.0
    %3940 = vmatprep.subr.mxu0 0.0
    %3941 = vmatpush1.msra.mxu0 0.0
    %3942 = vmatprep.subr.mxu0 0.0
    %3943 = vmatpush1.msra.mxu0 0.0
    %3944 = vmatprep.subr.mxu0 0.0
    %3945 = vmatpush1.msra.mxu0 0.0
    %3946 = vmatprep.subr.mxu0 0.0
    %3947 = vmatpush1.msra.mxu0 0.0
    %3948 = vmatprep.subr.mxu0 0.0
    %3949 = vmatpush1.msra.mxu0 0.0
    %3950 = vmatprep.subr.mxu0 0.0
    %3951 = vmatpush1.msra.mxu0 0.0
    %3952 = vmatprep.subr.mxu0 0.0
    %3953 = vmatpush1.msra.mxu0 0.0
    %3954 = vmatprep.subr.mxu0 0.0
    %3955 = vmatpush1.msra.mxu0 0.0
    %3956 = vmatprep.subr.mxu0 0.0
    %3957 = vmatpush1.msra.mxu0 0.0
    %3958 = vmatprep.subr.mxu0 0.0
    %3959 = vmatpush1.msra.mxu0 0.0
    %3960 = vmatprep.subr.mxu0 0.0
    %3961 = vmatpush1.msra.mxu0 0.0
    %3962 = vmatprep.subr.mxu0 0.0
    %3963 = vmatpush1.msra.mxu0 0.0
    %3964 = vmatprep.subr.mxu0 0.0
    %3965 = vmatpush1.msra.mxu0 0.0
    %3966 = vmatprep.subr.mxu0 0.0
    %3967 = vmatpush1.msra.mxu0 0.0
    %3968 = vmatprep.subr.mxu0 0.0
    %3969 = vmatpush1.msra.mxu0 0.0
    %3970 = vmatprep.subr.mxu0 0.0
    %3971 = vmatpush1.msra.mxu0 0.0
    %3972 = vmatprep.subr.mxu0 0.0
    %3973 = vmatpush1.msra.mxu0 0.0
    %3974 = vmatprep.subr.mxu0 0.0
    %3975 = vmatpush1.msra.mxu0 0.0
    %3976 = vmatprep.subr.mxu0 0.0
    %3977 = vmatpush1.msra.mxu0 0.0
    %3978 = vmatprep.subr.mxu0 0.0
    %3979 = vmatpush1.msra.mxu0 0.0
    %3980 = vmatprep.subr.mxu0 0.0
    %3981 = vmatpush1.msra.mxu0 0.0
    %3982 = vmatprep.subr.mxu0 0.0
    %3983 = vmatpush1.msra.mxu0 0.0
    %3984 = vmatprep.subr.mxu0 0.0
    %3985 = vmatpush1.msra.mxu0 0.0
    %3986 = vmatprep.subr.mxu0 0.0
    %3987 = vmatpush1.msra.mxu0 0.0
    %3988 = vmatprep.subr.mxu0 0.0
    %3989 = vmatpush1.msra.mxu0 0.0
    %3990 = vmatprep.subr.mxu0 0.0
    %3991 = vmatpush1.msra.mxu0 0.0
    %3992 = vmatprep.mubr.f32.mxu0 0.0
    %3993 = vmatmul.mubr.f32.gmra.mrb[0].mxu0 %v3926
    %v3994 = vpop.f32.mrb[0].mxu0
    %v3995 = vadd.f32 0.0, %v3994
    %v3996 = vpop.f32.mrb[0].mxu0
    %3997 = vdwg.mxu0
    %4000 = vrot.lane.b32.xlu0 %v3250, 16
    %v4001 = vpop.permute.xlu0 %4000
    %4002 = vrot.lane.b32.xlu0 %v3327, 16
    %v4003 = vpop.permute.xlu0 %4002
    %4008 = vrot.lane.b32.xlu0 %v3585, 32
    %v4009 = vpop.permute.xlu0 %4008
    %4010 = vrot.lane.b32.xlu0 %v3661, 32
    %v4011 = vpop.permute.xlu0 %4010
    %4016 = vrot.lane.b32.xlu0 %v3919, 48
    %v4017 = vpop.permute.xlu0 %4016
    %4018 = vrot.lane.b32.xlu0 %v3995, 48
    %v4019 = vpop.permute.xlu0 %4018
    %v4022 = vsel %vm2669, %v2918, %v4001
    %v4023 = vsel %vm2669, %v2991, %v4003
    %vm4024 = vcmask 261120
    %v4025 = vsel %vm4024, %v4022, %v4009
    %v4026 = vsel %vm4024, %v4023, %v4011
    %vm4027 = vcmask 392192
    %v4028 = vsel %vm4027, %v4025, %v4017
    %v4029 = vsel %vm4027, %v4026, %v4019
    %v4030 = vpack.c.bf16 %v4029, %v4028
    %v4031 = vld [vmem:[%s11] sm:$0xf]
    %v4032 = vld [vmem:[%s11 + $0x4] sm:$0xf]
    %v4033 = vld [vmem:[%s11 + $0x8] sm:$0xf]
    %v4034 = vld [vmem:[%s11 + $0xc] sm:$0xf]
    %v4035 = vld [vmem:[%s11 + $0x10] sm:$0xf]
    %v4036 = vld [vmem:[%s11 + $0x14] sm:$0xf]
    %v4037 = vld [vmem:[%s11 + $0x18] sm:$0xf]
    %v4038 = vld [vmem:[%s11 + $0x1c] sm:$0xf]
    %v4047 = vunpack.c.l.b16 %v4031
    %v4048 = vunpack.c.l.b16 %v4032
    %v4049 = vunpack.c.l.b16 %v4033
    %v4050 = vunpack.c.l.b16 %v4034
    %v4051 = vunpack.c.l.b16 %v4035
    %v4052 = vunpack.c.l.b16 %v4036
    %v4053 = vunpack.c.l.b16 %v4037
    %v4054 = vunpack.c.l.b16 %v4038
    %v4055 = vpack.c.b16 %v4048, %v4047
    %v4056 = vpack.c.b16 %v4050, %v4049
    %v4057 = vpack.c.b16 %v4052, %v4051
    %v4058 = vpack.c.b16 %v4054, %v4053
    %v4064 = vsel %vm975, %v4030, 0
    %4066 = vmatprep.subr.bf16.mxu0 0
    %4067 = vmatpush1.bf16.msra.mxu0 %v4055
    %4068 = vmatprep.subr.bf16.mxu0 0
    %4069 = vmatpush1.bf16.msra.mxu0 %v4056
    %4070 = vmatprep.subr.bf16.mxu0 0
    %4071 = vmatpush1.bf16.msra.mxu0 %v4057
    %4072 = vmatprep.subr.bf16.mxu0 0
    %4073 = vmatpush1.bf16.msra.mxu0 %v4058
    %4074 = vmatprep.subr.bf16.mxu0 0
    %4075 = vmatpush1.bf16.msra.mxu0 0
    %4076 = vmatprep.subr.bf16.mxu0 0
    %4077 = vmatpush1.bf16.msra.mxu0 0
    %4078 = vmatprep.subr.bf16.mxu0 0
    %4079 = vmatpush1.bf16.msra.mxu0 0
    %4080 = vmatprep.subr.bf16.mxu0 0
    %4081 = vmatpush1.bf16.msra.mxu0 0
    %4082 = vmatprep.subr.bf16.mxu0 0
    %4083 = vmatpush1.bf16.msra.mxu0 0
    %4084 = vmatprep.subr.bf16.mxu0 0
    %4085 = vmatpush1.bf16.msra.mxu0 0
    %4086 = vmatprep.subr.bf16.mxu0 0
    %4087 = vmatpush1.bf16.msra.mxu0 0
    %4088 = vmatprep.subr.bf16.mxu0 0
    %4089 = vmatpush1.bf16.msra.mxu0 0
    %4090 = vmatprep.subr.bf16.mxu0 0
    %4091 = vmatpush1.bf16.msra.mxu0 0
    %4092 = vmatprep.subr.bf16.mxu0 0
    %4093 = vmatpush1.bf16.msra.mxu0 0
    %4094 = vmatprep.subr.bf16.mxu0 0
    %4095 = vmatpush1.bf16.msra.mxu0 0
    %4096 = vmatprep.subr.bf16.mxu0 0
    %4097 = vmatpush1.bf16.msra.mxu0 0
    %4098 = vmatprep.mubr.bf16.mxu0 0
    %4099 = vmatmul.mubr.bf16.gmra.mrb[0].mxu0 %v4064
    %v4100 = vpop.f32.mrb[0].mxu0
    %v4101 = vadd.f32 0.0, %v4100
    %v4102 = vpop.f32.mrb[0].mxu0
    %v4103 = vpop.f32.mrb[0].mxu0
    %v4104 = vadd.f32 0.0, %v4103
    %v4105 = vpop.f32.mrb[0].mxu0
    %4106 = vdwg.mxu0
    %v4107 = vadd.f32 %v914, %v4101
    %v4108 = vadd.f32 %v915, %v4104
    %s4109 = scalar_lea.vmem %s9, 2
    %v4110 = vld [vmem:[%s4109] sm:$0x1]
    %v4111 = vmul.f32 %v4107, %v4107
    %v4112 = vmul.f32 %v4108, %v4108
    %v4113 = vsel %vm975, %v4111, 0.0
    %4114 = vadd.xlane.f32.xlu0 %v4113
    %v4115 = vpop.xlane.xlu0 %4114
    %v4116 = vsel %vm975, %v4112, 0.0
    %4117 = vadd.xlane.f32.xlu0 %v4116
    %v4118 = vpop.xlane.xlu0 %4117
    %v4119 = vmul.f32 %v4115, %v2473
    %v4120 = vmul.f32 %v4118, %v2473
    %v4121 = vadd.f32 %v4119, 1e-05
    %v4122 = vadd.f32 %v4120, 1e-05
    %v4123 = vrsqrt.pop %v4121
    %v4124 = vrsqrt.pop %v4122
    %v4125 = vmul.f32 %v4107, %v4123
    %v4126 = vmul.f32 %v4108, %v4124
    %v4128 = vlaneseq
    %v4129 = vshrl.u32 %v4128, 7
    %v4130 = vsub.s32 0, %v4129
    %v4131 = vrot.slane %v4110, %v4130
    %v4133 = vmul.f32 %v4125, %v4131
    %v4134 = vmul.f32 %v4126, %v4131
    %v4135 = vpack.c.bf16 %v4134, %v4133
    %v4136 = vld [vmem:[%s12] sm:$0xff]
    %v4137 = vld [vmem:[%s12 + $0x8] sm:$0xff]
    %v4138 = vld [vmem:[%s12 + $0x10] sm:$0xff]
    %v4139 = vld [vmem:[%s12 + $0x18] sm:$0xff]
    %v4140 = vld [vmem:[%s12 + $0x20] sm:$0xff]
    %v4141 = vld [vmem:[%s12 + $0x28] sm:$0xff]
    %v4142 = vld [vmem:[%s12 + $0x30] sm:$0xff]
    %v4143 = vld [vmem:[%s12 + $0x38] sm:$0xff]
    %v4152 = vunpack.c.l.b16 %v4136
    %v4153 = vunpack.c.h.b16 %v4136
    %v4154 = vunpack.c.l.b16 %v4137
    %v4155 = vunpack.c.h.b16 %v4137
    %v4156 = vunpack.c.l.b16 %v4138
    %v4157 = vunpack.c.h.b16 %v4138
    %v4158 = vunpack.c.l.b16 %v4139
    %v4159 = vunpack.c.h.b16 %v4139
    %v4160 = vunpack.c.l.b16 %v4140
    %v4161 = vunpack.c.h.b16 %v4140
    %v4162 = vunpack.c.l.b16 %v4141
    %v4163 = vunpack.c.h.b16 %v4141
    %v4164 = vunpack.c.l.b16 %v4142
    %v4165 = vunpack.c.h.b16 %v4142
    %v4166 = vunpack.c.l.b16 %v4143
    %v4167 = vunpack.c.h.b16 %v4143
    %v4168 = vpack.c.b16 %v4154, %v4152
    %v4169 = vpack.c.b16 %v4155, %v4153
    %v4170 = vpack.c.b16 %v4158, %v4156
    %v4171 = vpack.c.b16 %v4159, %v4157
    %v4172 = vpack.c.b16 %v4162, %v4160
    %v4173 = vpack.c.b16 %v4163, %v4161
    %v4174 = vpack.c.b16 %v4166, %v4164
    %v4175 = vpack.c.b16 %v4167, %v4165
    %v4185 = vsel %vm975, %v4135, 0
    %4187 = vmatprep.subr.bf16.mxu0 %v4169
    %4188 = vmatpush1.bf16.msra.mxu0 %v4168
    %4189 = vmatprep.subr.bf16.mxu0 %v4171
    %4190 = vmatpush1.bf16.msra.mxu0 %v4170
    %4191 = vmatprep.subr.bf16.mxu0 %v4173
    %4192 = vmatpush1.bf16.msra.mxu0 %v4172
    %4193 = vmatprep.subr.bf16.mxu0 %v4175
    %4194 = vmatpush1.bf16.msra.mxu0 %v4174
    %4195 = vmatprep.subr.bf16.mxu0 0
    %4196 = vmatpush1.bf16.msra.mxu0 0
    %4197 = vmatprep.subr.bf16.mxu0 0
    %4198 = vmatpush1.bf16.msra.mxu0 0
    %4199 = vmatprep.subr.bf16.mxu0 0
    %4200 = vmatpush1.bf16.msra.mxu0 0
    %4201 = vmatprep.subr.bf16.mxu0 0
    %4202 = vmatpush1.bf16.msra.mxu0 0
    %4203 = vmatprep.subr.bf16.mxu0 0
    %4204 = vmatpush1.bf16.msra.mxu0 0
    %4205 = vmatprep.subr.bf16.mxu0 0
    %4206 = vmatpush1.bf16.msra.mxu0 0
    %4207 = vmatprep.subr.bf16.mxu0 0
    %4208 = vmatpush1.bf16.msra.mxu0 0
    %4209 = vmatprep.subr.bf16.mxu0 0
    %4210 = vmatpush1.bf16.msra.mxu0 0
    %4211 = vmatprep.subr.bf16.mxu0 0
    %4212 = vmatpush1.bf16.msra.mxu0 0
    %4213 = vmatprep.subr.bf16.mxu0 0
    %4214 = vmatpush1.bf16.msra.mxu0 0
    %4215 = vmatprep.subr.bf16.mxu0 0
    %4216 = vmatpush1.bf16.msra.mxu0 0
    %4217 = vmatprep.subr.bf16.mxu0 0
    %4218 = vmatpush1.bf16.msra.mxu0 0
    %4219 = vmatprep.mubr.bf16.mxu0 0
    %4220 = vmatmul.mubr.bf16.gmra.mrb[0].mxu0 %v4185
    %v4221 = vpop.f32.mrb[0].mxu0
    %v4222 = vadd.f32 0.0, %v4221
    %v4223 = vpop.f32.mrb[0].mxu0
    %v4224 = vadd.f32 0.0, %v4223
    %v4225 = vpop.f32.mrb[0].mxu0
    %v4226 = vadd.f32 0.0, %v4225
    %v4227 = vpop.f32.mrb[0].mxu0
    %v4228 = vadd.f32 0.0, %v4227
    %4229 = vdwg.mxu0
    %v4230 = vxor.u32 %v4222, 2147483648
    %v4231 = vxor.u32 %v4226, 2147483648
    %v4232 = vmul.f32 %v4230, 1.442695
    %v4233 = vpow.pop %v4232
    %v4234 = vmul.f32 %v4231, 1.442695
    %v4235 = vpow.pop %v4234
    %v4236 = vadd.f32 %v4233, 1.0
    %v4237 = vadd.f32 %v4235, 1.0
    %v4238 = vrcp.pop %v4236
    %v4239 = vmul.f32 1.0, %v4238
    %v4240 = vrcp.pop %v4237
    %v4241 = vmul.f32 1.0, %v4240
    %v4242 = vmul.f32 %v4222, %v4239
    %v4243 = vmul.f32 %v4226, %v4241
    %v4244 = vmul.f32 %v4242, %v4224
    %v4245 = vmul.f32 %v4243, %v4228
    %v4246 = vpack.c.bf16 %v4245, %v4244
    %v4247 = vld [vmem:[%s13] sm:$0xf]
    %v4248 = vld [vmem:[%s13 + $0x4] sm:$0xf]
    %v4249 = vld [vmem:[%s13 + $0x8] sm:$0xf]
    %v4250 = vld [vmem:[%s13 + $0xc] sm:$0xf]
    %v4251 = vld [vmem:[%s13 + $0x10] sm:$0xf]
    %v4252 = vld [vmem:[%s13 + $0x14] sm:$0xf]
    %v4253 = vld [vmem:[%s13 + $0x18] sm:$0xf]
    %v4254 = vld [vmem:[%s13 + $0x1c] sm:$0xf]
    %v4255 = vld [vmem:[%s13 + $0x20] sm:$0xf]
    %v4256 = vld [vmem:[%s13 + $0x24] sm:$0xf]
    %v4257 = vld [vmem:[%s13 + $0x28] sm:$0xf]
    %v4258 = vld [vmem:[%s13 + $0x2c] sm:$0xf]
    %v4259 = vld [vmem:[%s13 + $0x30] sm:$0xf]
    %v4260 = vld [vmem:[%s13 + $0x34] sm:$0xf]
    %v4261 = vld [vmem:[%s13 + $0x38] sm:$0xf]
    %v4262 = vld [vmem:[%s13 + $0x3c] sm:$0xf]
    %v4279 = vunpack.c.l.b16 %v4247
    %v4280 = vunpack.c.l.b16 %v4248
    %v4281 = vunpack.c.l.b16 %v4249
    %v4282 = vunpack.c.l.b16 %v4250
    %v4283 = vunpack.c.l.b16 %v4251
    %v4284 = vunpack.c.l.b16 %v4252
    %v4285 = vunpack.c.l.b16 %v4253
    %v4286 = vunpack.c.l.b16 %v4254
    %v4287 = vunpack.c.l.b16 %v4255
    %v4288 = vunpack.c.l.b16 %v4256
    %v4289 = vunpack.c.l.b16 %v4257
    %v4290 = vunpack.c.l.b16 %v4258
    %v4291 = vunpack.c.l.b16 %v4259
    %v4292 = vunpack.c.l.b16 %v4260
    %v4293 = vunpack.c.l.b16 %v4261
    %v4294 = vunpack.c.l.b16 %v4262
    %v4295 = vpack.c.b16 %v4280, %v4279
    %v4296 = vpack.c.b16 %v4282, %v4281
    %v4297 = vpack.c.b16 %v4284, %v4283
    %v4298 = vpack.c.b16 %v4286, %v4285
    %v4299 = vpack.c.b16 %v4288, %v4287
    %v4300 = vpack.c.b16 %v4290, %v4289
    %v4301 = vpack.c.b16 %v4292, %v4291
    %v4302 = vpack.c.b16 %v4294, %v4293
    %4311 = vmatprep.subr.bf16.mxu0 0
    %4312 = vmatpush1.bf16.msra.mxu0 %v4295
    %4313 = vmatprep.subr.bf16.mxu0 0
    %4314 = vmatpush1.bf16.msra.mxu0 %v4296
    %4315 = vmatprep.subr.bf16.mxu0 0
    %4316 = vmatpush1.bf16.msra.mxu0 %v4297
    %4317 = vmatprep.subr.bf16.mxu0 0
    %4318 = vmatpush1.bf16.msra.mxu0 %v4298
    %4319 = vmatprep.subr.bf16.mxu0 0
    %4320 = vmatpush1.bf16.msra.mxu0 %v4299
    %4321 = vmatprep.subr.bf16.mxu0 0
    %4322 = vmatpush1.bf16.msra.mxu0 %v4300
    %4323 = vmatprep.subr.bf16.mxu0 0
    %4324 = vmatpush1.bf16.msra.mxu0 %v4301
    %4325 = vmatprep.subr.bf16.mxu0 0
    %4326 = vmatpush1.bf16.msra.mxu0 %v4302
    %4327 = vmatprep.subr.bf16.mxu0 0
    %4328 = vmatpush1.bf16.msra.mxu0 0
    %4329 = vmatprep.subr.bf16.mxu0 0
    %4330 = vmatpush1.bf16.msra.mxu0 0
    %4331 = vmatprep.subr.bf16.mxu0 0
    %4332 = vmatpush1.bf16.msra.mxu0 0
    %4333 = vmatprep.subr.bf16.mxu0 0
    %4334 = vmatpush1.bf16.msra.mxu0 0
    %4335 = vmatprep.subr.bf16.mxu0 0
    %4336 = vmatpush1.bf16.msra.mxu0 0
    %4337 = vmatprep.subr.bf16.mxu0 0
    %4338 = vmatpush1.bf16.msra.mxu0 0
    %4339 = vmatprep.subr.bf16.mxu0 0
    %4340 = vmatpush1.bf16.msra.mxu0 0
    %4341 = vmatprep.subr.bf16.mxu0 0
    %4342 = vmatpush1.bf16.msra.mxu0 0
    %4343 = vmatprep.mubr.bf16.mxu0 0
    %4344 = vmatmul.mubr.bf16.gmra.mrb[0].mxu0 %v4246
    %v4345 = vpop.f32.mrb[0].mxu0
    %v4346 = vadd.f32 0.0, %v4345
    %v4347 = vpop.f32.mrb[0].mxu0
    %v4348 = vpop.f32.mrb[0].mxu0
    %v4349 = vadd.f32 0.0, %v4348
    %v4350 = vpop.f32.mrb[0].mxu0
    %4351 = vdwg.mxu0
    %v4352 = vadd.f32 %v4107, %v4346
    %v4353 = vadd.f32 %v4108, %v4349
    %s4354 = scalar_lea.vmem %s9, 1
    %v4355 = vld [vmem:[%s4354] sm:$0x1]
    %v4356 = vmul.f32 %v4352, %v4352
    %v4357 = vmul.f32 %v4353, %v4353
    %v4358 = vsel %vm975, %v4356, 0.0
    %4359 = vadd.xlane.f32.xlu0 %v4358
    %v4360 = vpop.xlane.xlu0 %4359
    %v4361 = vsel %vm975, %v4357, 0.0
    %4362 = vadd.xlane.f32.xlu0 %v4361
    %v4363 = vpop.xlane.xlu0 %4362
    %v4364 = vmul.f32 %v4360, %v2473
    %v4365 = vmul.f32 %v4363, %v2473
    %v4366 = vadd.f32 %v4364, 1e-05
    %v4367 = vadd.f32 %v4365, 1e-05
    %v4368 = vrsqrt.pop %v4366
    %v4369 = vrsqrt.pop %v4367
    %v4370 = vmul.f32 %v4352, %v4368
    %v4371 = vmul.f32 %v4353, %v4369
    %v4373 = vlaneseq
    %v4374 = vshrl.u32 %v4373, 7
    %v4375 = vsub.s32 0, %v4374
    %v4376 = vrot.slane %v4355, %v4375
    %v4378 = vmul.f32 %v4370, %v4376
    %v4379 = vmul.f32 %v4371, %v4376
    %v4380 = vpack.c.bf16 %v4379, %v4378
    %s4381 = scalar_lea.vmem %s10, 64
    %v4382 = vld [vmem:[%s4381] sm:$0xff]
    %v4383 = vld [vmem:[%s4381 + $0x8] sm:$0xff]
    %v4384 = vld [vmem:[%s4381 + $0x10] sm:$0xff]
    %v4385 = vld [vmem:[%s4381 + $0x18] sm:$0xff]
    %v4386 = vld [vmem:[%s4381 + $0x20] sm:$0xff]
    %v4387 = vld [vmem:[%s4381 + $0x28] sm:$0xff]
    %v4388 = vld [vmem:[%s4381 + $0x30] sm:$0xff]
    %v4389 = vld [vmem:[%s4381 + $0x38] sm:$0xff]
    %v4398 = vunpack.c.l.b16 %v4382
    %v4399 = vunpack.c.h.b16 %v4382
    %v4400 = vunpack.c.l.b16 %v4383
    %v4401 = vunpack.c.h.b16 %v4383
    %v4402 = vunpack.c.l.b16 %v4384
    %v4403 = vunpack.c.h.b16 %v4384
    %v4404 = vunpack.c.l.b16 %v4385
    %v4405 = vunpack.c.h.b16 %v4385
    %v4406 = vunpack.c.l.b16 %v4386
    %v4407 = vunpack.c.h.b16 %v4386
    %v4408 = vunpack.c.l.b16 %v4387
    %v4409 = vunpack.c.h.b16 %v4387
    %v4410 = vunpack.c.l.b16 %v4388
    %v4411 = vunpack.c.h.b16 %v4388
    %v4412 = vunpack.c.l.b16 %v4389
    %v4413 = vunpack.c.h.b16 %v4389
    %v4414 = vpack.c.b16 %v4400, %v4398
    %v4415 = vpack.c.b16 %v4401, %v4399
    %v4416 = vpack.c.b16 %v4404, %v4402
    %v4417 = vpack.c.b16 %v4405, %v4403
    %v4418 = vpack.c.b16 %v4408, %v4406
    %v4419 = vpack.c.b16 %v4409, %v4407
    %v4420 = vpack.c.b16 %v4412, %v4410
    %v4421 = vpack.c.b16 %v4413, %v4411
    %v4431 = vsel %vm975, %v4380, 0
    %4433 = vmatprep.subr.bf16.mxu0 %v4415
    %4434 = vmatpush1.bf16.msra.mxu0 %v4414
    %4435 = vmatprep.subr.bf16.mxu0 %v4417
    %4436 = vmatpush1.bf16.msra.mxu0 %v4416
    %4437 = vmatprep.subr.bf16.mxu0 %v4419
    %4438 = vmatpush1.bf16.msra.mxu0 %v4418
    %4439 = vmatprep.subr.bf16.mxu0 %v4421
    %4440 = vmatpush1.bf16.msra.mxu0 %v4420
    %4441 = vmatprep.subr.bf16.mxu0 0
    %4442 = vmatpush1.bf16.msra.mxu0 0
    %4443 = vmatprep.subr.bf16.mxu0 0
    %4444 = vmatpush1.bf16.msra.mxu0 0
    %4445 = vmatprep.subr.bf16.mxu0 0
    %4446 = vmatpush1.bf16.msra.mxu0 0
    %4447 = vmatprep.subr.bf16.mxu0 0
    %4448 = vmatpush1.bf16.msra.mxu0 0
    %4449 = vmatprep.subr.bf16.mxu0 0
    %4450 = vmatpush1.bf16.msra.mxu0 0
    %4451 = vmatprep.subr.bf16.mxu0 0
    %4452 = vmatpush1.bf16.msra.mxu0 0
    %4453 = vmatprep.subr.bf16.mxu0 0
    %4454 = vmatpush1.bf16.msra.mxu0 0
    %4455 = vmatprep.subr.bf16.mxu0 0
    %4456 = vmatpush1.bf16.msra.mxu0 0
    %4457 = vmatprep.subr.bf16.mxu0 0
    %4458 = vmatpush1.bf16.msra.mxu0 0
    %4459 = vmatprep.subr.bf16.mxu0 0
    %4460 = vmatpush1.bf16.msra.mxu0 0
    %4461 = vmatprep.subr.bf16.mxu0 0
    %4462 = vmatpush1.bf16.msra.mxu0 0
    %4463 = vmatprep.subr.bf16.mxu0 0
    %4464 = vmatpush1.bf16.msra.mxu0 0
    %4465 = vmatprep.mubr.bf16.mxu0 0
    %4466 = vmatmul.mubr.bf16.gmra.mrb[0].mxu0 %v4431
    %v4467 = vpop.f32.mrb[0].mxu0
    %v4468 = vadd.f32 0.0, %v4467
    %v4469 = vpop.f32.mrb[0].mxu0
    %v4470 = vadd.f32 0.0, %v4469
    %v4471 = vpop.f32.mrb[0].mxu0
    %v4472 = vadd.f32 0.0, %v4471
    %v4473 = vpop.f32.mrb[0].mxu0
    %v4474 = vadd.f32 0.0, %v4473
    %4475 = vdwg.mxu0
    %4476 = vmatprep.subr.mxu0 0.0
    %4477 = vmatpush1.msra.mxu0 %v2448
    %4478 = vmatprep.subr.mxu0 0.0
    %4479 = vmatpush1.msra.mxu0 %v2449
    %4480 = vmatprep.subr.mxu0 0.0
    %4481 = vmatpush1.msra.mxu0 %v2450
    %4482 = vmatprep.subr.mxu0 0.0
    %4483 = vmatpush1.msra.mxu0 %v2451
    %4484 = vmatprep.subr.mxu0 0.0
    %4485 = vmatpush1.msra.mxu0 %v2452
    %4486 = vmatprep.subr.mxu0 0.0
    %4487 = vmatpush1.msra.mxu0 %v2453
    %4488 = vmatprep.subr.mxu0 0.0
    %4489 = vmatpush1.msra.mxu0 %v2454
    %4490 = vmatprep.subr.mxu0 0.0
    %4491 = vmatpush1.msra.mxu0 %v2455
    %4492 = vmatprep.subr.mxu0 0.0
    %4493 = vmatpush1.msra.mxu0 %v2456
    %4494 = vmatprep.subr.mxu0 0.0
    %4495 = vmatpush1.msra.mxu0 %v2457
    %4496 = vmatprep.subr.mxu0 0.0
    %4497 = vmatpush1.msra.mxu0 %v2458
    %4498 = vmatprep.subr.mxu0 0.0
    %4499 = vmatpush1.msra.mxu0 %v2459
    %4500 = vmatprep.subr.mxu0 0.0
    %4501 = vmatpush1.msra.mxu0 %v2460
    %4502 = vmatprep.subr.mxu0 0.0
    %4503 = vmatpush1.msra.mxu0 %v2461
    %4504 = vmatprep.subr.mxu0 0.0
    %4505 = vmatpush1.msra.mxu0 %v2462
    %4506 = vmatprep.subr.mxu0 0.0
    %4507 = vmatpush1.msra.mxu0 %v2463
    %4508 = vmatprep.subr.mxu0 0.0
    %4509 = vmatpush1.msra.mxu0 0.0
    %4510 = vmatprep.subr.mxu0 0.0
    %4511 = vmatpush1.msra.mxu0 0.0
    %4512 = vmatprep.subr.mxu0 0.0
    %4513 = vmatpush1.msra.mxu0 0.0
    %4514 = vmatprep.subr.mxu0 0.0
    %4515 = vmatpush1.msra.mxu0 0.0
    %4516 = vmatprep.subr.mxu0 0.0
    %4517 = vmatpush1.msra.mxu0 0.0
    %4518 = vmatprep.subr.mxu0 0.0
    %4519 = vmatpush1.msra.mxu0 0.0
    %4520 = vmatprep.subr.mxu0 0.0
    %4521 = vmatpush1.msra.mxu0 0.0
    %4522 = vmatprep.subr.mxu0 0.0
    %4523 = vmatpush1.msra.mxu0 0.0
    %4524 = vmatprep.subr.mxu0 0.0
    %4525 = vmatpush1.msra.mxu0 0.0
    %4526 = vmatprep.subr.mxu0 0.0
    %4527 = vmatpush1.msra.mxu0 0.0
    %4528 = vmatprep.subr.mxu0 0.0
    %4529 = vmatpush1.msra.mxu0 0.0
    %4530 = vmatprep.subr.mxu0 0.0
    %4531 = vmatpush1.msra.mxu0 0.0
    %4532 = vmatprep.subr.mxu0 0.0
    %4533 = vmatpush1.msra.mxu0 0.0
    %4534 = vmatprep.subr.mxu0 0.0
    %4535 = vmatpush1.msra.mxu0 0.0
    %4536 = vmatprep.subr.mxu0 0.0
    %4537 = vmatpush1.msra.mxu0 0.0
    %4538 = vmatprep.subr.mxu0 0.0
    %4539 = vmatpush1.msra.mxu0 0.0
    %4540 = vmatprep.mubr.f32.mxu0 0.0
    %4541 = vmatmul.mubr.f32.gmra.mrb[0].mxu0 %v4468
    %v4542 = vpop.f32.mrb[0].mxu0
    %v4543 = vadd.f32 0.0, %v4542
    %v4544 = vpop.f32.mrb[0].mxu0
    %4545 = vmatprep.mubr.f32.mxu0 0.0
    %4546 = vmatmul.mubr.f32.gmra.mrb[0].mxu0 %v4472
    %v4547 = vpop.f32.mrb[0].mxu0
    %v4548 = vadd.f32 0.0, %v4547
    %v4549 = vpop.f32.mrb[0].mxu0
    %4550 = vdwg.mxu0
    %v4551 = vmul.f32 %v4468, %v2446
    %v4552 = vmul.f32 %v4472, %v2446
    %v4553 = vmul.f32 %v4543, %v2447
    %v4554 = vmul.f32 %v4548, %v2447
    %v4555 = vadd.f32 %v4551, %v4553
    %v4556 = vadd.f32 %v4552, %v4554
    %4558 = vrot.lane.b32.xlu0 %v4555, 64
    %v4559 = vpop.permute.xlu0 %4558
    %v4560 = vsel %vm2669, %v4555, 0
    %v4562 = vsel %vm2669, %v4559, 0
    %4564 = vmatprep.subr.mxu0 0.0
    %4565 = vmatpush1.xpose.msra.mxu0 %v4562
    %4566 = vmatprep.subr.mxu0 0.0
    %4567 = vmatpush1.xpose.msra.mxu0 0.0
    %4568 = vmatprep.subr.mxu0 0.0
    %4569 = vmatpush1.xpose.msra.mxu0 0.0
    %4570 = vmatprep.subr.mxu0 0.0
    %4571 = vmatpush1.xpose.msra.mxu0 0.0
    %4572 = vmatprep.subr.mxu0 0.0
    %4573 = vmatpush1.xpose.msra.mxu0 0.0
    %4574 = vmatprep.subr.mxu0 0.0
    %4575 = vmatpush1.xpose.msra.mxu0 0.0
    %4576 = vmatprep.subr.mxu0 0.0
    %4577 = vmatpush1.xpose.msra.mxu0 0.0
    %4578 = vmatprep.subr.mxu0 0.0
    %4579 = vmatpush1.xpose.msra.mxu0 0.0
    %4580 = vmatprep.subr.mxu0 0.0
    %4581 = vmatpush1.xpose.msra.mxu0 0.0
    %4582 = vmatprep.subr.mxu0 0.0
    %4583 = vmatpush1.xpose.msra.mxu0 0.0
    %4584 = vmatprep.subr.mxu0 0.0
    %4585 = vmatpush1.xpose.msra.mxu0 0.0
    %4586 = vmatprep.subr.mxu0 0.0
    %4587 = vmatpush1.xpose.msra.mxu0 0.0
    %4588 = vmatprep.subr.mxu0 0.0
    %4589 = vmatpush1.xpose.msra.mxu0 0.0
    %4590 = vmatprep.subr.mxu0 0.0
    %4591 = vmatpush1.xpose.msra.mxu0 0.0
    %4592 = vmatprep.subr.mxu0 0.0
    %4593 = vmatpush1.xpose.msra.mxu0 0.0
    %4594 = vmatprep.subr.mxu0 0.0
    %4595 = vmatpush1.xpose.msra.mxu0 0.0
    %4596 = vmatprep.subr.mxu0 0.0
    %4597 = vmatpush1.xpose.msra.mxu0 0.0
    %4598 = vmatprep.subr.mxu0 0.0
    %4599 = vmatpush1.xpose.msra.mxu0 0.0
    %4600 = vmatprep.subr.mxu0 0.0
    %4601 = vmatpush1.xpose.msra.mxu0 0.0
    %4602 = vmatprep.subr.mxu0 0.0
    %4603 = vmatpush1.xpose.msra.mxu0 0.0
    %4604 = vmatprep.subr.mxu0 0.0
    %4605 = vmatpush1.xpose.msra.mxu0 0.0
    %4606 = vmatprep.subr.mxu0 0.0
    %4607 = vmatpush1.xpose.msra.mxu0 0.0
    %4608 = vmatprep.subr.mxu0 0.0
    %4609 = vmatpush1.xpose.msra.mxu0 0.0
    %4610 = vmatprep.subr.mxu0 0.0
    %4611 = vmatpush1.xpose.msra.mxu0 0.0
    %4612 = vmatprep.subr.mxu0 0.0
    %4613 = vmatpush1.xpose.msra.mxu0 0.0
    %4614 = vmatprep.subr.mxu0 0.0
    %4615 = vmatpush1.xpose.msra.mxu0 0.0
    %4616 = vmatprep.subr.mxu0 0.0
    %4617 = vmatpush1.xpose.msra.mxu0 0.0
    %4618 = vmatprep.subr.mxu0 0.0
    %4619 = vmatpush1.xpose.msra.mxu0 0.0
    %4620 = vmatprep.subr.mxu0 0.0
    %4621 = vmatpush1.xpose.msra.mxu0 0.0
    %4622 = vmatprep.subr.mxu0 0.0
    %4623 = vmatpush1.xpose.msra.mxu0 0.0
    %4624 = vmatprep.subr.mxu0 0.0
    %4625 = vmatpush1.xpose.msra.mxu0 0.0
    %4626 = vmatprep.subr.mxu0 0.0
    %4627 = vmatpush1.xpose.msra.mxu0 0.0
    %4628 = vmatprep.mubr.f32.mxu0 0.0
    %4629 = vmatmul.mubr.f32.gmra.mrb[0].mxu0 %v4560
    %v4630 = vpop.f32.mrb[0].mxu0
    %v4631 = vadd.f32 0.0, %v4630
    %v4632 = vpop.f32.mrb[0].mxu0
    %4633 = vdwg.mxu0
    %4635 = vrot.lane.b32.xlu0 %v4556, 64
    %v4636 = vpop.permute.xlu0 %4635
    %v4637 = vsel %vm2669, %v4556, 0
    %v4639 = vsel %vm2669, %v4636, 0
    %4641 = vmatprep.subr.mxu0 0.0
    %4642 = vmatpush1.xpose.msra.mxu0 %v4639
    %4643 = vmatprep.subr.mxu0 0.0
    %4644 = vmatpush1.xpose.msra.mxu0 0.0
    %4645 = vmatprep.subr.mxu0 0.0
    %4646 = vmatpush1.xpose.msra.mxu0 0.0
    %4647 = vmatprep.subr.mxu0 0.0
    %4648 = vmatpush1.xpose.msra.mxu0 0.0
    %4649 = vmatprep.subr.mxu0 0.0
    %4650 = vmatpush1.xpose.msra.mxu0 0.0
    %4651 = vmatprep.subr.mxu0 0.0
    %4652 = vmatpush1.xpose.msra.mxu0 0.0
    %4653 = vmatprep.subr.mxu0 0.0
    %4654 = vmatpush1.xpose.msra.mxu0 0.0
    %4655 = vmatprep.subr.mxu0 0.0
    %4656 = vmatpush1.xpose.msra.mxu0 0.0
    %4657 = vmatprep.subr.mxu0 0.0
    %4658 = vmatpush1.xpose.msra.mxu0 0.0
    %4659 = vmatprep.subr.mxu0 0.0
    %4660 = vmatpush1.xpose.msra.mxu0 0.0
    %4661 = vmatprep.subr.mxu0 0.0
    %4662 = vmatpush1.xpose.msra.mxu0 0.0
    %4663 = vmatprep.subr.mxu0 0.0
    %4664 = vmatpush1.xpose.msra.mxu0 0.0
    %4665 = vmatprep.subr.mxu0 0.0
    %4666 = vmatpush1.xpose.msra.mxu0 0.0
    %4667 = vmatprep.subr.mxu0 0.0
    %4668 = vmatpush1.xpose.msra.mxu0 0.0
    %4669 = vmatprep.subr.mxu0 0.0
    %4670 = vmatpush1.xpose.msra.mxu0 0.0
    %4671 = vmatprep.subr.mxu0 0.0
    %4672 = vmatpush1.xpose.msra.mxu0 0.0
    %4673 = vmatprep.subr.mxu0 0.0
    %4674 = vmatpush1.xpose.msra.mxu0 0.0
    %4675 = vmatprep.subr.mxu0 0.0
    %4676 = vmatpush1.xpose.msra.mxu0 0.0
    %4677 = vmatprep.subr.mxu0 0.0
    %4678 = vmatpush1.xpose.msra.mxu0 0.0
    %4679 = vmatprep.subr.mxu0 0.0
    %4680 = vmatpush1.xpose.msra.mxu0 0.0
    %4681 = vmatprep.subr.mxu0 0.0
    %4682 = vmatpush1.xpose.msra.mxu0 0.0
    %4683 = vmatprep.subr.mxu0 0.0
    %4684 = vmatpush1.xpose.msra.mxu0 0.0
    %4685 = vmatprep.subr.mxu0 0.0
    %4686 = vmatpush1.xpose.msra.mxu0 0.0
    %4687 = vmatprep.subr.mxu0 0.0
    %4688 = vmatpush1.xpose.msra.mxu0 0.0
    %4689 = vmatprep.subr.mxu0 0.0
    %4690 = vmatpush1.xpose.msra.mxu0 0.0
    %4691 = vmatprep.subr.mxu0 0.0
    %4692 = vmatpush1.xpose.msra.mxu0 0.0
    %4693 = vmatprep.subr.mxu0 0.0
    %4694 = vmatpush1.xpose.msra.mxu0 0.0
    %4695 = vmatprep.subr.mxu0 0.0
    %4696 = vmatpush1.xpose.msra.mxu0 0.0
    %4697 = vmatprep.subr.mxu0 0.0
    %4698 = vmatpush1.xpose.msra.mxu0 0.0
    %4699 = vmatprep.subr.mxu0 0.0
    %4700 = vmatpush1.xpose.msra.mxu0 0.0
    %4701 = vmatprep.subr.mxu0 0.0
    %4702 = vmatpush1.xpose.msra.mxu0 0.0
    %4703 = vmatprep.subr.mxu0 0.0
    %4704 = vmatpush1.xpose.msra.mxu0 0.0
    %4705 = vmatprep.mubr.f32.mxu0 0.0
    %4706 = vmatmul.mubr.f32.gmra.mrb[0].mxu0 %v4637
    %v4707 = vpop.f32.mrb[0].mxu0
    %v4708 = vadd.f32 0.0, %v4707
    %v4709 = vpop.f32.mrb[0].mxu0
    %4710 = vdwg.mxu0
    %v4711 = vmul.f32 %v4631, 0.25
    %v4712 = vmul.f32 %v4708, 0.25
    %v4713 = vadd.f32 %v4711, %v940
    %v4714 = vadd.f32 %v4712, %v944
    %v4715 = vsel %vm2825, %v4713, -inf
    %4716 = vmax.xlane.f32.xlu0 %v4715
    %v4717 = vpop.xlane.xlu0 %4716
    %v4718 = vsel %vm2825, %v4714, -inf
    %4719 = vmax.xlane.f32.xlu0 %v4718
    %v4720 = vpop.xlane.xlu0 %4719
    %v4721 = vsub.f32 %v4713, %v4717
    %v4722 = vsub.f32 %v4714, %v4720
    %v4723 = vmul.f32 %v4721, 1.442695
    %v4724 = vpow.pop %v4723
    %v4725 = vmul.f32 %v4722, 1.442695
    %v4726 = vpow.pop %v4725
    %v4727 = vsel %vm2825, %v4724, 0.0
    %4728 = vadd.xlane.f32.xlu0 %v4727
    %v4729 = vpop.xlane.xlu0 %4728
    %v4730 = vsel %vm2825, %v4726, 0.0
    %4731 = vadd.xlane.f32.xlu0 %v4730
    %v4732 = vpop.xlane.xlu0 %4731
    %v4733 = vrcp.pop %v4729
    %v4734 = vmul.f32 %v4724, %v4733
    %v4735 = vrcp.pop %v4732
    %v4736 = vmul.f32 %v4726, %v4735
    %v4738 = vsel %vm2825, %v4734, 0
    %4740 = vmatprep.subr.mxu0 0.0
    %4741 = vmatpush1.msra.mxu0 %v4470
    %4742 = vmatprep.subr.mxu0 0.0
    %4743 = vmatpush1.msra.mxu0 0.0
    %4744 = vmatprep.subr.mxu0 0.0
    %4745 = vmatpush1.msra.mxu0 0.0
    %4746 = vmatprep.subr.mxu0 0.0
    %4747 = vmatpush1.msra.mxu0 0.0
    %4748 = vmatprep.subr.mxu0 0.0
    %4749 = vmatpush1.msra.mxu0 0.0
    %4750 = vmatprep.subr.mxu0 0.0
    %4751 = vmatpush1.msra.mxu0 0.0
    %4752 = vmatprep.subr.mxu0 0.0
    %4753 = vmatpush1.msra.mxu0 0.0
    %4754 = vmatprep.subr.mxu0 0.0
    %4755 = vmatpush1.msra.mxu0 0.0
    %4756 = vmatprep.subr.mxu0 0.0
    %4757 = vmatpush1.msra.mxu0 0.0
    %4758 = vmatprep.subr.mxu0 0.0
    %4759 = vmatpush1.msra.mxu0 0.0
    %4760 = vmatprep.subr.mxu0 0.0
    %4761 = vmatpush1.msra.mxu0 0.0
    %4762 = vmatprep.subr.mxu0 0.0
    %4763 = vmatpush1.msra.mxu0 0.0
    %4764 = vmatprep.subr.mxu0 0.0
    %4765 = vmatpush1.msra.mxu0 0.0
    %4766 = vmatprep.subr.mxu0 0.0
    %4767 = vmatpush1.msra.mxu0 0.0
    %4768 = vmatprep.subr.mxu0 0.0
    %4769 = vmatpush1.msra.mxu0 0.0
    %4770 = vmatprep.subr.mxu0 0.0
    %4771 = vmatpush1.msra.mxu0 0.0
    %4772 = vmatprep.subr.mxu0 0.0
    %4773 = vmatpush1.msra.mxu0 0.0
    %4774 = vmatprep.subr.mxu0 0.0
    %4775 = vmatpush1.msra.mxu0 0.0
    %4776 = vmatprep.subr.mxu0 0.0
    %4777 = vmatpush1.msra.mxu0 0.0
    %4778 = vmatprep.subr.mxu0 0.0
    %4779 = vmatpush1.msra.mxu0 0.0
    %4780 = vmatprep.subr.mxu0 0.0
    %4781 = vmatpush1.msra.mxu0 0.0
    %4782 = vmatprep.subr.mxu0 0.0
    %4783 = vmatpush1.msra.mxu0 0.0
    %4784 = vmatprep.subr.mxu0 0.0
    %4785 = vmatpush1.msra.mxu0 0.0
    %4786 = vmatprep.subr.mxu0 0.0
    %4787 = vmatpush1.msra.mxu0 0.0
    %4788 = vmatprep.subr.mxu0 0.0
    %4789 = vmatpush1.msra.mxu0 0.0
    %4790 = vmatprep.subr.mxu0 0.0
    %4791 = vmatpush1.msra.mxu0 0.0
    %4792 = vmatprep.subr.mxu0 0.0
    %4793 = vmatpush1.msra.mxu0 0.0
    %4794 = vmatprep.subr.mxu0 0.0
    %4795 = vmatpush1.msra.mxu0 0.0
    %4796 = vmatprep.subr.mxu0 0.0
    %4797 = vmatpush1.msra.mxu0 0.0
    %4798 = vmatprep.subr.mxu0 0.0
    %4799 = vmatpush1.msra.mxu0 0.0
    %4800 = vmatprep.subr.mxu0 0.0
    %4801 = vmatpush1.msra.mxu0 0.0
    %4802 = vmatprep.subr.mxu0 0.0
    %4803 = vmatpush1.msra.mxu0 0.0
    %4804 = vmatprep.mubr.f32.mxu0 0.0
    %4805 = vmatmul.mubr.f32.gmra.mrb[0].mxu0 %v4738
    %v4806 = vpop.f32.mrb[0].mxu0
    %v4807 = vadd.f32 0.0, %v4806
    %v4808 = vpop.f32.mrb[0].mxu0
    %4809 = vdwg.mxu0
    %v4811 = vsel %vm2825, %v4736, 0
    %4813 = vmatprep.subr.mxu0 0.0
    %4814 = vmatpush1.msra.mxu0 %v4474
    %4815 = vmatprep.subr.mxu0 0.0
    %4816 = vmatpush1.msra.mxu0 0.0
    %4817 = vmatprep.subr.mxu0 0.0
    %4818 = vmatpush1.msra.mxu0 0.0
    %4819 = vmatprep.subr.mxu0 0.0
    %4820 = vmatpush1.msra.mxu0 0.0
    %4821 = vmatprep.subr.mxu0 0.0
    %4822 = vmatpush1.msra.mxu0 0.0
    %4823 = vmatprep.subr.mxu0 0.0
    %4824 = vmatpush1.msra.mxu0 0.0
    %4825 = vmatprep.subr.mxu0 0.0
    %4826 = vmatpush1.msra.mxu0 0.0
    %4827 = vmatprep.subr.mxu0 0.0
    %4828 = vmatpush1.msra.mxu0 0.0
    %4829 = vmatprep.subr.mxu0 0.0
    %4830 = vmatpush1.msra.mxu0 0.0
    %4831 = vmatprep.subr.mxu0 0.0
    %4832 = vmatpush1.msra.mxu0 0.0
    %4833 = vmatprep.subr.mxu0 0.0
    %4834 = vmatpush1.msra.mxu0 0.0
    %4835 = vmatprep.subr.mxu0 0.0
    %4836 = vmatpush1.msra.mxu0 0.0
    %4837 = vmatprep.subr.mxu0 0.0
    %4838 = vmatpush1.msra.mxu0 0.0
    %4839 = vmatprep.subr.mxu0 0.0
    %4840 = vmatpush1.msra.mxu0 0.0
    %4841 = vmatprep.subr.mxu0 0.0
    %4842 = vmatpush1.msra.mxu0 0.0
    %4843 = vmatprep.subr.mxu0 0.0
    %4844 = vmatpush1.msra.mxu0 0.0
    %4845 = vmatprep.subr.mxu0 0.0
    %4846 = vmatpush1.msra.mxu0 0.0
    %4847 = vmatprep.subr.mxu0 0.0
    %4848 = vmatpush1.msra.mxu0 0.0
    %4849 = vmatprep.subr.mxu0 0.0
    %4850 = vmatpush1.msra.mxu0 0.0
    %4851 = vmatprep.subr.mxu0 0.0
    %4852 = vmatpush1.msra.mxu0 0.0
    %4853 = vmatprep.subr.mxu0 0.0
    %4854 = vmatpush1.msra.mxu0 0.0
    %4855 = vmatprep.subr.mxu0 0.0
    %4856 = vmatpush1.msra.mxu0 0.0
    %4857 = vmatprep.subr.mxu0 0.0
    %4858 = vmatpush1.msra.mxu0 0.0
    %4859 = vmatprep.subr.mxu0 0.0
    %4860 = vmatpush1.msra.mxu0 0.0
    %4861 = vmatprep.subr.mxu0 0.0
    %4862 = vmatpush1.msra.mxu0 0.0
    %4863 = vmatprep.subr.mxu0 0.0
    %4864 = vmatpush1.msra.mxu0 0.0
    %4865 = vmatprep.subr.mxu0 0.0
    %4866 = vmatpush1.msra.mxu0 0.0
    %4867 = vmatprep.subr.mxu0 0.0
    %4868 = vmatpush1.msra.mxu0 0.0
    %4869 = vmatprep.subr.mxu0 0.0
    %4870 = vmatpush1.msra.mxu0 0.0
    %4871 = vmatprep.subr.mxu0 0.0
    %4872 = vmatpush1.msra.mxu0 0.0
    %4873 = vmatprep.subr.mxu0 0.0
    %4874 = vmatpush1.msra.mxu0 0.0
    %4875 = vmatprep.subr.mxu0 0.0
    %4876 = vmatpush1.msra.mxu0 0.0
    %4877 = vmatprep.mubr.f32.mxu0 0.0
    %4878 = vmatmul.mubr.f32.gmra.mrb[0].mxu0 %v4811
    %v4879 = vpop.f32.mrb[0].mxu0
    %v4880 = vadd.f32 0.0, %v4879
    %v4881 = vpop.f32.mrb[0].mxu0
    %4882 = vdwg.mxu0
    %4883 = vrot.lane.b32.xlu0 %v4555, 112
    %v4884 = vpop.permute.xlu0 %4883
    %4885 = vrot.lane.b32.xlu0 %v4555, 48
    %v4886 = vpop.permute.xlu0 %4885
    %v4887 = vsel %vm2669, %v4884, 0
    %v4889 = vsel %vm2669, %v4886, 0
    %4891 = vmatprep.subr.mxu0 0.0
    %4892 = vmatpush1.xpose.msra.mxu0 %v4889
    %4893 = vmatprep.subr.mxu0 0.0
    %4894 = vmatpush1.xpose.msra.mxu0 0.0
    %4895 = vmatprep.subr.mxu0 0.0
    %4896 = vmatpush1.xpose.msra.mxu0 0.0
    %4897 = vmatprep.subr.mxu0 0.0
    %4898 = vmatpush1.xpose.msra.mxu0 0.0
    %4899 = vmatprep.subr.mxu0 0.0
    %4900 = vmatpush1.xpose.msra.mxu0 0.0
    %4901 = vmatprep.subr.mxu0 0.0
    %4902 = vmatpush1.xpose.msra.mxu0 0.0
    %4903 = vmatprep.subr.mxu0 0.0
    %4904 = vmatpush1.xpose.msra.mxu0 0.0
    %4905 = vmatprep.subr.mxu0 0.0
    %4906 = vmatpush1.xpose.msra.mxu0 0.0
    %4907 = vmatprep.subr.mxu0 0.0
    %4908 = vmatpush1.xpose.msra.mxu0 0.0
    %4909 = vmatprep.subr.mxu0 0.0
    %4910 = vmatpush1.xpose.msra.mxu0 0.0
    %4911 = vmatprep.subr.mxu0 0.0
    %4912 = vmatpush1.xpose.msra.mxu0 0.0
    %4913 = vmatprep.subr.mxu0 0.0
    %4914 = vmatpush1.xpose.msra.mxu0 0.0
    %4915 = vmatprep.subr.mxu0 0.0
    %4916 = vmatpush1.xpose.msra.mxu0 0.0
    %4917 = vmatprep.subr.mxu0 0.0
    %4918 = vmatpush1.xpose.msra.mxu0 0.0
    %4919 = vmatprep.subr.mxu0 0.0
    %4920 = vmatpush1.xpose.msra.mxu0 0.0
    %4921 = vmatprep.subr.mxu0 0.0
    %4922 = vmatpush1.xpose.msra.mxu0 0.0
    %4923 = vmatprep.subr.mxu0 0.0
    %4924 = vmatpush1.xpose.msra.mxu0 0.0
    %4925 = vmatprep.subr.mxu0 0.0
    %4926 = vmatpush1.xpose.msra.mxu0 0.0
    %4927 = vmatprep.subr.mxu0 0.0
    %4928 = vmatpush1.xpose.msra.mxu0 0.0
    %4929 = vmatprep.subr.mxu0 0.0
    %4930 = vmatpush1.xpose.msra.mxu0 0.0
    %4931 = vmatprep.subr.mxu0 0.0
    %4932 = vmatpush1.xpose.msra.mxu0 0.0
    %4933 = vmatprep.subr.mxu0 0.0
    %4934 = vmatpush1.xpose.msra.mxu0 0.0
    %4935 = vmatprep.subr.mxu0 0.0
    %4936 = vmatpush1.xpose.msra.mxu0 0.0
    %4937 = vmatprep.subr.mxu0 0.0
    %4938 = vmatpush1.xpose.msra.mxu0 0.0
    %4939 = vmatprep.subr.mxu0 0.0
    %4940 = vmatpush1.xpose.msra.mxu0 0.0
    %4941 = vmatprep.subr.mxu0 0.0
    %4942 = vmatpush1.xpose.msra.mxu0 0.0
    %4943 = vmatprep.subr.mxu0 0.0
    %4944 = vmatpush1.xpose.msra.mxu0 0.0
    %4945 = vmatprep.subr.mxu0 0.0
    %4946 = vmatpush1.xpose.msra.mxu0 0.0
    %4947 = vmatprep.subr.mxu0 0.0
    %4948 = vmatpush1.xpose.msra.mxu0 0.0
    %4949 = vmatprep.subr.mxu0 0.0
    %4950 = vmatpush1.xpose.msra.mxu0 0.0
    %4951 = vmatprep.subr.mxu0 0.0
    %4952 = vmatpush1.xpose.msra.mxu0 0.0
    %4953 = vmatprep.subr.mxu0 0.0
    %4954 = vmatpush1.xpose.msra.mxu0 0.0
    %4955 = vmatprep.mubr.f32.mxu0 0.0
    %4956 = vmatmul.mubr.f32.gmra.mrb[0].mxu0 %v4887
    %v4957 = vpop.f32.mrb[0].mxu0
    %v4958 = vadd.f32 0.0, %v4957
    %v4959 = vpop.f32.mrb[0].mxu0
    %4960 = vdwg.mxu0
    %4961 = vrot.lane.b32.xlu0 %v4556, 112
    %v4962 = vpop.permute.xlu0 %4961
    %4963 = vrot.lane.b32.xlu0 %v4556, 48
    %v4964 = vpop.permute.xlu0 %4963
    %v4965 = vsel %vm2669, %v4962, 0
    %v4967 = vsel %vm2669, %v4964, 0
    %4969 = vmatprep.subr.mxu0 0.0
    %4970 = vmatpush1.xpose.msra.mxu0 %v4967
    %4971 = vmatprep.subr.mxu0 0.0
    %4972 = vmatpush1.xpose.msra.mxu0 0.0
    %4973 = vmatprep.subr.mxu0 0.0
    %4974 = vmatpush1.xpose.msra.mxu0 0.0
    %4975 = vmatprep.subr.mxu0 0.0
    %4976 = vmatpush1.xpose.msra.mxu0 0.0
    %4977 = vmatprep.subr.mxu0 0.0
    %4978 = vmatpush1.xpose.msra.mxu0 0.0
    %4979 = vmatprep.subr.mxu0 0.0
    %4980 = vmatpush1.xpose.msra.mxu0 0.0
    %4981 = vmatprep.subr.mxu0 0.0
    %4982 = vmatpush1.xpose.msra.mxu0 0.0
    %4983 = vmatprep.subr.mxu0 0.0
    %4984 = vmatpush1.xpose.msra.mxu0 0.0
    %4985 = vmatprep.subr.mxu0 0.0
    %4986 = vmatpush1.xpose.msra.mxu0 0.0
    %4987 = vmatprep.subr.mxu0 0.0
    %4988 = vmatpush1.xpose.msra.mxu0 0.0
    %4989 = vmatprep.subr.mxu0 0.0
    %4990 = vmatpush1.xpose.msra.mxu0 0.0
    %4991 = vmatprep.subr.mxu0 0.0
    %4992 = vmatpush1.xpose.msra.mxu0 0.0
    %4993 = vmatprep.subr.mxu0 0.0
    %4994 = vmatpush1.xpose.msra.mxu0 0.0
    %4995 = vmatprep.subr.mxu0 0.0
    %4996 = vmatpush1.xpose.msra.mxu0 0.0
    %4997 = vmatprep.subr.mxu0 0.0
    %4998 = vmatpush1.xpose.msra.mxu0 0.0
    %4999 = vmatprep.subr.mxu0 0.0
    %5000 = vmatpush1.xpose.msra.mxu0 0.0
    %5001 = vmatprep.subr.mxu0 0.0
    %5002 = vmatpush1.xpose.msra.mxu0 0.0
    %5003 = vmatprep.subr.mxu0 0.0
    %5004 = vmatpush1.xpose.msra.mxu0 0.0
    %5005 = vmatprep.subr.mxu0 0.0
    %5006 = vmatpush1.xpose.msra.mxu0 0.0
    %5007 = vmatprep.subr.mxu0 0.0
    %5008 = vmatpush1.xpose.msra.mxu0 0.0
    %5009 = vmatprep.subr.mxu0 0.0
    %5010 = vmatpush1.xpose.msra.mxu0 0.0
    %5011 = vmatprep.subr.mxu0 0.0
    %5012 = vmatpush1.xpose.msra.mxu0 0.0
    %5013 = vmatprep.subr.mxu0 0.0
    %5014 = vmatpush1.xpose.msra.mxu0 0.0
    %5015 = vmatprep.subr.mxu0 0.0
    %5016 = vmatpush1.xpose.msra.mxu0 0.0
    %5017 = vmatprep.subr.mxu0 0.0
    %5018 = vmatpush1.xpose.msra.mxu0 0.0
    %5019 = vmatprep.subr.mxu0 0.0
    %5020 = vmatpush1.xpose.msra.mxu0 0.0
    %5021 = vmatprep.subr.mxu0 0.0
    %5022 = vmatpush1.xpose.msra.mxu0 0.0
    %5023 = vmatprep.subr.mxu0 0.0
    %5024 = vmatpush1.xpose.msra.mxu0 0.0
    %5025 = vmatprep.subr.mxu0 0.0
    %5026 = vmatpush1.xpose.msra.mxu0 0.0
    %5027 = vmatprep.subr.mxu0 0.0
    %5028 = vmatpush1.xpose.msra.mxu0 0.0
    %5029 = vmatprep.subr.mxu0 0.0
    %5030 = vmatpush1.xpose.msra.mxu0 0.0
    %5031 = vmatprep.subr.mxu0 0.0
    %5032 = vmatpush1.xpose.msra.mxu0 0.0
    %5033 = vmatprep.mubr.f32.mxu0 0.0
    %5034 = vmatmul.mubr.f32.gmra.mrb[0].mxu0 %v4965
    %v5035 = vpop.f32.mrb[0].mxu0
    %v5036 = vadd.f32 0.0, %v5035
    %v5037 = vpop.f32.mrb[0].mxu0
    %5038 = vdwg.mxu0
    %v5039 = vmul.f32 %v4958, 0.25
    %v5040 = vmul.f32 %v5036, 0.25
    %v5041 = vadd.f32 %v5039, %v940
    %v5042 = vadd.f32 %v5040, %v944
    %v5043 = vsel %vm2825, %v5041, -inf
    %5044 = vmax.xlane.f32.xlu0 %v5043
    %v5045 = vpop.xlane.xlu0 %5044
    %v5046 = vsel %vm2825, %v5042, -inf
    %5047 = vmax.xlane.f32.xlu0 %v5046
    %v5048 = vpop.xlane.xlu0 %5047
    %v5049 = vsub.f32 %v5041, %v5045
    %v5050 = vsub.f32 %v5042, %v5048
    %v5051 = vmul.f32 %v5049, 1.442695
    %v5052 = vpow.pop %v5051
    %v5053 = vmul.f32 %v5050, 1.442695
    %v5054 = vpow.pop %v5053
    %v5055 = vsel %vm2825, %v5052, 0.0
    %5056 = vadd.xlane.f32.xlu0 %v5055
    %v5057 = vpop.xlane.xlu0 %5056
    %v5058 = vsel %vm2825, %v5054, 0.0
    %5059 = vadd.xlane.f32.xlu0 %v5058
    %v5060 = vpop.xlane.xlu0 %5059
    %v5061 = vrcp.pop %v5057
    %v5062 = vmul.f32 %v5052, %v5061
    %v5063 = vrcp.pop %v5060
    %v5064 = vmul.f32 %v5054, %v5063
    %5066 = vrot.lane.b32.xlu0 %v4470, 112
    %v5067 = vpop.permute.xlu0 %5066
    %v5070 = vsel %vm2825, %v5062, 0
    %5072 = vmatprep.subr.mxu0 0.0
    %5073 = vmatpush1.msra.mxu0 %v5067
    %5074 = vmatprep.subr.mxu0 0.0
    %5075 = vmatpush1.msra.mxu0 0.0
    %5076 = vmatprep.subr.mxu0 0.0
    %5077 = vmatpush1.msra.mxu0 0.0
    %5078 = vmatprep.subr.mxu0 0.0
    %5079 = vmatpush1.msra.mxu0 0.0
    %5080 = vmatprep.subr.mxu0 0.0
    %5081 = vmatpush1.msra.mxu0 0.0
    %5082 = vmatprep.subr.mxu0 0.0
    %5083 = vmatpush1.msra.mxu0 0.0
    %5084 = vmatprep.subr.mxu0 0.0
    %5085 = vmatpush1.msra.mxu0 0.0
    %5086 = vmatprep.subr.mxu0 0.0
    %5087 = vmatpush1.msra.mxu0 0.0
    %5088 = vmatprep.subr.mxu0 0.0
    %5089 = vmatpush1.msra.mxu0 0.0
    %5090 = vmatprep.subr.mxu0 0.0
    %5091 = vmatpush1.msra.mxu0 0.0
    %5092 = vmatprep.subr.mxu0 0.0
    %5093 = vmatpush1.msra.mxu0 0.0
    %5094 = vmatprep.subr.mxu0 0.0
    %5095 = vmatpush1.msra.mxu0 0.0
    %5096 = vmatprep.subr.mxu0 0.0
    %5097 = vmatpush1.msra.mxu0 0.0
    %5098 = vmatprep.subr.mxu0 0.0
    %5099 = vmatpush1.msra.mxu0 0.0
    %5100 = vmatprep.subr.mxu0 0.0
    %5101 = vmatpush1.msra.mxu0 0.0
    %5102 = vmatprep.subr.mxu0 0.0
    %5103 = vmatpush1.msra.mxu0 0.0
    %5104 = vmatprep.subr.mxu0 0.0
    %5105 = vmatpush1.msra.mxu0 0.0
    %5106 = vmatprep.subr.mxu0 0.0
    %5107 = vmatpush1.msra.mxu0 0.0
    %5108 = vmatprep.subr.mxu0 0.0
    %5109 = vmatpush1.msra.mxu0 0.0
    %5110 = vmatprep.subr.mxu0 0.0
    %5111 = vmatpush1.msra.mxu0 0.0
    %5112 = vmatprep.subr.mxu0 0.0
    %5113 = vmatpush1.msra.mxu0 0.0
    %5114 = vmatprep.subr.mxu0 0.0
    %5115 = vmatpush1.msra.mxu0 0.0
    %5116 = vmatprep.subr.mxu0 0.0
    %5117 = vmatpush1.msra.mxu0 0.0
    %5118 = vmatprep.subr.mxu0 0.0
    %5119 = vmatpush1.msra.mxu0 0.0
    %5120 = vmatprep.subr.mxu0 0.0
    %5121 = vmatpush1.msra.mxu0 0.0
    %5122 = vmatprep.subr.mxu0 0.0
    %5123 = vmatpush1.msra.mxu0 0.0
    %5124 = vmatprep.subr.mxu0 0.0
    %5125 = vmatpush1.msra.mxu0 0.0
    %5126 = vmatprep.subr.mxu0 0.0
    %5127 = vmatpush1.msra.mxu0 0.0
    %5128 = vmatprep.subr.mxu0 0.0
    %5129 = vmatpush1.msra.mxu0 0.0
    %5130 = vmatprep.subr.mxu0 0.0
    %5131 = vmatpush1.msra.mxu0 0.0
    %5132 = vmatprep.subr.mxu0 0.0
    %5133 = vmatpush1.msra.mxu0 0.0
    %5134 = vmatprep.subr.mxu0 0.0
    %5135 = vmatpush1.msra.mxu0 0.0
    %5136 = vmatprep.mubr.f32.mxu0 0.0
    %5137 = vmatmul.mubr.f32.gmra.mrb[0].mxu0 %v5070
    %v5138 = vpop.f32.mrb[0].mxu0
    %v5139 = vadd.f32 0.0, %v5138
    %v5140 = vpop.f32.mrb[0].mxu0
    %5141 = vdwg.mxu0
    %5143 = vrot.lane.b32.xlu0 %v4474, 112
    %v5144 = vpop.permute.xlu0 %5143
    %v5147 = vsel %vm2825, %v5064, 0
    %5149 = vmatprep.subr.mxu0 0.0
    %5150 = vmatpush1.msra.mxu0 %v5144
    %5151 = vmatprep.subr.mxu0 0.0
    %5152 = vmatpush1.msra.mxu0 0.0
    %5153 = vmatprep.subr.mxu0 0.0
    %5154 = vmatpush1.msra.mxu0 0.0
    %5155 = vmatprep.subr.mxu0 0.0
    %5156 = vmatpush1.msra.mxu0 0.0
    %5157 = vmatprep.subr.mxu0 0.0
    %5158 = vmatpush1.msra.mxu0 0.0
    %5159 = vmatprep.subr.mxu0 0.0
    %5160 = vmatpush1.msra.mxu0 0.0
    %5161 = vmatprep.subr.mxu0 0.0
    %5162 = vmatpush1.msra.mxu0 0.0
    %5163 = vmatprep.subr.mxu0 0.0
    %5164 = vmatpush1.msra.mxu0 0.0
    %5165 = vmatprep.subr.mxu0 0.0
    %5166 = vmatpush1.msra.mxu0 0.0
    %5167 = vmatprep.subr.mxu0 0.0
    %5168 = vmatpush1.msra.mxu0 0.0
    %5169 = vmatprep.subr.mxu0 0.0
    %5170 = vmatpush1.msra.mxu0 0.0
    %5171 = vmatprep.subr.mxu0 0.0
    %5172 = vmatpush1.msra.mxu0 0.0
    %5173 = vmatprep.subr.mxu0 0.0
    %5174 = vmatpush1.msra.mxu0 0.0
    %5175 = vmatprep.subr.mxu0 0.0
    %5176 = vmatpush1.msra.mxu0 0.0
    %5177 = vmatprep.subr.mxu0 0.0
    %5178 = vmatpush1.msra.mxu0 0.0
    %5179 = vmatprep.subr.mxu0 0.0
    %5180 = vmatpush1.msra.mxu0 0.0
    %5181 = vmatprep.subr.mxu0 0.0
    %5182 = vmatpush1.msra.mxu0 0.0
    %5183 = vmatprep.subr.mxu0 0.0
    %5184 = vmatpush1.msra.mxu0 0.0
    %5185 = vmatprep.subr.mxu0 0.0
    %5186 = vmatpush1.msra.mxu0 0.0
    %5187 = vmatprep.subr.mxu0 0.0
    %5188 = vmatpush1.msra.mxu0 0.0
    %5189 = vmatprep.subr.mxu0 0.0
    %5190 = vmatpush1.msra.mxu0 0.0
    %5191 = vmatprep.subr.mxu0 0.0
    %5192 = vmatpush1.msra.mxu0 0.0
    %5193 = vmatprep.subr.mxu0 0.0
    %5194 = vmatpush1.msra.mxu0 0.0
    %5195 = vmatprep.subr.mxu0 0.0
    %5196 = vmatpush1.msra.mxu0 0.0
    %5197 = vmatprep.subr.mxu0 0.0
    %5198 = vmatpush1.msra.mxu0 0.0
    %5199 = vmatprep.subr.mxu0 0.0
    %5200 = vmatpush1.msra.mxu0 0.0
    %5201 = vmatprep.subr.mxu0 0.0
    %5202 = vmatpush1.msra.mxu0 0.0
    %5203 = vmatprep.subr.mxu0 0.0
    %5204 = vmatpush1.msra.mxu0 0.0
    %5205 = vmatprep.subr.mxu0 0.0
    %5206 = vmatpush1.msra.mxu0 0.0
    %5207 = vmatprep.subr.mxu0 0.0
    %5208 = vmatpush1.msra.mxu0 0.0
    %5209 = vmatprep.subr.mxu0 0.0
    %5210 = vmatpush1.msra.mxu0 0.0
    %5211 = vmatprep.subr.mxu0 0.0
    %5212 = vmatpush1.msra.mxu0 0.0
    %5213 = vmatprep.mubr.f32.mxu0 0.0
    %5214 = vmatmul.mubr.f32.gmra.mrb[0].mxu0 %v5147
    %v5215 = vpop.f32.mrb[0].mxu0
    %v5216 = vadd.f32 0.0, %v5215
    %v5217 = vpop.f32.mrb[0].mxu0
    %5218 = vdwg.mxu0
    %5219 = vrot.lane.b32.xlu0 %v4555, 96
    %v5220 = vpop.permute.xlu0 %5219
    %5221 = vrot.lane.b32.xlu0 %v4555, 32
    %v5222 = vpop.permute.xlu0 %5221
    %v5223 = vsel %vm2669, %v5220, 0
    %v5225 = vsel %vm2669, %v5222, 0
    %5227 = vmatprep.subr.mxu0 0.0
    %5228 = vmatpush1.xpose.msra.mxu0 %v5225
    %5229 = vmatprep.subr.mxu0 0.0
    %5230 = vmatpush1.xpose.msra.mxu0 0.0
    %5231 = vmatprep.subr.mxu0 0.0
    %5232 = vmatpush1.xpose.msra.mxu0 0.0
    %5233 = vmatprep.subr.mxu0 0.0
    %5234 = vmatpush1.xpose.msra.mxu0 0.0
    %5235 = vmatprep.subr.mxu0 0.0
    %5236 = vmatpush1.xpose.msra.mxu0 0.0
    %5237 = vmatprep.subr.mxu0 0.0
    %5238 = vmatpush1.xpose.msra.mxu0 0.0
    %5239 = vmatprep.subr.mxu0 0.0
    %5240 = vmatpush1.xpose.msra.mxu0 0.0
    %5241 = vmatprep.subr.mxu0 0.0
    %5242 = vmatpush1.xpose.msra.mxu0 0.0
    %5243 = vmatprep.subr.mxu0 0.0
    %5244 = vmatpush1.xpose.msra.mxu0 0.0
    %5245 = vmatprep.subr.mxu0 0.0
    %5246 = vmatpush1.xpose.msra.mxu0 0.0
    %5247 = vmatprep.subr.mxu0 0.0
    %5248 = vmatpush1.xpose.msra.mxu0 0.0
    %5249 = vmatprep.subr.mxu0 0.0
    %5250 = vmatpush1.xpose.msra.mxu0 0.0
    %5251 = vmatprep.subr.mxu0 0.0
    %5252 = vmatpush1.xpose.msra.mxu0 0.0
    %5253 = vmatprep.subr.mxu0 0.0
    %5254 = vmatpush1.xpose.msra.mxu0 0.0
    %5255 = vmatprep.subr.mxu0 0.0
    %5256 = vmatpush1.xpose.msra.mxu0 0.0
    %5257 = vmatprep.subr.mxu0 0.0
    %5258 = vmatpush1.xpose.msra.mxu0 0.0
    %5259 = vmatprep.subr.mxu0 0.0
    %5260 = vmatpush1.xpose.msra.mxu0 0.0
    %5261 = vmatprep.subr.mxu0 0.0
    %5262 = vmatpush1.xpose.msra.mxu0 0.0
    %5263 = vmatprep.subr.mxu0 0.0
    %5264 = vmatpush1.xpose.msra.mxu0 0.0
    %5265 = vmatprep.subr.mxu0 0.0
    %5266 = vmatpush1.xpose.msra.mxu0 0.0
    %5267 = vmatprep.subr.mxu0 0.0
    %5268 = vmatpush1.xpose.msra.mxu0 0.0
    %5269 = vmatprep.subr.mxu0 0.0
    %5270 = vmatpush1.xpose.msra.mxu0 0.0
    %5271 = vmatprep.subr.mxu0 0.0
    %5272 = vmatpush1.xpose.msra.mxu0 0.0
    %5273 = vmatprep.subr.mxu0 0.0
    %5274 = vmatpush1.xpose.msra.mxu0 0.0
    %5275 = vmatprep.subr.mxu0 0.0
    %5276 = vmatpush1.xpose.msra.mxu0 0.0
    %5277 = vmatprep.subr.mxu0 0.0
    %5278 = vmatpush1.xpose.msra.mxu0 0.0
    %5279 = vmatprep.subr.mxu0 0.0
    %5280 = vmatpush1.xpose.msra.mxu0 0.0
    %5281 = vmatprep.subr.mxu0 0.0
    %5282 = vmatpush1.xpose.msra.mxu0 0.0
    %5283 = vmatprep.subr.mxu0 0.0
    %5284 = vmatpush1.xpose.msra.mxu0 0.0
    %5285 = vmatprep.subr.mxu0 0.0
    %5286 = vmatpush1.xpose.msra.mxu0 0.0
    %5287 = vmatprep.subr.mxu0 0.0
    %5288 = vmatpush1.xpose.msra.mxu0 0.0
    %5289 = vmatprep.subr.mxu0 0.0
    %5290 = vmatpush1.xpose.msra.mxu0 0.0
    %5291 = vmatprep.mubr.f32.mxu0 0.0
    %5292 = vmatmul.mubr.f32.gmra.mrb[0].mxu0 %v5223
    %v5293 = vpop.f32.mrb[0].mxu0
    %v5294 = vadd.f32 0.0, %v5293
    %v5295 = vpop.f32.mrb[0].mxu0
    %5296 = vdwg.mxu0
    %5297 = vrot.lane.b32.xlu0 %v4556, 96
    %v5298 = vpop.permute.xlu0 %5297
    %5299 = vrot.lane.b32.xlu0 %v4556, 32
    %v5300 = vpop.permute.xlu0 %5299
    %v5301 = vsel %vm2669, %v5298, 0
    %v5303 = vsel %vm2669, %v5300, 0
    %5305 = vmatprep.subr.mxu0 0.0
    %5306 = vmatpush1.xpose.msra.mxu0 %v5303
    %5307 = vmatprep.subr.mxu0 0.0
    %5308 = vmatpush1.xpose.msra.mxu0 0.0
    %5309 = vmatprep.subr.mxu0 0.0
    %5310 = vmatpush1.xpose.msra.mxu0 0.0
    %5311 = vmatprep.subr.mxu0 0.0
    %5312 = vmatpush1.xpose.msra.mxu0 0.0
    %5313 = vmatprep.subr.mxu0 0.0
    %5314 = vmatpush1.xpose.msra.mxu0 0.0
    %5315 = vmatprep.subr.mxu0 0.0
    %5316 = vmatpush1.xpose.msra.mxu0 0.0
    %5317 = vmatprep.subr.mxu0 0.0
    %5318 = vmatpush1.xpose.msra.mxu0 0.0
    %5319 = vmatprep.subr.mxu0 0.0
    %5320 = vmatpush1.xpose.msra.mxu0 0.0
    %5321 = vmatprep.subr.mxu0 0.0
    %5322 = vmatpush1.xpose.msra.mxu0 0.0
    %5323 = vmatprep.subr.mxu0 0.0
    %5324 = vmatpush1.xpose.msra.mxu0 0.0
    %5325 = vmatprep.subr.mxu0 0.0
    %5326 = vmatpush1.xpose.msra.mxu0 0.0
    %5327 = vmatprep.subr.mxu0 0.0
    %5328 = vmatpush1.xpose.msra.mxu0 0.0
    %5329 = vmatprep.subr.mxu0 0.0
    %5330 = vmatpush1.xpose.msra.mxu0 0.0
    %5331 = vmatprep.subr.mxu0 0.0
    %5332 = vmatpush1.xpose.msra.mxu0 0.0
    %5333 = vmatprep.subr.mxu0 0.0
    %5334 = vmatpush1.xpose.msra.mxu0 0.0
    %5335 = vmatprep.subr.mxu0 0.0
    %5336 = vmatpush1.xpose.msra.mxu0 0.0
    %5337 = vmatprep.subr.mxu0 0.0
    %5338 = vmatpush1.xpose.msra.mxu0 0.0
    %5339 = vmatprep.subr.mxu0 0.0
    %5340 = vmatpush1.xpose.msra.mxu0 0.0
    %5341 = vmatprep.subr.mxu0 0.0
    %5342 = vmatpush1.xpose.msra.mxu0 0.0
    %5343 = vmatprep.subr.mxu0 0.0
    %5344 = vmatpush1.xpose.msra.mxu0 0.0
    %5345 = vmatprep.subr.mxu0 0.0
    %5346 = vmatpush1.xpose.msra.mxu0 0.0
    %5347 = vmatprep.subr.mxu0 0.0
    %5348 = vmatpush1.xpose.msra.mxu0 0.0
    %5349 = vmatprep.subr.mxu0 0.0
    %5350 = vmatpush1.xpose.msra.mxu0 0.0
    %5351 = vmatprep.subr.mxu0 0.0
    %5352 = vmatpush1.xpose.msra.mxu0 0.0
    %5353 = vmatprep.subr.mxu0 0.0
    %5354 = vmatpush1.xpose.msra.mxu0 0.0
    %5355 = vmatprep.subr.mxu0 0.0
    %5356 = vmatpush1.xpose.msra.mxu0 0.0
    %5357 = vmatprep.subr.mxu0 0.0
    %5358 = vmatpush1.xpose.msra.mxu0 0.0
    %5359 = vmatprep.subr.mxu0 0.0
    %5360 = vmatpush1.xpose.msra.mxu0 0.0
    %5361 = vmatprep.subr.mxu0 0.0
    %5362 = vmatpush1.xpose.msra.mxu0 0.0
    %5363 = vmatprep.subr.mxu0 0.0
    %5364 = vmatpush1.xpose.msra.mxu0 0.0
    %5365 = vmatprep.subr.mxu0 0.0
    %5366 = vmatpush1.xpose.msra.mxu0 0.0
    %5367 = vmatprep.subr.mxu0 0.0
    %5368 = vmatpush1.xpose.msra.mxu0 0.0
    %5369 = vmatprep.mubr.f32.mxu0 0.0
    %5370 = vmatmul.mubr.f32.gmra.mrb[0].mxu0 %v5301
    %v5371 = vpop.f32.mrb[0].mxu0
    %v5372 = vadd.f32 0.0, %v5371
    %v5373 = vpop.f32.mrb[0].mxu0
    %5374 = vdwg.mxu0
    %v5375 = vmul.f32 %v5294, 0.25
    %v5376 = vmul.f32 %v5372, 0.25
    %v5377 = vadd.f32 %v5375, %v940
    %v5378 = vadd.f32 %v5376, %v944
    %v5379 = vsel %vm2825, %v5377, -inf
    %5380 = vmax.xlane.f32.xlu0 %v5379
    %v5381 = vpop.xlane.xlu0 %5380
    %v5382 = vsel %vm2825, %v5378, -inf
    %5383 = vmax.xlane.f32.xlu0 %v5382
    %v5384 = vpop.xlane.xlu0 %5383
    %v5385 = vsub.f32 %v5377, %v5381
    %v5386 = vsub.f32 %v5378, %v5384
    %v5387 = vmul.f32 %v5385, 1.442695
    %v5388 = vpow.pop %v5387
    %v5389 = vmul.f32 %v5386, 1.442695
    %v5390 = vpow.pop %v5389
    %v5391 = vsel %vm2825, %v5388, 0.0
    %5392 = vadd.xlane.f32.xlu0 %v5391
    %v5393 = vpop.xlane.xlu0 %5392
    %v5394 = vsel %vm2825, %v5390, 0.0
    %5395 = vadd.xlane.f32.xlu0 %v5394
    %v5396 = vpop.xlane.xlu0 %5395
    %v5397 = vrcp.pop %v5393
    %v5398 = vmul.f32 %v5388, %v5397
    %v5399 = vrcp.pop %v5396
    %v5400 = vmul.f32 %v5390, %v5399
    %5401 = vrot.lane.b32.xlu0 %v4470, 96
    %v5402 = vpop.permute.xlu0 %5401
    %v5405 = vsel %vm2825, %v5398, 0
    %5407 = vmatprep.subr.mxu0 0.0
    %5408 = vmatpush1.msra.mxu0 %v5402
    %5409 = vmatprep.subr.mxu0 0.0
    %5410 = vmatpush1.msra.mxu0 0.0
    %5411 = vmatprep.subr.mxu0 0.0
    %5412 = vmatpush1.msra.mxu0 0.0
    %5413 = vmatprep.subr.mxu0 0.0
    %5414 = vmatpush1.msra.mxu0 0.0
    %5415 = vmatprep.subr.mxu0 0.0
    %5416 = vmatpush1.msra.mxu0 0.0
    %5417 = vmatprep.subr.mxu0 0.0
    %5418 = vmatpush1.msra.mxu0 0.0
    %5419 = vmatprep.subr.mxu0 0.0
    %5420 = vmatpush1.msra.mxu0 0.0
    %5421 = vmatprep.subr.mxu0 0.0
    %5422 = vmatpush1.msra.mxu0 0.0
    %5423 = vmatprep.subr.mxu0 0.0
    %5424 = vmatpush1.msra.mxu0 0.0
    %5425 = vmatprep.subr.mxu0 0.0
    %5426 = vmatpush1.msra.mxu0 0.0
    %5427 = vmatprep.subr.mxu0 0.0
    %5428 = vmatpush1.msra.mxu0 0.0
    %5429 = vmatprep.subr.mxu0 0.0
    %5430 = vmatpush1.msra.mxu0 0.0
    %5431 = vmatprep.subr.mxu0 0.0
    %5432 = vmatpush1.msra.mxu0 0.0
    %5433 = vmatprep.subr.mxu0 0.0
    %5434 = vmatpush1.msra.mxu0 0.0
    %5435 = vmatprep.subr.mxu0 0.0
    %5436 = vmatpush1.msra.mxu0 0.0
    %5437 = vmatprep.subr.mxu0 0.0
    %5438 = vmatpush1.msra.mxu0 0.0
    %5439 = vmatprep.subr.mxu0 0.0
    %5440 = vmatpush1.msra.mxu0 0.0
    %5441 = vmatprep.subr.mxu0 0.0
    %5442 = vmatpush1.msra.mxu0 0.0
    %5443 = vmatprep.subr.mxu0 0.0
    %5444 = vmatpush1.msra.mxu0 0.0
    %5445 = vmatprep.subr.mxu0 0.0
    %5446 = vmatpush1.msra.mxu0 0.0
    %5447 = vmatprep.subr.mxu0 0.0
    %5448 = vmatpush1.msra.mxu0 0.0
    %5449 = vmatprep.subr.mxu0 0.0
    %5450 = vmatpush1.msra.mxu0 0.0
    %5451 = vmatprep.subr.mxu0 0.0
    %5452 = vmatpush1.msra.mxu0 0.0
    %5453 = vmatprep.subr.mxu0 0.0
    %5454 = vmatpush1.msra.mxu0 0.0
    %5455 = vmatprep.subr.mxu0 0.0
    %5456 = vmatpush1.msra.mxu0 0.0
    %5457 = vmatprep.subr.mxu0 0.0
    %5458 = vmatpush1.msra.mxu0 0.0
    %5459 = vmatprep.subr.mxu0 0.0
    %5460 = vmatpush1.msra.mxu0 0.0
    %5461 = vmatprep.subr.mxu0 0.0
    %5462 = vmatpush1.msra.mxu0 0.0
    %5463 = vmatprep.subr.mxu0 0.0
    %5464 = vmatpush1.msra.mxu0 0.0
    %5465 = vmatprep.subr.mxu0 0.0
    %5466 = vmatpush1.msra.mxu0 0.0
    %5467 = vmatprep.subr.mxu0 0.0
    %5468 = vmatpush1.msra.mxu0 0.0
    %5469 = vmatprep.subr.mxu0 0.0
    %5470 = vmatpush1.msra.mxu0 0.0
    %5471 = vmatprep.mubr.f32.mxu0 0.0
    %5472 = vmatmul.mubr.f32.gmra.mrb[0].mxu0 %v5405
    %v5473 = vpop.f32.mrb[0].mxu0
    %v5474 = vadd.f32 0.0, %v5473
    %v5475 = vpop.f32.mrb[0].mxu0
    %5476 = vdwg.mxu0
    %5477 = vrot.lane.b32.xlu0 %v4474, 96
    %v5478 = vpop.permute.xlu0 %5477
    %v5481 = vsel %vm2825, %v5400, 0
    %5483 = vmatprep.subr.mxu0 0.0
    %5484 = vmatpush1.msra.mxu0 %v5478
    %5485 = vmatprep.subr.mxu0 0.0
    %5486 = vmatpush1.msra.mxu0 0.0
    %5487 = vmatprep.subr.mxu0 0.0
    %5488 = vmatpush1.msra.mxu0 0.0
    %5489 = vmatprep.subr.mxu0 0.0
    %5490 = vmatpush1.msra.mxu0 0.0
    %5491 = vmatprep.subr.mxu0 0.0
    %5492 = vmatpush1.msra.mxu0 0.0
    %5493 = vmatprep.subr.mxu0 0.0
    %5494 = vmatpush1.msra.mxu0 0.0
    %5495 = vmatprep.subr.mxu0 0.0
    %5496 = vmatpush1.msra.mxu0 0.0
    %5497 = vmatprep.subr.mxu0 0.0
    %5498 = vmatpush1.msra.mxu0 0.0
    %5499 = vmatprep.subr.mxu0 0.0
    %5500 = vmatpush1.msra.mxu0 0.0
    %5501 = vmatprep.subr.mxu0 0.0
    %5502 = vmatpush1.msra.mxu0 0.0
    %5503 = vmatprep.subr.mxu0 0.0
    %5504 = vmatpush1.msra.mxu0 0.0
    %5505 = vmatprep.subr.mxu0 0.0
    %5506 = vmatpush1.msra.mxu0 0.0
    %5507 = vmatprep.subr.mxu0 0.0
    %5508 = vmatpush1.msra.mxu0 0.0
    %5509 = vmatprep.subr.mxu0 0.0
    %5510 = vmatpush1.msra.mxu0 0.0
    %5511 = vmatprep.subr.mxu0 0.0
    %5512 = vmatpush1.msra.mxu0 0.0
    %5513 = vmatprep.subr.mxu0 0.0
    %5514 = vmatpush1.msra.mxu0 0.0
    %5515 = vmatprep.subr.mxu0 0.0
    %5516 = vmatpush1.msra.mxu0 0.0
    %5517 = vmatprep.subr.mxu0 0.0
    %5518 = vmatpush1.msra.mxu0 0.0
    %5519 = vmatprep.subr.mxu0 0.0
    %5520 = vmatpush1.msra.mxu0 0.0
    %5521 = vmatprep.subr.mxu0 0.0
    %5522 = vmatpush1.msra.mxu0 0.0
    %5523 = vmatprep.subr.mxu0 0.0
    %5524 = vmatpush1.msra.mxu0 0.0
    %5525 = vmatprep.subr.mxu0 0.0
    %5526 = vmatpush1.msra.mxu0 0.0
    %5527 = vmatprep.subr.mxu0 0.0
    %5528 = vmatpush1.msra.mxu0 0.0
    %5529 = vmatprep.subr.mxu0 0.0
    %5530 = vmatpush1.msra.mxu0 0.0
    %5531 = vmatprep.subr.mxu0 0.0
    %5532 = vmatpush1.msra.mxu0 0.0
    %5533 = vmatprep.subr.mxu0 0.0
    %5534 = vmatpush1.msra.mxu0 0.0
    %5535 = vmatprep.subr.mxu0 0.0
    %5536 = vmatpush1.msra.mxu0 0.0
    %5537 = vmatprep.subr.mxu0 0.0
    %5538 = vmatpush1.msra.mxu0 0.0
    %5539 = vmatprep.subr.mxu0 0.0
    %5540 = vmatpush1.msra.mxu0 0.0
    %5541 = vmatprep.subr.mxu0 0.0
    %5542 = vmatpush1.msra.mxu0 0.0
    %5543 = vmatprep.subr.mxu0 0.0
    %5544 = vmatpush1.msra.mxu0 0.0
    %5545 = vmatprep.subr.mxu0 0.0
    %5546 = vmatpush1.msra.mxu0 0.0
    %5547 = vmatprep.mubr.f32.mxu0 0.0
    %5548 = vmatmul.mubr.f32.gmra.mrb[0].mxu0 %v5481
    %v5549 = vpop.f32.mrb[0].mxu0
    %v5550 = vadd.f32 0.0, %v5549
    %v5551 = vpop.f32.mrb[0].mxu0
    %5552 = vdwg.mxu0
    %5553 = vrot.lane.b32.xlu0 %v4555, 80
    %v5554 = vpop.permute.xlu0 %5553
    %5555 = vrot.lane.b32.xlu0 %v4555, 16
    %v5556 = vpop.permute.xlu0 %5555
    %v5557 = vsel %vm2669, %v5554, 0
    %v5559 = vsel %vm2669, %v5556, 0
    %5561 = vmatprep.subr.mxu0 0.0
    %5562 = vmatpush1.xpose.msra.mxu0 %v5559
    %5563 = vmatprep.subr.mxu0 0.0
    %5564 = vmatpush1.xpose.msra.mxu0 0.0
    %5565 = vmatprep.subr.mxu0 0.0
    %5566 = vmatpush1.xpose.msra.mxu0 0.0
    %5567 = vmatprep.subr.mxu0 0.0
    %5568 = vmatpush1.xpose.msra.mxu0 0.0
    %5569 = vmatprep.subr.mxu0 0.0
    %5570 = vmatpush1.xpose.msra.mxu0 0.0
    %5571 = vmatprep.subr.mxu0 0.0
    %5572 = vmatpush1.xpose.msra.mxu0 0.0
    %5573 = vmatprep.subr.mxu0 0.0
    %5574 = vmatpush1.xpose.msra.mxu0 0.0
    %5575 = vmatprep.subr.mxu0 0.0
    %5576 = vmatpush1.xpose.msra.mxu0 0.0
    %5577 = vmatprep.subr.mxu0 0.0
    %5578 = vmatpush1.xpose.msra.mxu0 0.0
    %5579 = vmatprep.subr.mxu0 0.0
    %5580 = vmatpush1.xpose.msra.mxu0 0.0
    %5581 = vmatprep.subr.mxu0 0.0
    %5582 = vmatpush1.xpose.msra.mxu0 0.0
    %5583 = vmatprep.subr.mxu0 0.0
    %5584 = vmatpush1.xpose.msra.mxu0 0.0
    %5585 = vmatprep.subr.mxu0 0.0
    %5586 = vmatpush1.xpose.msra.mxu0 0.0
    %5587 = vmatprep.subr.mxu0 0.0
    %5588 = vmatpush1.xpose.msra.mxu0 0.0
    %5589 = vmatprep.subr.mxu0 0.0
    %5590 = vmatpush1.xpose.msra.mxu0 0.0
    %5591 = vmatprep.subr.mxu0 0.0
    %5592 = vmatpush1.xpose.msra.mxu0 0.0
    %5593 = vmatprep.subr.mxu0 0.0
    %5594 = vmatpush1.xpose.msra.mxu0 0.0
    %5595 = vmatprep.subr.mxu0 0.0
    %5596 = vmatpush1.xpose.msra.mxu0 0.0
    %5597 = vmatprep.subr.mxu0 0.0
    %5598 = vmatpush1.xpose.msra.mxu0 0.0
    %5599 = vmatprep.subr.mxu0 0.0
    %5600 = vmatpush1.xpose.msra.mxu0 0.0
    %5601 = vmatprep.subr.mxu0 0.0
    %5602 = vmatpush1.xpose.msra.mxu0 0.0
    %5603 = vmatprep.subr.mxu0 0.0
    %5604 = vmatpush1.xpose.msra.mxu0 0.0
    %5605 = vmatprep.subr.mxu0 0.0
    %5606 = vmatpush1.xpose.msra.mxu0 0.0
    %5607 = vmatprep.subr.mxu0 0.0
    %5608 = vmatpush1.xpose.msra.mxu0 0.0
    %5609 = vmatprep.subr.mxu0 0.0
    %5610 = vmatpush1.xpose.msra.mxu0 0.0
    %5611 = vmatprep.subr.mxu0 0.0
    %5612 = vmatpush1.xpose.msra.mxu0 0.0
    %5613 = vmatprep.subr.mxu0 0.0
    %5614 = vmatpush1.xpose.msra.mxu0 0.0
    %5615 = vmatprep.subr.mxu0 0.0
    %5616 = vmatpush1.xpose.msra.mxu0 0.0
    %5617 = vmatprep.subr.mxu0 0.0
    %5618 = vmatpush1.xpose.msra.mxu0 0.0
    %5619 = vmatprep.subr.mxu0 0.0
    %5620 = vmatpush1.xpose.msra.mxu0 0.0
    %5621 = vmatprep.subr.mxu0 0.0
    %5622 = vmatpush1.xpose.msra.mxu0 0.0
    %5623 = vmatprep.subr.mxu0 0.0
    %5624 = vmatpush1.xpose.msra.mxu0 0.0
    %5625 = vmatprep.mubr.f32.mxu0 0.0
    %5626 = vmatmul.mubr.f32.gmra.mrb[0].mxu0 %v5557
    %v5627 = vpop.f32.mrb[0].mxu0
    %v5628 = vadd.f32 0.0, %v5627
    %v5629 = vpop.f32.mrb[0].mxu0
    %5630 = vdwg.mxu0
    %5631 = vrot.lane.b32.xlu0 %v4556, 80
    %v5632 = vpop.permute.xlu0 %5631
    %5633 = vrot.lane.b32.xlu0 %v4556, 16
    %v5634 = vpop.permute.xlu0 %5633
    %v5635 = vsel %vm2669, %v5632, 0
    %v5637 = vsel %vm2669, %v5634, 0
    %5639 = vmatprep.subr.mxu0 0.0
    %5640 = vmatpush1.xpose.msra.mxu0 %v5637
    %5641 = vmatprep.subr.mxu0 0.0
    %5642 = vmatpush1.xpose.msra.mxu0 0.0
    %5643 = vmatprep.subr.mxu0 0.0
    %5644 = vmatpush1.xpose.msra.mxu0 0.0
    %5645 = vmatprep.subr.mxu0 0.0
    %5646 = vmatpush1.xpose.msra.mxu0 0.0
    %5647 = vmatprep.subr.mxu0 0.0
    %5648 = vmatpush1.xpose.msra.mxu0 0.0
    %5649 = vmatprep.subr.mxu0 0.0
    %5650 = vmatpush1.xpose.msra.mxu0 0.0
    %5651 = vmatprep.subr.mxu0 0.0
    %5652 = vmatpush1.xpose.msra.mxu0 0.0
    %5653 = vmatprep.subr.mxu0 0.0
    %5654 = vmatpush1.xpose.msra.mxu0 0.0
    %5655 = vmatprep.subr.mxu0 0.0
    %5656 = vmatpush1.xpose.msra.mxu0 0.0
    %5657 = vmatprep.subr.mxu0 0.0
    %5658 = vmatpush1.xpose.msra.mxu0 0.0
    %5659 = vmatprep.subr.mxu0 0.0
    %5660 = vmatpush1.xpose.msra.mxu0 0.0
    %5661 = vmatprep.subr.mxu0 0.0
    %5662 = vmatpush1.xpose.msra.mxu0 0.0
    %5663 = vmatprep.subr.mxu0 0.0
    %5664 = vmatpush1.xpose.msra.mxu0 0.0
    %5665 = vmatprep.subr.mxu0 0.0
    %5666 = vmatpush1.xpose.msra.mxu0 0.0
    %5667 = vmatprep.subr.mxu0 0.0
    %5668 = vmatpush1.xpose.msra.mxu0 0.0
    %5669 = vmatprep.subr.mxu0 0.0
    %5670 = vmatpush1.xpose.msra.mxu0 0.0
    %5671 = vmatprep.subr.mxu0 0.0
    %5672 = vmatpush1.xpose.msra.mxu0 0.0
    %5673 = vmatprep.subr.mxu0 0.0
    %5674 = vmatpush1.xpose.msra.mxu0 0.0
    %5675 = vmatprep.subr.mxu0 0.0
    %5676 = vmatpush1.xpose.msra.mxu0 0.0
    %5677 = vmatprep.subr.mxu0 0.0
    %5678 = vmatpush1.xpose.msra.mxu0 0.0
    %5679 = vmatprep.subr.mxu0 0.0
    %5680 = vmatpush1.xpose.msra.mxu0 0.0
    %5681 = vmatprep.subr.mxu0 0.0
    %5682 = vmatpush1.xpose.msra.mxu0 0.0
    %5683 = vmatprep.subr.mxu0 0.0
    %5684 = vmatpush1.xpose.msra.mxu0 0.0
    %5685 = vmatprep.subr.mxu0 0.0
    %5686 = vmatpush1.xpose.msra.mxu0 0.0
    %5687 = vmatprep.subr.mxu0 0.0
    %5688 = vmatpush1.xpose.msra.mxu0 0.0
    %5689 = vmatprep.subr.mxu0 0.0
    %5690 = vmatpush1.xpose.msra.mxu0 0.0
    %5691 = vmatprep.subr.mxu0 0.0
    %5692 = vmatpush1.xpose.msra.mxu0 0.0
    %5693 = vmatprep.subr.mxu0 0.0
    %5694 = vmatpush1.xpose.msra.mxu0 0.0
    %5695 = vmatprep.subr.mxu0 0.0
    %5696 = vmatpush1.xpose.msra.mxu0 0.0
    %5697 = vmatprep.subr.mxu0 0.0
    %5698 = vmatpush1.xpose.msra.mxu0 0.0
    %5699 = vmatprep.subr.mxu0 0.0
    %5700 = vmatpush1.xpose.msra.mxu0 0.0
    %5701 = vmatprep.subr.mxu0 0.0
    %5702 = vmatpush1.xpose.msra.mxu0 0.0
    %5703 = vmatprep.mubr.f32.mxu0 0.0
    %5704 = vmatmul.mubr.f32.gmra.mrb[0].mxu0 %v5635
    %v5705 = vpop.f32.mrb[0].mxu0
    %v5706 = vadd.f32 0.0, %v5705
    %v5707 = vpop.f32.mrb[0].mxu0
    %5708 = vdwg.mxu0
    %v5709 = vmul.f32 %v5628, 0.25
    %v5710 = vmul.f32 %v5706, 0.25
    %v5711 = vadd.f32 %v5709, %v940
    %v5712 = vadd.f32 %v5710, %v944
    %v5713 = vsel %vm2825, %v5711, -inf
    %5714 = vmax.xlane.f32.xlu0 %v5713
    %v5715 = vpop.xlane.xlu0 %5714
    %v5716 = vsel %vm2825, %v5712, -inf
    %5717 = vmax.xlane.f32.xlu0 %v5716
    %v5718 = vpop.xlane.xlu0 %5717
    %v5719 = vsub.f32 %v5711, %v5715
    %v5720 = vsub.f32 %v5712, %v5718
    %v5721 = vmul.f32 %v5719, 1.442695
    %v5722 = vpow.pop %v5721
    %v5723 = vmul.f32 %v5720, 1.442695
    %v5724 = vpow.pop %v5723
    %v5725 = vsel %vm2825, %v5722, 0.0
    %5726 = vadd.xlane.f32.xlu0 %v5725
    %v5727 = vpop.xlane.xlu0 %5726
    %v5728 = vsel %vm2825, %v5724, 0.0
    %5729 = vadd.xlane.f32.xlu0 %v5728
    %v5730 = vpop.xlane.xlu0 %5729
    %v5731 = vrcp.pop %v5727
    %v5732 = vmul.f32 %v5722, %v5731
    %v5733 = vrcp.pop %v5730
    %v5734 = vmul.f32 %v5724, %v5733
    %5735 = vrot.lane.b32.xlu0 %v4470, 80
    %v5736 = vpop.permute.xlu0 %5735
    %v5739 = vsel %vm2825, %v5732, 0
    %5741 = vmatprep.subr.mxu0 0.0
    %5742 = vmatpush1.msra.mxu0 %v5736
    %5743 = vmatprep.subr.mxu0 0.0
    %5744 = vmatpush1.msra.mxu0 0.0
    %5745 = vmatprep.subr.mxu0 0.0
    %5746 = vmatpush1.msra.mxu0 0.0
    %5747 = vmatprep.subr.mxu0 0.0
    %5748 = vmatpush1.msra.mxu0 0.0
    %5749 = vmatprep.subr.mxu0 0.0
    %5750 = vmatpush1.msra.mxu0 0.0
    %5751 = vmatprep.subr.mxu0 0.0
    %5752 = vmatpush1.msra.mxu0 0.0
    %5753 = vmatprep.subr.mxu0 0.0
    %5754 = vmatpush1.msra.mxu0 0.0
    %5755 = vmatprep.subr.mxu0 0.0
    %5756 = vmatpush1.msra.mxu0 0.0
    %5757 = vmatprep.subr.mxu0 0.0
    %5758 = vmatpush1.msra.mxu0 0.0
    %5759 = vmatprep.subr.mxu0 0.0
    %5760 = vmatpush1.msra.mxu0 0.0
    %5761 = vmatprep.subr.mxu0 0.0
    %5762 = vmatpush1.msra.mxu0 0.0
    %5763 = vmatprep.subr.mxu0 0.0
    %5764 = vmatpush1.msra.mxu0 0.0
    %5765 = vmatprep.subr.mxu0 0.0
    %5766 = vmatpush1.msra.mxu0 0.0
    %5767 = vmatprep.subr.mxu0 0.0
    %5768 = vmatpush1.msra.mxu0 0.0
    %5769 = vmatprep.subr.mxu0 0.0
    %5770 = vmatpush1.msra.mxu0 0.0
    %5771 = vmatprep.subr.mxu0 0.0
    %5772 = vmatpush1.msra.mxu0 0.0
    %5773 = vmatprep.subr.mxu0 0.0
    %5774 = vmatpush1.msra.mxu0 0.0
    %5775 = vmatprep.subr.mxu0 0.0
    %5776 = vmatpush1.msra.mxu0 0.0
    %5777 = vmatprep.subr.mxu0 0.0
    %5778 = vmatpush1.msra.mxu0 0.0
    %5779 = vmatprep.subr.mxu0 0.0
    %5780 = vmatpush1.msra.mxu0 0.0
    %5781 = vmatprep.subr.mxu0 0.0
    %5782 = vmatpush1.msra.mxu0 0.0
    %5783 = vmatprep.subr.mxu0 0.0
    %5784 = vmatpush1.msra.mxu0 0.0
    %5785 = vmatprep.subr.mxu0 0.0
    %5786 = vmatpush1.msra.mxu0 0.0
    %5787 = vmatprep.subr.mxu0 0.0
    %5788 = vmatpush1.msra.mxu0 0.0
    %5789 = vmatprep.subr.mxu0 0.0
    %5790 = vmatpush1.msra.mxu0 0.0
    %5791 = vmatprep.subr.mxu0 0.0
    %5792 = vmatpush1.msra.mxu0 0.0
    %5793 = vmatprep.subr.mxu0 0.0
    %5794 = vmatpush1.msra.mxu0 0.0
    %5795 = vmatprep.subr.mxu0 0.0
    %5796 = vmatpush1.msra.mxu0 0.0
    %5797 = vmatprep.subr.mxu0 0.0
    %5798 = vmatpush1.msra.mxu0 0.0
    %5799 = vmatprep.subr.mxu0 0.0
    %5800 = vmatpush1.msra.mxu0 0.0
    %5801 = vmatprep.subr.mxu0 0.0
    %5802 = vmatpush1.msra.mxu0 0.0
    %5803 = vmatprep.subr.mxu0 0.0
    %5804 = vmatpush1.msra.mxu0 0.0
    %5805 = vmatprep.mubr.f32.mxu0 0.0
    %5806 = vmatmul.mubr.f32.gmra.mrb[0].mxu0 %v5739
    %v5807 = vpop.f32.mrb[0].mxu0
    %v5808 = vadd.f32 0.0, %v5807
    %v5809 = vpop.f32.mrb[0].mxu0
    %5810 = vdwg.mxu0
    %5811 = vrot.lane.b32.xlu0 %v4474, 80
    %v5812 = vpop.permute.xlu0 %5811
    %v5815 = vsel %vm2825, %v5734, 0
    %5817 = vmatprep.subr.mxu0 0.0
    %5818 = vmatpush1.msra.mxu0 %v5812
    %5819 = vmatprep.subr.mxu0 0.0
    %5820 = vmatpush1.msra.mxu0 0.0
    %5821 = vmatprep.subr.mxu0 0.0
    %5822 = vmatpush1.msra.mxu0 0.0
    %5823 = vmatprep.subr.mxu0 0.0
    %5824 = vmatpush1.msra.mxu0 0.0
    %5825 = vmatprep.subr.mxu0 0.0
    %5826 = vmatpush1.msra.mxu0 0.0
    %5827 = vmatprep.subr.mxu0 0.0
    %5828 = vmatpush1.msra.mxu0 0.0
    %5829 = vmatprep.subr.mxu0 0.0
    %5830 = vmatpush1.msra.mxu0 0.0
    %5831 = vmatprep.subr.mxu0 0.0
    %5832 = vmatpush1.msra.mxu0 0.0
    %5833 = vmatprep.subr.mxu0 0.0
    %5834 = vmatpush1.msra.mxu0 0.0
    %5835 = vmatprep.subr.mxu0 0.0
    %5836 = vmatpush1.msra.mxu0 0.0
    %5837 = vmatprep.subr.mxu0 0.0
    %5838 = vmatpush1.msra.mxu0 0.0
    %5839 = vmatprep.subr.mxu0 0.0
    %5840 = vmatpush1.msra.mxu0 0.0
    %5841 = vmatprep.subr.mxu0 0.0
    %5842 = vmatpush1.msra.mxu0 0.0
    %5843 = vmatprep.subr.mxu0 0.0
    %5844 = vmatpush1.msra.mxu0 0.0
    %5845 = vmatprep.subr.mxu0 0.0
    %5846 = vmatpush1.msra.mxu0 0.0
    %5847 = vmatprep.subr.mxu0 0.0
    %5848 = vmatpush1.msra.mxu0 0.0
    %5849 = vmatprep.subr.mxu0 0.0
    %5850 = vmatpush1.msra.mxu0 0.0
    %5851 = vmatprep.subr.mxu0 0.0
    %5852 = vmatpush1.msra.mxu0 0.0
    %5853 = vmatprep.subr.mxu0 0.0
    %5854 = vmatpush1.msra.mxu0 0.0
    %5855 = vmatprep.subr.mxu0 0.0
    %5856 = vmatpush1.msra.mxu0 0.0
    %5857 = vmatprep.subr.mxu0 0.0
    %5858 = vmatpush1.msra.mxu0 0.0
    %5859 = vmatprep.subr.mxu0 0.0
    %5860 = vmatpush1.msra.mxu0 0.0
    %5861 = vmatprep.subr.mxu0 0.0
    %5862 = vmatpush1.msra.mxu0 0.0
    %5863 = vmatprep.subr.mxu0 0.0
    %5864 = vmatpush1.msra.mxu0 0.0
    %5865 = vmatprep.subr.mxu0 0.0
    %5866 = vmatpush1.msra.mxu0 0.0
    %5867 = vmatprep.subr.mxu0 0.0
    %5868 = vmatpush1.msra.mxu0 0.0
    %5869 = vmatprep.subr.mxu0 0.0
    %5870 = vmatpush1.msra.mxu0 0.0
    %5871 = vmatprep.subr.mxu0 0.0
    %5872 = vmatpush1.msra.mxu0 0.0
    %5873 = vmatprep.subr.mxu0 0.0
    %5874 = vmatpush1.msra.mxu0 0.0
    %5875 = vmatprep.subr.mxu0 0.0
    %5876 = vmatpush1.msra.mxu0 0.0
    %5877 = vmatprep.subr.mxu0 0.0
    %5878 = vmatpush1.msra.mxu0 0.0
    %5879 = vmatprep.subr.mxu0 0.0
    %5880 = vmatpush1.msra.mxu0 0.0
    %5881 = vmatprep.mubr.f32.mxu0 0.0
    %5882 = vmatmul.mubr.f32.gmra.mrb[0].mxu0 %v5815
    %v5883 = vpop.f32.mrb[0].mxu0
    %v5884 = vadd.f32 0.0, %v5883
    %v5885 = vpop.f32.mrb[0].mxu0
    %5886 = vdwg.mxu0
    %5889 = vrot.lane.b32.xlu0 %v5139, 16
    %v5890 = vpop.permute.xlu0 %5889
    %5891 = vrot.lane.b32.xlu0 %v5216, 16
    %v5892 = vpop.permute.xlu0 %5891
    %5897 = vrot.lane.b32.xlu0 %v5474, 32
    %v5898 = vpop.permute.xlu0 %5897
    %5899 = vrot.lane.b32.xlu0 %v5550, 32
    %v5900 = vpop.permute.xlu0 %5899
    %5905 = vrot.lane.b32.xlu0 %v5808, 48
    %v5906 = vpop.permute.xlu0 %5905
    %5907 = vrot.lane.b32.xlu0 %v5884, 48
    %v5908 = vpop.permute.xlu0 %5907
    %v5911 = vsel %vm2669, %v4807, %v5890
    %v5912 = vsel %vm2669, %v4880, %v5892
    %v5913 = vsel %vm4024, %v5911, %v5898
    %v5914 = vsel %vm4024, %v5912, %v5900
    %v5915 = vsel %vm4027, %v5913, %v5906
    %v5916 = vsel %vm4027, %v5914, %v5908
    %v5917 = vpack.c.bf16 %v5916, %v5915
    %s5918 = scalar_lea.vmem %s11, 32
    %v5919 = vld [vmem:[%s5918] sm:$0xf]
    %v5920 = vld [vmem:[%s5918 + $0x4] sm:$0xf]
    %v5921 = vld [vmem:[%s5918 + $0x8] sm:$0xf]
    %v5922 = vld [vmem:[%s5918 + $0xc] sm:$0xf]
    %v5923 = vld [vmem:[%s5918 + $0x10] sm:$0xf]
    %v5924 = vld [vmem:[%s5918 + $0x14] sm:$0xf]
    %v5925 = vld [vmem:[%s5918 + $0x18] sm:$0xf]
    %v5926 = vld [vmem:[%s5918 + $0x1c] sm:$0xf]
    %v5935 = vunpack.c.l.b16 %v5919
    %v5936 = vunpack.c.l.b16 %v5920
    %v5937 = vunpack.c.l.b16 %v5921
    %v5938 = vunpack.c.l.b16 %v5922
    %v5939 = vunpack.c.l.b16 %v5923
    %v5940 = vunpack.c.l.b16 %v5924
    %v5941 = vunpack.c.l.b16 %v5925
    %v5942 = vunpack.c.l.b16 %v5926
    %v5943 = vpack.c.b16 %v5936, %v5935
    %v5944 = vpack.c.b16 %v5938, %v5937
    %v5945 = vpack.c.b16 %v5940, %v5939
    %v5946 = vpack.c.b16 %v5942, %v5941
    %v5952 = vsel %vm975, %v5917, 0
    %5954 = vmatprep.subr.bf16.mxu0 0
    %5955 = vmatpush1.bf16.msra.mxu0 %v5943
    %5956 = vmatprep.subr.bf16.mxu0 0
    %5957 = vmatpush1.bf16.msra.mxu0 %v5944
    %5958 = vmatprep.subr.bf16.mxu0 0
    %5959 = vmatpush1.bf16.msra.mxu0 %v5945
    %5960 = vmatprep.subr.bf16.mxu0 0
    %5961 = vmatpush1.bf16.msra.mxu0 %v5946
    %5962 = vmatprep.subr.bf16.mxu0 0
    %5963 = vmatpush1.bf16.msra.mxu0 0
    %5964 = vmatprep.subr.bf16.mxu0 0
    %5965 = vmatpush1.bf16.msra.mxu0 0
    %5966 = vmatprep.subr.bf16.mxu0 0
    %5967 = vmatpush1.bf16.msra.mxu0 0
    %5968 = vmatprep.subr.bf16.mxu0 0
    %5969 = vmatpush1.bf16.msra.mxu0 0
    %5970 = vmatprep.subr.bf16.mxu0 0
    %5971 = vmatpush1.bf16.msra.mxu0 0
    %5972 = vmatprep.subr.bf16.mxu0 0
    %5973 = vmatpush1.bf16.msra.mxu0 0
    %5974 = vmatprep.subr.bf16.mxu0 0
    %5975 = vmatpush1.bf16.msra.mxu0 0
    %5976 = vmatprep.subr.bf16.mxu0 0
    %5977 = vmatpush1.bf16.msra.mxu0 0
    %5978 = vmatprep.subr.bf16.mxu0 0
    %5979 = vmatpush1.bf16.msra.mxu0 0
    %5980 = vmatprep.subr.bf16.mxu0 0
    %5981 = vmatpush1.bf16.msra.mxu0 0
    %5982 = vmatprep.subr.bf16.mxu0 0
    %5983 = vmatpush1.bf16.msra.mxu0 0
    %5984 = vmatprep.subr.bf16.mxu0 0
    %5985 = vmatpush1.bf16.msra.mxu0 0
    %5986 = vmatprep.mubr.bf16.mxu0 0
    %5987 = vmatmul.mubr.bf16.gmra.mrb[0].mxu0 %v5952
    %v5988 = vpop.f32.mrb[0].mxu0
    %v5989 = vadd.f32 0.0, %v5988
    %v5990 = vpop.f32.mrb[0].mxu0
    %v5991 = vpop.f32.mrb[0].mxu0
    %v5992 = vadd.f32 0.0, %v5991
    %v5993 = vpop.f32.mrb[0].mxu0
    %5994 = vdwg.mxu0
    %v5995 = vadd.f32 %v4352, %v5989
    %v5996 = vadd.f32 %v4353, %v5992
    %s5997 = scalar_lea.vmem %s9, 3
    %v5998 = vld [vmem:[%s5997] sm:$0x1]
    %v5999 = vmul.f32 %v5995, %v5995
    %v6000 = vmul.f32 %v5996, %v5996
    %v6001 = vsel %vm975, %v5999, 0.0
    %6002 = vadd.xlane.f32.xlu0 %v6001
    %v6003 = vpop.xlane.xlu0 %6002
    %v6004 = vsel %vm975, %v6000, 0.0
    %6005 = vadd.xlane.f32.xlu0 %v6004
    %v6006 = vpop.xlane.xlu0 %6005
    %v6007 = vmul.f32 %v6003, %v2473
    %v6008 = vmul.f32 %v6006, %v2473
    %v6009 = vadd.f32 %v6007, 1e-05
    %v6010 = vadd.f32 %v6008, 1e-05
    %v6011 = vrsqrt.pop %v6009
    %v6012 = vrsqrt.pop %v6010
    %v6013 = vmul.f32 %v5995, %v6011
    %v6014 = vmul.f32 %v5996, %v6012
    %v6016 = vlaneseq
    %v6017 = vshrl.u32 %v6016, 7
    %v6018 = vsub.s32 0, %v6017
    %v6019 = vrot.slane %v5998, %v6018
    %v6021 = vmul.f32 %v6013, %v6019
    %v6022 = vmul.f32 %v6014, %v6019
    %v6023 = vpack.c.bf16 %v6022, %v6021
    %s6024 = scalar_lea.vmem %s12, 64
    %v6025 = vld [vmem:[%s6024] sm:$0xff]
    %v6026 = vld [vmem:[%s6024 + $0x8] sm:$0xff]
    %v6027 = vld [vmem:[%s6024 + $0x10] sm:$0xff]
    %v6028 = vld [vmem:[%s6024 + $0x18] sm:$0xff]
    %v6029 = vld [vmem:[%s6024 + $0x20] sm:$0xff]
    %v6030 = vld [vmem:[%s6024 + $0x28] sm:$0xff]
    %v6031 = vld [vmem:[%s6024 + $0x30] sm:$0xff]
    %v6032 = vld [vmem:[%s6024 + $0x38] sm:$0xff]
    %v6041 = vunpack.c.l.b16 %v6025
    %v6042 = vunpack.c.h.b16 %v6025
    %v6043 = vunpack.c.l.b16 %v6026
    %v6044 = vunpack.c.h.b16 %v6026
    %v6045 = vunpack.c.l.b16 %v6027
    %v6046 = vunpack.c.h.b16 %v6027
    %v6047 = vunpack.c.l.b16 %v6028
    %v6048 = vunpack.c.h.b16 %v6028
    %v6049 = vunpack.c.l.b16 %v6029
    %v6050 = vunpack.c.h.b16 %v6029
    %v6051 = vunpack.c.l.b16 %v6030
    %v6052 = vunpack.c.h.b16 %v6030
    %v6053 = vunpack.c.l.b16 %v6031
    %v6054 = vunpack.c.h.b16 %v6031
    %v6055 = vunpack.c.l.b16 %v6032
    %v6056 = vunpack.c.h.b16 %v6032
    %v6057 = vpack.c.b16 %v6043, %v6041
    %v6058 = vpack.c.b16 %v6044, %v6042
    %v6059 = vpack.c.b16 %v6047, %v6045
    %v6060 = vpack.c.b16 %v6048, %v6046
    %v6061 = vpack.c.b16 %v6051, %v6049
    %v6062 = vpack.c.b16 %v6052, %v6050
    %v6063 = vpack.c.b16 %v6055, %v6053
    %v6064 = vpack.c.b16 %v6056, %v6054
    %v6074 = vsel %vm975, %v6023, 0
    %6076 = vmatprep.subr.bf16.mxu0 %v6058
    %6077 = vmatpush1.bf16.msra.mxu0 %v6057
    %6078 = vmatprep.subr.bf16.mxu0 %v6060
    %6079 = vmatpush1.bf16.msra.mxu0 %v6059
    %6080 = vmatprep.subr.bf16.mxu0 %v6062
    %6081 = vmatpush1.bf16.msra.mxu0 %v6061
    %6082 = vmatprep.subr.bf16.mxu0 %v6064
    %6083 = vmatpush1.bf16.msra.mxu0 %v6063
    %6084 = vmatprep.subr.bf16.mxu0 0
    %6085 = vmatpush1.bf16.msra.mxu0 0
    %6086 = vmatprep.subr.bf16.mxu0 0
    %6087 = vmatpush1.bf16.msra.mxu0 0
    %6088 = vmatprep.subr.bf16.mxu0 0
    %6089 = vmatpush1.bf16.msra.mxu0 0
    %6090 = vmatprep.subr.bf16.mxu0 0
    %6091 = vmatpush1.bf16.msra.mxu0 0
    %6092 = vmatprep.subr.bf16.mxu0 0
    %6093 = vmatpush1.bf16.msra.mxu0 0
    %6094 = vmatprep.subr.bf16.mxu0 0
    %6095 = vmatpush1.bf16.msra.mxu0 0
    %6096 = vmatprep.subr.bf16.mxu0 0
    %6097 = vmatpush1.bf16.msra.mxu0 0
    %6098 = vmatprep.subr.bf16.mxu0 0
    %6099 = vmatpush1.bf16.msra.mxu0 0
    %6100 = vmatprep.subr.bf16.mxu0 0
    %6101 = vmatpush1.bf16.msra.mxu0 0
    %6102 = vmatprep.subr.bf16.mxu0 0
    %6103 = vmatpush1.bf16.msra.mxu0 0
    %6104 = vmatprep.subr.bf16.mxu0 0
    %6105 = vmatpush1.bf16.msra.mxu0 0
    %6106 = vmatprep.subr.bf16.mxu0 0
    %6107 = vmatpush1.bf16.msra.mxu0 0
    %6108 = vmatprep.mubr.bf16.mxu0 0
    %6109 = vmatmul.mubr.bf16.gmra.mrb[0].mxu0 %v6074
    %v6110 = vpop.f32.mrb[0].mxu0
    %v6111 = vadd.f32 0.0, %v6110
    %v6112 = vpop.f32.mrb[0].mxu0
    %v6113 = vadd.f32 0.0, %v6112
    %v6114 = vpop.f32.mrb[0].mxu0
    %v6115 = vadd.f32 0.0, %v6114
    %v6116 = vpop.f32.mrb[0].mxu0
    %v6117 = vadd.f32 0.0, %v6116
    %6118 = vdwg.mxu0
    %v6119 = vxor.u32 %v6111, 2147483648
    %v6120 = vxor.u32 %v6115, 2147483648
    %v6121 = vmul.f32 %v6119, 1.442695
    %v6122 = vpow.pop %v6121
    %v6123 = vmul.f32 %v6120, 1.442695
    %v6124 = vpow.pop %v6123
    %v6125 = vadd.f32 %v6122, 1.0
    %v6126 = vadd.f32 %v6124, 1.0
    %v6127 = vrcp.pop %v6125
    %v6128 = vmul.f32 1.0, %v6127
    %v6129 = vrcp.pop %v6126
    %v6130 = vmul.f32 1.0, %v6129
    %v6131 = vmul.f32 %v6111, %v6128
    %v6132 = vmul.f32 %v6115, %v6130
    %v6133 = vmul.f32 %v6131, %v6113
    %v6134 = vmul.f32 %v6132, %v6117
    %v6135 = vpack.c.bf16 %v6134, %v6133
    %s6136 = scalar_lea.vmem %s13, 64
    %v6137 = vld [vmem:[%s6136] sm:$0xf]
    %v6138 = vld [vmem:[%s6136 + $0x4] sm:$0xf]
    %v6139 = vld [vmem:[%s6136 + $0x8] sm:$0xf]
    %v6140 = vld [vmem:[%s6136 + $0xc] sm:$0xf]
    %v6141 = vld [vmem:[%s6136 + $0x10] sm:$0xf]
    %v6142 = vld [vmem:[%s6136 + $0x14] sm:$0xf]
    %v6143 = vld [vmem:[%s6136 + $0x18] sm:$0xf]
    %v6144 = vld [vmem:[%s6136 + $0x1c] sm:$0xf]
    %v6145 = vld [vmem:[%s6136 + $0x20] sm:$0xf]
    %v6146 = vld [vmem:[%s6136 + $0x24] sm:$0xf]
    %v6147 = vld [vmem:[%s6136 + $0x28] sm:$0xf]
    %v6148 = vld [vmem:[%s6136 + $0x2c] sm:$0xf]
    %v6149 = vld [vmem:[%s6136 + $0x30] sm:$0xf]
    %v6150 = vld [vmem:[%s6136 + $0x34] sm:$0xf]
    %v6151 = vld [vmem:[%s6136 + $0x38] sm:$0xf]
    %v6152 = vld [vmem:[%s6136 + $0x3c] sm:$0xf]
    %v6169 = vunpack.c.l.b16 %v6137
    %v6170 = vunpack.c.l.b16 %v6138
    %v6171 = vunpack.c.l.b16 %v6139
    %v6172 = vunpack.c.l.b16 %v6140
    %v6173 = vunpack.c.l.b16 %v6141
    %v6174 = vunpack.c.l.b16 %v6142
    %v6175 = vunpack.c.l.b16 %v6143
    %v6176 = vunpack.c.l.b16 %v6144
    %v6177 = vunpack.c.l.b16 %v6145
    %v6178 = vunpack.c.l.b16 %v6146
    %v6179 = vunpack.c.l.b16 %v6147
    %v6180 = vunpack.c.l.b16 %v6148
    %v6181 = vunpack.c.l.b16 %v6149
    %v6182 = vunpack.c.l.b16 %v6150
    %v6183 = vunpack.c.l.b16 %v6151
    %v6184 = vunpack.c.l.b16 %v6152
    %v6185 = vpack.c.b16 %v6170, %v6169
    %v6186 = vpack.c.b16 %v6172, %v6171
    %v6187 = vpack.c.b16 %v6174, %v6173
    %v6188 = vpack.c.b16 %v6176, %v6175
    %v6189 = vpack.c.b16 %v6178, %v6177
    %v6190 = vpack.c.b16 %v6180, %v6179
    %v6191 = vpack.c.b16 %v6182, %v6181
    %v6192 = vpack.c.b16 %v6184, %v6183
    %6201 = vmatprep.subr.bf16.mxu0 0
    %6202 = vmatpush1.bf16.msra.mxu0 %v6185
    %6203 = vmatprep.subr.bf16.mxu0 0
    %6204 = vmatpush1.bf16.msra.mxu0 %v6186
    %6205 = vmatprep.subr.bf16.mxu0 0
    %6206 = vmatpush1.bf16.msra.mxu0 %v6187
    %6207 = vmatprep.subr.bf16.mxu0 0
    %6208 = vmatpush1.bf16.msra.mxu0 %v6188
    %6209 = vmatprep.subr.bf16.mxu0 0
    %6210 = vmatpush1.bf16.msra.mxu0 %v6189
    %6211 = vmatprep.subr.bf16.mxu0 0
    %6212 = vmatpush1.bf16.msra.mxu0 %v6190
    %6213 = vmatprep.subr.bf16.mxu0 0
    %6214 = vmatpush1.bf16.msra.mxu0 %v6191
    %6215 = vmatprep.subr.bf16.mxu0 0
    %6216 = vmatpush1.bf16.msra.mxu0 %v6192
    %6217 = vmatprep.subr.bf16.mxu0 0
    %6218 = vmatpush1.bf16.msra.mxu0 0
    %6219 = vmatprep.subr.bf16.mxu0 0
    %6220 = vmatpush1.bf16.msra.mxu0 0
    %6221 = vmatprep.subr.bf16.mxu0 0
    %6222 = vmatpush1.bf16.msra.mxu0 0
    %6223 = vmatprep.subr.bf16.mxu0 0
    %6224 = vmatpush1.bf16.msra.mxu0 0
    %6225 = vmatprep.subr.bf16.mxu0 0
    %6226 = vmatpush1.bf16.msra.mxu0 0
    %6227 = vmatprep.subr.bf16.mxu0 0
    %6228 = vmatpush1.bf16.msra.mxu0 0
    %6229 = vmatprep.subr.bf16.mxu0 0
    %6230 = vmatpush1.bf16.msra.mxu0 0
    %6231 = vmatprep.subr.bf16.mxu0 0
    %6232 = vmatpush1.bf16.msra.mxu0 0
    %6233 = vmatprep.mubr.bf16.mxu0 0
    %6234 = vmatmul.mubr.bf16.gmra.mrb[0].mxu0 %v6135
    %v6235 = vpop.f32.mrb[0].mxu0
    %v6236 = vadd.f32 0.0, %v6235
    %v6237 = vpop.f32.mrb[0].mxu0
    %v6238 = vpop.f32.mrb[0].mxu0
    %v6239 = vadd.f32 0.0, %v6238
    %v6240 = vpop.f32.mrb[0].mxu0
    %6241 = vdwg.mxu0
    %v6242 = vadd.f32 %v5995, %v6236
    %v6243 = vadd.f32 %v5996, %v6239
    %s6244 = scalar_lea.vmem %s9, 4
    %v6245 = vld [vmem:[%s6244] sm:$0x1]
    %v6246 = vmul.f32 %v6242, %v6242
    %v6247 = vmul.f32 %v6243, %v6243
    %v6248 = vsel %vm975, %v6246, 0.0
    %6249 = vadd.xlane.f32.xlu0 %v6248
    %v6250 = vpop.xlane.xlu0 %6249
    %v6251 = vsel %vm975, %v6247, 0.0
    %6252 = vadd.xlane.f32.xlu0 %v6251
    %v6253 = vpop.xlane.xlu0 %6252
    %v6254 = vmul.f32 %v6250, %v2473
    %v6255 = vmul.f32 %v6253, %v2473
    %v6256 = vadd.f32 %v6254, 1e-05
    %v6257 = vadd.f32 %v6255, 1e-05
    %v6258 = vrsqrt.pop %v6256
    %v6259 = vrsqrt.pop %v6257
    %v6260 = vmul.f32 %v6242, %v6258
    %v6261 = vmul.f32 %v6243, %v6259
    %v6263 = vlaneseq
    %v6264 = vshrl.u32 %v6263, 7
    %v6265 = vsub.s32 0, %v6264
    %v6266 = vrot.slane %v6245, %v6265
    %v6268 = vmul.f32 %v6260, %v6266
    %v6269 = vmul.f32 %v6261, %v6266
    %6271 = vset.pattern.permute.xlu0 0
    %6272 = vperm.xlu0 %6271, %v916
    %v6273 = vpop.permute.xlu0 %6272
    %6276 = vset.pattern.permute.xlu0 0
    %6277 = vperm.xlu0 %6276, %v917
    %v6278 = vpop.permute.xlu0 %6277
    %v6280 = vmul.f32 %v6268, %v6273
    %v6281 = vmul.f32 %v6269, %v6278
    %v6282 = vsel %vm975, %v6280, 0.0
    %v6283 = vrot.slane %v6282, 4
    %v6284 = vadd.f32 %v6282, %v6283
    %v6285 = vrot.slane %v6284, 2
    %v6286 = vadd.f32 %v6284, %v6285
    %v6287 = vrot.slane %v6286, 1
    %v6288 = vadd.f32 %v6286, %v6287
    %v6289 = vsel %vm975, %v6281, 0.0
    %v6290 = vrot.slane %v6289, 4
    %v6291 = vadd.f32 %v6289, %v6290
    %v6292 = vrot.slane %v6291, 2
    %v6293 = vadd.f32 %v6291, %v6292
    %v6294 = vrot.slane %v6293, 1
    %v6295 = vadd.f32 %v6293, %v6294
    %6297 = vset.pattern.permute.xlu0 0
    %6298 = vperm.xlu0 %6297, %v925
    %v6299 = vpop.permute.xlu0 %6298
    %6302 = vset.pattern.permute.xlu0 0
    %6303 = vperm.xlu0 %6302, %v932
    %v6304 = vpop.permute.xlu0 %6303
    %v6306 = vrcp.pop %v6299
    %v6307 = vmul.f32 %v6288, %v6306
    %v6308 = vrcp.pop %v6304
    %v6309 = vmul.f32 %v6295, %v6308
    %6312 = vrot.lane.b32.xlu0 %v6307, 64
    %v6313 = vpop.permute.xlu0 %6312
    %6314 = vrot.lane.b32.xlu0 %v6309, 64
    %v6315 = vpop.permute.xlu0 %6314
    %v6318 = vadd.f32 %v2444, %v6313
    %v6319 = vadd.f32 %v2445, %v6315
    %s6320 = smul.u32 4, 8
    %s6321 = smul.u32 %s6320, 16
    %s6322 = sshll.u32 %s6321, 4
    %6323 = dma.done [#allocation4], %s6322
    %v6324 = vpack.c.bf16 %v6318, %v6318
    %v6325 = vpack.c.bf16 %v6319, %v6319
    %v6326 = vld [vmem:[#allocation2] sm:$0xff]
    %v6327 = vld [vmem:[#allocation2 + $0x8] sm:$0xff]
    %v6328 = vld [vmem:[#allocation2 + $0x10] sm:$0xff]
    %v6329 = vld [vmem:[#allocation2 + $0x18] sm:$0xff]
    %v6330 = vld [vmem:[#allocation2 + $0x20] sm:$0xff]
    %v6331 = vld [vmem:[#allocation2 + $0x28] sm:$0xff]
    %v6332 = vld [vmem:[#allocation2 + $0x30] sm:$0xff]
    %v6333 = vld [vmem:[#allocation2 + $0x38] sm:$0xff]
    %v6334 = vld [vmem:[#allocation2 + $0x40] sm:$0xff]
    %v6335 = vld [vmem:[#allocation2 + $0x48] sm:$0xff]
    %v6336 = vld [vmem:[#allocation2 + $0x50] sm:$0xff]
    %v6337 = vld [vmem:[#allocation2 + $0x58] sm:$0xff]
    %v6338 = vld [vmem:[#allocation2 + $0x60] sm:$0xff]
    %v6339 = vld [vmem:[#allocation2 + $0x68] sm:$0xff]
    %v6340 = vld [vmem:[#allocation2 + $0x70] sm:$0xff]
    %v6341 = vld [vmem:[#allocation2 + $0x78] sm:$0xff]
    %v6342 = vld [vmem:[#allocation2 + $0x80] sm:$0xff]
    %v6343 = vld [vmem:[#allocation2 + $0x88] sm:$0xff]
    %v6344 = vld [vmem:[#allocation2 + $0x90] sm:$0xff]
    %v6345 = vld [vmem:[#allocation2 + $0x98] sm:$0xff]
    %v6346 = vld [vmem:[#allocation2 + $0xa0] sm:$0xff]
    %v6347 = vld [vmem:[#allocation2 + $0xa8] sm:$0xff]
    %v6348 = vld [vmem:[#allocation2 + $0xb0] sm:$0xff]
    %v6349 = vld [vmem:[#allocation2 + $0xb8] sm:$0xff]
    %v6350 = vld [vmem:[#allocation2 + $0xc0] sm:$0xff]
    %v6351 = vld [vmem:[#allocation2 + $0xc8] sm:$0xff]
    %v6352 = vld [vmem:[#allocation2 + $0xd0] sm:$0xff]
    %v6353 = vld [vmem:[#allocation2 + $0xd8] sm:$0xff]
    %v6354 = vld [vmem:[#allocation2 + $0xe0] sm:$0xff]
    %v6355 = vld [vmem:[#allocation2 + $0xe8] sm:$0xff]
    %v6356 = vld [vmem:[#allocation2 + $0xf0] sm:$0xff]
    %v6357 = vld [vmem:[#allocation2 + $0xf8] sm:$0xff]
    %v6358 = vld [vmem:[#allocation2 + $0x100] sm:$0xff]
    %v6359 = vld [vmem:[#allocation2 + $0x108] sm:$0xff]
    %v6360 = vld [vmem:[#allocation2 + $0x110] sm:$0xff]
    %v6361 = vld [vmem:[#allocation2 + $0x118] sm:$0xff]
    %v6362 = vld [vmem:[#allocation2 + $0x120] sm:$0xff]
    %v6363 = vld [vmem:[#allocation2 + $0x128] sm:$0xff]
    %v6364 = vld [vmem:[#allocation2 + $0x130] sm:$0xff]
    %v6365 = vld [vmem:[#allocation2 + $0x138] sm:$0xff]
    %v6366 = vld [vmem:[#allocation2 + $0x140] sm:$0xff]
    %v6367 = vld [vmem:[#allocation2 + $0x148] sm:$0xff]
    %v6368 = vld [vmem:[#allocation2 + $0x150] sm:$0xff]
    %v6369 = vld [vmem:[#allocation2 + $0x158] sm:$0xff]
    %v6370 = vld [vmem:[#allocation2 + $0x160] sm:$0xff]
    %v6371 = vld [vmem:[#allocation2 + $0x168] sm:$0xff]
    %v6372 = vld [vmem:[#allocation2 + $0x170] sm:$0xff]
    %v6373 = vld [vmem:[#allocation2 + $0x178] sm:$0xff]
    %v6374 = vld [vmem:[#allocation2 + $0x180] sm:$0xff]
    %v6375 = vld [vmem:[#allocation2 + $0x188] sm:$0xff]
    %v6376 = vld [vmem:[#allocation2 + $0x190] sm:$0xff]
    %v6377 = vld [vmem:[#allocation2 + $0x198] sm:$0xff]
    %v6378 = vld [vmem:[#allocation2 + $0x1a0] sm:$0xff]
    %v6379 = vld [vmem:[#allocation2 + $0x1a8] sm:$0xff]
    %v6380 = vld [vmem:[#allocation2 + $0x1b0] sm:$0xff]
    %v6381 = vld [vmem:[#allocation2 + $0x1b8] sm:$0xff]
    %v6382 = vld [vmem:[#allocation2 + $0x1c0] sm:$0xff]
    %v6383 = vld [vmem:[#allocation2 + $0x1c8] sm:$0xff]
    %v6384 = vld [vmem:[#allocation2 + $0x1d0] sm:$0xff]
    %v6385 = vld [vmem:[#allocation2 + $0x1d8] sm:$0xff]
    %v6386 = vld [vmem:[#allocation2 + $0x1e0] sm:$0xff]
    %v6387 = vld [vmem:[#allocation2 + $0x1e8] sm:$0xff]
    %v6388 = vld [vmem:[#allocation2 + $0x1f0] sm:$0xff]
    %v6389 = vld [vmem:[#allocation2 + $0x1f8] sm:$0xff]
    %v6390 = vld [vmem:[%s14] sm:$0xff]
    %v6391 = vld [vmem:[%s14 + $0x8] sm:$0xff]
    %v6394 = vlaneseq
    %v6395 = vshrl.u32 %v6394, 7
    %v6396 = vsub.s32 0, %v6395
    %v6397 = vrot.slane %v6390, %v6396
    %v6398 = vlaneseq
    %v6399 = vshrl.u32 %v6398, 7
    %v6400 = vsub.s32 1, %v6399
    %v6401 = vrot.slane %v6390, %v6400
    %v6402 = vlaneseq
    %v6403 = vshrl.u32 %v6402, 7
    %v6404 = vsub.s32 2, %v6403
    %v6405 = vrot.slane %v6390, %v6404
    %v6406 = vlaneseq
    %v6407 = vshrl.u32 %v6406, 7
    %v6408 = vsub.s32 3, %v6407
    %v6409 = vrot.slane %v6390, %v6408
    %v6410 = vlaneseq
    %v6411 = vshrl.u32 %v6410, 7
    %v6412 = vsub.s32 4, %v6411
    %v6413 = vrot.slane %v6390, %v6412
    %v6414 = vlaneseq
    %v6415 = vshrl.u32 %v6414, 7
    %v6416 = vsub.s32 5, %v6415
    %v6417 = vrot.slane %v6390, %v6416
    %v6418 = vlaneseq
    %v6419 = vshrl.u32 %v6418, 7
    %v6420 = vsub.s32 6, %v6419
    %v6421 = vrot.slane %v6390, %v6420
    %v6422 = vlaneseq
    %v6423 = vshrl.u32 %v6422, 7
    %v6424 = vsub.s32 7, %v6423
    %v6425 = vrot.slane %v6390, %v6424
    %v6426 = vlaneseq
    %v6427 = vshrl.u32 %v6426, 7
    %v6428 = vsub.s32 0, %v6427
    %v6429 = vrot.slane %v6391, %v6428
    %v6430 = vlaneseq
    %v6431 = vshrl.u32 %v6430, 7
    %v6432 = vsub.s32 1, %v6431
    %v6433 = vrot.slane %v6391, %v6432
    %v6434 = vlaneseq
    %v6435 = vshrl.u32 %v6434, 7
    %v6436 = vsub.s32 2, %v6435
    %v6437 = vrot.slane %v6391, %v6436
    %v6438 = vlaneseq
    %v6439 = vshrl.u32 %v6438, 7
    %v6440 = vsub.s32 3, %v6439
    %v6441 = vrot.slane %v6391, %v6440
    %v6442 = vlaneseq
    %v6443 = vshrl.u32 %v6442, 7
    %v6444 = vsub.s32 4, %v6443
    %v6445 = vrot.slane %v6391, %v6444
    %v6446 = vlaneseq
    %v6447 = vshrl.u32 %v6446, 7
    %v6448 = vsub.s32 5, %v6447
    %v6449 = vrot.slane %v6391, %v6448
    %v6450 = vlaneseq
    %v6451 = vshrl.u32 %v6450, 7
    %v6452 = vsub.s32 6, %v6451
    %v6453 = vrot.slane %v6391, %v6452
    %v6454 = vlaneseq
    %v6455 = vshrl.u32 %v6454, 7
    %v6456 = vsub.s32 7, %v6455
    %v6457 = vrot.slane %v6391, %v6456
    %v6476 = vunpack.c.l.b16 %v6324
    %v6477 = vunpack.c.l.b16 %v6325
    %v6478 = vrot.slane %v6477, 7
    %v6479 = vsel %vm1224, %v6478, %v6476
    %v6480 = vpack.c.b16 %v6479, %v6479
    %6481 = vrot.lane.b32.xlu0 %v6480, 64
    %v6482 = vpop.permute.xlu0 %6481
    %v6484 = vsel %vm975, %v6482, 0
    %6486 = vmatprep.subr.bf16.mxu0 %v6327
    %6487 = vmatpush1.bf16.msra.mxu0 %v6326
    %6488 = vmatprep.subr.bf16.mxu0 %v6343
    %6489 = vmatpush1.bf16.msra.mxu0 %v6342
    %6490 = vmatprep.subr.bf16.mxu0 %v6359
    %6491 = vmatpush1.bf16.msra.mxu0 %v6358
    %6492 = vmatprep.subr.bf16.mxu0 %v6375
    %6493 = vmatpush1.bf16.msra.mxu0 %v6374
    %6494 = vmatprep.subr.bf16.mxu0 0
    %6495 = vmatpush1.bf16.msra.mxu0 0
    %6496 = vmatprep.subr.bf16.mxu0 0
    %6497 = vmatpush1.bf16.msra.mxu0 0
    %6498 = vmatprep.subr.bf16.mxu0 0
    %6499 = vmatpush1.bf16.msra.mxu0 0
    %6500 = vmatprep.subr.bf16.mxu0 0
    %6501 = vmatpush1.bf16.msra.mxu0 0
    %6502 = vmatprep.subr.bf16.mxu0 0
    %6503 = vmatpush1.bf16.msra.mxu0 0
    %6504 = vmatprep.subr.bf16.mxu0 0
    %6505 = vmatpush1.bf16.msra.mxu0 0
    %6506 = vmatprep.subr.bf16.mxu0 0
    %6507 = vmatpush1.bf16.msra.mxu0 0
    %6508 = vmatprep.subr.bf16.mxu0 0
    %6509 = vmatpush1.bf16.msra.mxu0 0
    %6510 = vmatprep.subr.bf16.mxu0 0
    %6511 = vmatpush1.bf16.msra.mxu0 0
    %6512 = vmatprep.subr.bf16.mxu0 0
    %6513 = vmatpush1.bf16.msra.mxu0 0
    %6514 = vmatprep.subr.bf16.mxu0 0
    %6515 = vmatpush1.bf16.msra.mxu0 0
    %6516 = vmatprep.subr.bf16.mxu0 0
    %6517 = vmatpush1.bf16.msra.mxu0 0
    %6518 = vmatprep.mubr.bf16.mxu0 0
    %6519 = vmatmul.mubr.bf16.gmra.mrb[0].mxu0 %v6484
    %v6520 = vpop.f32.mrb[0].mxu0
    %v6521 = vadd.f32 %v6397, %v6520
    %v6522 = vpop.f32.mrb[0].mxu0
    %v6523 = vadd.f32 %v6401, %v6522
    %v6524 = vpop.f32.mrb[0].mxu0
    %v6525 = vpop.f32.mrb[0].mxu0
    %6526 = vdwg.mxu0
    %6527 = vmatprep.subr.bf16.mxu0 %v6329
    %6528 = vmatpush1.bf16.msra.mxu0 %v6328
    %6529 = vmatprep.subr.bf16.mxu0 %v6345
    %6530 = vmatpush1.bf16.msra.mxu0 %v6344
    %6531 = vmatprep.subr.bf16.mxu0 %v6361
    %6532 = vmatpush1.bf16.msra.mxu0 %v6360
    %6533 = vmatprep.subr.bf16.mxu0 %v6377
    %6534 = vmatpush1.bf16.msra.mxu0 %v6376
    %6535 = vmatprep.subr.bf16.mxu0 0
    %6536 = vmatpush1.bf16.msra.mxu0 0
    %6537 = vmatprep.subr.bf16.mxu0 0
    %6538 = vmatpush1.bf16.msra.mxu0 0
    %6539 = vmatprep.subr.bf16.mxu0 0
    %6540 = vmatpush1.bf16.msra.mxu0 0
    %6541 = vmatprep.subr.bf16.mxu0 0
    %6542 = vmatpush1.bf16.msra.mxu0 0
    %6543 = vmatprep.subr.bf16.mxu0 0
    %6544 = vmatpush1.bf16.msra.mxu0 0
    %6545 = vmatprep.subr.bf16.mxu0 0
    %6546 = vmatpush1.bf16.msra.mxu0 0
    %6547 = vmatprep.subr.bf16.mxu0 0
    %6548 = vmatpush1.bf16.msra.mxu0 0
    %6549 = vmatprep.subr.bf16.mxu0 0
    %6550 = vmatpush1.bf16.msra.mxu0 0
    %6551 = vmatprep.subr.bf16.mxu0 0
    %6552 = vmatpush1.bf16.msra.mxu0 0
    %6553 = vmatprep.subr.bf16.mxu0 0
    %6554 = vmatpush1.bf16.msra.mxu0 0
    %6555 = vmatprep.subr.bf16.mxu0 0
    %6556 = vmatpush1.bf16.msra.mxu0 0
    %6557 = vmatprep.subr.bf16.mxu0 0
    %6558 = vmatpush1.bf16.msra.mxu0 0
    %6559 = vmatprep.mubr.bf16.mxu0 0
    %6560 = vmatmul.mubr.bf16.gmra.mrb[0].mxu0 %v6484
    %v6561 = vpop.f32.mrb[0].mxu0
    %v6562 = vadd.f32 %v6405, %v6561
    %v6563 = vpop.f32.mrb[0].mxu0
    %v6564 = vadd.f32 %v6409, %v6563
    %v6565 = vpop.f32.mrb[0].mxu0
    %v6566 = vpop.f32.mrb[0].mxu0
    %6567 = vdwg.mxu0
    %6568 = vmatprep.subr.bf16.mxu0 %v6331
    %6569 = vmatpush1.bf16.msra.mxu0 %v6330
    %6570 = vmatprep.subr.bf16.mxu0 %v6347
    %6571 = vmatpush1.bf16.msra.mxu0 %v6346
    %6572 = vmatprep.subr.bf16.mxu0 %v6363
    %6573 = vmatpush1.bf16.msra.mxu0 %v6362
    %6574 = vmatprep.subr.bf16.mxu0 %v6379
    %6575 = vmatpush1.bf16.msra.mxu0 %v6378
    %6576 = vmatprep.subr.bf16.mxu0 0
    %6577 = vmatpush1.bf16.msra.mxu0 0
    %6578 = vmatprep.subr.bf16.mxu0 0
    %6579 = vmatpush1.bf16.msra.mxu0 0
    %6580 = vmatprep.subr.bf16.mxu0 0
    %6581 = vmatpush1.bf16.msra.mxu0 0
    %6582 = vmatprep.subr.bf16.mxu0 0
    %6583 = vmatpush1.bf16.msra.mxu0 0
    %6584 = vmatprep.subr.bf16.mxu0 0
    %6585 = vmatpush1.bf16.msra.mxu0 0
    %6586 = vmatprep.subr.bf16.mxu0 0
    %6587 = vmatpush1.bf16.msra.mxu0 0
    %6588 = vmatprep.subr.bf16.mxu0 0
    %6589 = vmatpush1.bf16.msra.mxu0 0
    %6590 = vmatprep.subr.bf16.mxu0 0
    %6591 = vmatpush1.bf16.msra.mxu0 0
    %6592 = vmatprep.subr.bf16.mxu0 0
    %6593 = vmatpush1.bf16.msra.mxu0 0
    %6594 = vmatprep.subr.bf16.mxu0 0
    %6595 = vmatpush1.bf16.msra.mxu0 0
    %6596 = vmatprep.subr.bf16.mxu0 0
    %6597 = vmatpush1.bf16.msra.mxu0 0
    %6598 = vmatprep.subr.bf16.mxu0 0
    %6599 = vmatpush1.bf16.msra.mxu0 0
    %6600 = vmatprep.mubr.bf16.mxu0 0
    %6601 = vmatmul.mubr.bf16.gmra.mrb[0].mxu0 %v6484
    %v6602 = vpop.f32.mrb[0].mxu0
    %v6603 = vadd.f32 %v6413, %v6602
    %v6604 = vpop.f32.mrb[0].mxu0
    %v6605 = vadd.f32 %v6417, %v6604
    %v6606 = vpop.f32.mrb[0].mxu0
    %v6607 = vpop.f32.mrb[0].mxu0
    %6608 = vdwg.mxu0
    %6609 = vmatprep.subr.bf16.mxu0 %v6333
    %6610 = vmatpush1.bf16.msra.mxu0 %v6332
    %6611 = vmatprep.subr.bf16.mxu0 %v6349
    %6612 = vmatpush1.bf16.msra.mxu0 %v6348
    %6613 = vmatprep.subr.bf16.mxu0 %v6365
    %6614 = vmatpush1.bf16.msra.mxu0 %v6364
    %6615 = vmatprep.subr.bf16.mxu0 %v6381
    %6616 = vmatpush1.bf16.msra.mxu0 %v6380
    %6617 = vmatprep.subr.bf16.mxu0 0
    %6618 = vmatpush1.bf16.msra.mxu0 0
    %6619 = vmatprep.subr.bf16.mxu0 0
    %6620 = vmatpush1.bf16.msra.mxu0 0
    %6621 = vmatprep.subr.bf16.mxu0 0
    %6622 = vmatpush1.bf16.msra.mxu0 0
    %6623 = vmatprep.subr.bf16.mxu0 0
    %6624 = vmatpush1.bf16.msra.mxu0 0
    %6625 = vmatprep.subr.bf16.mxu0 0
    %6626 = vmatpush1.bf16.msra.mxu0 0
    %6627 = vmatprep.subr.bf16.mxu0 0
    %6628 = vmatpush1.bf16.msra.mxu0 0
    %6629 = vmatprep.subr.bf16.mxu0 0
    %6630 = vmatpush1.bf16.msra.mxu0 0
    %6631 = vmatprep.subr.bf16.mxu0 0
    %6632 = vmatpush1.bf16.msra.mxu0 0
    %6633 = vmatprep.subr.bf16.mxu0 0
    %6634 = vmatpush1.bf16.msra.mxu0 0
    %6635 = vmatprep.subr.bf16.mxu0 0
    %6636 = vmatpush1.bf16.msra.mxu0 0
    %6637 = vmatprep.subr.bf16.mxu0 0
    %6638 = vmatpush1.bf16.msra.mxu0 0
    %6639 = vmatprep.subr.bf16.mxu0 0
    %6640 = vmatpush1.bf16.msra.mxu0 0
    %6641 = vmatprep.mubr.bf16.mxu0 0
    %6642 = vmatmul.mubr.bf16.gmra.mrb[0].mxu0 %v6484
    %v6643 = vpop.f32.mrb[0].mxu0
    %v6644 = vadd.f32 %v6421, %v6643
    %v6645 = vpop.f32.mrb[0].mxu0
    %v6646 = vadd.f32 %v6425, %v6645
    %v6647 = vpop.f32.mrb[0].mxu0
    %v6648 = vpop.f32.mrb[0].mxu0
    %6649 = vdwg.mxu0
    %6650 = vmatprep.subr.bf16.mxu0 %v6335
    %6651 = vmatpush1.bf16.msra.mxu0 %v6334
    %6652 = vmatprep.subr.bf16.mxu0 %v6351
    %6653 = vmatpush1.bf16.msra.mxu0 %v6350
    %6654 = vmatprep.subr.bf16.mxu0 %v6367
    %6655 = vmatpush1.bf16.msra.mxu0 %v6366
    %6656 = vmatprep.subr.bf16.mxu0 %v6383
    %6657 = vmatpush1.bf16.msra.mxu0 %v6382
    %6658 = vmatprep.subr.bf16.mxu0 0
    %6659 = vmatpush1.bf16.msra.mxu0 0
    %6660 = vmatprep.subr.bf16.mxu0 0
    %6661 = vmatpush1.bf16.msra.mxu0 0
    %6662 = vmatprep.subr.bf16.mxu0 0
    %6663 = vmatpush1.bf16.msra.mxu0 0
    %6664 = vmatprep.subr.bf16.mxu0 0
    %6665 = vmatpush1.bf16.msra.mxu0 0
    %6666 = vmatprep.subr.bf16.mxu0 0
    %6667 = vmatpush1.bf16.msra.mxu0 0
    %6668 = vmatprep.subr.bf16.mxu0 0
    %6669 = vmatpush1.bf16.msra.mxu0 0
    %6670 = vmatprep.subr.bf16.mxu0 0
    %6671 = vmatpush1.bf16.msra.mxu0 0
    %6672 = vmatprep.subr.bf16.mxu0 0
    %6673 = vmatpush1.bf16.msra.mxu0 0
    %6674 = vmatprep.subr.bf16.mxu0 0
    %6675 = vmatpush1.bf16.msra.mxu0 0
    %6676 = vmatprep.subr.bf16.mxu0 0
    %6677 = vmatpush1.bf16.msra.mxu0 0
    %6678 = vmatprep.subr.bf16.mxu0 0
    %6679 = vmatpush1.bf16.msra.mxu0 0
    %6680 = vmatprep.subr.bf16.mxu0 0
    %6681 = vmatpush1.bf16.msra.mxu0 0
    %6682 = vmatprep.mubr.bf16.mxu0 0
    %6683 = vmatmul.mubr.bf16.gmra.mrb[0].mxu0 %v6484
    %v6684 = vpop.f32.mrb[0].mxu0
    %v6685 = vadd.f32 %v6429, %v6684
    %v6686 = vpop.f32.mrb[0].mxu0
    %v6687 = vadd.f32 %v6433, %v6686
    %v6688 = vpop.f32.mrb[0].mxu0
    %v6689 = vpop.f32.mrb[0].mxu0
    %6690 = vdwg.mxu0
    %6691 = vmatprep.subr.bf16.mxu0 %v6337
    %6692 = vmatpush1.bf16.msra.mxu0 %v6336
    %6693 = vmatprep.subr.bf16.mxu0 %v6353
    %6694 = vmatpush1.bf16.msra.mxu0 %v6352
    %6695 = vmatprep.subr.bf16.mxu0 %v6369
    %6696 = vmatpush1.bf16.msra.mxu0 %v6368
    %6697 = vmatprep.subr.bf16.mxu0 %v6385
    %6698 = vmatpush1.bf16.msra.mxu0 %v6384
    %6699 = vmatprep.subr.bf16.mxu0 0
    %6700 = vmatpush1.bf16.msra.mxu0 0
    %6701 = vmatprep.subr.bf16.mxu0 0
    %6702 = vmatpush1.bf16.msra.mxu0 0
    %6703 = vmatprep.subr.bf16.mxu0 0
    %6704 = vmatpush1.bf16.msra.mxu0 0
    %6705 = vmatprep.subr.bf16.mxu0 0
    %6706 = vmatpush1.bf16.msra.mxu0 0
    %6707 = vmatprep.subr.bf16.mxu0 0
    %6708 = vmatpush1.bf16.msra.mxu0 0
    %6709 = vmatprep.subr.bf16.mxu0 0
    %6710 = vmatpush1.bf16.msra.mxu0 0
    %6711 = vmatprep.subr.bf16.mxu0 0
    %6712 = vmatpush1.bf16.msra.mxu0 0
    %6713 = vmatprep.subr.bf16.mxu0 0
    %6714 = vmatpush1.bf16.msra.mxu0 0
    %6715 = vmatprep.subr.bf16.mxu0 0
    %6716 = vmatpush1.bf16.msra.mxu0 0
    %6717 = vmatprep.subr.bf16.mxu0 0
    %6718 = vmatpush1.bf16.msra.mxu0 0
    %6719 = vmatprep.subr.bf16.mxu0 0
    %6720 = vmatpush1.bf16.msra.mxu0 0
    %6721 = vmatprep.subr.bf16.mxu0 0
    %6722 = vmatpush1.bf16.msra.mxu0 0
    %6723 = vmatprep.mubr.bf16.mxu0 0
    %6724 = vmatmul.mubr.bf16.gmra.mrb[0].mxu0 %v6484
    %v6725 = vpop.f32.mrb[0].mxu0
    %v6726 = vadd.f32 %v6437, %v6725
    %v6727 = vpop.f32.mrb[0].mxu0
    %v6728 = vadd.f32 %v6441, %v6727
    %v6729 = vpop.f32.mrb[0].mxu0
    %v6730 = vpop.f32.mrb[0].mxu0
    %6731 = vdwg.mxu0
    %6732 = vmatprep.subr.bf16.mxu0 %v6339
    %6733 = vmatpush1.bf16.msra.mxu0 %v6338
    %6734 = vmatprep.subr.bf16.mxu0 %v6355
    %6735 = vmatpush1.bf16.msra.mxu0 %v6354
    %6736 = vmatprep.subr.bf16.mxu0 %v6371
    %6737 = vmatpush1.bf16.msra.mxu0 %v6370
    %6738 = vmatprep.subr.bf16.mxu0 %v6387
    %6739 = vmatpush1.bf16.msra.mxu0 %v6386
    %6740 = vmatprep.subr.bf16.mxu0 0
    %6741 = vmatpush1.bf16.msra.mxu0 0
    %6742 = vmatprep.subr.bf16.mxu0 0
    %6743 = vmatpush1.bf16.msra.mxu0 0
    %6744 = vmatprep.subr.bf16.mxu0 0
    %6745 = vmatpush1.bf16.msra.mxu0 0
    %6746 = vmatprep.subr.bf16.mxu0 0
    %6747 = vmatpush1.bf16.msra.mxu0 0
    %6748 = vmatprep.subr.bf16.mxu0 0
    %6749 = vmatpush1.bf16.msra.mxu0 0
    %6750 = vmatprep.subr.bf16.mxu0 0
    %6751 = vmatpush1.bf16.msra.mxu0 0
    %6752 = vmatprep.subr.bf16.mxu0 0
    %6753 = vmatpush1.bf16.msra.mxu0 0
    %6754 = vmatprep.subr.bf16.mxu0 0
    %6755 = vmatpush1.bf16.msra.mxu0 0
    %6756 = vmatprep.subr.bf16.mxu0 0
    %6757 = vmatpush1.bf16.msra.mxu0 0
    %6758 = vmatprep.subr.bf16.mxu0 0
    %6759 = vmatpush1.bf16.msra.mxu0 0
    %6760 = vmatprep.subr.bf16.mxu0 0
    %6761 = vmatpush1.bf16.msra.mxu0 0
    %6762 = vmatprep.subr.bf16.mxu0 0
    %6763 = vmatpush1.bf16.msra.mxu0 0
    %6764 = vmatprep.mubr.bf16.mxu0 0
    %6765 = vmatmul.mubr.bf16.gmra.mrb[0].mxu0 %v6484
    %v6766 = vpop.f32.mrb[0].mxu0
    %v6767 = vadd.f32 %v6445, %v6766
    %v6768 = vpop.f32.mrb[0].mxu0
    %v6769 = vadd.f32 %v6449, %v6768
    %v6770 = vpop.f32.mrb[0].mxu0
    %v6771 = vpop.f32.mrb[0].mxu0
    %6772 = vdwg.mxu0
    %6773 = vmatprep.subr.bf16.mxu0 %v6341
    %6774 = vmatpush1.bf16.msra.mxu0 %v6340
    %6775 = vmatprep.subr.bf16.mxu0 %v6357
    %6776 = vmatpush1.bf16.msra.mxu0 %v6356
    %6777 = vmatprep.subr.bf16.mxu0 %v6373
    %6778 = vmatpush1.bf16.msra.mxu0 %v6372
    %6779 = vmatprep.subr.bf16.mxu0 %v6389
    %6780 = vmatpush1.bf16.msra.mxu0 %v6388
    %6781 = vmatprep.subr.bf16.mxu0 0
    %6782 = vmatpush1.bf16.msra.mxu0 0
    %6783 = vmatprep.subr.bf16.mxu0 0
    %6784 = vmatpush1.bf16.msra.mxu0 0
    %6785 = vmatprep.subr.bf16.mxu0 0
    %6786 = vmatpush1.bf16.msra.mxu0 0
    %6787 = vmatprep.subr.bf16.mxu0 0
    %6788 = vmatpush1.bf16.msra.mxu0 0
    %6789 = vmatprep.subr.bf16.mxu0 0
    %6790 = vmatpush1.bf16.msra.mxu0 0
    %6791 = vmatprep.subr.bf16.mxu0 0
    %6792 = vmatpush1.bf16.msra.mxu0 0
    %6793 = vmatprep.subr.bf16.mxu0 0
    %6794 = vmatpush1.bf16.msra.mxu0 0
    %6795 = vmatprep.subr.bf16.mxu0 0
    %6796 = vmatpush1.bf16.msra.mxu0 0
    %6797 = vmatprep.subr.bf16.mxu0 0
    %6798 = vmatpush1.bf16.msra.mxu0 0
    %6799 = vmatprep.subr.bf16.mxu0 0
    %6800 = vmatpush1.bf16.msra.mxu0 0
    %6801 = vmatprep.subr.bf16.mxu0 0
    %6802 = vmatpush1.bf16.msra.mxu0 0
    %6803 = vmatprep.subr.bf16.mxu0 0
    %6804 = vmatpush1.bf16.msra.mxu0 0
    %6805 = vmatprep.mubr.bf16.mxu0 0
    %6806 = vmatmul.mubr.bf16.gmra.mrb[0].mxu0 %v6484
    %v6807 = vpop.f32.mrb[0].mxu0
    %v6808 = vadd.f32 %v6453, %v6807
    %v6809 = vpop.f32.mrb[0].mxu0
    %v6810 = vadd.f32 %v6457, %v6809
    %v6811 = vpop.f32.mrb[0].mxu0
    %v6812 = vpop.f32.mrb[0].mxu0
    %6813 = vdwg.mxu0
    %v6814 = vmax.f32 %v6521, 0.0
    %v6815 = vmax.f32 %v6523, 0.0
    %v6816 = vmax.f32 %v6562, 0.0
    %v6817 = vmax.f32 %v6564, 0.0
    %v6818 = vmax.f32 %v6603, 0.0
    %v6819 = vmax.f32 %v6605, 0.0
    %v6820 = vmax.f32 %v6644, 0.0
    %v6821 = vmax.f32 %v6646, 0.0
    %v6822 = vmax.f32 %v6685, 0.0
    %v6823 = vmax.f32 %v6687, 0.0
    %v6824 = vmax.f32 %v6726, 0.0
    %v6825 = vmax.f32 %v6728, 0.0
    %v6826 = vmax.f32 %v6767, 0.0
    %v6827 = vmax.f32 %v6769, 0.0
    %v6828 = vmax.f32 %v6808, 0.0
    %v6829 = vmax.f32 %v6810, 0.0
    %s6830 = smul.u32 4, 256
    %s6831 = smul.u32 %s6830, 1
    %s6832 = sshll.u32 %s6831, 4
    %6833 = dma.done %s617, %s6832
    %v6834 = vpack.c.bf16 %v6814, %v6814
    %v6835 = vpack.c.bf16 %v6815, %v6815
    %v6836 = vpack.c.bf16 %v6816, %v6816
    %v6837 = vpack.c.bf16 %v6817, %v6817
    %v6838 = vpack.c.bf16 %v6818, %v6818
    %v6839 = vpack.c.bf16 %v6819, %v6819
    %v6840 = vpack.c.bf16 %v6820, %v6820
    %v6841 = vpack.c.bf16 %v6821, %v6821
    %v6842 = vpack.c.bf16 %v6822, %v6822
    %v6843 = vpack.c.bf16 %v6823, %v6823
    %v6844 = vpack.c.bf16 %v6824, %v6824
    %v6845 = vpack.c.bf16 %v6825, %v6825
    %v6846 = vpack.c.bf16 %v6826, %v6826
    %v6847 = vpack.c.bf16 %v6827, %v6827
    %v6848 = vpack.c.bf16 %v6828, %v6828
    %v6849 = vpack.c.bf16 %v6829, %v6829
    %v6850 = vld [vmem:[#allocation3] sm:$0xff]
    %v6851 = vld [vmem:[#allocation3 + $0x8] sm:$0xff]
    %v6852 = vld [vmem:[#allocation3 + $0x10] sm:$0xff]
    %v6853 = vld [vmem:[#allocation3 + $0x18] sm:$0xff]
    %v6854 = vld [vmem:[#allocation3 + $0x20] sm:$0xff]
    %v6855 = vld [vmem:[#allocation3 + $0x28] sm:$0xff]
    %v6856 = vld [vmem:[#allocation3 + $0x30] sm:$0xff]
    %v6857 = vld [vmem:[#allocation3 + $0x38] sm:$0xff]
    %v6858 = vld [vmem:[#allocation3 + $0x40] sm:$0xff]
    %v6859 = vld [vmem:[#allocation3 + $0x48] sm:$0xff]
    %v6860 = vld [vmem:[#allocation3 + $0x50] sm:$0xff]
    %v6861 = vld [vmem:[#allocation3 + $0x58] sm:$0xff]
    %v6862 = vld [vmem:[#allocation3 + $0x60] sm:$0xff]
    %v6863 = vld [vmem:[#allocation3 + $0x68] sm:$0xff]
    %v6864 = vld [vmem:[#allocation3 + $0x70] sm:$0xff]
    %v6865 = vld [vmem:[#allocation3 + $0x78] sm:$0xff]
    %v6866 = vld [vmem:[#allocation3 + $0x80] sm:$0xff]
    %v6867 = vld [vmem:[#allocation3 + $0x88] sm:$0xff]
    %v6868 = vld [vmem:[#allocation3 + $0x90] sm:$0xff]
    %v6869 = vld [vmem:[#allocation3 + $0x98] sm:$0xff]
    %v6870 = vld [vmem:[#allocation3 + $0xa0] sm:$0xff]
    %v6871 = vld [vmem:[#allocation3 + $0xa8] sm:$0xff]
    %v6872 = vld [vmem:[#allocation3 + $0xb0] sm:$0xff]
    %v6873 = vld [vmem:[#allocation3 + $0xb8] sm:$0xff]
    %v6874 = vld [vmem:[#allocation3 + $0xc0] sm:$0xff]
    %v6875 = vld [vmem:[#allocation3 + $0xc8] sm:$0xff]
    %v6876 = vld [vmem:[#allocation3 + $0xd0] sm:$0xff]
    %v6877 = vld [vmem:[#allocation3 + $0xd8] sm:$0xff]
    %v6878 = vld [vmem:[#allocation3 + $0xe0] sm:$0xff]
    %v6879 = vld [vmem:[#allocation3 + $0xe8] sm:$0xff]
    %v6880 = vld [vmem:[#allocation3 + $0xf0] sm:$0xff]
    %v6881 = vld [vmem:[#allocation3 + $0xf8] sm:$0xff]
    %v6882 = vld [vmem:[#allocation3 + $0x100] sm:$0xff]
    %v6883 = vld [vmem:[#allocation3 + $0x108] sm:$0xff]
    %v6884 = vld [vmem:[#allocation3 + $0x110] sm:$0xff]
    %v6885 = vld [vmem:[#allocation3 + $0x118] sm:$0xff]
    %v6886 = vld [vmem:[#allocation3 + $0x120] sm:$0xff]
    %v6887 = vld [vmem:[#allocation3 + $0x128] sm:$0xff]
    %v6888 = vld [vmem:[#allocation3 + $0x130] sm:$0xff]
    %v6889 = vld [vmem:[#allocation3 + $0x138] sm:$0xff]
    %v6890 = vld [vmem:[#allocation3 + $0x140] sm:$0xff]
    %v6891 = vld [vmem:[#allocation3 + $0x148] sm:$0xff]
    %v6892 = vld [vmem:[#allocation3 + $0x150] sm:$0xff]
    %v6893 = vld [vmem:[#allocation3 + $0x158] sm:$0xff]
    %v6894 = vld [vmem:[#allocation3 + $0x160] sm:$0xff]
    %v6895 = vld [vmem:[#allocation3 + $0x168] sm:$0xff]
    %v6896 = vld [vmem:[#allocation3 + $0x170] sm:$0xff]
    %v6897 = vld [vmem:[#allocation3 + $0x178] sm:$0xff]
    %v6898 = vld [vmem:[#allocation3 + $0x180] sm:$0xff]
    %v6899 = vld [vmem:[#allocation3 + $0x188] sm:$0xff]
    %v6900 = vld [vmem:[#allocation3 + $0x190] sm:$0xff]
    %v6901 = vld [vmem:[#allocation3 + $0x198] sm:$0xff]
    %v6902 = vld [vmem:[#allocation3 + $0x1a0] sm:$0xff]
    %v6903 = vld [vmem:[#allocation3 + $0x1a8] sm:$0xff]
    %v6904 = vld [vmem:[#allocation3 + $0x1b0] sm:$0xff]
    %v6905 = vld [vmem:[#allocation3 + $0x1b8] sm:$0xff]
    %v6906 = vld [vmem:[#allocation3 + $0x1c0] sm:$0xff]
    %v6907 = vld [vmem:[#allocation3 + $0x1c8] sm:$0xff]
    %v6908 = vld [vmem:[#allocation3 + $0x1d0] sm:$0xff]
    %v6909 = vld [vmem:[#allocation3 + $0x1d8] sm:$0xff]
    %v6910 = vld [vmem:[#allocation3 + $0x1e0] sm:$0xff]
    %v6911 = vld [vmem:[#allocation3 + $0x1e8] sm:$0xff]
    %v6912 = vld [vmem:[#allocation3 + $0x1f0] sm:$0xff]
    %v6913 = vld [vmem:[#allocation3 + $0x1f8] sm:$0xff]
    %v6914 = vld [vmem:[#allocation3 + $0x200] sm:$0xff]
    %v6915 = vld [vmem:[#allocation3 + $0x208] sm:$0xff]
    %v6916 = vld [vmem:[#allocation3 + $0x210] sm:$0xff]
    %v6917 = vld [vmem:[#allocation3 + $0x218] sm:$0xff]
    %v6918 = vld [vmem:[#allocation3 + $0x220] sm:$0xff]
    %v6919 = vld [vmem:[#allocation3 + $0x228] sm:$0xff]
    %v6920 = vld [vmem:[#allocation3 + $0x230] sm:$0xff]
    %v6921 = vld [vmem:[#allocation3 + $0x238] sm:$0xff]
    %v6922 = vld [vmem:[#allocation3 + $0x240] sm:$0xff]
    %v6923 = vld [vmem:[#allocation3 + $0x248] sm:$0xff]
    %v6924 = vld [vmem:[#allocation3 + $0x250] sm:$0xff]
    %v6925 = vld [vmem:[#allocation3 + $0x258] sm:$0xff]
    %v6926 = vld [vmem:[#allocation3 + $0x260] sm:$0xff]
    %v6927 = vld [vmem:[#allocation3 + $0x268] sm:$0xff]
    %v6928 = vld [vmem:[#allocation3 + $0x270] sm:$0xff]
    %v6929 = vld [vmem:[#allocation3 + $0x278] sm:$0xff]
    %v6930 = vld [vmem:[#allocation3 + $0x280] sm:$0xff]
    %v6931 = vld [vmem:[#allocation3 + $0x288] sm:$0xff]
    %v6932 = vld [vmem:[#allocation3 + $0x290] sm:$0xff]
    %v6933 = vld [vmem:[#allocation3 + $0x298] sm:$0xff]
    %v6934 = vld [vmem:[#allocation3 + $0x2a0] sm:$0xff]
    %v6935 = vld [vmem:[#allocation3 + $0x2a8] sm:$0xff]
    %v6936 = vld [vmem:[#allocation3 + $0x2b0] sm:$0xff]
    %v6937 = vld [vmem:[#allocation3 + $0x2b8] sm:$0xff]
    %v6938 = vld [vmem:[#allocation3 + $0x2c0] sm:$0xff]
    %v6939 = vld [vmem:[#allocation3 + $0x2c8] sm:$0xff]
    %v6940 = vld [vmem:[#allocation3 + $0x2d0] sm:$0xff]
    %v6941 = vld [vmem:[#allocation3 + $0x2d8] sm:$0xff]
    %v6942 = vld [vmem:[#allocation3 + $0x2e0] sm:$0xff]
    %v6943 = vld [vmem:[#allocation3 + $0x2e8] sm:$0xff]
    %v6944 = vld [vmem:[#allocation3 + $0x2f0] sm:$0xff]
    %v6945 = vld [vmem:[#allocation3 + $0x2f8] sm:$0xff]
    %v6946 = vld [vmem:[#allocation3 + $0x300] sm:$0xff]
    %v6947 = vld [vmem:[#allocation3 + $0x308] sm:$0xff]
    %v6948 = vld [vmem:[#allocation3 + $0x310] sm:$0xff]
    %v6949 = vld [vmem:[#allocation3 + $0x318] sm:$0xff]
    %v6950 = vld [vmem:[#allocation3 + $0x320] sm:$0xff]
    %v6951 = vld [vmem:[#allocation3 + $0x328] sm:$0xff]
    %v6952 = vld [vmem:[#allocation3 + $0x330] sm:$0xff]
    %v6953 = vld [vmem:[#allocation3 + $0x338] sm:$0xff]
    %v6954 = vld [vmem:[#allocation3 + $0x340] sm:$0xff]
    %v6955 = vld [vmem:[#allocation3 + $0x348] sm:$0xff]
    %v6956 = vld [vmem:[#allocation3 + $0x350] sm:$0xff]
    %v6957 = vld [vmem:[#allocation3 + $0x358] sm:$0xff]
    %v6958 = vld [vmem:[#allocation3 + $0x360] sm:$0xff]
    %v6959 = vld [vmem:[#allocation3 + $0x368] sm:$0xff]
    %v6960 = vld [vmem:[#allocation3 + $0x370] sm:$0xff]
    %v6961 = vld [vmem:[#allocation3 + $0x378] sm:$0xff]
    %v6962 = vld [vmem:[#allocation3 + $0x380] sm:$0xff]
    %v6963 = vld [vmem:[#allocation3 + $0x388] sm:$0xff]
    %v6964 = vld [vmem:[#allocation3 + $0x390] sm:$0xff]
    %v6965 = vld [vmem:[#allocation3 + $0x398] sm:$0xff]
    %v6966 = vld [vmem:[#allocation3 + $0x3a0] sm:$0xff]
    %v6967 = vld [vmem:[#allocation3 + $0x3a8] sm:$0xff]
    %v6968 = vld [vmem:[#allocation3 + $0x3b0] sm:$0xff]
    %v6969 = vld [vmem:[#allocation3 + $0x3b8] sm:$0xff]
    %v6970 = vld [vmem:[#allocation3 + $0x3c0] sm:$0xff]
    %v6971 = vld [vmem:[#allocation3 + $0x3c8] sm:$0xff]
    %v6972 = vld [vmem:[#allocation3 + $0x3d0] sm:$0xff]
    %v6973 = vld [vmem:[#allocation3 + $0x3d8] sm:$0xff]
    %v6974 = vld [vmem:[#allocation3 + $0x3e0] sm:$0xff]
    %v6975 = vld [vmem:[#allocation3 + $0x3e8] sm:$0xff]
    %v6976 = vld [vmem:[#allocation3 + $0x3f0] sm:$0xff]
    %v6977 = vld [vmem:[#allocation3 + $0x3f8] sm:$0xff]
    %v6978 = vld [vmem:[%s15] sm:$0x1]
    %v6980 = vlaneseq
    %v6981 = vshrl.u32 %v6980, 7
    %v6982 = vsub.s32 0, %v6981
    %v6983 = vrot.slane %v6978, %v6982
    %6985 = vmatprep.subr.bf16.mxu0 0
    %6986 = vmatpush1.bf16.msra.mxu0 %v6850
    %6987 = vmatprep.subr.bf16.mxu0 0
    %6988 = vmatpush1.bf16.msra.mxu0 %v6851
    %6989 = vmatprep.subr.bf16.mxu0 0
    %6990 = vmatpush1.bf16.msra.mxu0 %v6852
    %6991 = vmatprep.subr.bf16.mxu0 0
    %6992 = vmatpush1.bf16.msra.mxu0 %v6853
    %6993 = vmatprep.subr.bf16.mxu0 0
    %6994 = vmatpush1.bf16.msra.mxu0 %v6854
    %6995 = vmatprep.subr.bf16.mxu0 0
    %6996 = vmatpush1.bf16.msra.mxu0 %v6855
    %6997 = vmatprep.subr.bf16.mxu0 0
    %6998 = vmatpush1.bf16.msra.mxu0 %v6856
    %6999 = vmatprep.subr.bf16.mxu0 0
    %7000 = vmatpush1.bf16.msra.mxu0 %v6857
    %7001 = vmatprep.subr.bf16.mxu0 0
    %7002 = vmatpush1.bf16.msra.mxu0 %v6858
    %7003 = vmatprep.subr.bf16.mxu0 0
    %7004 = vmatpush1.bf16.msra.mxu0 %v6859
    %7005 = vmatprep.subr.bf16.mxu0 0
    %7006 = vmatpush1.bf16.msra.mxu0 %v6860
    %7007 = vmatprep.subr.bf16.mxu0 0
    %7008 = vmatpush1.bf16.msra.mxu0 %v6861
    %7009 = vmatprep.subr.bf16.mxu0 0
    %7010 = vmatpush1.bf16.msra.mxu0 %v6862
    %7011 = vmatprep.subr.bf16.mxu0 0
    %7012 = vmatpush1.bf16.msra.mxu0 %v6863
    %7013 = vmatprep.subr.bf16.mxu0 0
    %7014 = vmatpush1.bf16.msra.mxu0 %v6864
    %7015 = vmatprep.subr.bf16.mxu0 0
    %7016 = vmatpush1.bf16.msra.mxu0 %v6865
    %7017 = vmatprep.mubr.bf16.mxu0 %v6835
    %7018 = vmatmul.mubr.bf16.gmra.mrb[0].mxu0 %v6834
    %v7019 = vpop.f32.mrb[0].mxu0
    %v7020 = vadd.f32 %v6983, %v7019
    %v7021 = vpop.f32.mrb[0].mxu0
    %v7022 = vpop.f32.mrb[0].mxu0
    %v7023 = vpop.f32.mrb[0].mxu0
    %7024 = vdwg.mxu0
    %7025 = vmatprep.subr.bf16.mxu0 0
    %7026 = vmatpush1.bf16.msra.mxu0 %v6866
    %7027 = vmatprep.subr.bf16.mxu0 0
    %7028 = vmatpush1.bf16.msra.mxu0 %v6867
    %7029 = vmatprep.subr.bf16.mxu0 0
    %7030 = vmatpush1.bf16.msra.mxu0 %v6868
    %7031 = vmatprep.subr.bf16.mxu0 0
    %7032 = vmatpush1.bf16.msra.mxu0 %v6869
    %7033 = vmatprep.subr.bf16.mxu0 0
    %7034 = vmatpush1.bf16.msra.mxu0 %v6870
    %7035 = vmatprep.subr.bf16.mxu0 0
    %7036 = vmatpush1.bf16.msra.mxu0 %v6871
    %7037 = vmatprep.subr.bf16.mxu0 0
    %7038 = vmatpush1.bf16.msra.mxu0 %v6872
    %7039 = vmatprep.subr.bf16.mxu0 0
    %7040 = vmatpush1.bf16.msra.mxu0 %v6873
    %7041 = vmatprep.subr.bf16.mxu0 0
    %7042 = vmatpush1.bf16.msra.mxu0 %v6874
    %7043 = vmatprep.subr.bf16.mxu0 0
    %7044 = vmatpush1.bf16.msra.mxu0 %v6875
    %7045 = vmatprep.subr.bf16.mxu0 0
    %7046 = vmatpush1.bf16.msra.mxu0 %v6876
    %7047 = vmatprep.subr.bf16.mxu0 0
    %7048 = vmatpush1.bf16.msra.mxu0 %v6877
    %7049 = vmatprep.subr.bf16.mxu0 0
    %7050 = vmatpush1.bf16.msra.mxu0 %v6878
    %7051 = vmatprep.subr.bf16.mxu0 0
    %7052 = vmatpush1.bf16.msra.mxu0 %v6879
    %7053 = vmatprep.subr.bf16.mxu0 0
    %7054 = vmatpush1.bf16.msra.mxu0 %v6880
    %7055 = vmatprep.subr.bf16.mxu0 0
    %7056 = vmatpush1.bf16.msra.mxu0 %v6881
    %7057 = vmatprep.mubr.bf16.mxu0 %v6837
    %7058 = vmatmul.mubr.bf16.gmra.mrb[0].mxu0 %v6836
    %v7059 = vpop.f32.mrb[0].mxu0
    %v7060 = vadd.f32 %v7020, %v7059
    %v7061 = vpop.f32.mrb[0].mxu0
    %v7062 = vpop.f32.mrb[0].mxu0
    %v7063 = vpop.f32.mrb[0].mxu0
    %7064 = vdwg.mxu0
    %7065 = vmatprep.subr.bf16.mxu0 0
    %7066 = vmatpush1.bf16.msra.mxu0 %v6882
    %7067 = vmatprep.subr.bf16.mxu0 0
    %7068 = vmatpush1.bf16.msra.mxu0 %v6883
    %7069 = vmatprep.subr.bf16.mxu0 0
    %7070 = vmatpush1.bf16.msra.mxu0 %v6884
    %7071 = vmatprep.subr.bf16.mxu0 0
    %7072 = vmatpush1.bf16.msra.mxu0 %v6885
    %7073 = vmatprep.subr.bf16.mxu0 0
    %7074 = vmatpush1.bf16.msra.mxu0 %v6886
    %7075 = vmatprep.subr.bf16.mxu0 0
    %7076 = vmatpush1.bf16.msra.mxu0 %v6887
    %7077 = vmatprep.subr.bf16.mxu0 0
    %7078 = vmatpush1.bf16.msra.mxu0 %v6888
    %7079 = vmatprep.subr.bf16.mxu0 0
    %7080 = vmatpush1.bf16.msra.mxu0 %v6889
    %7081 = vmatprep.subr.bf16.mxu0 0
    %7082 = vmatpush1.bf16.msra.mxu0 %v6890
    %7083 = vmatprep.subr.bf16.mxu0 0
    %7084 = vmatpush1.bf16.msra.mxu0 %v6891
    %7085 = vmatprep.subr.bf16.mxu0 0
    %7086 = vmatpush1.bf16.msra.mxu0 %v6892
    %7087 = vmatprep.subr.bf16.mxu0 0
    %7088 = vmatpush1.bf16.msra.mxu0 %v6893
    %7089 = vmatprep.subr.bf16.mxu0 0
    %7090 = vmatpush1.bf16.msra.mxu0 %v6894
    %7091 = vmatprep.subr.bf16.mxu0 0
    %7092 = vmatpush1.bf16.msra.mxu0 %v6895
    %7093 = vmatprep.subr.bf16.mxu0 0
    %7094 = vmatpush1.bf16.msra.mxu0 %v6896
    %7095 = vmatprep.subr.bf16.mxu0 0
    %7096 = vmatpush1.bf16.msra.mxu0 %v6897
    %7097 = vmatprep.mubr.bf16.mxu0 %v6839
    %7098 = vmatmul.mubr.bf16.gmra.mrb[0].mxu0 %v6838
    %v7099 = vpop.f32.mrb[0].mxu0
    %v7100 = vadd.f32 %v7060, %v7099
    %v7101 = vpop.f32.mrb[0].mxu0
    %v7102 = vpop.f32.mrb[0].mxu0
    %v7103 = vpop.f32.mrb[0].mxu0
    %7104 = vdwg.mxu0
    %7105 = vmatprep.subr.bf16.mxu0 0
    %7106 = vmatpush1.bf16.msra.mxu0 %v6898
    %7107 = vmatprep.subr.bf16.mxu0 0
    %7108 = vmatpush1.bf16.msra.mxu0 %v6899
    %7109 = vmatprep.subr.bf16.mxu0 0
    %7110 = vmatpush1.bf16.msra.mxu0 %v6900
    %7111 = vmatprep.subr.bf16.mxu0 0
    %7112 = vmatpush1.bf16.msra.mxu0 %v6901
    %7113 = vmatprep.subr.bf16.mxu0 0
    %7114 = vmatpush1.bf16.msra.mxu0 %v6902
    %7115 = vmatprep.subr.bf16.mxu0 0
    %7116 = vmatpush1.bf16.msra.mxu0 %v6903
    %7117 = vmatprep.subr.bf16.mxu0 0
    %7118 = vmatpush1.bf16.msra.mxu0 %v6904
    %7119 = vmatprep.subr.bf16.mxu0 0
    %7120 = vmatpush1.bf16.msra.mxu0 %v6905
    %7121 = vmatprep.subr.bf16.mxu0 0
    %7122 = vmatpush1.bf16.msra.mxu0 %v6906
    %7123 = vmatprep.subr.bf16.mxu0 0
    %7124 = vmatpush1.bf16.msra.mxu0 %v6907
    %7125 = vmatprep.subr.bf16.mxu0 0
    %7126 = vmatpush1.bf16.msra.mxu0 %v6908
    %7127 = vmatprep.subr.bf16.mxu0 0
    %7128 = vmatpush1.bf16.msra.mxu0 %v6909
    %7129 = vmatprep.subr.bf16.mxu0 0
    %7130 = vmatpush1.bf16.msra.mxu0 %v6910
    %7131 = vmatprep.subr.bf16.mxu0 0
    %7132 = vmatpush1.bf16.msra.mxu0 %v6911
    %7133 = vmatprep.subr.bf16.mxu0 0
    %7134 = vmatpush1.bf16.msra.mxu0 %v6912
    %7135 = vmatprep.subr.bf16.mxu0 0
    %7136 = vmatpush1.bf16.msra.mxu0 %v6913
    %7137 = vmatprep.mubr.bf16.mxu0 %v6841
    %7138 = vmatmul.mubr.bf16.gmra.mrb[0].mxu0 %v6840
    %v7139 = vpop.f32.mrb[0].mxu0
    %v7140 = vadd.f32 %v7100, %v7139
    %v7141 = vpop.f32.mrb[0].mxu0
    %v7142 = vpop.f32.mrb[0].mxu0
    %v7143 = vpop.f32.mrb[0].mxu0
    %7144 = vdwg.mxu0
    %7145 = vmatprep.subr.bf16.mxu0 0
    %7146 = vmatpush1.bf16.msra.mxu0 %v6914
    %7147 = vmatprep.subr.bf16.mxu0 0
    %7148 = vmatpush1.bf16.msra.mxu0 %v6915
    %7149 = vmatprep.subr.bf16.mxu0 0
    %7150 = vmatpush1.bf16.msra.mxu0 %v6916
    %7151 = vmatprep.subr.bf16.mxu0 0
    %7152 = vmatpush1.bf16.msra.mxu0 %v6917
    %7153 = vmatprep.subr.bf16.mxu0 0
    %7154 = vmatpush1.bf16.msra.mxu0 %v6918
    %7155 = vmatprep.subr.bf16.mxu0 0
    %7156 = vmatpush1.bf16.msra.mxu0 %v6919
    %7157 = vmatprep.subr.bf16.mxu0 0
    %7158 = vmatpush1.bf16.msra.mxu0 %v6920
    %7159 = vmatprep.subr.bf16.mxu0 0
    %7160 = vmatpush1.bf16.msra.mxu0 %v6921
    %7161 = vmatprep.subr.bf16.mxu0 0
    %7162 = vmatpush1.bf16.msra.mxu0 %v6922
    %7163 = vmatprep.subr.bf16.mxu0 0
    %7164 = vmatpush1.bf16.msra.mxu0 %v6923
    %7165 = vmatprep.subr.bf16.mxu0 0
    %7166 = vmatpush1.bf16.msra.mxu0 %v6924
    %7167 = vmatprep.subr.bf16.mxu0 0
    %7168 = vmatpush1.bf16.msra.mxu0 %v6925
    %7169 = vmatprep.subr.bf16.mxu0 0
    %7170 = vmatpush1.bf16.msra.mxu0 %v6926
    %7171 = vmatprep.subr.bf16.mxu0 0
    %7172 = vmatpush1.bf16.msra.mxu0 %v6927
    %7173 = vmatprep.subr.bf16.mxu0 0
    %7174 = vmatpush1.bf16.msra.mxu0 %v6928
    %7175 = vmatprep.subr.bf16.mxu0 0
    %7176 = vmatpush1.bf16.msra.mxu0 %v6929
    %7177 = vmatprep.mubr.bf16.mxu0 %v6843
    %7178 = vmatmul.mubr.bf16.gmra.mrb[0].mxu0 %v6842
    %v7179 = vpop.f32.mrb[0].mxu0
    %v7180 = vadd.f32 %v7140, %v7179
    %v7181 = vpop.f32.mrb[0].mxu0
    %v7182 = vpop.f32.mrb[0].mxu0
    %v7183 = vpop.f32.mrb[0].mxu0
    %7184 = vdwg.mxu0
    %7185 = vmatprep.subr.bf16.mxu0 0
    %7186 = vmatpush1.bf16.msra.mxu0 %v6930
    %7187 = vmatprep.subr.bf16.mxu0 0
    %7188 = vmatpush1.bf16.msra.mxu0 %v6931
    %7189 = vmatprep.subr.bf16.mxu0 0
    %7190 = vmatpush1.bf16.msra.mxu0 %v6932
    %7191 = vmatprep.subr.bf16.mxu0 0
    %7192 = vmatpush1.bf16.msra.mxu0 %v6933
    %7193 = vmatprep.subr.bf16.mxu0 0
    %7194 = vmatpush1.bf16.msra.mxu0 %v6934
    %7195 = vmatprep.subr.bf16.mxu0 0
    %7196 = vmatpush1.bf16.msra.mxu0 %v6935
    %7197 = vmatprep.subr.bf16.mxu0 0
    %7198 = vmatpush1.bf16.msra.mxu0 %v6936
    %7199 = vmatprep.subr.bf16.mxu0 0
    %7200 = vmatpush1.bf16.msra.mxu0 %v6937
    %7201 = vmatprep.subr.bf16.mxu0 0
    %7202 = vmatpush1.bf16.msra.mxu0 %v6938
    %7203 = vmatprep.subr.bf16.mxu0 0
    %7204 = vmatpush1.bf16.msra.mxu0 %v6939
    %7205 = vmatprep.subr.bf16.mxu0 0
    %7206 = vmatpush1.bf16.msra.mxu0 %v6940
    %7207 = vmatprep.subr.bf16.mxu0 0
    %7208 = vmatpush1.bf16.msra.mxu0 %v6941
    %7209 = vmatprep.subr.bf16.mxu0 0
    %7210 = vmatpush1.bf16.msra.mxu0 %v6942
    %7211 = vmatprep.subr.bf16.mxu0 0
    %7212 = vmatpush1.bf16.msra.mxu0 %v6943
    %7213 = vmatprep.subr.bf16.mxu0 0
    %7214 = vmatpush1.bf16.msra.mxu0 %v6944
    %7215 = vmatprep.subr.bf16.mxu0 0
    %7216 = vmatpush1.bf16.msra.mxu0 %v6945
    %7217 = vmatprep.mubr.bf16.mxu0 %v6845
    %7218 = vmatmul.mubr.bf16.gmra.mrb[0].mxu0 %v6844
    %v7219 = vpop.f32.mrb[0].mxu0
    %v7220 = vadd.f32 %v7180, %v7219
    %v7221 = vpop.f32.mrb[0].mxu0
    %v7222 = vpop.f32.mrb[0].mxu0
    %v7223 = vpop.f32.mrb[0].mxu0
    %7224 = vdwg.mxu0
    %7225 = vmatprep.subr.bf16.mxu0 0
    %7226 = vmatpush1.bf16.msra.mxu0 %v6946
    %7227 = vmatprep.subr.bf16.mxu0 0
    %7228 = vmatpush1.bf16.msra.mxu0 %v6947
    %7229 = vmatprep.subr.bf16.mxu0 0
    %7230 = vmatpush1.bf16.msra.mxu0 %v6948
    %7231 = vmatprep.subr.bf16.mxu0 0
    %7232 = vmatpush1.bf16.msra.mxu0 %v6949
    %7233 = vmatprep.subr.bf16.mxu0 0
    %7234 = vmatpush1.bf16.msra.mxu0 %v6950
    %7235 = vmatprep.subr.bf16.mxu0 0
    %7236 = vmatpush1.bf16.msra.mxu0 %v6951
    %7237 = vmatprep.subr.bf16.mxu0 0
    %7238 = vmatpush1.bf16.msra.mxu0 %v6952
    %7239 = vmatprep.subr.bf16.mxu0 0
    %7240 = vmatpush1.bf16.msra.mxu0 %v6953
    %7241 = vmatprep.subr.bf16.mxu0 0
    %7242 = vmatpush1.bf16.msra.mxu0 %v6954
    %7243 = vmatprep.subr.bf16.mxu0 0
    %7244 = vmatpush1.bf16.msra.mxu0 %v6955
    %7245 = vmatprep.subr.bf16.mxu0 0
    %7246 = vmatpush1.bf16.msra.mxu0 %v6956
    %7247 = vmatprep.subr.bf16.mxu0 0
    %7248 = vmatpush1.bf16.msra.mxu0 %v6957
    %7249 = vmatprep.subr.bf16.mxu0 0
    %7250 = vmatpush1.bf16.msra.mxu0 %v6958
    %7251 = vmatprep.subr.bf16.mxu0 0
    %7252 = vmatpush1.bf16.msra.mxu0 %v6959
    %7253 = vmatprep.subr.bf16.mxu0 0
    %7254 = vmatpush1.bf16.msra.mxu0 %v6960
    %7255 = vmatprep.subr.bf16.mxu0 0
    %7256 = vmatpush1.bf16.msra.mxu0 %v6961
    %7257 = vmatprep.mubr.bf16.mxu0 %v6847
    %7258 = vmatmul.mubr.bf16.gmra.mrb[0].mxu0 %v6846
    %v7259 = vpop.f32.mrb[0].mxu0
    %v7260 = vadd.f32 %v7220, %v7259
    %v7261 = vpop.f32.mrb[0].mxu0
    %v7262 = vpop.f32.mrb[0].mxu0
    %v7263 = vpop.f32.mrb[0].mxu0
    %7264 = vdwg.mxu0
    %7265 = vmatprep.subr.bf16.mxu0 0
    %7266 = vmatpush1.bf16.msra.mxu0 %v6962
    %7267 = vmatprep.subr.bf16.mxu0 0
    %7268 = vmatpush1.bf16.msra.mxu0 %v6963
    %7269 = vmatprep.subr.bf16.mxu0 0
    %7270 = vmatpush1.bf16.msra.mxu0 %v6964
    %7271 = vmatprep.subr.bf16.mxu0 0
    %7272 = vmatpush1.bf16.msra.mxu0 %v6965
    %7273 = vmatprep.subr.bf16.mxu0 0
    %7274 = vmatpush1.bf16.msra.mxu0 %v6966
    %7275 = vmatprep.subr.bf16.mxu0 0
    %7276 = vmatpush1.bf16.msra.mxu0 %v6967
    %7277 = vmatprep.subr.bf16.mxu0 0
    %7278 = vmatpush1.bf16.msra.mxu0 %v6968
    %7279 = vmatprep.subr.bf16.mxu0 0
    %7280 = vmatpush1.bf16.msra.mxu0 %v6969
    %7281 = vmatprep.subr.bf16.mxu0 0
    %7282 = vmatpush1.bf16.msra.mxu0 %v6970
    %7283 = vmatprep.subr.bf16.mxu0 0
    %7284 = vmatpush1.bf16.msra.mxu0 %v6971
    %7285 = vmatprep.subr.bf16.mxu0 0
    %7286 = vmatpush1.bf16.msra.mxu0 %v6972
    %7287 = vmatprep.subr.bf16.mxu0 0
    %7288 = vmatpush1.bf16.msra.mxu0 %v6973
    %7289 = vmatprep.subr.bf16.mxu0 0
    %7290 = vmatpush1.bf16.msra.mxu0 %v6974
    %7291 = vmatprep.subr.bf16.mxu0 0
    %7292 = vmatpush1.bf16.msra.mxu0 %v6975
    %7293 = vmatprep.subr.bf16.mxu0 0
    %7294 = vmatpush1.bf16.msra.mxu0 %v6976
    %7295 = vmatprep.subr.bf16.mxu0 0
    %7296 = vmatpush1.bf16.msra.mxu0 %v6977
    %7297 = vmatprep.mubr.bf16.mxu0 %v6849
    %7298 = vmatmul.mubr.bf16.gmra.mrb[0].mxu0 %v6848
    %v7299 = vpop.f32.mrb[0].mxu0
    %v7300 = vadd.f32 %v7260, %v7299
    %v7301 = vpop.f32.mrb[0].mxu0
    %v7302 = vpop.f32.mrb[0].mxu0
    %v7303 = vpop.f32.mrb[0].mxu0
    %7304 = vdwg.mxu0
    %vm7305 = vcmask 517120
    %7306 = vst.msk [vmem:[#allocation5] sm:$0x3] %vm7305, %v7300
    // Predicated region
    $region137: #{forward.1} parent=1 // pred_check
      _
    $region138: #{forward.1} parent=1 // pred_check_branch
      %7308 = sbr.rel (0) target = $region140
    $region139: #{forward.1} parent=1 // pred_region
      %s7310 = ssub.s32 32, 32
      %7311 = vsyncadd [#allocation6], %s7310
      %s7313 = sshll.u32 [#allocation5], 4
      %s7314 = int_to_ptr.vmem [resolvable:$true] %s7313
      %7316 = dma.vmem_to_hbm [thread:$0]  %s7314, 32, %s18, [#allocation6]
    $region140: #{forward.1} parent=1 // pred_fallthru
      _
    // Predicated region
    $region141: #{forward.1} parent=1 // pred_check
      _
    $region142: #{forward.1} parent=1 // pred_check_branch
      %7318 = sbr.rel (0) target = $region144
    $region143: #{forward.1} parent=1 // pred_region
      %7319 = dma.done [#allocation6], 32
    $region144: #{forward.1} parent=1 // pred_fallthru
      _
    %7320 = vsyncpa [#allocation6], 1
  %7321 = vsyncmov [#allocation4]
  %s7322 = vpop.sfrf %7321
  %p7323 = scmp.eq.s32.totalorder %s7322, 0
  %p7324 = pneg %p7323
  %7326 = shalt.err (%p7324)
  %s7327 = scalar_lea.sflag [#allocation4], 1
  %7328 = vsyncmov %s7327
  %s7329 = vpop.sfrf %7328
  %p7330 = scmp.eq.s32.totalorder %s7329, 0
  %p7331 = pneg %p7330
  %7333 = shalt.err (%p7331)

</llo_original>
